<compile_context>
chip_gen: v6e
topology: v6e:2x2x1
jax: 0.10.0
libtpu: 0.0.40
codegen_flags: <defaults>
</compile_context>

<pallas_src>
import functools

import jax
import jax.numpy as jnp
from jax.experimental import pallas as pl
from jax.experimental.pallas import tpu as pltpu


# ----------------------------------------------------------------------------
# Fused kernel: conv1 -> conv2 -> conv3 -> flatten -> l_1 -> (l_pi | l_v)
# ----------------------------------------------------------------------------
def _leaky(x):
    return jnp.where(x > 0, x, 0.01 * x)           # F.leaky_relu default 0.01


def _fused_kernel(n,
                  p1_ref, w1_ref, b1_ref, w2_ref, b2_ref, w3_ref, b3_ref,
                  w1l_hbm, bl1_ref, wh_ref, bh_ref,
                  out_ref,
                  w1l_vmem, dma_sem, h1_ref, h2p_ref, p3_ref, h3_ref,
                  flat_ref):
    bf16 = jnp.bfloat16
    f32 = jnp.float32

    # Kick off the l_1 weight DMA (2.36 MiB, the dominant HBM transfer) now so
    # it overlaps with all the conv compute below.
    l1_copy = pltpu.make_async_copy(w1l_hbm, w1l_vmem, dma_sem)
    l1_copy.start()

    # ---- conv1: one matmul over the space-to-depth patch rows --------------
    # p1: (n*160, 432) bf16, rows = (image, s2d-row r in 0..9, s2d-col q 0..15)
    # w1: (432, 128)  -> 128 lanes = 4 parity planes x 32 channels.
    y1 = jnp.dot(p1_ref[...], w1_ref[...], preferred_element_type=f32)
    y1 = _leaky(y1 + b1_ref[...])                          # (n*160, 128)
    h1_ref[...] = y1.reshape(n * 10, 16, 128)              # aligned split

    # ---- conv2: 2x2/stride-1 conv over the s2d map (4 taps, K=128) ---------
    acc2 = jnp.zeros((n * 64, 64), f32)
    for a in range(2):
        for b in range(2):
            t = a * 2 + b
            wins = [
                h1_ref[img * 10 + a:img * 10 + a + 8, b:b + 8, :]
                .reshape(64, 128)
                for img in range(n)
            ]
            lhs = jnp.concatenate(wins, axis=0)            # (n*64, 128)
            acc2 = acc2 + jnp.dot(lhs.astype(bf16),
                                  w2_ref[t * 128:(t + 1) * 128, :],
                                  preferred_element_type=f32)
    h2 = _leaky(acc2 + b2_ref[...])                        # (n*64, 64), 8x8

    # Zero-pad the 8x8 conv2 output into a 10x16 map so every conv3 window is
    # an aligned 8x8 block (padded outputs are computed but never used).
    h2p_ref[...] = jnp.zeros(h2p_ref.shape, f32)
    for img in range(n):
        h2p_ref[img * 10:img * 10 + 8, 0:8, :] = (
            h2[img * 64:(img + 1) * 64, :].reshape(8, 8, 64))

    # ---- conv3: build im2col patches in VMEM, then one matmul --------------
    for img in range(n):
        for i in range(3):
            for j in range(3):
                t = i * 3 + j
                win = h2p_ref[img * 10 + i:img * 10 + i + 8, j:j + 8, :]
                p3_ref[img * 64:(img + 1) * 64, t * 64:(t + 1) * 64] = (
                    win.reshape(64, 64).astype(bf16))
    y3 = jnp.dot(p3_ref[...], w3_ref[...], preferred_element_type=f32)
    h3_ref[...] = _leaky(y3 + b3_ref[...])                 # (n*64, 64)

    # ---- flatten valid 6x6x64 block -> 2304 lanes (layout change only) -----
    for img in range(n):
        for oh in range(6):
            for ow in range(6):
                s = oh * 6 + ow
                row = img * 64 + oh * 8 + ow
                flat_ref[img:img + 1, s * 64:(s + 1) * 64] = (
                    h3_ref[row:row + 1, :])

    # ---- l_1 + fused (l_pi | l_v) heads: hidden never leaves the chip ------
    l1_copy.wait()                                          # weight resident
    hmid = jnp.dot(flat_ref[...].astype(bf16), w1l_vmem[...],
                   preferred_element_type=f32)
    hmid = _leaky(hmid + bl1_ref[...])                      # (n, 512)
    out = jnp.dot(hmid.astype(bf16), wh_ref[...],
                  preferred_element_type=f32)
    out_ref[...] = out + bh_ref[...]                        # (n, 128)


def _build_fused_call(n):
    kernel = functools.partial(_fused_kernel, n)
    flops = 2 * (n * 160 * 432 * 128 + 4 * n * 64 * 128 * 64
                 + n * 64 * 576 * 64 + n * 2304 * 512 + n * 512 * 128)
    bytes_accessed = (n * 160 * 432 * 2                       # conv1 patches
                      + (432 * 128 + 512 * 64 + 576 * 64
                         + 2304 * 512 + 512 * 128) * 2        # bf16 weights
                      + (128 + 64 + 64 + 512 + 128) * 4       # biases
                      + n * 128 * 4)                          # output
    vmem = lambda: pl.BlockSpec(memory_space=pltpu.VMEM)
    return pl.pallas_call(
        kernel,
        out_shape=jax.ShapeDtypeStruct((n, 128), jnp.float32),
        in_specs=[vmem(), vmem(), vmem(), vmem(), vmem(), vmem(), vmem(),
                  pl.BlockSpec(memory_space=pl.ANY),   # l_1 weight (HBM)
                  vmem(), vmem(), vmem()],
        out_specs=vmem(),
        scratch_shapes=[
            pltpu.VMEM((2304, 512), jnp.bfloat16),     # l_1 weight buffer
            pltpu.SemaphoreType.DMA,                   # its DMA semaphore
            pltpu.VMEM((n * 10, 16, 128), jnp.float32),  # conv1 out (s2d map)
            pltpu.VMEM((n * 10, 16, 64), jnp.float32),   # conv2 out (padded)
            pltpu.VMEM((n * 64, 576), jnp.bfloat16),     # conv3 im2col
            pltpu.VMEM((n * 64, 64), jnp.float32),       # conv3 out
            pltpu.VMEM((n, 2304), jnp.float32),          # l_1 input
        ],
        cost_estimate=pl.CostEstimate(flops=flops, transcendentals=0,
                                      bytes_accessed=bytes_accessed),
    )


# ----------------------------------------------------------------------------
# Parameters: PyTorch-layout init + one-time preprocessing for the kernel
# ----------------------------------------------------------------------------
def init_params(key):
    def draw(k, shape, fan_in):
        return jax.random.normal(k, shape, jnp.float32) / jnp.sqrt(fan_in)

    ks = jax.random.split(key, 12)
    return {
        "conv1_w": draw(ks[0], (32, 3, 8, 8), 3 * 8 * 8),
        "conv1_b": draw(ks[1], (32,), 3 * 8 * 8),
        "conv2_w": draw(ks[2], (64, 32, 4, 4), 32 * 4 * 4),
        "conv2_b": draw(ks[3], (64,), 32 * 4 * 4),
        "conv3_w": draw(ks[4], (64, 64, 3, 3), 64 * 3 * 3),
        "conv3_b": draw(ks[5], (64,), 64 * 3 * 3),
        "l1_w": draw(ks[6], (512, 2304), 2304),
        "l1_b": draw(ks[7], (512,), 2304),
        "lpi_w": draw(ks[8], (4, 512), 512),
        "lpi_b": draw(ks[9], (4,), 512),
        "lv_w": draw(ks[10], (1, 512), 512),
        "lv_b": draw(ks[11], (1,), 512),
    }


def preprocess_params(p):
    """One-time weight reshuffle: s2d conv1, tap-stacked conv2, im2col conv3,
    permuted l_1, fused lane-padded heads; everything cast to bf16."""
    bf16 = jnp.bfloat16

    # conv1 -> 12x12/stride-8 conv producing the 2x2 space-to-depth of the
    # original output: lane block (pi*2+pj)*32+oc, tap weight shifted by 4.
    w1t = jnp.transpose(p["conv1_w"], (2, 3, 1, 0))          # (8,8,3,32)
    w1s = jnp.zeros((12, 12, 3, 4, 32), jnp.float32)
    for pi in range(2):
        for pj in range(2):
            w1s = w1s.at[4 * pi:4 * pi + 8, 4 * pj:4 * pj + 8, :,
                         pi * 2 + pj, :].set(w1t)
    w1s = w1s.reshape(432, 128).astype(bf16)
    b1s = jnp.tile(p["conv1_b"], 4).reshape(1, 128)

    # conv2 -> 2x2/stride-1 conv over the s2d map: tap (a,b), K-row order
    # (pi*2+pj)*32+ic, taps stacked row-major into (512, 64).
    w2t = jnp.transpose(p["conv2_w"], (2, 3, 1, 0))          # (4,4,32,64)
    taps = []
    for a in range(2):
        for b in range(2):
            blocks = [w2t[2 * a + pi, 2 * b + pj]
                      for pi in range(2) for pj in range(2)]
            taps.append(jnp.concatenate(blocks, axis=0))     # (128, 64)
    w2k = jnp.concatenate(taps, axis=0).astype(bf16)         # (512, 64)

    # conv3: standard im2col weight, feature order (kh, kw, ic).
    w3k = jnp.transpose(p["conv3_w"], (2, 3, 1, 0)).reshape(576, 64)
    w3k = w3k.astype(bf16)

    # l_1 columns: PyTorch flatten order is (C, H, W); kernel uses (H*W, C).
    l1 = p["l1_w"].reshape(512, 64, 36).transpose(0, 2, 1).reshape(512, 2304)
    l1 = l1.T.astype(bf16)                                   # (2304, 512)

    # Fused policy/value head, zero-padded to 128 lanes (lane-dense output).
    wh = jnp.concatenate([p["lpi_w"], p["lv_w"]], axis=0).T  # (512, 5)
    wh = jnp.zeros((512, 128), jnp.float32).at[:, :5].set(wh).astype(bf16)
    bh = jnp.zeros((1, 128), jnp.float32).at[0, :5].set(
        jnp.concatenate([p["lpi_b"], p["lv_b"]]))

    return {
        "c1_w": w1s, "c1_b": b1s,
        "c2_w": w2k, "c2_b": p["conv2_b"].reshape(1, 64),
        "c3_w": w3k, "c3_b": p["conv3_b"].reshape(1, 64),
        "l1_w": l1, "l1_b": p["l1_b"].reshape(1, 512),
        "lh_w": wh, "lh_b": bh,
    }


# ----------------------------------------------------------------------------
# Forward pass (pi, v) — mirrors A3CModel.forward
# ----------------------------------------------------------------------------
def a3c_forward(kp, x):
    """x: (N, 3, 80, 80) f32 NCHW (PyTorch layout). Returns (pi, v) in f32."""
    n, c, hh, ww = x.shape
    assert (c, hh, ww) == (3, 80, 80), "A3CModel hard-codes a 2304-wide flatten"

    # bf16 cast first, then NHWC; patch extraction for the s2d conv1 below is
    # a single XLA fusion feeding the kernel's input DMA.
    xb = jnp.transpose(x.astype(jnp.bfloat16), (0, 2, 3, 1))   # (N, 80, 80, 3)
    xp = jnp.pad(xb, ((0, 0), (0, 4), (0, 4), (0, 0)))         # (N, 84, 84, 3)
    cols = []
    for i in range(12):
        for j in range(12):
            cols.append(xp[:, i:i + 73:8, j:j + 73:8, :])      # (N, 10, 10, 3)
    p1 = jnp.concatenate(cols, axis=-1)                        # (N,10,10,432)
    p1 = jnp.pad(p1, ((0, 0), (0, 0), (0, 6), (0, 0)))         # (N,10,16,432)
    p1 = p1.reshape(n * 160, 432)

    out = _build_fused_call(n)(
        p1, kp["c1_w"], kp["c1_b"], kp["c2_w"], kp["c2_b"],
        kp["c3_w"], kp["c3_b"], kp["l1_w"], kp["l1_b"],
        kp["lh_w"], kp["lh_b"])
    return out[:, :4], out[:, 4:5]


# ----------------------------------------------------------------------------
# Pure-JAX f32 reference for correctness check
# ----------------------------------------------------------------------------
def a3c_forward_ref(params, x):
    def conv(x, w, b, s):
        y = jax.lax.conv_general_dilated(
            x, w, window_strides=(s, s), padding="VALID",
            dimension_numbers=("NCHW", "OIHW", "NCHW"))
        y = y + b[None, :, None, None]
        return jnp.where(y > 0, y, 0.01 * y)

    h = conv(x, params["conv1_w"], params["conv1_b"], 4)
    h = conv(h, params["conv2_w"], params["conv2_b"], 2)
    h = conv(h, params["conv3_w"], params["conv3_b"], 1)
    h = h.reshape(-1, 2304)
    h = h @ params["l1_w"].T + params["l1_b"]
    h = jnp.where(h > 0, h, 0.01 * h)
    pi = h @ params["lpi_w"].T + params["lpi_b"]
    v = h @ params["lv_w"].T + params["lv_b"]
    return pi, v


if __name__ == "__main__":
    key = jax.random.PRNGKey(0)
    kx, kp = jax.random.split(key)

    # 80x80 input -> conv stack yields 64 x 6 x 6 = 2304 features, matching
    # the hard-coded h.view(-1, 2304) in the PyTorch module.
    x = jax.random.normal(kx, (2, 3, 80, 80), jnp.float32)
    params = init_params(kp)
    kparams = preprocess_params(params)       # one-time weight preprocessing

    fwd = jax.jit(a3c_forward)
    pi, v = fwd(kparams, x)
    jax.block_until_ready((pi, v))

    assert pi.shape == (2, 4) and v.shape == (2, 1)

    pi_ref, v_ref = a3c_forward_ref(params, x)
    scale = float(jnp.max(jnp.abs(pi_ref))) + 1.0
    err_pi = float(jnp.max(jnp.abs(pi - pi_ref)))
    err_v = float(jnp.max(jnp.abs(v - v_ref)))
    # bf16 matmul operands / f32 accumulation: allow ~2.5% of output scale.
    assert err_pi < 2.5e-2 * scale and err_v < 2.5e-2 * scale, (err_pi, err_v)

    print("KERNEL_OK")
</pallas_src>

<mosaic_0001>
module attributes {stable_mosaic.version = 11 : i64} {
  func.func @_fused_kernel(%arg0: memref<320x432xbf16, #tpu.memory_space<vmem>>, %arg1: memref<432x128xbf16, #tpu.memory_space<vmem>>, %arg2: memref<1x128xf32, #tpu.memory_space<vmem>>, %arg3: memref<512x64xbf16, #tpu.memory_space<vmem>>, %arg4: memref<1x64xf32, #tpu.memory_space<vmem>>, %arg5: memref<576x64xbf16, #tpu.memory_space<vmem>>, %arg6: memref<1x64xf32, #tpu.memory_space<vmem>>, %arg7: memref<2304x512xbf16, #tpu.memory_space<any>>, %arg8: memref<1x512xf32, #tpu.memory_space<vmem>>, %arg9: memref<512x128xbf16, #tpu.memory_space<vmem>>, %arg10: memref<1x128xf32, #tpu.memory_space<vmem>>, %arg11: memref<2x128xf32, #tpu.memory_space<vmem>>, %arg12: memref<2304x512xbf16, #tpu.memory_space<vmem>>, %arg13: memref<!tpu.dma_semaphore, #tpu.memory_space<semaphore_mem>>, %arg14: memref<20x16x128xf32, #tpu.memory_space<vmem>>, %arg15: memref<20x16x64xf32, #tpu.memory_space<vmem>>, %arg16: memref<128x576xbf16, #tpu.memory_space<vmem>>, %arg17: memref<128x64xf32, #tpu.memory_space<vmem>>, %arg18: memref<2x2304xf32, #tpu.memory_space<vmem>>) attributes {dimension_semantics = [], scalar_prefetch = 0 : i64, scratch_operands = 7 : i64, tpu.core_type = #tpu.core_type<tc>} {
    tpu.enqueue_dma source(%arg7 : memref<2304x512xbf16, #tpu.memory_space<any>>) target(%arg12 : memref<2304x512xbf16, #tpu.memory_space<vmem>>) target_semaphore(%arg13 : memref<!tpu.dma_semaphore, #tpu.memory_space<semaphore_mem>>)
    %c0 = arith.constant 0 : index
    %c0_0 = arith.constant 0 : index
    %0 = vector.load %arg0[%c0, %c0_0] : memref<320x432xbf16, #tpu.memory_space<vmem>>, vector<320x432xbf16>
    %c0_1 = arith.constant 0 : index
    %c0_2 = arith.constant 0 : index
    %1 = vector.load %arg1[%c0_1, %c0_2] : memref<432x128xbf16, #tpu.memory_space<vmem>>, vector<432x128xbf16>
    %cst = arith.constant dense<0.000000e+00> : vector<320x128xf32>
    %2 = tpu.matmul %0, %1, %cst {dimension_numbers = #tpu.dot_dimension_numbers<[1], [0], [0], [1], [0, 0, 1, 1], [], []>} : vector<320x432xbf16>, vector<432x128xbf16>, vector<320x128xf32> -> vector<320x128xf32>
    %c0_3 = arith.constant 0 : index
    %c0_4 = arith.constant 0 : index
    %3 = vector.load %arg2[%c0_3, %c0_4] : memref<1x128xf32, #tpu.memory_space<vmem>>, vector<1x128xf32>
    %4 = vector.broadcast %3 : vector<1x128xf32> to vector<320x128xf32>
    %5 = arith.addf %2, %4 : vector<320x128xf32>
    %cst_5 = arith.constant 0.000000e+00 : f32
    %6 = vector.broadcast %cst_5 : f32 to vector<320x128xf32>
    %7 = arith.cmpf ogt, %5, %6 : vector<320x128xf32>
    %cst_6 = arith.constant 0.00999999977 : f32
    %8 = vector.broadcast %cst_6 : f32 to vector<320x128xf32>
    %9 = arith.mulf %8, %5 : vector<320x128xf32>
    %10 = arith.select %7, %5, %9 : vector<320x128xi1>, vector<320x128xf32>
    %11 = vector.shape_cast %10 : vector<320x128xf32> to vector<20x16x128xf32>
    %c0_7 = arith.constant 0 : index
    %c0_8 = arith.constant 0 : index
    %c0_9 = arith.constant 0 : index
    %12 = vector.load %arg14[%c0_7, %c0_8, %c0_9] : memref<20x16x128xf32, #tpu.memory_space<vmem>>, vector<20x16x128xf32>
    tpu.vector_store %arg14[%c0_7, %c0_8, %c0_9], %11 {strides = array<i32>} : memref<20x16x128xf32, #tpu.memory_space<vmem>>, vector<20x16x128xf32>,
    %cst_10 = arith.constant 0.000000e+00 : f32
    %13 = vector.broadcast %cst_10 : f32 to vector<128x64xf32>
    %c0_11 = arith.constant 0 : index
    %c0_12 = arith.constant 0 : index
    %c0_13 = arith.constant 0 : index
    %14 = vector.load %arg14[%c0_11, %c0_12, %c0_13] : memref<20x16x128xf32, #tpu.memory_space<vmem>>, vector<8x8x128xf32>
    %15 = vector.shape_cast %14 : vector<8x8x128xf32> to vector<64x128xf32>
    %c10 = arith.constant 10 : index
    %c0_14 = arith.constant 0 : index
    %c0_15 = arith.constant 0 : index
    %16 = vector.load %arg14[%c10, %c0_14, %c0_15] : memref<20x16x128xf32, #tpu.memory_space<vmem>>, vector<8x8x128xf32>
    %17 = vector.shape_cast %16 : vector<8x8x128xf32> to vector<64x128xf32>
    %18 = tpu.concatenate %15, %17 in 0 : vector<64x128xf32>, vector<64x128xf32> -> vector<128x128xf32>
    %19 = arith.truncf %18 : vector<128x128xf32> to vector<128x128xbf16>
    %c0_16 = arith.constant 0 : index
    %c0_17 = arith.constant 0 : index
    %20 = vector.load %arg3[%c0_16, %c0_17] : memref<512x64xbf16, #tpu.memory_space<vmem>>, vector<128x64xbf16>
    %cst_18 = arith.constant dense<0.000000e+00> : vector<128x64xf32>
    %21 = tpu.matmul %19, %20, %cst_18 {dimension_numbers = #tpu.dot_dimension_numbers<[1], [0], [0], [1], [0, 0, 1, 1], [], []>} : vector<128x128xbf16>, vector<128x64xbf16>, vector<128x64xf32> -> vector<128x64xf32>
    %22 = arith.addf %13, %21 : vector<128x64xf32>
    %c0_19 = arith.constant 0 : index
    %c1 = arith.constant 1 : index
    %c0_20 = arith.constant 0 : index
    %23 = vector.load %arg14[%c0_19, %c1, %c0_20] : memref<20x16x128xf32, #tpu.memory_space<vmem>>, vector<8x8x128xf32>
    %24 = vector.shape_cast %23 : vector<8x8x128xf32> to vector<64x128xf32>
    %c10_21 = arith.constant 10 : index
    %c1_22 = arith.constant 1 : index
    %c0_23 = arith.constant 0 : index
    %25 = vector.load %arg14[%c10_21, %c1_22, %c0_23] : memref<20x16x128xf32, #tpu.memory_space<vmem>>, vector<8x8x128xf32>
    %26 = vector.shape_cast %25 : vector<8x8x128xf32> to vector<64x128xf32>
    %27 = tpu.concatenate %24, %26 in 0 : vector<64x128xf32>, vector<64x128xf32> -> vector<128x128xf32>
    %28 = arith.truncf %27 : vector<128x128xf32> to vector<128x128xbf16>
    %c128 = arith.constant 128 : index
    %c0_24 = arith.constant 0 : index
    %29 = vector.load %arg3[%c128, %c0_24] : memref<512x64xbf16, #tpu.memory_space<vmem>>, vector<128x64xbf16>
    %cst_25 = arith.constant dense<0.000000e+00> : vector<128x64xf32>
    %30 = tpu.matmul %28, %29, %cst_25 {dimension_numbers = #tpu.dot_dimension_numbers<[1], [0], [0], [1], [0, 0, 1, 1], [], []>} : vector<128x128xbf16>, vector<128x64xbf16>, vector<128x64xf32> -> vector<128x64xf32>
    %31 = arith.addf %22, %30 : vector<128x64xf32>
    %c1_26 = arith.constant 1 : index
    %c0_27 = arith.constant 0 : index
    %c0_28 = arith.constant 0 : index
    %32 = vector.load %arg14[%c1_26, %c0_27, %c0_28] : memref<20x16x128xf32, #tpu.memory_space<vmem>>, vector<8x8x128xf32>
    %33 = vector.shape_cast %32 : vector<8x8x128xf32> to vector<64x128xf32>
    %c11 = arith.constant 11 : index
    %c0_29 = arith.constant 0 : index
    %c0_30 = arith.constant 0 : index
    %34 = vector.load %arg14[%c11, %c0_29, %c0_30] : memref<20x16x128xf32, #tpu.memory_space<vmem>>, vector<8x8x128xf32>
    %35 = vector.shape_cast %34 : vector<8x8x128xf32> to vector<64x128xf32>
    %36 = tpu.concatenate %33, %35 in 0 : vector<64x128xf32>, vector<64x128xf32> -> vector<128x128xf32>
    %37 = arith.truncf %36 : vector<128x128xf32> to vector<128x128xbf16>
    %c256 = arith.constant 256 : index
    %c0_31 = arith.constant 0 : index
    %38 = vector.load %arg3[%c256, %c0_31] : memref<512x64xbf16, #tpu.memory_space<vmem>>, vector<128x64xbf16>
    %cst_32 = arith.constant dense<0.000000e+00> : vector<128x64xf32>
    %39 = tpu.matmul %37, %38, %cst_32 {dimension_numbers = #tpu.dot_dimension_numbers<[1], [0], [0], [1], [0, 0, 1, 1], [], []>} : vector<128x128xbf16>, vector<128x64xbf16>, vector<128x64xf32> -> vector<128x64xf32>
    %40 = arith.addf %31, %39 : vector<128x64xf32>
    %c1_33 = arith.constant 1 : index
    %c1_34 = arith.constant 1 : index
    %c0_35 = arith.constant 0 : index
    %41 = vector.load %arg14[%c1_33, %c1_34, %c0_35] : memref<20x16x128xf32, #tpu.memory_space<vmem>>, vector<8x8x128xf32>
    %42 = vector.shape_cast %41 : vector<8x8x128xf32> to vector<64x128xf32>
    %c11_36 = arith.constant 11 : index
    %c1_37 = arith.constant 1 : index
    %c0_38 = arith.constant 0 : index
    %43 = vector.load %arg14[%c11_36, %c1_37, %c0_38] : memref<20x16x128xf32, #tpu.memory_space<vmem>>, vector<8x8x128xf32>
    %44 = vector.shape_cast %43 : vector<8x8x128xf32> to vector<64x128xf32>
    %45 = tpu.concatenate %42, %44 in 0 : vector<64x128xf32>, vector<64x128xf32> -> vector<128x128xf32>
    %46 = arith.truncf %45 : vector<128x128xf32> to vector<128x128xbf16>
    %c384 = arith.constant 384 : index
    %c0_39 = arith.constant 0 : index
    %47 = vector.load %arg3[%c384, %c0_39] : memref<512x64xbf16, #tpu.memory_space<vmem>>, vector<128x64xbf16>
    %cst_40 = arith.constant dense<0.000000e+00> : vector<128x64xf32>
    %48 = tpu.matmul %46, %47, %cst_40 {dimension_numbers = #tpu.dot_dimension_numbers<[1], [0], [0], [1], [0, 0, 1, 1], [], []>} : vector<128x128xbf16>, vector<128x64xbf16>, vector<128x64xf32> -> vector<128x64xf32>
    %49 = arith.addf %40, %48 : vector<128x64xf32>
    %c0_41 = arith.constant 0 : index
    %c0_42 = arith.constant 0 : index
    %50 = vector.load %arg4[%c0_41, %c0_42] : memref<1x64xf32, #tpu.memory_space<vmem>>, vector<1x64xf32>
    %51 = vector.broadcast %50 : vector<1x64xf32> to vector<128x64xf32>
    %52 = arith.addf %49, %51 : vector<128x64xf32>
    %cst_43 = arith.constant 0.000000e+00 : f32
    %53 = vector.broadcast %cst_43 : f32 to vector<128x64xf32>
    %54 = arith.cmpf ogt, %52, %53 : vector<128x64xf32>
    %cst_44 = arith.constant 0.00999999977 : f32
    %55 = vector.broadcast %cst_44 : f32 to vector<128x64xf32>
    %56 = arith.mulf %55, %52 : vector<128x64xf32>
    %57 = arith.select %54, %52, %56 : vector<128x64xi1>, vector<128x64xf32>
    %cst_45 = arith.constant 0.000000e+00 : f32
    %58 = vector.broadcast %cst_45 : f32 to vector<20x16x64xf32>
    %c0_46 = arith.constant 0 : index
    %c0_47 = arith.constant 0 : index
    %c0_48 = arith.constant 0 : index
    %59 = vector.load %arg15[%c0_46, %c0_47, %c0_48] : memref<20x16x64xf32, #tpu.memory_space<vmem>>, vector<20x16x64xf32>
    tpu.vector_store %arg15[%c0_46, %c0_47, %c0_48], %58 {strides = array<i32>} : memref<20x16x64xf32, #tpu.memory_space<vmem>>, vector<20x16x64xf32>,
    %60 = vector.extract_strided_slice %57 {offsets = [0, 0], sizes = [64, 64], strides = [1, 1]} : vector<128x64xf32> to vector<64x64xf32>
    %61 = vector.shape_cast %60 : vector<64x64xf32> to vector<8x8x64xf32>
    %c0_49 = arith.constant 0 : index
    %c0_50 = arith.constant 0 : index
    %c0_51 = arith.constant 0 : index
    %62 = vector.load %arg15[%c0_49, %c0_50, %c0_51] : memref<20x16x64xf32, #tpu.memory_space<vmem>>, vector<8x8x64xf32>
    tpu.vector_store %arg15[%c0_49, %c0_50, %c0_51], %61 {strides = array<i32>} : memref<20x16x64xf32, #tpu.memory_space<vmem>>, vector<8x8x64xf32>,
    %63 = vector.extract_strided_slice %57 {offsets = [64, 0], sizes = [64, 64], strides = [1, 1]} : vector<128x64xf32> to vector<64x64xf32>
    %64 = vector.shape_cast %63 : vector<64x64xf32> to vector<8x8x64xf32>
    %c10_52 = arith.constant 10 : index
    %c0_53 = arith.constant 0 : index
    %c0_54 = arith.constant 0 : index
    %65 = vector.load %arg15[%c10_52, %c0_53, %c0_54] : memref<20x16x64xf32, #tpu.memory_space<vmem>>, vector<8x8x64xf32>
    tpu.vector_store %arg15[%c10_52, %c0_53, %c0_54], %64 {strides = array<i32>} : memref<20x16x64xf32, #tpu.memory_space<vmem>>, vector<8x8x64xf32>,
    %c0_55 = arith.constant 0 : index
    %c0_56 = arith.constant 0 : index
    %c0_57 = arith.constant 0 : index
    %66 = vector.load %arg15[%c0_55, %c0_56, %c0_57] : memref<20x16x64xf32, #tpu.memory_space<vmem>>, vector<8x8x64xf32>
    %67 = vector.shape_cast %66 : vector<8x8x64xf32> to vector<64x64xf32>
    %68 = arith.truncf %67 : vector<64x64xf32> to vector<64x64xbf16>
    %c0_58 = arith.constant 0 : index
    %c0_59 = arith.constant 0 : index
    %69 = vector.load %arg16[%c0_58, %c0_59] : memref<128x576xbf16, #tpu.memory_space<vmem>>, vector<64x64xbf16>
    tpu.vector_store %arg16[%c0_58, %c0_59], %68 {strides = array<i32>} : memref<128x576xbf16, #tpu.memory_space<vmem>>, vector<64x64xbf16>,
    %c0_60 = arith.constant 0 : index
    %c1_61 = arith.constant 1 : index
    %c0_62 = arith.constant 0 : index
    %70 = vector.load %arg15[%c0_60, %c1_61, %c0_62] : memref<20x16x64xf32, #tpu.memory_space<vmem>>, vector<8x8x64xf32>
    %71 = vector.shape_cast %70 : vector<8x8x64xf32> to vector<64x64xf32>
    %72 = arith.truncf %71 : vector<64x64xf32> to vector<64x64xbf16>
    %c0_63 = arith.constant 0 : index
    %c64 = arith.constant 64 : index
    %73 = vector.load %arg16[%c0_63, %c64] : memref<128x576xbf16, #tpu.memory_space<vmem>>, vector<64x64xbf16>
    tpu.vector_store %arg16[%c0_63, %c64], %72 {strides = array<i32>} : memref<128x576xbf16, #tpu.memory_space<vmem>>, vector<64x64xbf16>,
    %c0_64 = arith.constant 0 : index
    %c2 = arith.constant 2 : index
    %c0_65 = arith.constant 0 : index
    %74 = vector.load %arg15[%c0_64, %c2, %c0_65] : memref<20x16x64xf32, #tpu.memory_space<vmem>>, vector<8x8x64xf32>
    %75 = vector.shape_cast %74 : vector<8x8x64xf32> to vector<64x64xf32>
    %76 = arith.truncf %75 : vector<64x64xf32> to vector<64x64xbf16>
    %c0_66 = arith.constant 0 : index
    %c128_67 = arith.constant 128 : index
    %77 = vector.load %arg16[%c0_66, %c128_67] : memref<128x576xbf16, #tpu.memory_space<vmem>>, vector<64x64xbf16>
    tpu.vector_store %arg16[%c0_66, %c128_67], %76 {strides = array<i32>} : memref<128x576xbf16, #tpu.memory_space<vmem>>, vector<64x64xbf16>,
    %c1_68 = arith.constant 1 : index
    %c0_69 = arith.constant 0 : index
    %c0_70 = arith.constant 0 : index
    %78 = vector.load %arg15[%c1_68, %c0_69, %c0_70] : memref<20x16x64xf32, #tpu.memory_space<vmem>>, vector<8x8x64xf32>
    %79 = vector.shape_cast %78 : vector<8x8x64xf32> to vector<64x64xf32>
    %80 = arith.truncf %79 : vector<64x64xf32> to vector<64x64xbf16>
    %c0_71 = arith.constant 0 : index
    %c192 = arith.constant 192 : index
    %81 = vector.load %arg16[%c0_71, %c192] : memref<128x576xbf16, #tpu.memory_space<vmem>>, vector<64x64xbf16>
    tpu.vector_store %arg16[%c0_71, %c192], %80 {strides = array<i32>} : memref<128x576xbf16, #tpu.memory_space<vmem>>, vector<64x64xbf16>,
    %c1_72 = arith.constant 1 : index
    %c1_73 = arith.constant 1 : index
    %c0_74 = arith.constant 0 : index
    %82 = vector.load %arg15[%c1_72, %c1_73, %c0_74] : memref<20x16x64xf32, #tpu.memory_space<vmem>>, vector<8x8x64xf32>
    %83 = vector.shape_cast %82 : vector<8x8x64xf32> to vector<64x64xf32>
    %84 = arith.truncf %83 : vector<64x64xf32> to vector<64x64xbf16>
    %c0_75 = arith.constant 0 : index
    %c256_76 = arith.constant 256 : index
    %85 = vector.load %arg16[%c0_75, %c256_76] : memref<128x576xbf16, #tpu.memory_space<vmem>>, vector<64x64xbf16>
    tpu.vector_store %arg16[%c0_75, %c256_76], %84 {strides = array<i32>} : memref<128x576xbf16, #tpu.memory_space<vmem>>, vector<64x64xbf16>,
    %c1_77 = arith.constant 1 : index
    %c2_78 = arith.constant 2 : index
    %c0_79 = arith.constant 0 : index
    %86 = vector.load %arg15[%c1_77, %c2_78, %c0_79] : memref<20x16x64xf32, #tpu.memory_space<vmem>>, vector<8x8x64xf32>
    %87 = vector.shape_cast %86 : vector<8x8x64xf32> to vector<64x64xf32>
    %88 = arith.truncf %87 : vector<64x64xf32> to vector<64x64xbf16>
    %c0_80 = arith.constant 0 : index
    %c320 = arith.constant 320 : index
    %89 = vector.load %arg16[%c0_80, %c320] : memref<128x576xbf16, #tpu.memory_space<vmem>>, vector<64x64xbf16>
    tpu.vector_store %arg16[%c0_80, %c320], %88 {strides = array<i32>} : memref<128x576xbf16, #tpu.memory_space<vmem>>, vector<64x64xbf16>,
    %c2_81 = arith.constant 2 : index
    %c0_82 = arith.constant 0 : index
    %c0_83 = arith.constant 0 : index
    %90 = vector.load %arg15[%c2_81, %c0_82, %c0_83] : memref<20x16x64xf32, #tpu.memory_space<vmem>>, vector<8x8x64xf32>
    %91 = vector.shape_cast %90 : vector<8x8x64xf32> to vector<64x64xf32>
    %92 = arith.truncf %91 : vector<64x64xf32> to vector<64x64xbf16>
    %c0_84 = arith.constant 0 : index
    %c384_85 = arith.constant 384 : index
    %93 = vector.load %arg16[%c0_84, %c384_85] : memref<128x576xbf16, #tpu.memory_space<vmem>>, vector<64x64xbf16>
    tpu.vector_store %arg16[%c0_84, %c384_85], %92 {strides = array<i32>} : memref<128x576xbf16, #tpu.memory_space<vmem>>, vector<64x64xbf16>,
    %c2_86 = arith.constant 2 : index
    %c1_87 = arith.constant 1 : index
    %c0_88 = arith.constant 0 : index
    %94 = vector.load %arg15[%c2_86, %c1_87, %c0_88] : memref<20x16x64xf32, #tpu.memory_space<vmem>>, vector<8x8x64xf32>
    %95 = vector.shape_cast %94 : vector<8x8x64xf32> to vector<64x64xf32>
    %96 = arith.truncf %95 : vector<64x64xf32> to vector<64x64xbf16>
    %c0_89 = arith.constant 0 : index
    %c448 = arith.constant 448 : index
    %97 = vector.load %arg16[%c0_89, %c448] : memref<128x576xbf16, #tpu.memory_space<vmem>>, vector<64x64xbf16>
    tpu.vector_store %arg16[%c0_89, %c448], %96 {strides = array<i32>} : memref<128x576xbf16, #tpu.memory_space<vmem>>, vector<64x64xbf16>,
    %c2_90 = arith.constant 2 : index
    %c2_91 = arith.constant 2 : index
    %c0_92 = arith.constant 0 : index
    %98 = vector.load %arg15[%c2_90, %c2_91, %c0_92] : memref<20x16x64xf32, #tpu.memory_space<vmem>>, vector<8x8x64xf32>
    %99 = vector.shape_cast %98 : vector<8x8x64xf32> to vector<64x64xf32>
    %100 = arith.truncf %99 : vector<64x64xf32> to vector<64x64xbf16>
    %c0_93 = arith.constant 0 : index
    %c512 = arith.constant 512 : index
    %101 = vector.load %arg16[%c0_93, %c512] : memref<128x576xbf16, #tpu.memory_space<vmem>>, vector<64x64xbf16>
    tpu.vector_store %arg16[%c0_93, %c512], %100 {strides = array<i32>} : memref<128x576xbf16, #tpu.memory_space<vmem>>, vector<64x64xbf16>,
    %c10_94 = arith.constant 10 : index
    %c0_95 = arith.constant 0 : index
    %c0_96 = arith.constant 0 : index
    %102 = vector.load %arg15[%c10_94, %c0_95, %c0_96] : memref<20x16x64xf32, #tpu.memory_space<vmem>>, vector<8x8x64xf32>
    %103 = vector.shape_cast %102 : vector<8x8x64xf32> to vector<64x64xf32>
    %104 = arith.truncf %103 : vector<64x64xf32> to vector<64x64xbf16>
    %c64_97 = arith.constant 64 : index
    %c0_98 = arith.constant 0 : index
    %105 = vector.load %arg16[%c64_97, %c0_98] : memref<128x576xbf16, #tpu.memory_space<vmem>>, vector<64x64xbf16>
    tpu.vector_store %arg16[%c64_97, %c0_98], %104 {strides = array<i32>} : memref<128x576xbf16, #tpu.memory_space<vmem>>, vector<64x64xbf16>,
    %c10_99 = arith.constant 10 : index
    %c1_100 = arith.constant 1 : index
    %c0_101 = arith.constant 0 : index
    %106 = vector.load %arg15[%c10_99, %c1_100, %c0_101] : memref<20x16x64xf32, #tpu.memory_space<vmem>>, vector<8x8x64xf32>
    %107 = vector.shape_cast %106 : vector<8x8x64xf32> to vector<64x64xf32>
    %108 = arith.truncf %107 : vector<64x64xf32> to vector<64x64xbf16>
    %c64_102 = arith.constant 64 : index
    %c64_103 = arith.constant 64 : index
    %109 = vector.load %arg16[%c64_102, %c64_103] : memref<128x576xbf16, #tpu.memory_space<vmem>>, vector<64x64xbf16>
    tpu.vector_store %arg16[%c64_102, %c64_103], %108 {strides = array<i32>} : memref<128x576xbf16, #tpu.memory_space<vmem>>, vector<64x64xbf16>,
    %c10_104 = arith.constant 10 : index
    %c2_105 = arith.constant 2 : index
    %c0_106 = arith.constant 0 : index
    %110 = vector.load %arg15[%c10_104, %c2_105, %c0_106] : memref<20x16x64xf32, #tpu.memory_space<vmem>>, vector<8x8x64xf32>
    %111 = vector.shape_cast %110 : vector<8x8x64xf32> to vector<64x64xf32>
    %112 = arith.truncf %111 : vector<64x64xf32> to vector<64x64xbf16>
    %c64_107 = arith.constant 64 : index
    %c128_108 = arith.constant 128 : index
    %113 = vector.load %arg16[%c64_107, %c128_108] : memref<128x576xbf16, #tpu.memory_space<vmem>>, vector<64x64xbf16>
    tpu.vector_store %arg16[%c64_107, %c128_108], %112 {strides = array<i32>} : memref<128x576xbf16, #tpu.memory_space<vmem>>, vector<64x64xbf16>,
    %c11_109 = arith.constant 11 : index
    %c0_110 = arith.constant 0 : index
    %c0_111 = arith.constant 0 : index
    %114 = vector.load %arg15[%c11_109, %c0_110, %c0_111] : memref<20x16x64xf32, #tpu.memory_space<vmem>>, vector<8x8x64xf32>
    %115 = vector.shape_cast %114 : vector<8x8x64xf32> to vector<64x64xf32>
    %116 = arith.truncf %115 : vector<64x64xf32> to vector<64x64xbf16>
    %c64_112 = arith.constant 64 : index
    %c192_113 = arith.constant 192 : index
    %117 = vector.load %arg16[%c64_112, %c192_113] : memref<128x576xbf16, #tpu.memory_space<vmem>>, vector<64x64xbf16>
    tpu.vector_store %arg16[%c64_112, %c192_113], %116 {strides = array<i32>} : memref<128x576xbf16, #tpu.memory_space<vmem>>, vector<64x64xbf16>,
    %c11_114 = arith.constant 11 : index
    %c1_115 = arith.constant 1 : index
    %c0_116 = arith.constant 0 : index
    %118 = vector.load %arg15[%c11_114, %c1_115, %c0_116] : memref<20x16x64xf32, #tpu.memory_space<vmem>>, vector<8x8x64xf32>
    %119 = vector.shape_cast %118 : vector<8x8x64xf32> to vector<64x64xf32>
    %120 = arith.truncf %119 : vector<64x64xf32> to vector<64x64xbf16>
    %c64_117 = arith.constant 64 : index
    %c256_118 = arith.constant 256 : index
    %121 = vector.load %arg16[%c64_117, %c256_118] : memref<128x576xbf16, #tpu.memory_space<vmem>>, vector<64x64xbf16>
    tpu.vector_store %arg16[%c64_117, %c256_118], %120 {strides = array<i32>} : memref<128x576xbf16, #tpu.memory_space<vmem>>, vector<64x64xbf16>,
    %c11_119 = arith.constant 11 : index
    %c2_120 = arith.constant 2 : index
    %c0_121 = arith.constant 0 : index
    %122 = vector.load %arg15[%c11_119, %c2_120, %c0_121] : memref<20x16x64xf32, #tpu.memory_space<vmem>>, vector<8x8x64xf32>
    %123 = vector.shape_cast %122 : vector<8x8x64xf32> to vector<64x64xf32>
    %124 = arith.truncf %123 : vector<64x64xf32> to vector<64x64xbf16>
    %c64_122 = arith.constant 64 : index
    %c320_123 = arith.constant 320 : index
    %125 = vector.load %arg16[%c64_122, %c320_123] : memref<128x576xbf16, #tpu.memory_space<vmem>>, vector<64x64xbf16>
    tpu.vector_store %arg16[%c64_122, %c320_123], %124 {strides = array<i32>} : memref<128x576xbf16, #tpu.memory_space<vmem>>, vector<64x64xbf16>,
    %c12 = arith.constant 12 : index
    %c0_124 = arith.constant 0 : index
    %c0_125 = arith.constant 0 : index
    %126 = vector.load %arg15[%c12, %c0_124, %c0_125] : memref<20x16x64xf32, #tpu.memory_space<vmem>>, vector<8x8x64xf32>
    %127 = vector.shape_cast %126 : vector<8x8x64xf32> to vector<64x64xf32>
    %128 = arith.truncf %127 : vector<64x64xf32> to vector<64x64xbf16>
    %c64_126 = arith.constant 64 : index
    %c384_127 = arith.constant 384 : index
    %129 = vector.load %arg16[%c64_126, %c384_127] : memref<128x576xbf16, #tpu.memory_space<vmem>>, vector<64x64xbf16>
    tpu.vector_store %arg16[%c64_126, %c384_127], %128 {strides = array<i32>} : memref<128x576xbf16, #tpu.memory_space<vmem>>, vector<64x64xbf16>,
    %c12_128 = arith.constant 12 : index
    %c1_129 = arith.constant 1 : index
    %c0_130 = arith.constant 0 : index
    %130 = vector.load %arg15[%c12_128, %c1_129, %c0_130] : memref<20x16x64xf32, #tpu.memory_space<vmem>>, vector<8x8x64xf32>
    %131 = vector.shape_cast %130 : vector<8x8x64xf32> to vector<64x64xf32>
    %132 = arith.truncf %131 : vector<64x64xf32> to vector<64x64xbf16>
    %c64_131 = arith.constant 64 : index
    %c448_132 = arith.constant 448 : index
    %133 = vector.load %arg16[%c64_131, %c448_132] : memref<128x576xbf16, #tpu.memory_space<vmem>>, vector<64x64xbf16>
    tpu.vector_store %arg16[%c64_131, %c448_132], %132 {strides = array<i32>} : memref<128x576xbf16, #tpu.memory_space<vmem>>, vector<64x64xbf16>,
    %c12_133 = arith.constant 12 : index
    %c2_134 = arith.constant 2 : index
    %c0_135 = arith.constant 0 : index
    %134 = vector.load %arg15[%c12_133, %c2_134, %c0_135] : memref<20x16x64xf32, #tpu.memory_space<vmem>>, vector<8x8x64xf32>
    %135 = vector.shape_cast %134 : vector<8x8x64xf32> to vector<64x64xf32>
    %136 = arith.truncf %135 : vector<64x64xf32> to vector<64x64xbf16>
    %c64_136 = arith.constant 64 : index
    %c512_137 = arith.constant 512 : index
    %137 = vector.load %arg16[%c64_136, %c512_137] : memref<128x576xbf16, #tpu.memory_space<vmem>>, vector<64x64xbf16>
    tpu.vector_store %arg16[%c64_136, %c512_137], %136 {strides = array<i32>} : memref<128x576xbf16, #tpu.memory_space<vmem>>, vector<64x64xbf16>,
    %c0_138 = arith.constant 0 : index
    %c0_139 = arith.constant 0 : index
    %138 = vector.load %arg16[%c0_138, %c0_139] : memref<128x576xbf16, #tpu.memory_space<vmem>>, vector<128x576xbf16>
    %c0_140 = arith.constant 0 : index
    %c0_141 = arith.constant 0 : index
    %139 = vector.load %arg5[%c0_140, %c0_141] : memref<576x64xbf16, #tpu.memory_space<vmem>>, vector<576x64xbf16>
    %cst_142 = arith.constant dense<0.000000e+00> : vector<128x64xf32>
    %140 = tpu.matmul %138, %139, %cst_142 {dimension_numbers = #tpu.dot_dimension_numbers<[1], [0], [0], [1], [0, 0, 1, 1], [], []>} : vector<128x576xbf16>, vector<576x64xbf16>, vector<128x64xf32> -> vector<128x64xf32>
    %c0_143 = arith.constant 0 : index
    %c0_144 = arith.constant 0 : index
    %141 = vector.load %arg6[%c0_143, %c0_144] : memref<1x64xf32, #tpu.memory_space<vmem>>, vector<1x64xf32>
    %142 = vector.broadcast %141 : vector<1x64xf32> to vector<128x64xf32>
    %143 = arith.addf %140, %142 : vector<128x64xf32>
    %cst_145 = arith.constant 0.000000e+00 : f32
    %144 = vector.broadcast %cst_145 : f32 to vector<128x64xf32>
    %145 = arith.cmpf ogt, %143, %144 : vector<128x64xf32>
    %cst_146 = arith.constant 0.00999999977 : f32
    %146 = vector.broadcast %cst_146 : f32 to vector<128x64xf32>
    %147 = arith.mulf %146, %143 : vector<128x64xf32>
    %148 = arith.select %145, %143, %147 : vector<128x64xi1>, vector<128x64xf32>
    %c0_147 = arith.constant 0 : index
    %c0_148 = arith.constant 0 : index
    %149 = vector.load %arg17[%c0_147, %c0_148] : memref<128x64xf32, #tpu.memory_space<vmem>>, vector<128x64xf32>
    tpu.vector_store %arg17[%c0_147, %c0_148], %148 {strides = array<i32>} : memref<128x64xf32, #tpu.memory_space<vmem>>, vector<128x64xf32>,
    %c0_149 = arith.constant 0 : index
    %c0_150 = arith.constant 0 : index
    %150 = vector.load %arg17[%c0_149, %c0_150] : memref<128x64xf32, #tpu.memory_space<vmem>>, vector<1x64xf32>
    %c0_151 = arith.constant 0 : index
    %c0_152 = arith.constant 0 : index
    %151 = vector.load %arg18[%c0_151, %c0_152] : memref<2x2304xf32, #tpu.memory_space<vmem>>, vector<1x64xf32>
    tpu.vector_store %arg18[%c0_151, %c0_152], %150 {strides = array<i32>} : memref<2x2304xf32, #tpu.memory_space<vmem>>, vector<1x64xf32>,
    %c1_153 = arith.constant 1 : index
    %c0_154 = arith.constant 0 : index
    %152 = vector.load %arg17[%c1_153, %c0_154] : memref<128x64xf32, #tpu.memory_space<vmem>>, vector<1x64xf32>
    %c0_155 = arith.constant 0 : index
    %c64_156 = arith.constant 64 : index
    %153 = vector.load %arg18[%c0_155, %c64_156] : memref<2x2304xf32, #tpu.memory_space<vmem>>, vector<1x64xf32>
    tpu.vector_store %arg18[%c0_155, %c64_156], %152 {strides = array<i32>} : memref<2x2304xf32, #tpu.memory_space<vmem>>, vector<1x64xf32>,
    %c2_157 = arith.constant 2 : index
    %c0_158 = arith.constant 0 : index
    %154 = vector.load %arg17[%c2_157, %c0_158] : memref<128x64xf32, #tpu.memory_space<vmem>>, vector<1x64xf32>
    %c0_159 = arith.constant 0 : index
    %c128_160 = arith.constant 128 : index
    %155 = vector.load %arg18[%c0_159, %c128_160] : memref<2x2304xf32, #tpu.memory_space<vmem>>, vector<1x64xf32>
    tpu.vector_store %arg18[%c0_159, %c128_160], %154 {strides = array<i32>} : memref<2x2304xf32, #tpu.memory_space<vmem>>, vector<1x64xf32>,
    %c3 = arith.constant 3 : index
    %c0_161 = arith.constant 0 : index
    %156 = vector.load %arg17[%c3, %c0_161] : memref<128x64xf32, #tpu.memory_space<vmem>>, vector<1x64xf32>
    %c0_162 = arith.constant 0 : index
    %c192_163 = arith.constant 192 : index
    %157 = vector.load %arg18[%c0_162, %c192_163] : memref<2x2304xf32, #tpu.memory_space<vmem>>, vector<1x64xf32>
    tpu.vector_store %arg18[%c0_162, %c192_163], %156 {strides = array<i32>} : memref<2x2304xf32, #tpu.memory_space<vmem>>, vector<1x64xf32>,
    %c4 = arith.constant 4 : index
    %c0_164 = arith.constant 0 : index
    %158 = vector.load %arg17[%c4, %c0_164] : memref<128x64xf32, #tpu.memory_space<vmem>>, vector<1x64xf32>
    %c0_165 = arith.constant 0 : index
    %c256_166 = arith.constant 256 : index
    %159 = vector.load %arg18[%c0_165, %c256_166] : memref<2x2304xf32, #tpu.memory_space<vmem>>, vector<1x64xf32>
    tpu.vector_store %arg18[%c0_165, %c256_166], %158 {strides = array<i32>} : memref<2x2304xf32, #tpu.memory_space<vmem>>, vector<1x64xf32>,
    %c5 = arith.constant 5 : index
    %c0_167 = arith.constant 0 : index
    %160 = vector.load %arg17[%c5, %c0_167] : memref<128x64xf32, #tpu.memory_space<vmem>>, vector<1x64xf32>
    %c0_168 = arith.constant 0 : index
    %c320_169 = arith.constant 320 : index
    %161 = vector.load %arg18[%c0_168, %c320_169] : memref<2x2304xf32, #tpu.memory_space<vmem>>, vector<1x64xf32>
    tpu.vector_store %arg18[%c0_168, %c320_169], %160 {strides = array<i32>} : memref<2x2304xf32, #tpu.memory_space<vmem>>, vector<1x64xf32>,
    %c8 = arith.constant 8 : index
    %c0_170 = arith.constant 0 : index
    %162 = vector.load %arg17[%c8, %c0_170] : memref<128x64xf32, #tpu.memory_space<vmem>>, vector<1x64xf32>
    %c0_171 = arith.constant 0 : index
    %c384_172 = arith.constant 384 : index
    %163 = vector.load %arg18[%c0_171, %c384_172] : memref<2x2304xf32, #tpu.memory_space<vmem>>, vector<1x64xf32>
    tpu.vector_store %arg18[%c0_171, %c384_172], %162 {strides = array<i32>} : memref<2x2304xf32, #tpu.memory_space<vmem>>, vector<1x64xf32>,
    %c9 = arith.constant 9 : index
    %c0_173 = arith.constant 0 : index
    %164 = vector.load %arg17[%c9, %c0_173] : memref<128x64xf32, #tpu.memory_space<vmem>>, vector<1x64xf32>
    %c0_174 = arith.constant 0 : index
    %c448_175 = arith.constant 448 : index
    %165 = vector.load %arg18[%c0_174, %c448_175] : memref<2x2304xf32, #tpu.memory_space<vmem>>, vector<1x64xf32>
    tpu.vector_store %arg18[%c0_174, %c448_175], %164 {strides = array<i32>} : memref<2x2304xf32, #tpu.memory_space<vmem>>, vector<1x64xf32>,
    %c10_176 = arith.constant 10 : index
    %c0_177 = arith.constant 0 : index
    %166 = vector.load %arg17[%c10_176, %c0_177] : memref<128x64xf32, #tpu.memory_space<vmem>>, vector<1x64xf32>
    %c0_178 = arith.constant 0 : index
    %c512_179 = arith.constant 512 : index
    %167 = vector.load %arg18[%c0_178, %c512_179] : memref<2x2304xf32, #tpu.memory_space<vmem>>, vector<1x64xf32>
    tpu.vector_store %arg18[%c0_178, %c512_179], %166 {strides = array<i32>} : memref<2x2304xf32, #tpu.memory_space<vmem>>, vector<1x64xf32>,
    %c11_180 = arith.constant 11 : index
    %c0_181 = arith.constant 0 : index
    %168 = vector.load %arg17[%c11_180, %c0_181] : memref<128x64xf32, #tpu.memory_space<vmem>>, vector<1x64xf32>
    %c0_182 = arith.constant 0 : index
    %c576 = arith.constant 576 : index
    %169 = vector.load %arg18[%c0_182, %c576] : memref<2x2304xf32, #tpu.memory_space<vmem>>, vector<1x64xf32>
    tpu.vector_store %arg18[%c0_182, %c576], %168 {strides = array<i32>} : memref<2x2304xf32, #tpu.memory_space<vmem>>, vector<1x64xf32>,
    %c12_183 = arith.constant 12 : index
    %c0_184 = arith.constant 0 : index
    %170 = vector.load %arg17[%c12_183, %c0_184] : memref<128x64xf32, #tpu.memory_space<vmem>>, vector<1x64xf32>
    %c0_185 = arith.constant 0 : index
    %c640 = arith.constant 640 : index
    %171 = vector.load %arg18[%c0_185, %c640] : memref<2x2304xf32, #tpu.memory_space<vmem>>, vector<1x64xf32>
    tpu.vector_store %arg18[%c0_185, %c640], %170 {strides = array<i32>} : memref<2x2304xf32, #tpu.memory_space<vmem>>, vector<1x64xf32>,
    %c13 = arith.constant 13 : index
    %c0_186 = arith.constant 0 : index
    %172 = vector.load %arg17[%c13, %c0_186] : memref<128x64xf32, #tpu.memory_space<vmem>>, vector<1x64xf32>
    %c0_187 = arith.constant 0 : index
    %c704 = arith.constant 704 : index
    %173 = vector.load %arg18[%c0_187, %c704] : memref<2x2304xf32, #tpu.memory_space<vmem>>, vector<1x64xf32>
    tpu.vector_store %arg18[%c0_187, %c704], %172 {strides = array<i32>} : memref<2x2304xf32, #tpu.memory_space<vmem>>, vector<1x64xf32>,
    %c16 = arith.constant 16 : index
    %c0_188 = arith.constant 0 : index
    %174 = vector.load %arg17[%c16, %c0_188] : memref<128x64xf32, #tpu.memory_space<vmem>>, vector<1x64xf32>
    %c0_189 = arith.constant 0 : index
    %c768 = arith.constant 768 : index
    %175 = vector.load %arg18[%c0_189, %c768] : memref<2x2304xf32, #tpu.memory_space<vmem>>, vector<1x64xf32>
    tpu.vector_store %arg18[%c0_189, %c768], %174 {strides = array<i32>} : memref<2x2304xf32, #tpu.memory_space<vmem>>, vector<1x64xf32>,
    %c17 = arith.constant 17 : index
    %c0_190 = arith.constant 0 : index
    %176 = vector.load %arg17[%c17, %c0_190] : memref<128x64xf32, #tpu.memory_space<vmem>>, vector<1x64xf32>
    %c0_191 = arith.constant 0 : index
    %c832 = arith.constant 832 : index
    %177 = vector.load %arg18[%c0_191, %c832] : memref<2x2304xf32, #tpu.memory_space<vmem>>, vector<1x64xf32>
    tpu.vector_store %arg18[%c0_191, %c832], %176 {strides = array<i32>} : memref<2x2304xf32, #tpu.memory_space<vmem>>, vector<1x64xf32>,
    %c18 = arith.constant 18 : index
    %c0_192 = arith.constant 0 : index
    %178 = vector.load %arg17[%c18, %c0_192] : memref<128x64xf32, #tpu.memory_space<vmem>>, vector<1x64xf32>
    %c0_193 = arith.constant 0 : index
    %c896 = arith.constant 896 : index
    %179 = vector.load %arg18[%c0_193, %c896] : memref<2x2304xf32, #tpu.memory_space<vmem>>, vector<1x64xf32>
    tpu.vector_store %arg18[%c0_193, %c896], %178 {strides = array<i32>} : memref<2x2304xf32, #tpu.memory_space<vmem>>, vector<1x64xf32>,
    %c19 = arith.constant 19 : index
    %c0_194 = arith.constant 0 : index
    %180 = vector.load %arg17[%c19, %c0_194] : memref<128x64xf32, #tpu.memory_space<vmem>>, vector<1x64xf32>
    %c0_195 = arith.constant 0 : index
    %c960 = arith.constant 960 : index
    %181 = vector.load %arg18[%c0_195, %c960] : memref<2x2304xf32, #tpu.memory_space<vmem>>, vector<1x64xf32>
    tpu.vector_store %arg18[%c0_195, %c960], %180 {strides = array<i32>} : memref<2x2304xf32, #tpu.memory_space<vmem>>, vector<1x64xf32>,
    %c20 = arith.constant 20 : index
    %c0_196 = arith.constant 0 : index
    %182 = vector.load %arg17[%c20, %c0_196] : memref<128x64xf32, #tpu.memory_space<vmem>>, vector<1x64xf32>
    %c0_197 = arith.constant 0 : index
    %c1024 = arith.constant 1024 : index
    %183 = vector.load %arg18[%c0_197, %c1024] : memref<2x2304xf32, #tpu.memory_space<vmem>>, vector<1x64xf32>
    tpu.vector_store %arg18[%c0_197, %c1024], %182 {strides = array<i32>} : memref<2x2304xf32, #tpu.memory_space<vmem>>, vector<1x64xf32>,
    %c21 = arith.constant 21 : index
    %c0_198 = arith.constant 0 : index
    %184 = vector.load %arg17[%c21, %c0_198] : memref<128x64xf32, #tpu.memory_space<vmem>>, vector<1x64xf32>
    %c0_199 = arith.constant 0 : index
    %c1088 = arith.constant 1088 : index
    %185 = vector.load %arg18[%c0_199, %c1088] : memref<2x2304xf32, #tpu.memory_space<vmem>>, vector<1x64xf32>
    tpu.vector_store %arg18[%c0_199, %c1088], %184 {strides = array<i32>} : memref<2x2304xf32, #tpu.memory_space<vmem>>, vector<1x64xf32>,
    %c24 = arith.constant 24 : index
    %c0_200 = arith.constant 0 : index
    %186 = vector.load %arg17[%c24, %c0_200] : memref<128x64xf32, #tpu.memory_space<vmem>>, vector<1x64xf32>
    %c0_201 = arith.constant 0 : index
    %c1152 = arith.constant 1152 : index
    %187 = vector.load %arg18[%c0_201, %c1152] : memref<2x2304xf32, #tpu.memory_space<vmem>>, vector<1x64xf32>
    tpu.vector_store %arg18[%c0_201, %c1152], %186 {strides = array<i32>} : memref<2x2304xf32, #tpu.memory_space<vmem>>, vector<1x64xf32>,
    %c25 = arith.constant 25 : index
    %c0_202 = arith.constant 0 : index
    %188 = vector.load %arg17[%c25, %c0_202] : memref<128x64xf32, #tpu.memory_space<vmem>>, vector<1x64xf32>
    %c0_203 = arith.constant 0 : index
    %c1216 = arith.constant 1216 : index
    %189 = vector.load %arg18[%c0_203, %c1216] : memref<2x2304xf32, #tpu.memory_space<vmem>>, vector<1x64xf32>
    tpu.vector_store %arg18[%c0_203, %c1216], %188 {strides = array<i32>} : memref<2x2304xf32, #tpu.memory_space<vmem>>, vector<1x64xf32>,
    %c26 = arith.constant 26 : index
    %c0_204 = arith.constant 0 : index
    %190 = vector.load %arg17[%c26, %c0_204] : memref<128x64xf32, #tpu.memory_space<vmem>>, vector<1x64xf32>
    %c0_205 = arith.constant 0 : index
    %c1280 = arith.constant 1280 : index
    %191 = vector.load %arg18[%c0_205, %c1280] : memref<2x2304xf32, #tpu.memory_space<vmem>>, vector<1x64xf32>
    tpu.vector_store %arg18[%c0_205, %c1280], %190 {strides = array<i32>} : memref<2x2304xf32, #tpu.memory_space<vmem>>, vector<1x64xf32>,
    %c27 = arith.constant 27 : index
    %c0_206 = arith.constant 0 : index
    %192 = vector.load %arg17[%c27, %c0_206] : memref<128x64xf32, #tpu.memory_space<vmem>>, vector<1x64xf32>
    %c0_207 = arith.constant 0 : index
    %c1344 = arith.constant 1344 : index
    %193 = vector.load %arg18[%c0_207, %c1344] : memref<2x2304xf32, #tpu.memory_space<vmem>>, vector<1x64xf32>
    tpu.vector_store %arg18[%c0_207, %c1344], %192 {strides = array<i32>} : memref<2x2304xf32, #tpu.memory_space<vmem>>, vector<1x64xf32>,
    %c28 = arith.constant 28 : index
    %c0_208 = arith.constant 0 : index
    %194 = vector.load %arg17[%c28, %c0_208] : memref<128x64xf32, #tpu.memory_space<vmem>>, vector<1x64xf32>
    %c0_209 = arith.constant 0 : index
    %c1408 = arith.constant 1408 : index
    %195 = vector.load %arg18[%c0_209, %c1408] : memref<2x2304xf32, #tpu.memory_space<vmem>>, vector<1x64xf32>
    tpu.vector_store %arg18[%c0_209, %c1408], %194 {strides = array<i32>} : memref<2x2304xf32, #tpu.memory_space<vmem>>, vector<1x64xf32>,
    %c29 = arith.constant 29 : index
    %c0_210 = arith.constant 0 : index
    %196 = vector.load %arg17[%c29, %c0_210] : memref<128x64xf32, #tpu.memory_space<vmem>>, vector<1x64xf32>
    %c0_211 = arith.constant 0 : index
    %c1472 = arith.constant 1472 : index
    %197 = vector.load %arg18[%c0_211, %c1472] : memref<2x2304xf32, #tpu.memory_space<vmem>>, vector<1x64xf32>
    tpu.vector_store %arg18[%c0_211, %c1472], %196 {strides = array<i32>} : memref<2x2304xf32, #tpu.memory_space<vmem>>, vector<1x64xf32>,
    %c32 = arith.constant 32 : index
    %c0_212 = arith.constant 0 : index
    %198 = vector.load %arg17[%c32, %c0_212] : memref<128x64xf32, #tpu.memory_space<vmem>>, vector<1x64xf32>
    %c0_213 = arith.constant 0 : index
    %c1536 = arith.constant 1536 : index
    %199 = vector.load %arg18[%c0_213, %c1536] : memref<2x2304xf32, #tpu.memory_space<vmem>>, vector<1x64xf32>
    tpu.vector_store %arg18[%c0_213, %c1536], %198 {strides = array<i32>} : memref<2x2304xf32, #tpu.memory_space<vmem>>, vector<1x64xf32>,
    %c33 = arith.constant 33 : index
    %c0_214 = arith.constant 0 : index
    %200 = vector.load %arg17[%c33, %c0_214] : memref<128x64xf32, #tpu.memory_space<vmem>>, vector<1x64xf32>
    %c0_215 = arith.constant 0 : index
    %c1600 = arith.constant 1600 : index
    %201 = vector.load %arg18[%c0_215, %c1600] : memref<2x2304xf32, #tpu.memory_space<vmem>>, vector<1x64xf32>
    tpu.vector_store %arg18[%c0_215, %c1600], %200 {strides = array<i32>} : memref<2x2304xf32, #tpu.memory_space<vmem>>, vector<1x64xf32>,
    %c34 = arith.constant 34 : index
    %c0_216 = arith.constant 0 : index
    %202 = vector.load %arg17[%c34, %c0_216] : memref<128x64xf32, #tpu.memory_space<vmem>>, vector<1x64xf32>
    %c0_217 = arith.constant 0 : index
    %c1664 = arith.constant 1664 : index
    %203 = vector.load %arg18[%c0_217, %c1664] : memref<2x2304xf32, #tpu.memory_space<vmem>>, vector<1x64xf32>
    tpu.vector_store %arg18[%c0_217, %c1664], %202 {strides = array<i32>} : memref<2x2304xf32, #tpu.memory_space<vmem>>, vector<1x64xf32>,
    %c35 = arith.constant 35 : index
    %c0_218 = arith.constant 0 : index
    %204 = vector.load %arg17[%c35, %c0_218] : memref<128x64xf32, #tpu.memory_space<vmem>>, vector<1x64xf32>
    %c0_219 = arith.constant 0 : index
    %c1728 = arith.constant 1728 : index
    %205 = vector.load %arg18[%c0_219, %c1728] : memref<2x2304xf32, #tpu.memory_space<vmem>>, vector<1x64xf32>
    tpu.vector_store %arg18[%c0_219, %c1728], %204 {strides = array<i32>} : memref<2x2304xf32, #tpu.memory_space<vmem>>, vector<1x64xf32>,
    %c36 = arith.constant 36 : index
    %c0_220 = arith.constant 0 : index
    %206 = vector.load %arg17[%c36, %c0_220] : memref<128x64xf32, #tpu.memory_space<vmem>>, vector<1x64xf32>
    %c0_221 = arith.constant 0 : index
    %c1792 = arith.constant 1792 : index
    %207 = vector.load %arg18[%c0_221, %c1792] : memref<2x2304xf32, #tpu.memory_space<vmem>>, vector<1x64xf32>
    tpu.vector_store %arg18[%c0_221, %c1792], %206 {strides = array<i32>} : memref<2x2304xf32, #tpu.memory_space<vmem>>, vector<1x64xf32>,
    %c37 = arith.constant 37 : index
    %c0_222 = arith.constant 0 : index
    %208 = vector.load %arg17[%c37, %c0_222] : memref<128x64xf32, #tpu.memory_space<vmem>>, vector<1x64xf32>
    %c0_223 = arith.constant 0 : index
    %c1856 = arith.constant 1856 : index
    %209 = vector.load %arg18[%c0_223, %c1856] : memref<2x2304xf32, #tpu.memory_space<vmem>>, vector<1x64xf32>
    tpu.vector_store %arg18[%c0_223, %c1856], %208 {strides = array<i32>} : memref<2x2304xf32, #tpu.memory_space<vmem>>, vector<1x64xf32>,
    %c40 = arith.constant 40 : index
    %c0_224 = arith.constant 0 : index
    %210 = vector.load %arg17[%c40, %c0_224] : memref<128x64xf32, #tpu.memory_space<vmem>>, vector<1x64xf32>
    %c0_225 = arith.constant 0 : index
    %c1920 = arith.constant 1920 : index
    %211 = vector.load %arg18[%c0_225, %c1920] : memref<2x2304xf32, #tpu.memory_space<vmem>>, vector<1x64xf32>
    tpu.vector_store %arg18[%c0_225, %c1920], %210 {strides = array<i32>} : memref<2x2304xf32, #tpu.memory_space<vmem>>, vector<1x64xf32>,
    %c41 = arith.constant 41 : index
    %c0_226 = arith.constant 0 : index
    %212 = vector.load %arg17[%c41, %c0_226] : memref<128x64xf32, #tpu.memory_space<vmem>>, vector<1x64xf32>
    %c0_227 = arith.constant 0 : index
    %c1984 = arith.constant 1984 : index
    %213 = vector.load %arg18[%c0_227, %c1984] : memref<2x2304xf32, #tpu.memory_space<vmem>>, vector<1x64xf32>
    tpu.vector_store %arg18[%c0_227, %c1984], %212 {strides = array<i32>} : memref<2x2304xf32, #tpu.memory_space<vmem>>, vector<1x64xf32>,
    %c42 = arith.constant 42 : index
    %c0_228 = arith.constant 0 : index
    %214 = vector.load %arg17[%c42, %c0_228] : memref<128x64xf32, #tpu.memory_space<vmem>>, vector<1x64xf32>
    %c0_229 = arith.constant 0 : index
    %c2048 = arith.constant 2048 : index
    %215 = vector.load %arg18[%c0_229, %c2048] : memref<2x2304xf32, #tpu.memory_space<vmem>>, vector<1x64xf32>
    tpu.vector_store %arg18[%c0_229, %c2048], %214 {strides = array<i32>} : memref<2x2304xf32, #tpu.memory_space<vmem>>, vector<1x64xf32>,
    %c43 = arith.constant 43 : index
    %c0_230 = arith.constant 0 : index
    %216 = vector.load %arg17[%c43, %c0_230] : memref<128x64xf32, #tpu.memory_space<vmem>>, vector<1x64xf32>
    %c0_231 = arith.constant 0 : index
    %c2112 = arith.constant 2112 : index
    %217 = vector.load %arg18[%c0_231, %c2112] : memref<2x2304xf32, #tpu.memory_space<vmem>>, vector<1x64xf32>
    tpu.vector_store %arg18[%c0_231, %c2112], %216 {strides = array<i32>} : memref<2x2304xf32, #tpu.memory_space<vmem>>, vector<1x64xf32>,
    %c44 = arith.constant 44 : index
    %c0_232 = arith.constant 0 : index
    %218 = vector.load %arg17[%c44, %c0_232] : memref<128x64xf32, #tpu.memory_space<vmem>>, vector<1x64xf32>
    %c0_233 = arith.constant 0 : index
    %c2176 = arith.constant 2176 : index
    %219 = vector.load %arg18[%c0_233, %c2176] : memref<2x2304xf32, #tpu.memory_space<vmem>>, vector<1x64xf32>
    tpu.vector_store %arg18[%c0_233, %c2176], %218 {strides = array<i32>} : memref<2x2304xf32, #tpu.memory_space<vmem>>, vector<1x64xf32>,
    %c45 = arith.constant 45 : index
    %c0_234 = arith.constant 0 : index
    %220 = vector.load %arg17[%c45, %c0_234] : memref<128x64xf32, #tpu.memory_space<vmem>>, vector<1x64xf32>
    %c0_235 = arith.constant 0 : index
    %c2240 = arith.constant 2240 : index
    %221 = vector.load %arg18[%c0_235, %c2240] : memref<2x2304xf32, #tpu.memory_space<vmem>>, vector<1x64xf32>
    tpu.vector_store %arg18[%c0_235, %c2240], %220 {strides = array<i32>} : memref<2x2304xf32, #tpu.memory_space<vmem>>, vector<1x64xf32>,
    %c64_236 = arith.constant 64 : index
    %c0_237 = arith.constant 0 : index
    %222 = vector.load %arg17[%c64_236, %c0_237] : memref<128x64xf32, #tpu.memory_space<vmem>>, vector<1x64xf32>
    %c1_238 = arith.constant 1 : index
    %c0_239 = arith.constant 0 : index
    %223 = vector.load %arg18[%c1_238, %c0_239] : memref<2x2304xf32, #tpu.memory_space<vmem>>, vector<1x64xf32>
    tpu.vector_store %arg18[%c1_238, %c0_239], %222 {strides = array<i32>} : memref<2x2304xf32, #tpu.memory_space<vmem>>, vector<1x64xf32>,
    %c65 = arith.constant 65 : index
    %c0_240 = arith.constant 0 : index
    %224 = vector.load %arg17[%c65, %c0_240] : memref<128x64xf32, #tpu.memory_space<vmem>>, vector<1x64xf32>
    %c1_241 = arith.constant 1 : index
    %c64_242 = arith.constant 64 : index
    %225 = vector.load %arg18[%c1_241, %c64_242] : memref<2x2304xf32, #tpu.memory_space<vmem>>, vector<1x64xf32>
    tpu.vector_store %arg18[%c1_241, %c64_242], %224 {strides = array<i32>} : memref<2x2304xf32, #tpu.memory_space<vmem>>, vector<1x64xf32>,
    %c66 = arith.constant 66 : index
    %c0_243 = arith.constant 0 : index
    %226 = vector.load %arg17[%c66, %c0_243] : memref<128x64xf32, #tpu.memory_space<vmem>>, vector<1x64xf32>
    %c1_244 = arith.constant 1 : index
    %c128_245 = arith.constant 128 : index
    %227 = vector.load %arg18[%c1_244, %c128_245] : memref<2x2304xf32, #tpu.memory_space<vmem>>, vector<1x64xf32>
    tpu.vector_store %arg18[%c1_244, %c128_245], %226 {strides = array<i32>} : memref<2x2304xf32, #tpu.memory_space<vmem>>, vector<1x64xf32>,
    %c67 = arith.constant 67 : index
    %c0_246 = arith.constant 0 : index
    %228 = vector.load %arg17[%c67, %c0_246] : memref<128x64xf32, #tpu.memory_space<vmem>>, vector<1x64xf32>
    %c1_247 = arith.constant 1 : index
    %c192_248 = arith.constant 192 : index
    %229 = vector.load %arg18[%c1_247, %c192_248] : memref<2x2304xf32, #tpu.memory_space<vmem>>, vector<1x64xf32>
    tpu.vector_store %arg18[%c1_247, %c192_248], %228 {strides = array<i32>} : memref<2x2304xf32, #tpu.memory_space<vmem>>, vector<1x64xf32>,
    %c68 = arith.constant 68 : index
    %c0_249 = arith.constant 0 : index
    %230 = vector.load %arg17[%c68, %c0_249] : memref<128x64xf32, #tpu.memory_space<vmem>>, vector<1x64xf32>
    %c1_250 = arith.constant 1 : index
    %c256_251 = arith.constant 256 : index
    %231 = vector.load %arg18[%c1_250, %c256_251] : memref<2x2304xf32, #tpu.memory_space<vmem>>, vector<1x64xf32>
    tpu.vector_store %arg18[%c1_250, %c256_251], %230 {strides = array<i32>} : memref<2x2304xf32, #tpu.memory_space<vmem>>, vector<1x64xf32>,
    %c69 = arith.constant 69 : index
    %c0_252 = arith.constant 0 : index
    %232 = vector.load %arg17[%c69, %c0_252] : memref<128x64xf32, #tpu.memory_space<vmem>>, vector<1x64xf32>
    %c1_253 = arith.constant 1 : index
    %c320_254 = arith.constant 320 : index
    %233 = vector.load %arg18[%c1_253, %c320_254] : memref<2x2304xf32, #tpu.memory_space<vmem>>, vector<1x64xf32>
    tpu.vector_store %arg18[%c1_253, %c320_254], %232 {strides = array<i32>} : memref<2x2304xf32, #tpu.memory_space<vmem>>, vector<1x64xf32>,
    %c72 = arith.constant 72 : index
    %c0_255 = arith.constant 0 : index
    %234 = vector.load %arg17[%c72, %c0_255] : memref<128x64xf32, #tpu.memory_space<vmem>>, vector<1x64xf32>
    %c1_256 = arith.constant 1 : index
    %c384_257 = arith.constant 384 : index
    %235 = vector.load %arg18[%c1_256, %c384_257] : memref<2x2304xf32, #tpu.memory_space<vmem>>, vector<1x64xf32>
    tpu.vector_store %arg18[%c1_256, %c384_257], %234 {strides = array<i32>} : memref<2x2304xf32, #tpu.memory_space<vmem>>, vector<1x64xf32>,
    %c73 = arith.constant 73 : index
    %c0_258 = arith.constant 0 : index
    %236 = vector.load %arg17[%c73, %c0_258] : memref<128x64xf32, #tpu.memory_space<vmem>>, vector<1x64xf32>
    %c1_259 = arith.constant 1 : index
    %c448_260 = arith.constant 448 : index
    %237 = vector.load %arg18[%c1_259, %c448_260] : memref<2x2304xf32, #tpu.memory_space<vmem>>, vector<1x64xf32>
    tpu.vector_store %arg18[%c1_259, %c448_260], %236 {strides = array<i32>} : memref<2x2304xf32, #tpu.memory_space<vmem>>, vector<1x64xf32>,
    %c74 = arith.constant 74 : index
    %c0_261 = arith.constant 0 : index
    %238 = vector.load %arg17[%c74, %c0_261] : memref<128x64xf32, #tpu.memory_space<vmem>>, vector<1x64xf32>
    %c1_262 = arith.constant 1 : index
    %c512_263 = arith.constant 512 : index
    %239 = vector.load %arg18[%c1_262, %c512_263] : memref<2x2304xf32, #tpu.memory_space<vmem>>, vector<1x64xf32>
    tpu.vector_store %arg18[%c1_262, %c512_263], %238 {strides = array<i32>} : memref<2x2304xf32, #tpu.memory_space<vmem>>, vector<1x64xf32>,
    %c75 = arith.constant 75 : index
    %c0_264 = arith.constant 0 : index
    %240 = vector.load %arg17[%c75, %c0_264] : memref<128x64xf32, #tpu.memory_space<vmem>>, vector<1x64xf32>
    %c1_265 = arith.constant 1 : index
    %c576_266 = arith.constant 576 : index
    %241 = vector.load %arg18[%c1_265, %c576_266] : memref<2x2304xf32, #tpu.memory_space<vmem>>, vector<1x64xf32>
    tpu.vector_store %arg18[%c1_265, %c576_266], %240 {strides = array<i32>} : memref<2x2304xf32, #tpu.memory_space<vmem>>, vector<1x64xf32>,
    %c76 = arith.constant 76 : index
    %c0_267 = arith.constant 0 : index
    %242 = vector.load %arg17[%c76, %c0_267] : memref<128x64xf32, #tpu.memory_space<vmem>>, vector<1x64xf32>
    %c1_268 = arith.constant 1 : index
    %c640_269 = arith.constant 640 : index
    %243 = vector.load %arg18[%c1_268, %c640_269] : memref<2x2304xf32, #tpu.memory_space<vmem>>, vector<1x64xf32>
    tpu.vector_store %arg18[%c1_268, %c640_269], %242 {strides = array<i32>} : memref<2x2304xf32, #tpu.memory_space<vmem>>, vector<1x64xf32>,
    %c77 = arith.constant 77 : index
    %c0_270 = arith.constant 0 : index
    %244 = vector.load %arg17[%c77, %c0_270] : memref<128x64xf32, #tpu.memory_space<vmem>>, vector<1x64xf32>
    %c1_271 = arith.constant 1 : index
    %c704_272 = arith.constant 704 : index
    %245 = vector.load %arg18[%c1_271, %c704_272] : memref<2x2304xf32, #tpu.memory_space<vmem>>, vector<1x64xf32>
    tpu.vector_store %arg18[%c1_271, %c704_272], %244 {strides = array<i32>} : memref<2x2304xf32, #tpu.memory_space<vmem>>, vector<1x64xf32>,
    %c80 = arith.constant 80 : index
    %c0_273 = arith.constant 0 : index
    %246 = vector.load %arg17[%c80, %c0_273] : memref<128x64xf32, #tpu.memory_space<vmem>>, vector<1x64xf32>
    %c1_274 = arith.constant 1 : index
    %c768_275 = arith.constant 768 : index
    %247 = vector.load %arg18[%c1_274, %c768_275] : memref<2x2304xf32, #tpu.memory_space<vmem>>, vector<1x64xf32>
    tpu.vector_store %arg18[%c1_274, %c768_275], %246 {strides = array<i32>} : memref<2x2304xf32, #tpu.memory_space<vmem>>, vector<1x64xf32>,
    %c81 = arith.constant 81 : index
    %c0_276 = arith.constant 0 : index
    %248 = vector.load %arg17[%c81, %c0_276] : memref<128x64xf32, #tpu.memory_space<vmem>>, vector<1x64xf32>
    %c1_277 = arith.constant 1 : index
    %c832_278 = arith.constant 832 : index
    %249 = vector.load %arg18[%c1_277, %c832_278] : memref<2x2304xf32, #tpu.memory_space<vmem>>, vector<1x64xf32>
    tpu.vector_store %arg18[%c1_277, %c832_278], %248 {strides = array<i32>} : memref<2x2304xf32, #tpu.memory_space<vmem>>, vector<1x64xf32>,
    %c82 = arith.constant 82 : index
    %c0_279 = arith.constant 0 : index
    %250 = vector.load %arg17[%c82, %c0_279] : memref<128x64xf32, #tpu.memory_space<vmem>>, vector<1x64xf32>
    %c1_280 = arith.constant 1 : index
    %c896_281 = arith.constant 896 : index
    %251 = vector.load %arg18[%c1_280, %c896_281] : memref<2x2304xf32, #tpu.memory_space<vmem>>, vector<1x64xf32>
    tpu.vector_store %arg18[%c1_280, %c896_281], %250 {strides = array<i32>} : memref<2x2304xf32, #tpu.memory_space<vmem>>, vector<1x64xf32>,
    %c83 = arith.constant 83 : index
    %c0_282 = arith.constant 0 : index
    %252 = vector.load %arg17[%c83, %c0_282] : memref<128x64xf32, #tpu.memory_space<vmem>>, vector<1x64xf32>
    %c1_283 = arith.constant 1 : index
    %c960_284 = arith.constant 960 : index
    %253 = vector.load %arg18[%c1_283, %c960_284] : memref<2x2304xf32, #tpu.memory_space<vmem>>, vector<1x64xf32>
    tpu.vector_store %arg18[%c1_283, %c960_284], %252 {strides = array<i32>} : memref<2x2304xf32, #tpu.memory_space<vmem>>, vector<1x64xf32>,
    %c84 = arith.constant 84 : index
    %c0_285 = arith.constant 0 : index
    %254 = vector.load %arg17[%c84, %c0_285] : memref<128x64xf32, #tpu.memory_space<vmem>>, vector<1x64xf32>
    %c1_286 = arith.constant 1 : index
    %c1024_287 = arith.constant 1024 : index
    %255 = vector.load %arg18[%c1_286, %c1024_287] : memref<2x2304xf32, #tpu.memory_space<vmem>>, vector<1x64xf32>
    tpu.vector_store %arg18[%c1_286, %c1024_287], %254 {strides = array<i32>} : memref<2x2304xf32, #tpu.memory_space<vmem>>, vector<1x64xf32>,
    %c85 = arith.constant 85 : index
    %c0_288 = arith.constant 0 : index
    %256 = vector.load %arg17[%c85, %c0_288] : memref<128x64xf32, #tpu.memory_space<vmem>>, vector<1x64xf32>
    %c1_289 = arith.constant 1 : index
    %c1088_290 = arith.constant 1088 : index
    %257 = vector.load %arg18[%c1_289, %c1088_290] : memref<2x2304xf32, #tpu.memory_space<vmem>>, vector<1x64xf32>
    tpu.vector_store %arg18[%c1_289, %c1088_290], %256 {strides = array<i32>} : memref<2x2304xf32, #tpu.memory_space<vmem>>, vector<1x64xf32>,
    %c88 = arith.constant 88 : index
    %c0_291 = arith.constant 0 : index
    %258 = vector.load %arg17[%c88, %c0_291] : memref<128x64xf32, #tpu.memory_space<vmem>>, vector<1x64xf32>
    %c1_292 = arith.constant 1 : index
    %c1152_293 = arith.constant 1152 : index
    %259 = vector.load %arg18[%c1_292, %c1152_293] : memref<2x2304xf32, #tpu.memory_space<vmem>>, vector<1x64xf32>
    tpu.vector_store %arg18[%c1_292, %c1152_293], %258 {strides = array<i32>} : memref<2x2304xf32, #tpu.memory_space<vmem>>, vector<1x64xf32>,
    %c89 = arith.constant 89 : index
    %c0_294 = arith.constant 0 : index
    %260 = vector.load %arg17[%c89, %c0_294] : memref<128x64xf32, #tpu.memory_space<vmem>>, vector<1x64xf32>
    %c1_295 = arith.constant 1 : index
    %c1216_296 = arith.constant 1216 : index
    %261 = vector.load %arg18[%c1_295, %c1216_296] : memref<2x2304xf32, #tpu.memory_space<vmem>>, vector<1x64xf32>
    tpu.vector_store %arg18[%c1_295, %c1216_296], %260 {strides = array<i32>} : memref<2x2304xf32, #tpu.memory_space<vmem>>, vector<1x64xf32>,
    %c90 = arith.constant 90 : index
    %c0_297 = arith.constant 0 : index
    %262 = vector.load %arg17[%c90, %c0_297] : memref<128x64xf32, #tpu.memory_space<vmem>>, vector<1x64xf32>
    %c1_298 = arith.constant 1 : index
    %c1280_299 = arith.constant 1280 : index
    %263 = vector.load %arg18[%c1_298, %c1280_299] : memref<2x2304xf32, #tpu.memory_space<vmem>>, vector<1x64xf32>
    tpu.vector_store %arg18[%c1_298, %c1280_299], %262 {strides = array<i32>} : memref<2x2304xf32, #tpu.memory_space<vmem>>, vector<1x64xf32>,
    %c91 = arith.constant 91 : index
    %c0_300 = arith.constant 0 : index
    %264 = vector.load %arg17[%c91, %c0_300] : memref<128x64xf32, #tpu.memory_space<vmem>>, vector<1x64xf32>
    %c1_301 = arith.constant 1 : index
    %c1344_302 = arith.constant 1344 : index
    %265 = vector.load %arg18[%c1_301, %c1344_302] : memref<2x2304xf32, #tpu.memory_space<vmem>>, vector<1x64xf32>
    tpu.vector_store %arg18[%c1_301, %c1344_302], %264 {strides = array<i32>} : memref<2x2304xf32, #tpu.memory_space<vmem>>, vector<1x64xf32>,
    %c92 = arith.constant 92 : index
    %c0_303 = arith.constant 0 : index
    %266 = vector.load %arg17[%c92, %c0_303] : memref<128x64xf32, #tpu.memory_space<vmem>>, vector<1x64xf32>
    %c1_304 = arith.constant 1 : index
    %c1408_305 = arith.constant 1408 : index
    %267 = vector.load %arg18[%c1_304, %c1408_305] : memref<2x2304xf32, #tpu.memory_space<vmem>>, vector<1x64xf32>
    tpu.vector_store %arg18[%c1_304, %c1408_305], %266 {strides = array<i32>} : memref<2x2304xf32, #tpu.memory_space<vmem>>, vector<1x64xf32>,
    %c93 = arith.constant 93 : index
    %c0_306 = arith.constant 0 : index
    %268 = vector.load %arg17[%c93, %c0_306] : memref<128x64xf32, #tpu.memory_space<vmem>>, vector<1x64xf32>
    %c1_307 = arith.constant 1 : index
    %c1472_308 = arith.constant 1472 : index
    %269 = vector.load %arg18[%c1_307, %c1472_308] : memref<2x2304xf32, #tpu.memory_space<vmem>>, vector<1x64xf32>
    tpu.vector_store %arg18[%c1_307, %c1472_308], %268 {strides = array<i32>} : memref<2x2304xf32, #tpu.memory_space<vmem>>, vector<1x64xf32>,
    %c96 = arith.constant 96 : index
    %c0_309 = arith.constant 0 : index
    %270 = vector.load %arg17[%c96, %c0_309] : memref<128x64xf32, #tpu.memory_space<vmem>>, vector<1x64xf32>
    %c1_310 = arith.constant 1 : index
    %c1536_311 = arith.constant 1536 : index
    %271 = vector.load %arg18[%c1_310, %c1536_311] : memref<2x2304xf32, #tpu.memory_space<vmem>>, vector<1x64xf32>
    tpu.vector_store %arg18[%c1_310, %c1536_311], %270 {strides = array<i32>} : memref<2x2304xf32, #tpu.memory_space<vmem>>, vector<1x64xf32>,
    %c97 = arith.constant 97 : index
    %c0_312 = arith.constant 0 : index
    %272 = vector.load %arg17[%c97, %c0_312] : memref<128x64xf32, #tpu.memory_space<vmem>>, vector<1x64xf32>
    %c1_313 = arith.constant 1 : index
    %c1600_314 = arith.constant 1600 : index
    %273 = vector.load %arg18[%c1_313, %c1600_314] : memref<2x2304xf32, #tpu.memory_space<vmem>>, vector<1x64xf32>
    tpu.vector_store %arg18[%c1_313, %c1600_314], %272 {strides = array<i32>} : memref<2x2304xf32, #tpu.memory_space<vmem>>, vector<1x64xf32>,
    %c98 = arith.constant 98 : index
    %c0_315 = arith.constant 0 : index
    %274 = vector.load %arg17[%c98, %c0_315] : memref<128x64xf32, #tpu.memory_space<vmem>>, vector<1x64xf32>
    %c1_316 = arith.constant 1 : index
    %c1664_317 = arith.constant 1664 : index
    %275 = vector.load %arg18[%c1_316, %c1664_317] : memref<2x2304xf32, #tpu.memory_space<vmem>>, vector<1x64xf32>
    tpu.vector_store %arg18[%c1_316, %c1664_317], %274 {strides = array<i32>} : memref<2x2304xf32, #tpu.memory_space<vmem>>, vector<1x64xf32>,
    %c99 = arith.constant 99 : index
    %c0_318 = arith.constant 0 : index
    %276 = vector.load %arg17[%c99, %c0_318] : memref<128x64xf32, #tpu.memory_space<vmem>>, vector<1x64xf32>
    %c1_319 = arith.constant 1 : index
    %c1728_320 = arith.constant 1728 : index
    %277 = vector.load %arg18[%c1_319, %c1728_320] : memref<2x2304xf32, #tpu.memory_space<vmem>>, vector<1x64xf32>
    tpu.vector_store %arg18[%c1_319, %c1728_320], %276 {strides = array<i32>} : memref<2x2304xf32, #tpu.memory_space<vmem>>, vector<1x64xf32>,
    %c100 = arith.constant 100 : index
    %c0_321 = arith.constant 0 : index
    %278 = vector.load %arg17[%c100, %c0_321] : memref<128x64xf32, #tpu.memory_space<vmem>>, vector<1x64xf32>
    %c1_322 = arith.constant 1 : index
    %c1792_323 = arith.constant 1792 : index
    %279 = vector.load %arg18[%c1_322, %c1792_323] : memref<2x2304xf32, #tpu.memory_space<vmem>>, vector<1x64xf32>
    tpu.vector_store %arg18[%c1_322, %c1792_323], %278 {strides = array<i32>} : memref<2x2304xf32, #tpu.memory_space<vmem>>, vector<1x64xf32>,
    %c101 = arith.constant 101 : index
    %c0_324 = arith.constant 0 : index
    %280 = vector.load %arg17[%c101, %c0_324] : memref<128x64xf32, #tpu.memory_space<vmem>>, vector<1x64xf32>
    %c1_325 = arith.constant 1 : index
    %c1856_326 = arith.constant 1856 : index
    %281 = vector.load %arg18[%c1_325, %c1856_326] : memref<2x2304xf32, #tpu.memory_space<vmem>>, vector<1x64xf32>
    tpu.vector_store %arg18[%c1_325, %c1856_326], %280 {strides = array<i32>} : memref<2x2304xf32, #tpu.memory_space<vmem>>, vector<1x64xf32>,
    %c104 = arith.constant 104 : index
    %c0_327 = arith.constant 0 : index
    %282 = vector.load %arg17[%c104, %c0_327] : memref<128x64xf32, #tpu.memory_space<vmem>>, vector<1x64xf32>
    %c1_328 = arith.constant 1 : index
    %c1920_329 = arith.constant 1920 : index
    %283 = vector.load %arg18[%c1_328, %c1920_329] : memref<2x2304xf32, #tpu.memory_space<vmem>>, vector<1x64xf32>
    tpu.vector_store %arg18[%c1_328, %c1920_329], %282 {strides = array<i32>} : memref<2x2304xf32, #tpu.memory_space<vmem>>, vector<1x64xf32>,
    %c105 = arith.constant 105 : index
    %c0_330 = arith.constant 0 : index
    %284 = vector.load %arg17[%c105, %c0_330] : memref<128x64xf32, #tpu.memory_space<vmem>>, vector<1x64xf32>
    %c1_331 = arith.constant 1 : index
    %c1984_332 = arith.constant 1984 : index
    %285 = vector.load %arg18[%c1_331, %c1984_332] : memref<2x2304xf32, #tpu.memory_space<vmem>>, vector<1x64xf32>
    tpu.vector_store %arg18[%c1_331, %c1984_332], %284 {strides = array<i32>} : memref<2x2304xf32, #tpu.memory_space<vmem>>, vector<1x64xf32>,
    %c106 = arith.constant 106 : index
    %c0_333 = arith.constant 0 : index
    %286 = vector.load %arg17[%c106, %c0_333] : memref<128x64xf32, #tpu.memory_space<vmem>>, vector<1x64xf32>
    %c1_334 = arith.constant 1 : index
    %c2048_335 = arith.constant 2048 : index
    %287 = vector.load %arg18[%c1_334, %c2048_335] : memref<2x2304xf32, #tpu.memory_space<vmem>>, vector<1x64xf32>
    tpu.vector_store %arg18[%c1_334, %c2048_335], %286 {strides = array<i32>} : memref<2x2304xf32, #tpu.memory_space<vmem>>, vector<1x64xf32>,
    %c107 = arith.constant 107 : index
    %c0_336 = arith.constant 0 : index
    %288 = vector.load %arg17[%c107, %c0_336] : memref<128x64xf32, #tpu.memory_space<vmem>>, vector<1x64xf32>
    %c1_337 = arith.constant 1 : index
    %c2112_338 = arith.constant 2112 : index
    %289 = vector.load %arg18[%c1_337, %c2112_338] : memref<2x2304xf32, #tpu.memory_space<vmem>>, vector<1x64xf32>
    tpu.vector_store %arg18[%c1_337, %c2112_338], %288 {strides = array<i32>} : memref<2x2304xf32, #tpu.memory_space<vmem>>, vector<1x64xf32>,
    %c108 = arith.constant 108 : index
    %c0_339 = arith.constant 0 : index
    %290 = vector.load %arg17[%c108, %c0_339] : memref<128x64xf32, #tpu.memory_space<vmem>>, vector<1x64xf32>
    %c1_340 = arith.constant 1 : index
    %c2176_341 = arith.constant 2176 : index
    %291 = vector.load %arg18[%c1_340, %c2176_341] : memref<2x2304xf32, #tpu.memory_space<vmem>>, vector<1x64xf32>
    tpu.vector_store %arg18[%c1_340, %c2176_341], %290 {strides = array<i32>} : memref<2x2304xf32, #tpu.memory_space<vmem>>, vector<1x64xf32>,
    %c109 = arith.constant 109 : index
    %c0_342 = arith.constant 0 : index
    %292 = vector.load %arg17[%c109, %c0_342] : memref<128x64xf32, #tpu.memory_space<vmem>>, vector<1x64xf32>
    %c1_343 = arith.constant 1 : index
    %c2240_344 = arith.constant 2240 : index
    %293 = vector.load %arg18[%c1_343, %c2240_344] : memref<2x2304xf32, #tpu.memory_space<vmem>>, vector<1x64xf32>
    tpu.vector_store %arg18[%c1_343, %c2240_344], %292 {strides = array<i32>} : memref<2x2304xf32, #tpu.memory_space<vmem>>, vector<1x64xf32>,
    tpu.wait_dma2 semaphore(%arg13 : memref<!tpu.dma_semaphore, #tpu.memory_space<semaphore_mem>>) src(%arg7 : memref<2304x512xbf16, #tpu.memory_space<any>>) dst(%arg12 : memref<2304x512xbf16, #tpu.memory_space<vmem>>)
    %c0_345 = arith.constant 0 : index
    %c0_346 = arith.constant 0 : index
    %294 = vector.load %arg18[%c0_345, %c0_346] : memref<2x2304xf32, #tpu.memory_space<vmem>>, vector<2x2304xf32>
    %295 = arith.truncf %294 : vector<2x2304xf32> to vector<2x2304xbf16>
    %c0_347 = arith.constant 0 : index
    %c0_348 = arith.constant 0 : index
    %296 = vector.load %arg12[%c0_347, %c0_348] : memref<2304x512xbf16, #tpu.memory_space<vmem>>, vector<2304x512xbf16>
    %cst_349 = arith.constant dense<0.000000e+00> : vector<2x512xf32>
    %297 = tpu.matmul %295, %296, %cst_349 {dimension_numbers = #tpu.dot_dimension_numbers<[1], [0], [0], [1], [0, 0, 1, 1], [], []>} : vector<2x2304xbf16>, vector<2304x512xbf16>, vector<2x512xf32> -> vector<2x512xf32>
    %c0_350 = arith.constant 0 : index
    %c0_351 = arith.constant 0 : index
    %298 = vector.load %arg8[%c0_350, %c0_351] : memref<1x512xf32, #tpu.memory_space<vmem>>, vector<1x512xf32>
    %299 = vector.broadcast %298 : vector<1x512xf32> to vector<2x512xf32>
    %300 = arith.addf %297, %299 : vector<2x512xf32>
    %cst_352 = arith.constant 0.000000e+00 : f32
    %301 = vector.broadcast %cst_352 : f32 to vector<2x512xf32>
    %302 = arith.cmpf ogt, %300, %301 : vector<2x512xf32>
    %cst_353 = arith.constant 0.00999999977 : f32
    %303 = vector.broadcast %cst_353 : f32 to vector<2x512xf32>
    %304 = arith.mulf %303, %300 : vector<2x512xf32>
    %305 = arith.select %302, %300, %304 : vector<2x512xi1>, vector<2x512xf32>
    %306 = arith.truncf %305 : vector<2x512xf32> to vector<2x512xbf16>
    %c0_354 = arith.constant 0 : index
    %c0_355 = arith.constant 0 : index
    %307 = vector.load %arg9[%c0_354, %c0_355] : memref<512x128xbf16, #tpu.memory_space<vmem>>, vector<512x128xbf16>
    %cst_356 = arith.constant dense<0.000000e+00> : vector<2x128xf32>
    %308 = tpu.matmul %306, %307, %cst_356 {dimension_numbers = #tpu.dot_dimension_numbers<[1], [0], [0], [1], [0, 0, 1, 1], [], []>} : vector<2x512xbf16>, vector<512x128xbf16>, vector<2x128xf32> -> vector<2x128xf32>
    %c0_357 = arith.constant 0 : index
    %c0_358 = arith.constant 0 : index
    %309 = vector.load %arg10[%c0_357, %c0_358] : memref<1x128xf32, #tpu.memory_space<vmem>>, vector<1x128xf32>
    %310 = vector.broadcast %309 : vector<1x128xf32> to vector<2x128xf32>
    %311 = arith.addf %308, %310 : vector<2x128xf32>
    %c0_359 = arith.constant 0 : index
    %c0_360 = arith.constant 0 : index
    %312 = vector.load %arg11[%c0_359, %c0_360] : memref<2x128xf32, #tpu.memory_space<vmem>>, vector<2x128xf32>
    tpu.vector_store %arg11[%c0_359, %c0_360], %311 {strides = array<i32>} : memref<2x128xf32, #tpu.memory_space<vmem>>, vector<2x128xf32>,
    return
  }
}

</mosaic_0001>

<llo_original>
// kernel: a3c_forward.1
$region0: #{a3c_forward.1}
  #allocation0 [shape = 'u32[]', space=smem, size = 0x4, offset = 0x4, fixed_abs, tag = 'smem constant byte address 0x4 - core index']
  #allocation1 [shape = 'u32[144,128]{1,0:T(1,128)}', space=vmem, size = 0x12000, scoped, tag = 'internal scratch']
  #allocation2 [shape = 'bf16[2304,512]{1,0:T(8,128)(2,1)}', space=vmem, size = 0x240000, scoped, tag = 'scratch operand']
  #allocation3 [shape = 's32[1]{0}', space=sflag, size = 0x4, scoped, tag = 'scratch operand']
  #allocation4 [shape = 'f32[20,16,128]{2,1,0:T(8,128)}', space=vmem, size = 0x28000, scoped, tag = 'scratch operand']
  #allocation5 [shape = 'f32[20,16,64]{2,1,0:T(8,128)}', space=vmem, size = 0x28000, scoped, tag = 'scratch operand']
  #allocation6 [shape = 'bf16[128,576]{1,0:T(8,128)(2,1)}', space=vmem, size = 0x28000, scoped, tag = 'scratch operand']
  #allocation7 [shape = 'f32[128,64]{1,0:T(8,128)}', space=vmem, size = 0x10000, scoped, tag = 'scratch operand']
  #allocation8 [shape = 'f32[2,2304]{1,0:T(2,128)}', space=vmem, size = 0x4800, scoped, tag = 'scratch operand']
  #allocation9 [shape = 's32[]', space=sflag, size = 0x4, offset = 0, fixed_abs, tag = 'sflag constant byte address 0x0 - dummy sync flag']
  %s0 = inlined_call_operand.vmem [shape: bf16[320,432], index: 0, kind: input, shape index: {}]
  %s1 = inlined_call_operand.vmem [shape: bf16[432,128], index: 1, kind: input, shape index: {}]
  %s2 = inlined_call_operand.vmem [shape: f32[1,128], index: 2, kind: input, shape index: {}]
  %s3 = inlined_call_operand.vmem [shape: bf16[512,64], index: 3, kind: input, shape index: {}]
  %s4 = inlined_call_operand.vmem [shape: f32[1,64], index: 4, kind: input, shape index: {}]
  %s5 = inlined_call_operand.vmem [shape: bf16[576,64], index: 5, kind: input, shape index: {}]
  %s6 = inlined_call_operand.vmem [shape: f32[1,64], index: 6, kind: input, shape index: {}]
  %s7 = inlined_call_operand.vmem [shape: bf16[2304,512], index: 7, kind: input, shape index: {}]
  %s8 = inlined_call_operand.vmem [shape: f32[1,512], index: 8, kind: input, shape index: {}]
  %s9 = inlined_call_operand.vmem [shape: bf16[512,128], index: 9, kind: input, shape index: {}]
  %s10 = inlined_call_operand.vmem [shape: f32[1,128], index: 10, kind: input, shape index: {}]
  %s11 = inlined_call_operand.vmem [shape: f32[2,128], index: 11, kind: output, shape index: {}]
  %s12 = sld [smem:[#allocation0]]
  $region84: #{a3c_forward.1} parent=0
    _
  %s14 = ssub.s32 1, %s12
  %s15 = scalar_select 0, %s14, %s12
  // Predicated region
  $region2: #{a3c_forward.1} parent=0 // pred_check
    _
  $region3: #{a3c_forward.1} parent=0 // pred_check_branch
    %17 = sbr.rel (0) target = $region5
  $region4: #{a3c_forward.1} parent=0 // pred_region
    _
  $region5: #{a3c_forward.1} parent=0 // pred_fallthru
    _
  // Predicated region
  $region6: #{a3c_forward.1} parent=0 // pred_check
    _
  $region7: #{a3c_forward.1} parent=0 // pred_check_branch
    %19 = sbr.rel (0) target = $region9
  $region8: #{a3c_forward.1} parent=0 // pred_region
    _
  $region9: #{a3c_forward.1} parent=0 // pred_fallthru
    _
  // Predicated region
  $region10: #{a3c_forward.1} parent=0 // pred_check
    _
  $region11: #{a3c_forward.1} parent=0 // pred_check_branch
    %21 = sbr.rel (0) target = $region13
  $region12: #{a3c_forward.1} parent=0 // pred_region
    _
  $region13: #{a3c_forward.1} parent=0 // pred_fallthru
    _
  // Predicated region
  $region14: #{a3c_forward.1} parent=0 // pred_check
    _
  $region15: #{a3c_forward.1} parent=0 // pred_check_branch
    %23 = sbr.rel (0) target = $region17
  $region16: #{a3c_forward.1} parent=0 // pred_region
    _
  $region17: #{a3c_forward.1} parent=0 // pred_fallthru
    _
  // Predicated region
  $region18: #{a3c_forward.1} parent=0 // pred_check
    _
  $region19: #{a3c_forward.1} parent=0 // pred_check_branch
    %25 = sbr.rel (0) target = $region21
  $region20: #{a3c_forward.1} parent=0 // pred_region
    _
  $region21: #{a3c_forward.1} parent=0 // pred_fallthru
    _
  // Predicated region
  $region22: #{a3c_forward.1} parent=0 // pred_check
    _
  $region23: #{a3c_forward.1} parent=0 // pred_check_branch
    %27 = sbr.rel (0) target = $region25
  $region24: #{a3c_forward.1} parent=0 // pred_region
    _
  $region25: #{a3c_forward.1} parent=0 // pred_fallthru
    _
  // Predicated region
  $region26: #{a3c_forward.1} parent=0 // pred_check
    _
  $region27: #{a3c_forward.1} parent=0 // pred_check_branch
    %29 = sbr.rel (0) target = $region29
  $region28: #{a3c_forward.1} parent=0 // pred_region
    _
  $region29: #{a3c_forward.1} parent=0 // pred_fallthru
    _
  // Predicated region
  $region30: #{a3c_forward.1} parent=0 // pred_check
    _
  $region31: #{a3c_forward.1} parent=0 // pred_check_branch
    %31 = sbr.rel (0) target = $region33
  $region32: #{a3c_forward.1} parent=0 // pred_region
    _
  $region33: #{a3c_forward.1} parent=0 // pred_fallthru
    _
  // Predicated region
  $region34: #{a3c_forward.1} parent=0 // pred_check
    _
  $region35: #{a3c_forward.1} parent=0 // pred_check_branch
    %33 = sbr.rel (0) target = $region37
  $region36: #{a3c_forward.1} parent=0 // pred_region
    _
  $region37: #{a3c_forward.1} parent=0 // pred_fallthru
    _
  // Predicated region
  $region38: #{a3c_forward.1} parent=0 // pred_check
    _
  $region39: #{a3c_forward.1} parent=0 // pred_check_branch
    %35 = sbr.rel (0) target = $region41
  $region40: #{a3c_forward.1} parent=0 // pred_region
    _
  $region41: #{a3c_forward.1} parent=0 // pred_fallthru
    _
  %p38 = scmp.lt.u32.totalorder 4608, 8
  %p39 = pneg %p38
  // Predicated region
  $region42: #{a3c_forward.1} parent=0 // pred_check
    _
  $region43: #{a3c_forward.1} parent=0 // pred_check_branch
    %41 = sbr.rel (%p38) target = $region45
  $region44: #{a3c_forward.1} parent=0 // pred_region
    %s57 = sand.u32 4608, 7
    %p58 = scmp.eq.s32.totalorder %s57, 0
    // Predicated region
    $region57: #{a3c_forward.1} parent=44 // pred_check
      %p59 = pneg %p58
    $region58: #{a3c_forward.1} parent=44 // pred_check_branch
      %61 = sbr.rel (%p59) target = $region60
    $region59: #{a3c_forward.1} parent=44 // pred_region
      loop: start=0, step=1, limit=1
      $region61: #{a3c_forward.1} parent=59 // loop_pre_header
        _
      $region62: #{a3c_forward.1} parent=59 // loop_header
        %s63 = sphi 0, %s67
        %p64 = scmp.ge.s32.totalorder %s63, 1
        %s68 = sphi %s7, %s7
        %s69 = sphi [#allocation2], [#allocation2]
      $region63: #{a3c_forward.1} parent=59 // loop_header_branch
        %66 = sbr.rel (%p64) target = $region67
      $region64: #{a3c_forward.1} parent=59 // loop_body
        %v70 = vld [vmem:[%s68] sm:$0xff]
        %71 = vst [vmem:[%s69] sm:$0xff] %v70
        %v72 = vld [vmem:[%s68 + $0x8] sm:$0xff]
        %73 = vst [vmem:[%s69 + $0x8] sm:$0xff] %v72
        %v74 = vld [vmem:[%s68 + $0x10] sm:$0xff]
        %75 = vst [vmem:[%s69 + $0x10] sm:$0xff] %v74
        %v76 = vld [vmem:[%s68 + $0x18] sm:$0xff]
        %77 = vst [vmem:[%s69 + $0x18] sm:$0xff] %v76
        %v78 = vld [vmem:[%s68 + $0x20] sm:$0xff]
        %79 = vst [vmem:[%s69 + $0x20] sm:$0xff] %v78
        %v80 = vld [vmem:[%s68 + $0x28] sm:$0xff]
        %81 = vst [vmem:[%s69 + $0x28] sm:$0xff] %v80
        %v82 = vld [vmem:[%s68 + $0x30] sm:$0xff]
        %83 = vst [vmem:[%s69 + $0x30] sm:$0xff] %v82
        %v84 = vld [vmem:[%s68 + $0x38] sm:$0xff]
        %85 = vst [vmem:[%s69 + $0x38] sm:$0xff] %v84
        %v86 = vld [vmem:[%s68 + $0x40] sm:$0xff]
        %87 = vst [vmem:[%s69 + $0x40] sm:$0xff] %v86
        %v88 = vld [vmem:[%s68 + $0x48] sm:$0xff]
        %89 = vst [vmem:[%s69 + $0x48] sm:$0xff] %v88
        %v90 = vld [vmem:[%s68 + $0x50] sm:$0xff]
        %91 = vst [vmem:[%s69 + $0x50] sm:$0xff] %v90
        %v92 = vld [vmem:[%s68 + $0x58] sm:$0xff]
        %93 = vst [vmem:[%s69 + $0x58] sm:$0xff] %v92
        %v94 = vld [vmem:[%s68 + $0x60] sm:$0xff]
        %95 = vst [vmem:[%s69 + $0x60] sm:$0xff] %v94
        %v96 = vld [vmem:[%s68 + $0x68] sm:$0xff]
        %97 = vst [vmem:[%s69 + $0x68] sm:$0xff] %v96
        %v98 = vld [vmem:[%s68 + $0x70] sm:$0xff]
        %99 = vst [vmem:[%s69 + $0x70] sm:$0xff] %v98
        %v100 = vld [vmem:[%s68 + $0x78] sm:$0xff]
        %101 = vst [vmem:[%s69 + $0x78] sm:$0xff] %v100
        %v102 = vld [vmem:[%s68 + $0x80] sm:$0xff]
        %103 = vst [vmem:[%s69 + $0x80] sm:$0xff] %v102
        %v104 = vld [vmem:[%s68 + $0x88] sm:$0xff]
        %105 = vst [vmem:[%s69 + $0x88] sm:$0xff] %v104
        %v106 = vld [vmem:[%s68 + $0x90] sm:$0xff]
        %107 = vst [vmem:[%s69 + $0x90] sm:$0xff] %v106
        %v108 = vld [vmem:[%s68 + $0x98] sm:$0xff]
        %109 = vst [vmem:[%s69 + $0x98] sm:$0xff] %v108
        %v110 = vld [vmem:[%s68 + $0xa0] sm:$0xff]
        %111 = vst [vmem:[%s69 + $0xa0] sm:$0xff] %v110
        %v112 = vld [vmem:[%s68 + $0xa8] sm:$0xff]
        %113 = vst [vmem:[%s69 + $0xa8] sm:$0xff] %v112
        %v114 = vld [vmem:[%s68 + $0xb0] sm:$0xff]
        %115 = vst [vmem:[%s69 + $0xb0] sm:$0xff] %v114
        %v116 = vld [vmem:[%s68 + $0xb8] sm:$0xff]
        %117 = vst [vmem:[%s69 + $0xb8] sm:$0xff] %v116
        %v118 = vld [vmem:[%s68 + $0xc0] sm:$0xff]
        %119 = vst [vmem:[%s69 + $0xc0] sm:$0xff] %v118
        %v120 = vld [vmem:[%s68 + $0xc8] sm:$0xff]
        %121 = vst [vmem:[%s69 + $0xc8] sm:$0xff] %v120
        %v122 = vld [vmem:[%s68 + $0xd0] sm:$0xff]
        %123 = vst [vmem:[%s69 + $0xd0] sm:$0xff] %v122
        %v124 = vld [vmem:[%s68 + $0xd8] sm:$0xff]
        %125 = vst [vmem:[%s69 + $0xd8] sm:$0xff] %v124
        %v126 = vld [vmem:[%s68 + $0xe0] sm:$0xff]
        %127 = vst [vmem:[%s69 + $0xe0] sm:$0xff] %v126
        %v128 = vld [vmem:[%s68 + $0xe8] sm:$0xff]
        %129 = vst [vmem:[%s69 + $0xe8] sm:$0xff] %v128
        %v130 = vld [vmem:[%s68 + $0xf0] sm:$0xff]
        %131 = vst [vmem:[%s69 + $0xf0] sm:$0xff] %v130
        %v132 = vld [vmem:[%s68 + $0xf8] sm:$0xff]
        %133 = vst [vmem:[%s69 + $0xf8] sm:$0xff] %v132
        %v134 = vld [vmem:[%s68 + $0x100] sm:$0xff]
        %135 = vst [vmem:[%s69 + $0x100] sm:$0xff] %v134
        %v136 = vld [vmem:[%s68 + $0x108] sm:$0xff]
        %137 = vst [vmem:[%s69 + $0x108] sm:$0xff] %v136
        %v138 = vld [vmem:[%s68 + $0x110] sm:$0xff]
        %139 = vst [vmem:[%s69 + $0x110] sm:$0xff] %v138
        %v140 = vld [vmem:[%s68 + $0x118] sm:$0xff]
        %141 = vst [vmem:[%s69 + $0x118] sm:$0xff] %v140
        %v142 = vld [vmem:[%s68 + $0x120] sm:$0xff]
        %143 = vst [vmem:[%s69 + $0x120] sm:$0xff] %v142
        %v144 = vld [vmem:[%s68 + $0x128] sm:$0xff]
        %145 = vst [vmem:[%s69 + $0x128] sm:$0xff] %v144
        %v146 = vld [vmem:[%s68 + $0x130] sm:$0xff]
        %147 = vst [vmem:[%s69 + $0x130] sm:$0xff] %v146
        %v148 = vld [vmem:[%s68 + $0x138] sm:$0xff]
        %149 = vst [vmem:[%s69 + $0x138] sm:$0xff] %v148
        %v150 = vld [vmem:[%s68 + $0x140] sm:$0xff]
        %151 = vst [vmem:[%s69 + $0x140] sm:$0xff] %v150
        %v152 = vld [vmem:[%s68 + $0x148] sm:$0xff]
        %153 = vst [vmem:[%s69 + $0x148] sm:$0xff] %v152
        %v154 = vld [vmem:[%s68 + $0x150] sm:$0xff]
        %155 = vst [vmem:[%s69 + $0x150] sm:$0xff] %v154
        %v156 = vld [vmem:[%s68 + $0x158] sm:$0xff]
        %157 = vst [vmem:[%s69 + $0x158] sm:$0xff] %v156
        %v158 = vld [vmem:[%s68 + $0x160] sm:$0xff]
        %159 = vst [vmem:[%s69 + $0x160] sm:$0xff] %v158
        %v160 = vld [vmem:[%s68 + $0x168] sm:$0xff]
        %161 = vst [vmem:[%s69 + $0x168] sm:$0xff] %v160
        %v162 = vld [vmem:[%s68 + $0x170] sm:$0xff]
        %163 = vst [vmem:[%s69 + $0x170] sm:$0xff] %v162
        %v164 = vld [vmem:[%s68 + $0x178] sm:$0xff]
        %165 = vst [vmem:[%s69 + $0x178] sm:$0xff] %v164
        %v166 = vld [vmem:[%s68 + $0x180] sm:$0xff]
        %167 = vst [vmem:[%s69 + $0x180] sm:$0xff] %v166
        %v168 = vld [vmem:[%s68 + $0x188] sm:$0xff]
        %169 = vst [vmem:[%s69 + $0x188] sm:$0xff] %v168
        %v170 = vld [vmem:[%s68 + $0x190] sm:$0xff]
        %171 = vst [vmem:[%s69 + $0x190] sm:$0xff] %v170
        %v172 = vld [vmem:[%s68 + $0x198] sm:$0xff]
        %173 = vst [vmem:[%s69 + $0x198] sm:$0xff] %v172
        %v174 = vld [vmem:[%s68 + $0x1a0] sm:$0xff]
        %175 = vst [vmem:[%s69 + $0x1a0] sm:$0xff] %v174
        %v176 = vld [vmem:[%s68 + $0x1a8] sm:$0xff]
        %177 = vst [vmem:[%s69 + $0x1a8] sm:$0xff] %v176
        %v178 = vld [vmem:[%s68 + $0x1b0] sm:$0xff]
        %179 = vst [vmem:[%s69 + $0x1b0] sm:$0xff] %v178
        %v180 = vld [vmem:[%s68 + $0x1b8] sm:$0xff]
        %181 = vst [vmem:[%s69 + $0x1b8] sm:$0xff] %v180
        %v182 = vld [vmem:[%s68 + $0x1c0] sm:$0xff]
        %183 = vst [vmem:[%s69 + $0x1c0] sm:$0xff] %v182
        %v184 = vld [vmem:[%s68 + $0x1c8] sm:$0xff]
        %185 = vst [vmem:[%s69 + $0x1c8] sm:$0xff] %v184
        %v186 = vld [vmem:[%s68 + $0x1d0] sm:$0xff]
        %187 = vst [vmem:[%s69 + $0x1d0] sm:$0xff] %v186
        %v188 = vld [vmem:[%s68 + $0x1d8] sm:$0xff]
        %189 = vst [vmem:[%s69 + $0x1d8] sm:$0xff] %v188
        %v190 = vld [vmem:[%s68 + $0x1e0] sm:$0xff]
        %191 = vst [vmem:[%s69 + $0x1e0] sm:$0xff] %v190
        %v192 = vld [vmem:[%s68 + $0x1e8] sm:$0xff]
        %193 = vst [vmem:[%s69 + $0x1e8] sm:$0xff] %v192
        %v194 = vld [vmem:[%s68 + $0x1f0] sm:$0xff]
        %195 = vst [vmem:[%s69 + $0x1f0] sm:$0xff] %v194
        %v196 = vld [vmem:[%s68 + $0x1f8] sm:$0xff]
        %197 = vst [vmem:[%s69 + $0x1f8] sm:$0xff] %v196
        %v198 = vld [vmem:[%s68 + $0x200] sm:$0xff]
        %199 = vst [vmem:[%s69 + $0x200] sm:$0xff] %v198
        %v200 = vld [vmem:[%s68 + $0x208] sm:$0xff]
        %201 = vst [vmem:[%s69 + $0x208] sm:$0xff] %v200
        %v202 = vld [vmem:[%s68 + $0x210] sm:$0xff]
        %203 = vst [vmem:[%s69 + $0x210] sm:$0xff] %v202
        %v204 = vld [vmem:[%s68 + $0x218] sm:$0xff]
        %205 = vst [vmem:[%s69 + $0x218] sm:$0xff] %v204
        %v206 = vld [vmem:[%s68 + $0x220] sm:$0xff]
        %207 = vst [vmem:[%s69 + $0x220] sm:$0xff] %v206
        %v208 = vld [vmem:[%s68 + $0x228] sm:$0xff]
        %209 = vst [vmem:[%s69 + $0x228] sm:$0xff] %v208
        %v210 = vld [vmem:[%s68 + $0x230] sm:$0xff]
        %211 = vst [vmem:[%s69 + $0x230] sm:$0xff] %v210
        %v212 = vld [vmem:[%s68 + $0x238] sm:$0xff]
        %213 = vst [vmem:[%s69 + $0x238] sm:$0xff] %v212
        %v214 = vld [vmem:[%s68 + $0x240] sm:$0xff]
        %215 = vst [vmem:[%s69 + $0x240] sm:$0xff] %v214
        %v216 = vld [vmem:[%s68 + $0x248] sm:$0xff]
        %217 = vst [vmem:[%s69 + $0x248] sm:$0xff] %v216
        %v218 = vld [vmem:[%s68 + $0x250] sm:$0xff]
        %219 = vst [vmem:[%s69 + $0x250] sm:$0xff] %v218
        %v220 = vld [vmem:[%s68 + $0x258] sm:$0xff]
        %221 = vst [vmem:[%s69 + $0x258] sm:$0xff] %v220
        %v222 = vld [vmem:[%s68 + $0x260] sm:$0xff]
        %223 = vst [vmem:[%s69 + $0x260] sm:$0xff] %v222
        %v224 = vld [vmem:[%s68 + $0x268] sm:$0xff]
        %225 = vst [vmem:[%s69 + $0x268] sm:$0xff] %v224
        %v226 = vld [vmem:[%s68 + $0x270] sm:$0xff]
        %227 = vst [vmem:[%s69 + $0x270] sm:$0xff] %v226
        %v228 = vld [vmem:[%s68 + $0x278] sm:$0xff]
        %229 = vst [vmem:[%s69 + $0x278] sm:$0xff] %v228
        %v230 = vld [vmem:[%s68 + $0x280] sm:$0xff]
        %231 = vst [vmem:[%s69 + $0x280] sm:$0xff] %v230
        %v232 = vld [vmem:[%s68 + $0x288] sm:$0xff]
        %233 = vst [vmem:[%s69 + $0x288] sm:$0xff] %v232
        %v234 = vld [vmem:[%s68 + $0x290] sm:$0xff]
        %235 = vst [vmem:[%s69 + $0x290] sm:$0xff] %v234
        %v236 = vld [vmem:[%s68 + $0x298] sm:$0xff]
        %237 = vst [vmem:[%s69 + $0x298] sm:$0xff] %v236
        %v238 = vld [vmem:[%s68 + $0x2a0] sm:$0xff]
        %239 = vst [vmem:[%s69 + $0x2a0] sm:$0xff] %v238
        %v240 = vld [vmem:[%s68 + $0x2a8] sm:$0xff]
        %241 = vst [vmem:[%s69 + $0x2a8] sm:$0xff] %v240
        %v242 = vld [vmem:[%s68 + $0x2b0] sm:$0xff]
        %243 = vst [vmem:[%s69 + $0x2b0] sm:$0xff] %v242
        %v244 = vld [vmem:[%s68 + $0x2b8] sm:$0xff]
        %245 = vst [vmem:[%s69 + $0x2b8] sm:$0xff] %v244
        %v246 = vld [vmem:[%s68 + $0x2c0] sm:$0xff]
        %247 = vst [vmem:[%s69 + $0x2c0] sm:$0xff] %v246
        %v248 = vld [vmem:[%s68 + $0x2c8] sm:$0xff]
        %249 = vst [vmem:[%s69 + $0x2c8] sm:$0xff] %v248
        %v250 = vld [vmem:[%s68 + $0x2d0] sm:$0xff]
        %251 = vst [vmem:[%s69 + $0x2d0] sm:$0xff] %v250
        %v252 = vld [vmem:[%s68 + $0x2d8] sm:$0xff]
        %253 = vst [vmem:[%s69 + $0x2d8] sm:$0xff] %v252
        %v254 = vld [vmem:[%s68 + $0x2e0] sm:$0xff]
        %255 = vst [vmem:[%s69 + $0x2e0] sm:$0xff] %v254
        %v256 = vld [vmem:[%s68 + $0x2e8] sm:$0xff]
        %257 = vst [vmem:[%s69 + $0x2e8] sm:$0xff] %v256
        %v258 = vld [vmem:[%s68 + $0x2f0] sm:$0xff]
        %259 = vst [vmem:[%s69 + $0x2f0] sm:$0xff] %v258
        %v260 = vld [vmem:[%s68 + $0x2f8] sm:$0xff]
        %261 = vst [vmem:[%s69 + $0x2f8] sm:$0xff] %v260
        %v262 = vld [vmem:[%s68 + $0x300] sm:$0xff]
        %263 = vst [vmem:[%s69 + $0x300] sm:$0xff] %v262
        %v264 = vld [vmem:[%s68 + $0x308] sm:$0xff]
        %265 = vst [vmem:[%s69 + $0x308] sm:$0xff] %v264
        %v266 = vld [vmem:[%s68 + $0x310] sm:$0xff]
        %267 = vst [vmem:[%s69 + $0x310] sm:$0xff] %v266
        %v268 = vld [vmem:[%s68 + $0x318] sm:$0xff]
        %269 = vst [vmem:[%s69 + $0x318] sm:$0xff] %v268
        %v270 = vld [vmem:[%s68 + $0x320] sm:$0xff]
        %271 = vst [vmem:[%s69 + $0x320] sm:$0xff] %v270
        %v272 = vld [vmem:[%s68 + $0x328] sm:$0xff]
        %273 = vst [vmem:[%s69 + $0x328] sm:$0xff] %v272
        %v274 = vld [vmem:[%s68 + $0x330] sm:$0xff]
        %275 = vst [vmem:[%s69 + $0x330] sm:$0xff] %v274
        %v276 = vld [vmem:[%s68 + $0x338] sm:$0xff]
        %277 = vst [vmem:[%s69 + $0x338] sm:$0xff] %v276
        %v278 = vld [vmem:[%s68 + $0x340] sm:$0xff]
        %279 = vst [vmem:[%s69 + $0x340] sm:$0xff] %v278
        %v280 = vld [vmem:[%s68 + $0x348] sm:$0xff]
        %281 = vst [vmem:[%s69 + $0x348] sm:$0xff] %v280
        %v282 = vld [vmem:[%s68 + $0x350] sm:$0xff]
        %283 = vst [vmem:[%s69 + $0x350] sm:$0xff] %v282
        %v284 = vld [vmem:[%s68 + $0x358] sm:$0xff]
        %285 = vst [vmem:[%s69 + $0x358] sm:$0xff] %v284
        %v286 = vld [vmem:[%s68 + $0x360] sm:$0xff]
        %287 = vst [vmem:[%s69 + $0x360] sm:$0xff] %v286
        %v288 = vld [vmem:[%s68 + $0x368] sm:$0xff]
        %289 = vst [vmem:[%s69 + $0x368] sm:$0xff] %v288
        %v290 = vld [vmem:[%s68 + $0x370] sm:$0xff]
        %291 = vst [vmem:[%s69 + $0x370] sm:$0xff] %v290
        %v292 = vld [vmem:[%s68 + $0x378] sm:$0xff]
        %293 = vst [vmem:[%s69 + $0x378] sm:$0xff] %v292
        %v294 = vld [vmem:[%s68 + $0x380] sm:$0xff]
        %295 = vst [vmem:[%s69 + $0x380] sm:$0xff] %v294
        %v296 = vld [vmem:[%s68 + $0x388] sm:$0xff]
        %297 = vst [vmem:[%s69 + $0x388] sm:$0xff] %v296
        %v298 = vld [vmem:[%s68 + $0x390] sm:$0xff]
        %299 = vst [vmem:[%s69 + $0x390] sm:$0xff] %v298
        %v300 = vld [vmem:[%s68 + $0x398] sm:$0xff]
        %301 = vst [vmem:[%s69 + $0x398] sm:$0xff] %v300
        %v302 = vld [vmem:[%s68 + $0x3a0] sm:$0xff]
        %303 = vst [vmem:[%s69 + $0x3a0] sm:$0xff] %v302
        %v304 = vld [vmem:[%s68 + $0x3a8] sm:$0xff]
        %305 = vst [vmem:[%s69 + $0x3a8] sm:$0xff] %v304
        %v306 = vld [vmem:[%s68 + $0x3b0] sm:$0xff]
        %307 = vst [vmem:[%s69 + $0x3b0] sm:$0xff] %v306
        %v308 = vld [vmem:[%s68 + $0x3b8] sm:$0xff]
        %309 = vst [vmem:[%s69 + $0x3b8] sm:$0xff] %v308
        %v310 = vld [vmem:[%s68 + $0x3c0] sm:$0xff]
        %311 = vst [vmem:[%s69 + $0x3c0] sm:$0xff] %v310
        %v312 = vld [vmem:[%s68 + $0x3c8] sm:$0xff]
        %313 = vst [vmem:[%s69 + $0x3c8] sm:$0xff] %v312
        %v314 = vld [vmem:[%s68 + $0x3d0] sm:$0xff]
        %315 = vst [vmem:[%s69 + $0x3d0] sm:$0xff] %v314
        %v316 = vld [vmem:[%s68 + $0x3d8] sm:$0xff]
        %317 = vst [vmem:[%s69 + $0x3d8] sm:$0xff] %v316
        %v318 = vld [vmem:[%s68 + $0x3e0] sm:$0xff]
        %319 = vst [vmem:[%s69 + $0x3e0] sm:$0xff] %v318
        %v320 = vld [vmem:[%s68 + $0x3e8] sm:$0xff]
        %321 = vst [vmem:[%s69 + $0x3e8] sm:$0xff] %v320
        %v322 = vld [vmem:[%s68 + $0x3f0] sm:$0xff]
        %323 = vst [vmem:[%s69 + $0x3f0] sm:$0xff] %v322
        %v324 = vld [vmem:[%s68 + $0x3f8] sm:$0xff]
        %325 = vst [vmem:[%s69 + $0x3f8] sm:$0xff] %v324
        %v326 = vld [vmem:[%s68 + $0x400] sm:$0xff]
        %327 = vst [vmem:[%s69 + $0x400] sm:$0xff] %v326
        %v328 = vld [vmem:[%s68 + $0x408] sm:$0xff]
        %329 = vst [vmem:[%s69 + $0x408] sm:$0xff] %v328
        %v330 = vld [vmem:[%s68 + $0x410] sm:$0xff]
        %331 = vst [vmem:[%s69 + $0x410] sm:$0xff] %v330
        %v332 = vld [vmem:[%s68 + $0x418] sm:$0xff]
        %333 = vst [vmem:[%s69 + $0x418] sm:$0xff] %v332
        %v334 = vld [vmem:[%s68 + $0x420] sm:$0xff]
        %335 = vst [vmem:[%s69 + $0x420] sm:$0xff] %v334
        %v336 = vld [vmem:[%s68 + $0x428] sm:$0xff]
        %337 = vst [vmem:[%s69 + $0x428] sm:$0xff] %v336
        %v338 = vld [vmem:[%s68 + $0x430] sm:$0xff]
        %339 = vst [vmem:[%s69 + $0x430] sm:$0xff] %v338
        %v340 = vld [vmem:[%s68 + $0x438] sm:$0xff]
        %341 = vst [vmem:[%s69 + $0x438] sm:$0xff] %v340
        %v342 = vld [vmem:[%s68 + $0x440] sm:$0xff]
        %343 = vst [vmem:[%s69 + $0x440] sm:$0xff] %v342
        %v344 = vld [vmem:[%s68 + $0x448] sm:$0xff]
        %345 = vst [vmem:[%s69 + $0x448] sm:$0xff] %v344
        %v346 = vld [vmem:[%s68 + $0x450] sm:$0xff]
        %347 = vst [vmem:[%s69 + $0x450] sm:$0xff] %v346
        %v348 = vld [vmem:[%s68 + $0x458] sm:$0xff]
        %349 = vst [vmem:[%s69 + $0x458] sm:$0xff] %v348
        %v350 = vld [vmem:[%s68 + $0x460] sm:$0xff]
        %351 = vst [vmem:[%s69 + $0x460] sm:$0xff] %v350
        %v352 = vld [vmem:[%s68 + $0x468] sm:$0xff]
        %353 = vst [vmem:[%s69 + $0x468] sm:$0xff] %v352
        %v354 = vld [vmem:[%s68 + $0x470] sm:$0xff]
        %355 = vst [vmem:[%s69 + $0x470] sm:$0xff] %v354
        %v356 = vld [vmem:[%s68 + $0x478] sm:$0xff]
        %357 = vst [vmem:[%s69 + $0x478] sm:$0xff] %v356
        %v358 = vld [vmem:[%s68 + $0x480] sm:$0xff]
        %359 = vst [vmem:[%s69 + $0x480] sm:$0xff] %v358
        %v360 = vld [vmem:[%s68 + $0x488] sm:$0xff]
        %361 = vst [vmem:[%s69 + $0x488] sm:$0xff] %v360
        %v362 = vld [vmem:[%s68 + $0x490] sm:$0xff]
        %363 = vst [vmem:[%s69 + $0x490] sm:$0xff] %v362
        %v364 = vld [vmem:[%s68 + $0x498] sm:$0xff]
        %365 = vst [vmem:[%s69 + $0x498] sm:$0xff] %v364
        %v366 = vld [vmem:[%s68 + $0x4a0] sm:$0xff]
        %367 = vst [vmem:[%s69 + $0x4a0] sm:$0xff] %v366
        %v368 = vld [vmem:[%s68 + $0x4a8] sm:$0xff]
        %369 = vst [vmem:[%s69 + $0x4a8] sm:$0xff] %v368
        %v370 = vld [vmem:[%s68 + $0x4b0] sm:$0xff]
        %371 = vst [vmem:[%s69 + $0x4b0] sm:$0xff] %v370
        %v372 = vld [vmem:[%s68 + $0x4b8] sm:$0xff]
        %373 = vst [vmem:[%s69 + $0x4b8] sm:$0xff] %v372
        %v374 = vld [vmem:[%s68 + $0x4c0] sm:$0xff]
        %375 = vst [vmem:[%s69 + $0x4c0] sm:$0xff] %v374
        %v376 = vld [vmem:[%s68 + $0x4c8] sm:$0xff]
        %377 = vst [vmem:[%s69 + $0x4c8] sm:$0xff] %v376
        %v378 = vld [vmem:[%s68 + $0x4d0] sm:$0xff]
        %379 = vst [vmem:[%s69 + $0x4d0] sm:$0xff] %v378
        %v380 = vld [vmem:[%s68 + $0x4d8] sm:$0xff]
        %381 = vst [vmem:[%s69 + $0x4d8] sm:$0xff] %v380
        %v382 = vld [vmem:[%s68 + $0x4e0] sm:$0xff]
        %383 = vst [vmem:[%s69 + $0x4e0] sm:$0xff] %v382
        %v384 = vld [vmem:[%s68 + $0x4e8] sm:$0xff]
        %385 = vst [vmem:[%s69 + $0x4e8] sm:$0xff] %v384
        %v386 = vld [vmem:[%s68 + $0x4f0] sm:$0xff]
        %387 = vst [vmem:[%s69 + $0x4f0] sm:$0xff] %v386
        %v388 = vld [vmem:[%s68 + $0x4f8] sm:$0xff]
        %389 = vst [vmem:[%s69 + $0x4f8] sm:$0xff] %v388
        %v390 = vld [vmem:[%s68 + $0x500] sm:$0xff]
        %391 = vst [vmem:[%s69 + $0x500] sm:$0xff] %v390
        %v392 = vld [vmem:[%s68 + $0x508] sm:$0xff]
        %393 = vst [vmem:[%s69 + $0x508] sm:$0xff] %v392
        %v394 = vld [vmem:[%s68 + $0x510] sm:$0xff]
        %395 = vst [vmem:[%s69 + $0x510] sm:$0xff] %v394
        %v396 = vld [vmem:[%s68 + $0x518] sm:$0xff]
        %397 = vst [vmem:[%s69 + $0x518] sm:$0xff] %v396
        %v398 = vld [vmem:[%s68 + $0x520] sm:$0xff]
        %399 = vst [vmem:[%s69 + $0x520] sm:$0xff] %v398
        %v400 = vld [vmem:[%s68 + $0x528] sm:$0xff]
        %401 = vst [vmem:[%s69 + $0x528] sm:$0xff] %v400
        %v402 = vld [vmem:[%s68 + $0x530] sm:$0xff]
        %403 = vst [vmem:[%s69 + $0x530] sm:$0xff] %v402
        %v404 = vld [vmem:[%s68 + $0x538] sm:$0xff]
        %405 = vst [vmem:[%s69 + $0x538] sm:$0xff] %v404
        %v406 = vld [vmem:[%s68 + $0x540] sm:$0xff]
        %407 = vst [vmem:[%s69 + $0x540] sm:$0xff] %v406
        %v408 = vld [vmem:[%s68 + $0x548] sm:$0xff]
        %409 = vst [vmem:[%s69 + $0x548] sm:$0xff] %v408
        %v410 = vld [vmem:[%s68 + $0x550] sm:$0xff]
        %411 = vst [vmem:[%s69 + $0x550] sm:$0xff] %v410
        %v412 = vld [vmem:[%s68 + $0x558] sm:$0xff]
        %413 = vst [vmem:[%s69 + $0x558] sm:$0xff] %v412
        %v414 = vld [vmem:[%s68 + $0x560] sm:$0xff]
        %415 = vst [vmem:[%s69 + $0x560] sm:$0xff] %v414
        %v416 = vld [vmem:[%s68 + $0x568] sm:$0xff]
        %417 = vst [vmem:[%s69 + $0x568] sm:$0xff] %v416
        %v418 = vld [vmem:[%s68 + $0x570] sm:$0xff]
        %419 = vst [vmem:[%s69 + $0x570] sm:$0xff] %v418
        %v420 = vld [vmem:[%s68 + $0x578] sm:$0xff]
        %421 = vst [vmem:[%s69 + $0x578] sm:$0xff] %v420
        %v422 = vld [vmem:[%s68 + $0x580] sm:$0xff]
        %423 = vst [vmem:[%s69 + $0x580] sm:$0xff] %v422
        %v424 = vld [vmem:[%s68 + $0x588] sm:$0xff]
        %425 = vst [vmem:[%s69 + $0x588] sm:$0xff] %v424
        %v426 = vld [vmem:[%s68 + $0x590] sm:$0xff]
        %427 = vst [vmem:[%s69 + $0x590] sm:$0xff] %v426
        %v428 = vld [vmem:[%s68 + $0x598] sm:$0xff]
        %429 = vst [vmem:[%s69 + $0x598] sm:$0xff] %v428
        %v430 = vld [vmem:[%s68 + $0x5a0] sm:$0xff]
        %431 = vst [vmem:[%s69 + $0x5a0] sm:$0xff] %v430
        %v432 = vld [vmem:[%s68 + $0x5a8] sm:$0xff]
        %433 = vst [vmem:[%s69 + $0x5a8] sm:$0xff] %v432
        %v434 = vld [vmem:[%s68 + $0x5b0] sm:$0xff]
        %435 = vst [vmem:[%s69 + $0x5b0] sm:$0xff] %v434
        %v436 = vld [vmem:[%s68 + $0x5b8] sm:$0xff]
        %437 = vst [vmem:[%s69 + $0x5b8] sm:$0xff] %v436
        %v438 = vld [vmem:[%s68 + $0x5c0] sm:$0xff]
        %439 = vst [vmem:[%s69 + $0x5c0] sm:$0xff] %v438
        %v440 = vld [vmem:[%s68 + $0x5c8] sm:$0xff]
        %441 = vst [vmem:[%s69 + $0x5c8] sm:$0xff] %v440
        %v442 = vld [vmem:[%s68 + $0x5d0] sm:$0xff]
        %443 = vst [vmem:[%s69 + $0x5d0] sm:$0xff] %v442
        %v444 = vld [vmem:[%s68 + $0x5d8] sm:$0xff]
        %445 = vst [vmem:[%s69 + $0x5d8] sm:$0xff] %v444
        %v446 = vld [vmem:[%s68 + $0x5e0] sm:$0xff]
        %447 = vst [vmem:[%s69 + $0x5e0] sm:$0xff] %v446
        %v448 = vld [vmem:[%s68 + $0x5e8] sm:$0xff]
        %449 = vst [vmem:[%s69 + $0x5e8] sm:$0xff] %v448
        %v450 = vld [vmem:[%s68 + $0x5f0] sm:$0xff]
        %451 = vst [vmem:[%s69 + $0x5f0] sm:$0xff] %v450
        %v452 = vld [vmem:[%s68 + $0x5f8] sm:$0xff]
        %453 = vst [vmem:[%s69 + $0x5f8] sm:$0xff] %v452
        %v454 = vld [vmem:[%s68 + $0x600] sm:$0xff]
        %455 = vst [vmem:[%s69 + $0x600] sm:$0xff] %v454
        %v456 = vld [vmem:[%s68 + $0x608] sm:$0xff]
        %457 = vst [vmem:[%s69 + $0x608] sm:$0xff] %v456
        %v458 = vld [vmem:[%s68 + $0x610] sm:$0xff]
        %459 = vst [vmem:[%s69 + $0x610] sm:$0xff] %v458
        %v460 = vld [vmem:[%s68 + $0x618] sm:$0xff]
        %461 = vst [vmem:[%s69 + $0x618] sm:$0xff] %v460
        %v462 = vld [vmem:[%s68 + $0x620] sm:$0xff]
        %463 = vst [vmem:[%s69 + $0x620] sm:$0xff] %v462
        %v464 = vld [vmem:[%s68 + $0x628] sm:$0xff]
        %465 = vst [vmem:[%s69 + $0x628] sm:$0xff] %v464
        %v466 = vld [vmem:[%s68 + $0x630] sm:$0xff]
        %467 = vst [vmem:[%s69 + $0x630] sm:$0xff] %v466
        %v468 = vld [vmem:[%s68 + $0x638] sm:$0xff]
        %469 = vst [vmem:[%s69 + $0x638] sm:$0xff] %v468
        %v470 = vld [vmem:[%s68 + $0x640] sm:$0xff]
        %471 = vst [vmem:[%s69 + $0x640] sm:$0xff] %v470
        %v472 = vld [vmem:[%s68 + $0x648] sm:$0xff]
        %473 = vst [vmem:[%s69 + $0x648] sm:$0xff] %v472
        %v474 = vld [vmem:[%s68 + $0x650] sm:$0xff]
        %475 = vst [vmem:[%s69 + $0x650] sm:$0xff] %v474
        %v476 = vld [vmem:[%s68 + $0x658] sm:$0xff]
        %477 = vst [vmem:[%s69 + $0x658] sm:$0xff] %v476
        %v478 = vld [vmem:[%s68 + $0x660] sm:$0xff]
        %479 = vst [vmem:[%s69 + $0x660] sm:$0xff] %v478
        %v480 = vld [vmem:[%s68 + $0x668] sm:$0xff]
        %481 = vst [vmem:[%s69 + $0x668] sm:$0xff] %v480
        %v482 = vld [vmem:[%s68 + $0x670] sm:$0xff]
        %483 = vst [vmem:[%s69 + $0x670] sm:$0xff] %v482
        %v484 = vld [vmem:[%s68 + $0x678] sm:$0xff]
        %485 = vst [vmem:[%s69 + $0x678] sm:$0xff] %v484
        %v486 = vld [vmem:[%s68 + $0x680] sm:$0xff]
        %487 = vst [vmem:[%s69 + $0x680] sm:$0xff] %v486
        %v488 = vld [vmem:[%s68 + $0x688] sm:$0xff]
        %489 = vst [vmem:[%s69 + $0x688] sm:$0xff] %v488
        %v490 = vld [vmem:[%s68 + $0x690] sm:$0xff]
        %491 = vst [vmem:[%s69 + $0x690] sm:$0xff] %v490
        %v492 = vld [vmem:[%s68 + $0x698] sm:$0xff]
        %493 = vst [vmem:[%s69 + $0x698] sm:$0xff] %v492
        %v494 = vld [vmem:[%s68 + $0x6a0] sm:$0xff]
        %495 = vst [vmem:[%s69 + $0x6a0] sm:$0xff] %v494
        %v496 = vld [vmem:[%s68 + $0x6a8] sm:$0xff]
        %497 = vst [vmem:[%s69 + $0x6a8] sm:$0xff] %v496
        %v498 = vld [vmem:[%s68 + $0x6b0] sm:$0xff]
        %499 = vst [vmem:[%s69 + $0x6b0] sm:$0xff] %v498
        %v500 = vld [vmem:[%s68 + $0x6b8] sm:$0xff]
        %501 = vst [vmem:[%s69 + $0x6b8] sm:$0xff] %v500
        %v502 = vld [vmem:[%s68 + $0x6c0] sm:$0xff]
        %503 = vst [vmem:[%s69 + $0x6c0] sm:$0xff] %v502
        %v504 = vld [vmem:[%s68 + $0x6c8] sm:$0xff]
        %505 = vst [vmem:[%s69 + $0x6c8] sm:$0xff] %v504
        %v506 = vld [vmem:[%s68 + $0x6d0] sm:$0xff]
        %507 = vst [vmem:[%s69 + $0x6d0] sm:$0xff] %v506
        %v508 = vld [vmem:[%s68 + $0x6d8] sm:$0xff]
        %509 = vst [vmem:[%s69 + $0x6d8] sm:$0xff] %v508
        %v510 = vld [vmem:[%s68 + $0x6e0] sm:$0xff]
        %511 = vst [vmem:[%s69 + $0x6e0] sm:$0xff] %v510
        %v512 = vld [vmem:[%s68 + $0x6e8] sm:$0xff]
        %513 = vst [vmem:[%s69 + $0x6e8] sm:$0xff] %v512
        %v514 = vld [vmem:[%s68 + $0x6f0] sm:$0xff]
        %515 = vst [vmem:[%s69 + $0x6f0] sm:$0xff] %v514
        %v516 = vld [vmem:[%s68 + $0x6f8] sm:$0xff]
        %517 = vst [vmem:[%s69 + $0x6f8] sm:$0xff] %v516
        %v518 = vld [vmem:[%s68 + $0x700] sm:$0xff]
        %519 = vst [vmem:[%s69 + $0x700] sm:$0xff] %v518
        %v520 = vld [vmem:[%s68 + $0x708] sm:$0xff]
        %521 = vst [vmem:[%s69 + $0x708] sm:$0xff] %v520
        %v522 = vld [vmem:[%s68 + $0x710] sm:$0xff]
        %523 = vst [vmem:[%s69 + $0x710] sm:$0xff] %v522
        %v524 = vld [vmem:[%s68 + $0x718] sm:$0xff]
        %525 = vst [vmem:[%s69 + $0x718] sm:$0xff] %v524
        %v526 = vld [vmem:[%s68 + $0x720] sm:$0xff]
        %527 = vst [vmem:[%s69 + $0x720] sm:$0xff] %v526
        %v528 = vld [vmem:[%s68 + $0x728] sm:$0xff]
        %529 = vst [vmem:[%s69 + $0x728] sm:$0xff] %v528
        %v530 = vld [vmem:[%s68 + $0x730] sm:$0xff]
        %531 = vst [vmem:[%s69 + $0x730] sm:$0xff] %v530
        %v532 = vld [vmem:[%s68 + $0x738] sm:$0xff]
        %533 = vst [vmem:[%s69 + $0x738] sm:$0xff] %v532
        %v534 = vld [vmem:[%s68 + $0x740] sm:$0xff]
        %535 = vst [vmem:[%s69 + $0x740] sm:$0xff] %v534
        %v536 = vld [vmem:[%s68 + $0x748] sm:$0xff]
        %537 = vst [vmem:[%s69 + $0x748] sm:$0xff] %v536
        %v538 = vld [vmem:[%s68 + $0x750] sm:$0xff]
        %539 = vst [vmem:[%s69 + $0x750] sm:$0xff] %v538
        %v540 = vld [vmem:[%s68 + $0x758] sm:$0xff]
        %541 = vst [vmem:[%s69 + $0x758] sm:$0xff] %v540
        %v542 = vld [vmem:[%s68 + $0x760] sm:$0xff]
        %543 = vst [vmem:[%s69 + $0x760] sm:$0xff] %v542
        %v544 = vld [vmem:[%s68 + $0x768] sm:$0xff]
        %545 = vst [vmem:[%s69 + $0x768] sm:$0xff] %v544
        %v546 = vld [vmem:[%s68 + $0x770] sm:$0xff]
        %547 = vst [vmem:[%s69 + $0x770] sm:$0xff] %v546
        %v548 = vld [vmem:[%s68 + $0x778] sm:$0xff]
        %549 = vst [vmem:[%s69 + $0x778] sm:$0xff] %v548
        %v550 = vld [vmem:[%s68 + $0x780] sm:$0xff]
        %551 = vst [vmem:[%s69 + $0x780] sm:$0xff] %v550
        %v552 = vld [vmem:[%s68 + $0x788] sm:$0xff]
        %553 = vst [vmem:[%s69 + $0x788] sm:$0xff] %v552
        %v554 = vld [vmem:[%s68 + $0x790] sm:$0xff]
        %555 = vst [vmem:[%s69 + $0x790] sm:$0xff] %v554
        %v556 = vld [vmem:[%s68 + $0x798] sm:$0xff]
        %557 = vst [vmem:[%s69 + $0x798] sm:$0xff] %v556
        %v558 = vld [vmem:[%s68 + $0x7a0] sm:$0xff]
        %559 = vst [vmem:[%s69 + $0x7a0] sm:$0xff] %v558
        %v560 = vld [vmem:[%s68 + $0x7a8] sm:$0xff]
        %561 = vst [vmem:[%s69 + $0x7a8] sm:$0xff] %v560
        %v562 = vld [vmem:[%s68 + $0x7b0] sm:$0xff]
        %563 = vst [vmem:[%s69 + $0x7b0] sm:$0xff] %v562
        %v564 = vld [vmem:[%s68 + $0x7b8] sm:$0xff]
        %565 = vst [vmem:[%s69 + $0x7b8] sm:$0xff] %v564
        %v566 = vld [vmem:[%s68 + $0x7c0] sm:$0xff]
        %567 = vst [vmem:[%s69 + $0x7c0] sm:$0xff] %v566
        %v568 = vld [vmem:[%s68 + $0x7c8] sm:$0xff]
        %569 = vst [vmem:[%s69 + $0x7c8] sm:$0xff] %v568
        %v570 = vld [vmem:[%s68 + $0x7d0] sm:$0xff]
        %571 = vst [vmem:[%s69 + $0x7d0] sm:$0xff] %v570
        %v572 = vld [vmem:[%s68 + $0x7d8] sm:$0xff]
        %573 = vst [vmem:[%s69 + $0x7d8] sm:$0xff] %v572
        %v574 = vld [vmem:[%s68 + $0x7e0] sm:$0xff]
        %575 = vst [vmem:[%s69 + $0x7e0] sm:$0xff] %v574
        %v576 = vld [vmem:[%s68 + $0x7e8] sm:$0xff]
        %577 = vst [vmem:[%s69 + $0x7e8] sm:$0xff] %v576
        %v578 = vld [vmem:[%s68 + $0x7f0] sm:$0xff]
        %579 = vst [vmem:[%s69 + $0x7f0] sm:$0xff] %v578
        %v580 = vld [vmem:[%s68 + $0x7f8] sm:$0xff]
        %581 = vst [vmem:[%s69 + $0x7f8] sm:$0xff] %v580
        %v582 = vld [vmem:[%s68 + $0x800] sm:$0xff]
        %583 = vst [vmem:[%s69 + $0x800] sm:$0xff] %v582
        %v584 = vld [vmem:[%s68 + $0x808] sm:$0xff]
        %585 = vst [vmem:[%s69 + $0x808] sm:$0xff] %v584
        %v586 = vld [vmem:[%s68 + $0x810] sm:$0xff]
        %587 = vst [vmem:[%s69 + $0x810] sm:$0xff] %v586
        %v588 = vld [vmem:[%s68 + $0x818] sm:$0xff]
        %589 = vst [vmem:[%s69 + $0x818] sm:$0xff] %v588
        %v590 = vld [vmem:[%s68 + $0x820] sm:$0xff]
        %591 = vst [vmem:[%s69 + $0x820] sm:$0xff] %v590
        %v592 = vld [vmem:[%s68 + $0x828] sm:$0xff]
        %593 = vst [vmem:[%s69 + $0x828] sm:$0xff] %v592
        %v594 = vld [vmem:[%s68 + $0x830] sm:$0xff]
        %595 = vst [vmem:[%s69 + $0x830] sm:$0xff] %v594
        %v596 = vld [vmem:[%s68 + $0x838] sm:$0xff]
        %597 = vst [vmem:[%s69 + $0x838] sm:$0xff] %v596
        %v598 = vld [vmem:[%s68 + $0x840] sm:$0xff]
        %599 = vst [vmem:[%s69 + $0x840] sm:$0xff] %v598
        %v600 = vld [vmem:[%s68 + $0x848] sm:$0xff]
        %601 = vst [vmem:[%s69 + $0x848] sm:$0xff] %v600
        %v602 = vld [vmem:[%s68 + $0x850] sm:$0xff]
        %603 = vst [vmem:[%s69 + $0x850] sm:$0xff] %v602
        %v604 = vld [vmem:[%s68 + $0x858] sm:$0xff]
        %605 = vst [vmem:[%s69 + $0x858] sm:$0xff] %v604
        %v606 = vld [vmem:[%s68 + $0x860] sm:$0xff]
        %607 = vst [vmem:[%s69 + $0x860] sm:$0xff] %v606
        %v608 = vld [vmem:[%s68 + $0x868] sm:$0xff]
        %609 = vst [vmem:[%s69 + $0x868] sm:$0xff] %v608
        %v610 = vld [vmem:[%s68 + $0x870] sm:$0xff]
        %611 = vst [vmem:[%s69 + $0x870] sm:$0xff] %v610
        %v612 = vld [vmem:[%s68 + $0x878] sm:$0xff]
        %613 = vst [vmem:[%s69 + $0x878] sm:$0xff] %v612
        %v614 = vld [vmem:[%s68 + $0x880] sm:$0xff]
        %615 = vst [vmem:[%s69 + $0x880] sm:$0xff] %v614
        %v616 = vld [vmem:[%s68 + $0x888] sm:$0xff]
        %617 = vst [vmem:[%s69 + $0x888] sm:$0xff] %v616
        %v618 = vld [vmem:[%s68 + $0x890] sm:$0xff]
        %619 = vst [vmem:[%s69 + $0x890] sm:$0xff] %v618
        %v620 = vld [vmem:[%s68 + $0x898] sm:$0xff]
        %621 = vst [vmem:[%s69 + $0x898] sm:$0xff] %v620
        %v622 = vld [vmem:[%s68 + $0x8a0] sm:$0xff]
        %623 = vst [vmem:[%s69 + $0x8a0] sm:$0xff] %v622
        %v624 = vld [vmem:[%s68 + $0x8a8] sm:$0xff]
        %625 = vst [vmem:[%s69 + $0x8a8] sm:$0xff] %v624
        %v626 = vld [vmem:[%s68 + $0x8b0] sm:$0xff]
        %627 = vst [vmem:[%s69 + $0x8b0] sm:$0xff] %v626
        %v628 = vld [vmem:[%s68 + $0x8b8] sm:$0xff]
        %629 = vst [vmem:[%s69 + $0x8b8] sm:$0xff] %v628
        %v630 = vld [vmem:[%s68 + $0x8c0] sm:$0xff]
        %631 = vst [vmem:[%s69 + $0x8c0] sm:$0xff] %v630
        %v632 = vld [vmem:[%s68 + $0x8c8] sm:$0xff]
        %633 = vst [vmem:[%s69 + $0x8c8] sm:$0xff] %v632
        %v634 = vld [vmem:[%s68 + $0x8d0] sm:$0xff]
        %635 = vst [vmem:[%s69 + $0x8d0] sm:$0xff] %v634
        %v636 = vld [vmem:[%s68 + $0x8d8] sm:$0xff]
        %637 = vst [vmem:[%s69 + $0x8d8] sm:$0xff] %v636
        %v638 = vld [vmem:[%s68 + $0x8e0] sm:$0xff]
        %639 = vst [vmem:[%s69 + $0x8e0] sm:$0xff] %v638
        %v640 = vld [vmem:[%s68 + $0x8e8] sm:$0xff]
        %641 = vst [vmem:[%s69 + $0x8e8] sm:$0xff] %v640
        %v642 = vld [vmem:[%s68 + $0x8f0] sm:$0xff]
        %643 = vst [vmem:[%s69 + $0x8f0] sm:$0xff] %v642
        %v644 = vld [vmem:[%s68 + $0x8f8] sm:$0xff]
        %645 = vst [vmem:[%s69 + $0x8f8] sm:$0xff] %v644
        %v646 = vld [vmem:[%s68 + $0x900] sm:$0xff]
        %647 = vst [vmem:[%s69 + $0x900] sm:$0xff] %v646
        %v648 = vld [vmem:[%s68 + $0x908] sm:$0xff]
        %649 = vst [vmem:[%s69 + $0x908] sm:$0xff] %v648
        %v650 = vld [vmem:[%s68 + $0x910] sm:$0xff]
        %651 = vst [vmem:[%s69 + $0x910] sm:$0xff] %v650
        %v652 = vld [vmem:[%s68 + $0x918] sm:$0xff]
        %653 = vst [vmem:[%s69 + $0x918] sm:$0xff] %v652
        %v654 = vld [vmem:[%s68 + $0x920] sm:$0xff]
        %655 = vst [vmem:[%s69 + $0x920] sm:$0xff] %v654
        %v656 = vld [vmem:[%s68 + $0x928] sm:$0xff]
        %657 = vst [vmem:[%s69 + $0x928] sm:$0xff] %v656
        %v658 = vld [vmem:[%s68 + $0x930] sm:$0xff]
        %659 = vst [vmem:[%s69 + $0x930] sm:$0xff] %v658
        %v660 = vld [vmem:[%s68 + $0x938] sm:$0xff]
        %661 = vst [vmem:[%s69 + $0x938] sm:$0xff] %v660
        %v662 = vld [vmem:[%s68 + $0x940] sm:$0xff]
        %663 = vst [vmem:[%s69 + $0x940] sm:$0xff] %v662
        %v664 = vld [vmem:[%s68 + $0x948] sm:$0xff]
        %665 = vst [vmem:[%s69 + $0x948] sm:$0xff] %v664
        %v666 = vld [vmem:[%s68 + $0x950] sm:$0xff]
        %667 = vst [vmem:[%s69 + $0x950] sm:$0xff] %v666
        %v668 = vld [vmem:[%s68 + $0x958] sm:$0xff]
        %669 = vst [vmem:[%s69 + $0x958] sm:$0xff] %v668
        %v670 = vld [vmem:[%s68 + $0x960] sm:$0xff]
        %671 = vst [vmem:[%s69 + $0x960] sm:$0xff] %v670
        %v672 = vld [vmem:[%s68 + $0x968] sm:$0xff]
        %673 = vst [vmem:[%s69 + $0x968] sm:$0xff] %v672
        %v674 = vld [vmem:[%s68 + $0x970] sm:$0xff]
        %675 = vst [vmem:[%s69 + $0x970] sm:$0xff] %v674
        %v676 = vld [vmem:[%s68 + $0x978] sm:$0xff]
        %677 = vst [vmem:[%s69 + $0x978] sm:$0xff] %v676
        %v678 = vld [vmem:[%s68 + $0x980] sm:$0xff]
        %679 = vst [vmem:[%s69 + $0x980] sm:$0xff] %v678
        %v680 = vld [vmem:[%s68 + $0x988] sm:$0xff]
        %681 = vst [vmem:[%s69 + $0x988] sm:$0xff] %v680
        %v682 = vld [vmem:[%s68 + $0x990] sm:$0xff]
        %683 = vst [vmem:[%s69 + $0x990] sm:$0xff] %v682
        %v684 = vld [vmem:[%s68 + $0x998] sm:$0xff]
        %685 = vst [vmem:[%s69 + $0x998] sm:$0xff] %v684
        %v686 = vld [vmem:[%s68 + $0x9a0] sm:$0xff]
        %687 = vst [vmem:[%s69 + $0x9a0] sm:$0xff] %v686
        %v688 = vld [vmem:[%s68 + $0x9a8] sm:$0xff]
        %689 = vst [vmem:[%s69 + $0x9a8] sm:$0xff] %v688
        %v690 = vld [vmem:[%s68 + $0x9b0] sm:$0xff]
        %691 = vst [vmem:[%s69 + $0x9b0] sm:$0xff] %v690
        %v692 = vld [vmem:[%s68 + $0x9b8] sm:$0xff]
        %693 = vst [vmem:[%s69 + $0x9b8] sm:$0xff] %v692
        %v694 = vld [vmem:[%s68 + $0x9c0] sm:$0xff]
        %695 = vst [vmem:[%s69 + $0x9c0] sm:$0xff] %v694
        %v696 = vld [vmem:[%s68 + $0x9c8] sm:$0xff]
        %697 = vst [vmem:[%s69 + $0x9c8] sm:$0xff] %v696
        %v698 = vld [vmem:[%s68 + $0x9d0] sm:$0xff]
        %699 = vst [vmem:[%s69 + $0x9d0] sm:$0xff] %v698
        %v700 = vld [vmem:[%s68 + $0x9d8] sm:$0xff]
        %701 = vst [vmem:[%s69 + $0x9d8] sm:$0xff] %v700
        %v702 = vld [vmem:[%s68 + $0x9e0] sm:$0xff]
        %703 = vst [vmem:[%s69 + $0x9e0] sm:$0xff] %v702
        %v704 = vld [vmem:[%s68 + $0x9e8] sm:$0xff]
        %705 = vst [vmem:[%s69 + $0x9e8] sm:$0xff] %v704
        %v706 = vld [vmem:[%s68 + $0x9f0] sm:$0xff]
        %707 = vst [vmem:[%s69 + $0x9f0] sm:$0xff] %v706
        %v708 = vld [vmem:[%s68 + $0x9f8] sm:$0xff]
        %709 = vst [vmem:[%s69 + $0x9f8] sm:$0xff] %v708
        %v710 = vld [vmem:[%s68 + $0xa00] sm:$0xff]
        %711 = vst [vmem:[%s69 + $0xa00] sm:$0xff] %v710
        %v712 = vld [vmem:[%s68 + $0xa08] sm:$0xff]
        %713 = vst [vmem:[%s69 + $0xa08] sm:$0xff] %v712
        %v714 = vld [vmem:[%s68 + $0xa10] sm:$0xff]
        %715 = vst [vmem:[%s69 + $0xa10] sm:$0xff] %v714
        %v716 = vld [vmem:[%s68 + $0xa18] sm:$0xff]
        %717 = vst [vmem:[%s69 + $0xa18] sm:$0xff] %v716
        %v718 = vld [vmem:[%s68 + $0xa20] sm:$0xff]
        %719 = vst [vmem:[%s69 + $0xa20] sm:$0xff] %v718
        %v720 = vld [vmem:[%s68 + $0xa28] sm:$0xff]
        %721 = vst [vmem:[%s69 + $0xa28] sm:$0xff] %v720
        %v722 = vld [vmem:[%s68 + $0xa30] sm:$0xff]
        %723 = vst [vmem:[%s69 + $0xa30] sm:$0xff] %v722
        %v724 = vld [vmem:[%s68 + $0xa38] sm:$0xff]
        %725 = vst [vmem:[%s69 + $0xa38] sm:$0xff] %v724
        %v726 = vld [vmem:[%s68 + $0xa40] sm:$0xff]
        %727 = vst [vmem:[%s69 + $0xa40] sm:$0xff] %v726
        %v728 = vld [vmem:[%s68 + $0xa48] sm:$0xff]
        %729 = vst [vmem:[%s69 + $0xa48] sm:$0xff] %v728
        %v730 = vld [vmem:[%s68 + $0xa50] sm:$0xff]
        %731 = vst [vmem:[%s69 + $0xa50] sm:$0xff] %v730
        %v732 = vld [vmem:[%s68 + $0xa58] sm:$0xff]
        %733 = vst [vmem:[%s69 + $0xa58] sm:$0xff] %v732
        %v734 = vld [vmem:[%s68 + $0xa60] sm:$0xff]
        %735 = vst [vmem:[%s69 + $0xa60] sm:$0xff] %v734
        %v736 = vld [vmem:[%s68 + $0xa68] sm:$0xff]
        %737 = vst [vmem:[%s69 + $0xa68] sm:$0xff] %v736
        %v738 = vld [vmem:[%s68 + $0xa70] sm:$0xff]
        %739 = vst [vmem:[%s69 + $0xa70] sm:$0xff] %v738
        %v740 = vld [vmem:[%s68 + $0xa78] sm:$0xff]
        %741 = vst [vmem:[%s69 + $0xa78] sm:$0xff] %v740
        %v742 = vld [vmem:[%s68 + $0xa80] sm:$0xff]
        %743 = vst [vmem:[%s69 + $0xa80] sm:$0xff] %v742
        %v744 = vld [vmem:[%s68 + $0xa88] sm:$0xff]
        %745 = vst [vmem:[%s69 + $0xa88] sm:$0xff] %v744
        %v746 = vld [vmem:[%s68 + $0xa90] sm:$0xff]
        %747 = vst [vmem:[%s69 + $0xa90] sm:$0xff] %v746
        %v748 = vld [vmem:[%s68 + $0xa98] sm:$0xff]
        %749 = vst [vmem:[%s69 + $0xa98] sm:$0xff] %v748
        %v750 = vld [vmem:[%s68 + $0xaa0] sm:$0xff]
        %751 = vst [vmem:[%s69 + $0xaa0] sm:$0xff] %v750
        %v752 = vld [vmem:[%s68 + $0xaa8] sm:$0xff]
        %753 = vst [vmem:[%s69 + $0xaa8] sm:$0xff] %v752
        %v754 = vld [vmem:[%s68 + $0xab0] sm:$0xff]
        %755 = vst [vmem:[%s69 + $0xab0] sm:$0xff] %v754
        %v756 = vld [vmem:[%s68 + $0xab8] sm:$0xff]
        %757 = vst [vmem:[%s69 + $0xab8] sm:$0xff] %v756
        %v758 = vld [vmem:[%s68 + $0xac0] sm:$0xff]
        %759 = vst [vmem:[%s69 + $0xac0] sm:$0xff] %v758
        %v760 = vld [vmem:[%s68 + $0xac8] sm:$0xff]
        %761 = vst [vmem:[%s69 + $0xac8] sm:$0xff] %v760
        %v762 = vld [vmem:[%s68 + $0xad0] sm:$0xff]
        %763 = vst [vmem:[%s69 + $0xad0] sm:$0xff] %v762
        %v764 = vld [vmem:[%s68 + $0xad8] sm:$0xff]
        %765 = vst [vmem:[%s69 + $0xad8] sm:$0xff] %v764
        %v766 = vld [vmem:[%s68 + $0xae0] sm:$0xff]
        %767 = vst [vmem:[%s69 + $0xae0] sm:$0xff] %v766
        %v768 = vld [vmem:[%s68 + $0xae8] sm:$0xff]
        %769 = vst [vmem:[%s69 + $0xae8] sm:$0xff] %v768
        %v770 = vld [vmem:[%s68 + $0xaf0] sm:$0xff]
        %771 = vst [vmem:[%s69 + $0xaf0] sm:$0xff] %v770
        %v772 = vld [vmem:[%s68 + $0xaf8] sm:$0xff]
        %773 = vst [vmem:[%s69 + $0xaf8] sm:$0xff] %v772
        %v774 = vld [vmem:[%s68 + $0xb00] sm:$0xff]
        %775 = vst [vmem:[%s69 + $0xb00] sm:$0xff] %v774
        %v776 = vld [vmem:[%s68 + $0xb08] sm:$0xff]
        %777 = vst [vmem:[%s69 + $0xb08] sm:$0xff] %v776
        %v778 = vld [vmem:[%s68 + $0xb10] sm:$0xff]
        %779 = vst [vmem:[%s69 + $0xb10] sm:$0xff] %v778
        %v780 = vld [vmem:[%s68 + $0xb18] sm:$0xff]
        %781 = vst [vmem:[%s69 + $0xb18] sm:$0xff] %v780
        %v782 = vld [vmem:[%s68 + $0xb20] sm:$0xff]
        %783 = vst [vmem:[%s69 + $0xb20] sm:$0xff] %v782
        %v784 = vld [vmem:[%s68 + $0xb28] sm:$0xff]
        %785 = vst [vmem:[%s69 + $0xb28] sm:$0xff] %v784
        %v786 = vld [vmem:[%s68 + $0xb30] sm:$0xff]
        %787 = vst [vmem:[%s69 + $0xb30] sm:$0xff] %v786
        %v788 = vld [vmem:[%s68 + $0xb38] sm:$0xff]
        %789 = vst [vmem:[%s69 + $0xb38] sm:$0xff] %v788
        %v790 = vld [vmem:[%s68 + $0xb40] sm:$0xff]
        %791 = vst [vmem:[%s69 + $0xb40] sm:$0xff] %v790
        %v792 = vld [vmem:[%s68 + $0xb48] sm:$0xff]
        %793 = vst [vmem:[%s69 + $0xb48] sm:$0xff] %v792
        %v794 = vld [vmem:[%s68 + $0xb50] sm:$0xff]
        %795 = vst [vmem:[%s69 + $0xb50] sm:$0xff] %v794
        %v796 = vld [vmem:[%s68 + $0xb58] sm:$0xff]
        %797 = vst [vmem:[%s69 + $0xb58] sm:$0xff] %v796
        %v798 = vld [vmem:[%s68 + $0xb60] sm:$0xff]
        %799 = vst [vmem:[%s69 + $0xb60] sm:$0xff] %v798
        %v800 = vld [vmem:[%s68 + $0xb68] sm:$0xff]
        %801 = vst [vmem:[%s69 + $0xb68] sm:$0xff] %v800
        %v802 = vld [vmem:[%s68 + $0xb70] sm:$0xff]
        %803 = vst [vmem:[%s69 + $0xb70] sm:$0xff] %v802
        %v804 = vld [vmem:[%s68 + $0xb78] sm:$0xff]
        %805 = vst [vmem:[%s69 + $0xb78] sm:$0xff] %v804
        %v806 = vld [vmem:[%s68 + $0xb80] sm:$0xff]
        %807 = vst [vmem:[%s69 + $0xb80] sm:$0xff] %v806
        %v808 = vld [vmem:[%s68 + $0xb88] sm:$0xff]
        %809 = vst [vmem:[%s69 + $0xb88] sm:$0xff] %v808
        %v810 = vld [vmem:[%s68 + $0xb90] sm:$0xff]
        %811 = vst [vmem:[%s69 + $0xb90] sm:$0xff] %v810
        %v812 = vld [vmem:[%s68 + $0xb98] sm:$0xff]
        %813 = vst [vmem:[%s69 + $0xb98] sm:$0xff] %v812
        %v814 = vld [vmem:[%s68 + $0xba0] sm:$0xff]
        %815 = vst [vmem:[%s69 + $0xba0] sm:$0xff] %v814
        %v816 = vld [vmem:[%s68 + $0xba8] sm:$0xff]
        %817 = vst [vmem:[%s69 + $0xba8] sm:$0xff] %v816
        %v818 = vld [vmem:[%s68 + $0xbb0] sm:$0xff]
        %819 = vst [vmem:[%s69 + $0xbb0] sm:$0xff] %v818
        %v820 = vld [vmem:[%s68 + $0xbb8] sm:$0xff]
        %821 = vst [vmem:[%s69 + $0xbb8] sm:$0xff] %v820
        %v822 = vld [vmem:[%s68 + $0xbc0] sm:$0xff]
        %823 = vst [vmem:[%s69 + $0xbc0] sm:$0xff] %v822
        %v824 = vld [vmem:[%s68 + $0xbc8] sm:$0xff]
        %825 = vst [vmem:[%s69 + $0xbc8] sm:$0xff] %v824
        %v826 = vld [vmem:[%s68 + $0xbd0] sm:$0xff]
        %827 = vst [vmem:[%s69 + $0xbd0] sm:$0xff] %v826
        %v828 = vld [vmem:[%s68 + $0xbd8] sm:$0xff]
        %829 = vst [vmem:[%s69 + $0xbd8] sm:$0xff] %v828
        %v830 = vld [vmem:[%s68 + $0xbe0] sm:$0xff]
        %831 = vst [vmem:[%s69 + $0xbe0] sm:$0xff] %v830
        %v832 = vld [vmem:[%s68 + $0xbe8] sm:$0xff]
        %833 = vst [vmem:[%s69 + $0xbe8] sm:$0xff] %v832
        %v834 = vld [vmem:[%s68 + $0xbf0] sm:$0xff]
        %835 = vst [vmem:[%s69 + $0xbf0] sm:$0xff] %v834
        %v836 = vld [vmem:[%s68 + $0xbf8] sm:$0xff]
        %837 = vst [vmem:[%s69 + $0xbf8] sm:$0xff] %v836
        %v838 = vld [vmem:[%s68 + $0xc00] sm:$0xff]
        %839 = vst [vmem:[%s69 + $0xc00] sm:$0xff] %v838
        %v840 = vld [vmem:[%s68 + $0xc08] sm:$0xff]
        %841 = vst [vmem:[%s69 + $0xc08] sm:$0xff] %v840
        %v842 = vld [vmem:[%s68 + $0xc10] sm:$0xff]
        %843 = vst [vmem:[%s69 + $0xc10] sm:$0xff] %v842
        %v844 = vld [vmem:[%s68 + $0xc18] sm:$0xff]
        %845 = vst [vmem:[%s69 + $0xc18] sm:$0xff] %v844
        %v846 = vld [vmem:[%s68 + $0xc20] sm:$0xff]
        %847 = vst [vmem:[%s69 + $0xc20] sm:$0xff] %v846
        %v848 = vld [vmem:[%s68 + $0xc28] sm:$0xff]
        %849 = vst [vmem:[%s69 + $0xc28] sm:$0xff] %v848
        %v850 = vld [vmem:[%s68 + $0xc30] sm:$0xff]
        %851 = vst [vmem:[%s69 + $0xc30] sm:$0xff] %v850
        %v852 = vld [vmem:[%s68 + $0xc38] sm:$0xff]
        %853 = vst [vmem:[%s69 + $0xc38] sm:$0xff] %v852
        %v854 = vld [vmem:[%s68 + $0xc40] sm:$0xff]
        %855 = vst [vmem:[%s69 + $0xc40] sm:$0xff] %v854
        %v856 = vld [vmem:[%s68 + $0xc48] sm:$0xff]
        %857 = vst [vmem:[%s69 + $0xc48] sm:$0xff] %v856
        %v858 = vld [vmem:[%s68 + $0xc50] sm:$0xff]
        %859 = vst [vmem:[%s69 + $0xc50] sm:$0xff] %v858
        %v860 = vld [vmem:[%s68 + $0xc58] sm:$0xff]
        %861 = vst [vmem:[%s69 + $0xc58] sm:$0xff] %v860
        %v862 = vld [vmem:[%s68 + $0xc60] sm:$0xff]
        %863 = vst [vmem:[%s69 + $0xc60] sm:$0xff] %v862
        %v864 = vld [vmem:[%s68 + $0xc68] sm:$0xff]
        %865 = vst [vmem:[%s69 + $0xc68] sm:$0xff] %v864
        %v866 = vld [vmem:[%s68 + $0xc70] sm:$0xff]
        %867 = vst [vmem:[%s69 + $0xc70] sm:$0xff] %v866
        %v868 = vld [vmem:[%s68 + $0xc78] sm:$0xff]
        %869 = vst [vmem:[%s69 + $0xc78] sm:$0xff] %v868
        %v870 = vld [vmem:[%s68 + $0xc80] sm:$0xff]
        %871 = vst [vmem:[%s69 + $0xc80] sm:$0xff] %v870
        %v872 = vld [vmem:[%s68 + $0xc88] sm:$0xff]
        %873 = vst [vmem:[%s69 + $0xc88] sm:$0xff] %v872
        %v874 = vld [vmem:[%s68 + $0xc90] sm:$0xff]
        %875 = vst [vmem:[%s69 + $0xc90] sm:$0xff] %v874
        %v876 = vld [vmem:[%s68 + $0xc98] sm:$0xff]
        %877 = vst [vmem:[%s69 + $0xc98] sm:$0xff] %v876
        %v878 = vld [vmem:[%s68 + $0xca0] sm:$0xff]
        %879 = vst [vmem:[%s69 + $0xca0] sm:$0xff] %v878
        %v880 = vld [vmem:[%s68 + $0xca8] sm:$0xff]
        %881 = vst [vmem:[%s69 + $0xca8] sm:$0xff] %v880
        %v882 = vld [vmem:[%s68 + $0xcb0] sm:$0xff]
        %883 = vst [vmem:[%s69 + $0xcb0] sm:$0xff] %v882
        %v884 = vld [vmem:[%s68 + $0xcb8] sm:$0xff]
        %885 = vst [vmem:[%s69 + $0xcb8] sm:$0xff] %v884
        %v886 = vld [vmem:[%s68 + $0xcc0] sm:$0xff]
        %887 = vst [vmem:[%s69 + $0xcc0] sm:$0xff] %v886
        %v888 = vld [vmem:[%s68 + $0xcc8] sm:$0xff]
        %889 = vst [vmem:[%s69 + $0xcc8] sm:$0xff] %v888
        %v890 = vld [vmem:[%s68 + $0xcd0] sm:$0xff]
        %891 = vst [vmem:[%s69 + $0xcd0] sm:$0xff] %v890
        %v892 = vld [vmem:[%s68 + $0xcd8] sm:$0xff]
        %893 = vst [vmem:[%s69 + $0xcd8] sm:$0xff] %v892
        %v894 = vld [vmem:[%s68 + $0xce0] sm:$0xff]
        %895 = vst [vmem:[%s69 + $0xce0] sm:$0xff] %v894
        %v896 = vld [vmem:[%s68 + $0xce8] sm:$0xff]
        %897 = vst [vmem:[%s69 + $0xce8] sm:$0xff] %v896
        %v898 = vld [vmem:[%s68 + $0xcf0] sm:$0xff]
        %899 = vst [vmem:[%s69 + $0xcf0] sm:$0xff] %v898
        %v900 = vld [vmem:[%s68 + $0xcf8] sm:$0xff]
        %901 = vst [vmem:[%s69 + $0xcf8] sm:$0xff] %v900
        %v902 = vld [vmem:[%s68 + $0xd00] sm:$0xff]
        %903 = vst [vmem:[%s69 + $0xd00] sm:$0xff] %v902
        %v904 = vld [vmem:[%s68 + $0xd08] sm:$0xff]
        %905 = vst [vmem:[%s69 + $0xd08] sm:$0xff] %v904
        %v906 = vld [vmem:[%s68 + $0xd10] sm:$0xff]
        %907 = vst [vmem:[%s69 + $0xd10] sm:$0xff] %v906
        %v908 = vld [vmem:[%s68 + $0xd18] sm:$0xff]
        %909 = vst [vmem:[%s69 + $0xd18] sm:$0xff] %v908
        %v910 = vld [vmem:[%s68 + $0xd20] sm:$0xff]
        %911 = vst [vmem:[%s69 + $0xd20] sm:$0xff] %v910
        %v912 = vld [vmem:[%s68 + $0xd28] sm:$0xff]
        %913 = vst [vmem:[%s69 + $0xd28] sm:$0xff] %v912
        %v914 = vld [vmem:[%s68 + $0xd30] sm:$0xff]
        %915 = vst [vmem:[%s69 + $0xd30] sm:$0xff] %v914
        %v916 = vld [vmem:[%s68 + $0xd38] sm:$0xff]
        %917 = vst [vmem:[%s69 + $0xd38] sm:$0xff] %v916
        %v918 = vld [vmem:[%s68 + $0xd40] sm:$0xff]
        %919 = vst [vmem:[%s69 + $0xd40] sm:$0xff] %v918
        %v920 = vld [vmem:[%s68 + $0xd48] sm:$0xff]
        %921 = vst [vmem:[%s69 + $0xd48] sm:$0xff] %v920
        %v922 = vld [vmem:[%s68 + $0xd50] sm:$0xff]
        %923 = vst [vmem:[%s69 + $0xd50] sm:$0xff] %v922
        %v924 = vld [vmem:[%s68 + $0xd58] sm:$0xff]
        %925 = vst [vmem:[%s69 + $0xd58] sm:$0xff] %v924
        %v926 = vld [vmem:[%s68 + $0xd60] sm:$0xff]
        %927 = vst [vmem:[%s69 + $0xd60] sm:$0xff] %v926
        %v928 = vld [vmem:[%s68 + $0xd68] sm:$0xff]
        %929 = vst [vmem:[%s69 + $0xd68] sm:$0xff] %v928
        %v930 = vld [vmem:[%s68 + $0xd70] sm:$0xff]
        %931 = vst [vmem:[%s69 + $0xd70] sm:$0xff] %v930
        %v932 = vld [vmem:[%s68 + $0xd78] sm:$0xff]
        %933 = vst [vmem:[%s69 + $0xd78] sm:$0xff] %v932
        %v934 = vld [vmem:[%s68 + $0xd80] sm:$0xff]
        %935 = vst [vmem:[%s69 + $0xd80] sm:$0xff] %v934
        %v936 = vld [vmem:[%s68 + $0xd88] sm:$0xff]
        %937 = vst [vmem:[%s69 + $0xd88] sm:$0xff] %v936
        %v938 = vld [vmem:[%s68 + $0xd90] sm:$0xff]
        %939 = vst [vmem:[%s69 + $0xd90] sm:$0xff] %v938
        %v940 = vld [vmem:[%s68 + $0xd98] sm:$0xff]
        %941 = vst [vmem:[%s69 + $0xd98] sm:$0xff] %v940
        %v942 = vld [vmem:[%s68 + $0xda0] sm:$0xff]
        %943 = vst [vmem:[%s69 + $0xda0] sm:$0xff] %v942
        %v944 = vld [vmem:[%s68 + $0xda8] sm:$0xff]
        %945 = vst [vmem:[%s69 + $0xda8] sm:$0xff] %v944
        %v946 = vld [vmem:[%s68 + $0xdb0] sm:$0xff]
        %947 = vst [vmem:[%s69 + $0xdb0] sm:$0xff] %v946
        %v948 = vld [vmem:[%s68 + $0xdb8] sm:$0xff]
        %949 = vst [vmem:[%s69 + $0xdb8] sm:$0xff] %v948
        %v950 = vld [vmem:[%s68 + $0xdc0] sm:$0xff]
        %951 = vst [vmem:[%s69 + $0xdc0] sm:$0xff] %v950
        %v952 = vld [vmem:[%s68 + $0xdc8] sm:$0xff]
        %953 = vst [vmem:[%s69 + $0xdc8] sm:$0xff] %v952
        %v954 = vld [vmem:[%s68 + $0xdd0] sm:$0xff]
        %955 = vst [vmem:[%s69 + $0xdd0] sm:$0xff] %v954
        %v956 = vld [vmem:[%s68 + $0xdd8] sm:$0xff]
        %957 = vst [vmem:[%s69 + $0xdd8] sm:$0xff] %v956
        %v958 = vld [vmem:[%s68 + $0xde0] sm:$0xff]
        %959 = vst [vmem:[%s69 + $0xde0] sm:$0xff] %v958
        %v960 = vld [vmem:[%s68 + $0xde8] sm:$0xff]
        %961 = vst [vmem:[%s69 + $0xde8] sm:$0xff] %v960
        %v962 = vld [vmem:[%s68 + $0xdf0] sm:$0xff]
        %963 = vst [vmem:[%s69 + $0xdf0] sm:$0xff] %v962
        %v964 = vld [vmem:[%s68 + $0xdf8] sm:$0xff]
        %965 = vst [vmem:[%s69 + $0xdf8] sm:$0xff] %v964
        %v966 = vld [vmem:[%s68 + $0xe00] sm:$0xff]
        %967 = vst [vmem:[%s69 + $0xe00] sm:$0xff] %v966
        %v968 = vld [vmem:[%s68 + $0xe08] sm:$0xff]
        %969 = vst [vmem:[%s69 + $0xe08] sm:$0xff] %v968
        %v970 = vld [vmem:[%s68 + $0xe10] sm:$0xff]
        %971 = vst [vmem:[%s69 + $0xe10] sm:$0xff] %v970
        %v972 = vld [vmem:[%s68 + $0xe18] sm:$0xff]
        %973 = vst [vmem:[%s69 + $0xe18] sm:$0xff] %v972
        %v974 = vld [vmem:[%s68 + $0xe20] sm:$0xff]
        %975 = vst [vmem:[%s69 + $0xe20] sm:$0xff] %v974
        %v976 = vld [vmem:[%s68 + $0xe28] sm:$0xff]
        %977 = vst [vmem:[%s69 + $0xe28] sm:$0xff] %v976
        %v978 = vld [vmem:[%s68 + $0xe30] sm:$0xff]
        %979 = vst [vmem:[%s69 + $0xe30] sm:$0xff] %v978
        %v980 = vld [vmem:[%s68 + $0xe38] sm:$0xff]
        %981 = vst [vmem:[%s69 + $0xe38] sm:$0xff] %v980
        %v982 = vld [vmem:[%s68 + $0xe40] sm:$0xff]
        %983 = vst [vmem:[%s69 + $0xe40] sm:$0xff] %v982
        %v984 = vld [vmem:[%s68 + $0xe48] sm:$0xff]
        %985 = vst [vmem:[%s69 + $0xe48] sm:$0xff] %v984
        %v986 = vld [vmem:[%s68 + $0xe50] sm:$0xff]
        %987 = vst [vmem:[%s69 + $0xe50] sm:$0xff] %v986
        %v988 = vld [vmem:[%s68 + $0xe58] sm:$0xff]
        %989 = vst [vmem:[%s69 + $0xe58] sm:$0xff] %v988
        %v990 = vld [vmem:[%s68 + $0xe60] sm:$0xff]
        %991 = vst [vmem:[%s69 + $0xe60] sm:$0xff] %v990
        %v992 = vld [vmem:[%s68 + $0xe68] sm:$0xff]
        %993 = vst [vmem:[%s69 + $0xe68] sm:$0xff] %v992
        %v994 = vld [vmem:[%s68 + $0xe70] sm:$0xff]
        %995 = vst [vmem:[%s69 + $0xe70] sm:$0xff] %v994
        %v996 = vld [vmem:[%s68 + $0xe78] sm:$0xff]
        %997 = vst [vmem:[%s69 + $0xe78] sm:$0xff] %v996
        %v998 = vld [vmem:[%s68 + $0xe80] sm:$0xff]
        %999 = vst [vmem:[%s69 + $0xe80] sm:$0xff] %v998
        %v1000 = vld [vmem:[%s68 + $0xe88] sm:$0xff]
        %1001 = vst [vmem:[%s69 + $0xe88] sm:$0xff] %v1000
        %v1002 = vld [vmem:[%s68 + $0xe90] sm:$0xff]
        %1003 = vst [vmem:[%s69 + $0xe90] sm:$0xff] %v1002
        %v1004 = vld [vmem:[%s68 + $0xe98] sm:$0xff]
        %1005 = vst [vmem:[%s69 + $0xe98] sm:$0xff] %v1004
        %v1006 = vld [vmem:[%s68 + $0xea0] sm:$0xff]
        %1007 = vst [vmem:[%s69 + $0xea0] sm:$0xff] %v1006
        %v1008 = vld [vmem:[%s68 + $0xea8] sm:$0xff]
        %1009 = vst [vmem:[%s69 + $0xea8] sm:$0xff] %v1008
        %v1010 = vld [vmem:[%s68 + $0xeb0] sm:$0xff]
        %1011 = vst [vmem:[%s69 + $0xeb0] sm:$0xff] %v1010
        %v1012 = vld [vmem:[%s68 + $0xeb8] sm:$0xff]
        %1013 = vst [vmem:[%s69 + $0xeb8] sm:$0xff] %v1012
        %v1014 = vld [vmem:[%s68 + $0xec0] sm:$0xff]
        %1015 = vst [vmem:[%s69 + $0xec0] sm:$0xff] %v1014
        %v1016 = vld [vmem:[%s68 + $0xec8] sm:$0xff]
        %1017 = vst [vmem:[%s69 + $0xec8] sm:$0xff] %v1016
        %v1018 = vld [vmem:[%s68 + $0xed0] sm:$0xff]
        %1019 = vst [vmem:[%s69 + $0xed0] sm:$0xff] %v1018
        %v1020 = vld [vmem:[%s68 + $0xed8] sm:$0xff]
        %1021 = vst [vmem:[%s69 + $0xed8] sm:$0xff] %v1020
        %v1022 = vld [vmem:[%s68 + $0xee0] sm:$0xff]
        %1023 = vst [vmem:[%s69 + $0xee0] sm:$0xff] %v1022
        %v1024 = vld [vmem:[%s68 + $0xee8] sm:$0xff]
        %1025 = vst [vmem:[%s69 + $0xee8] sm:$0xff] %v1024
        %v1026 = vld [vmem:[%s68 + $0xef0] sm:$0xff]
        %1027 = vst [vmem:[%s69 + $0xef0] sm:$0xff] %v1026
        %v1028 = vld [vmem:[%s68 + $0xef8] sm:$0xff]
        %1029 = vst [vmem:[%s69 + $0xef8] sm:$0xff] %v1028
        %v1030 = vld [vmem:[%s68 + $0xf00] sm:$0xff]
        %1031 = vst [vmem:[%s69 + $0xf00] sm:$0xff] %v1030
        %v1032 = vld [vmem:[%s68 + $0xf08] sm:$0xff]
        %1033 = vst [vmem:[%s69 + $0xf08] sm:$0xff] %v1032
        %v1034 = vld [vmem:[%s68 + $0xf10] sm:$0xff]
        %1035 = vst [vmem:[%s69 + $0xf10] sm:$0xff] %v1034
        %v1036 = vld [vmem:[%s68 + $0xf18] sm:$0xff]
        %1037 = vst [vmem:[%s69 + $0xf18] sm:$0xff] %v1036
        %v1038 = vld [vmem:[%s68 + $0xf20] sm:$0xff]
        %1039 = vst [vmem:[%s69 + $0xf20] sm:$0xff] %v1038
        %v1040 = vld [vmem:[%s68 + $0xf28] sm:$0xff]
        %1041 = vst [vmem:[%s69 + $0xf28] sm:$0xff] %v1040
        %v1042 = vld [vmem:[%s68 + $0xf30] sm:$0xff]
        %1043 = vst [vmem:[%s69 + $0xf30] sm:$0xff] %v1042
        %v1044 = vld [vmem:[%s68 + $0xf38] sm:$0xff]
        %1045 = vst [vmem:[%s69 + $0xf38] sm:$0xff] %v1044
        %v1046 = vld [vmem:[%s68 + $0xf40] sm:$0xff]
        %1047 = vst [vmem:[%s69 + $0xf40] sm:$0xff] %v1046
        %v1048 = vld [vmem:[%s68 + $0xf48] sm:$0xff]
        %1049 = vst [vmem:[%s69 + $0xf48] sm:$0xff] %v1048
        %v1050 = vld [vmem:[%s68 + $0xf50] sm:$0xff]
        %1051 = vst [vmem:[%s69 + $0xf50] sm:$0xff] %v1050
        %v1052 = vld [vmem:[%s68 + $0xf58] sm:$0xff]
        %1053 = vst [vmem:[%s69 + $0xf58] sm:$0xff] %v1052
        %v1054 = vld [vmem:[%s68 + $0xf60] sm:$0xff]
        %1055 = vst [vmem:[%s69 + $0xf60] sm:$0xff] %v1054
        %v1056 = vld [vmem:[%s68 + $0xf68] sm:$0xff]
        %1057 = vst [vmem:[%s69 + $0xf68] sm:$0xff] %v1056
        %v1058 = vld [vmem:[%s68 + $0xf70] sm:$0xff]
        %1059 = vst [vmem:[%s69 + $0xf70] sm:$0xff] %v1058
        %v1060 = vld [vmem:[%s68 + $0xf78] sm:$0xff]
        %1061 = vst [vmem:[%s69 + $0xf78] sm:$0xff] %v1060
        %v1062 = vld [vmem:[%s68 + $0xf80] sm:$0xff]
        %1063 = vst [vmem:[%s69 + $0xf80] sm:$0xff] %v1062
        %v1064 = vld [vmem:[%s68 + $0xf88] sm:$0xff]
        %1065 = vst [vmem:[%s69 + $0xf88] sm:$0xff] %v1064
        %v1066 = vld [vmem:[%s68 + $0xf90] sm:$0xff]
        %1067 = vst [vmem:[%s69 + $0xf90] sm:$0xff] %v1066
        %v1068 = vld [vmem:[%s68 + $0xf98] sm:$0xff]
        %1069 = vst [vmem:[%s69 + $0xf98] sm:$0xff] %v1068
        %v1070 = vld [vmem:[%s68 + $0xfa0] sm:$0xff]
        %1071 = vst [vmem:[%s69 + $0xfa0] sm:$0xff] %v1070
        %v1072 = vld [vmem:[%s68 + $0xfa8] sm:$0xff]
        %1073 = vst [vmem:[%s69 + $0xfa8] sm:$0xff] %v1072
        %v1074 = vld [vmem:[%s68 + $0xfb0] sm:$0xff]
        %1075 = vst [vmem:[%s69 + $0xfb0] sm:$0xff] %v1074
        %v1076 = vld [vmem:[%s68 + $0xfb8] sm:$0xff]
        %1077 = vst [vmem:[%s69 + $0xfb8] sm:$0xff] %v1076
        %v1078 = vld [vmem:[%s68 + $0xfc0] sm:$0xff]
        %1079 = vst [vmem:[%s69 + $0xfc0] sm:$0xff] %v1078
        %v1080 = vld [vmem:[%s68 + $0xfc8] sm:$0xff]
        %1081 = vst [vmem:[%s69 + $0xfc8] sm:$0xff] %v1080
        %v1082 = vld [vmem:[%s68 + $0xfd0] sm:$0xff]
        %1083 = vst [vmem:[%s69 + $0xfd0] sm:$0xff] %v1082
        %v1084 = vld [vmem:[%s68 + $0xfd8] sm:$0xff]
        %1085 = vst [vmem:[%s69 + $0xfd8] sm:$0xff] %v1084
        %v1086 = vld [vmem:[%s68 + $0xfe0] sm:$0xff]
        %1087 = vst [vmem:[%s69 + $0xfe0] sm:$0xff] %v1086
        %v1088 = vld [vmem:[%s68 + $0xfe8] sm:$0xff]
        %1089 = vst [vmem:[%s69 + $0xfe8] sm:$0xff] %v1088
        %v1090 = vld [vmem:[%s68 + $0xff0] sm:$0xff]
        %1091 = vst [vmem:[%s69 + $0xff0] sm:$0xff] %v1090
        %v1092 = vld [vmem:[%s68 + $0xff8] sm:$0xff]
        %1093 = vst [vmem:[%s69 + $0xff8] sm:$0xff] %v1092
        %v1094 = vld [vmem:[%s68 + $0x1000] sm:$0xff]
        %1095 = vst [vmem:[%s69 + $0x1000] sm:$0xff] %v1094
        %v1096 = vld [vmem:[%s68 + $0x1008] sm:$0xff]
        %1097 = vst [vmem:[%s69 + $0x1008] sm:$0xff] %v1096
        %v1098 = vld [vmem:[%s68 + $0x1010] sm:$0xff]
        %1099 = vst [vmem:[%s69 + $0x1010] sm:$0xff] %v1098
        %v1100 = vld [vmem:[%s68 + $0x1018] sm:$0xff]
        %1101 = vst [vmem:[%s69 + $0x1018] sm:$0xff] %v1100
        %v1102 = vld [vmem:[%s68 + $0x1020] sm:$0xff]
        %1103 = vst [vmem:[%s69 + $0x1020] sm:$0xff] %v1102
        %v1104 = vld [vmem:[%s68 + $0x1028] sm:$0xff]
        %1105 = vst [vmem:[%s69 + $0x1028] sm:$0xff] %v1104
        %v1106 = vld [vmem:[%s68 + $0x1030] sm:$0xff]
        %1107 = vst [vmem:[%s69 + $0x1030] sm:$0xff] %v1106
        %v1108 = vld [vmem:[%s68 + $0x1038] sm:$0xff]
        %1109 = vst [vmem:[%s69 + $0x1038] sm:$0xff] %v1108
        %v1110 = vld [vmem:[%s68 + $0x1040] sm:$0xff]
        %1111 = vst [vmem:[%s69 + $0x1040] sm:$0xff] %v1110
        %v1112 = vld [vmem:[%s68 + $0x1048] sm:$0xff]
        %1113 = vst [vmem:[%s69 + $0x1048] sm:$0xff] %v1112
        %v1114 = vld [vmem:[%s68 + $0x1050] sm:$0xff]
        %1115 = vst [vmem:[%s69 + $0x1050] sm:$0xff] %v1114
        %v1116 = vld [vmem:[%s68 + $0x1058] sm:$0xff]
        %1117 = vst [vmem:[%s69 + $0x1058] sm:$0xff] %v1116
        %v1118 = vld [vmem:[%s68 + $0x1060] sm:$0xff]
        %1119 = vst [vmem:[%s69 + $0x1060] sm:$0xff] %v1118
        %v1120 = vld [vmem:[%s68 + $0x1068] sm:$0xff]
        %1121 = vst [vmem:[%s69 + $0x1068] sm:$0xff] %v1120
        %v1122 = vld [vmem:[%s68 + $0x1070] sm:$0xff]
        %1123 = vst [vmem:[%s69 + $0x1070] sm:$0xff] %v1122
        %v1124 = vld [vmem:[%s68 + $0x1078] sm:$0xff]
        %1125 = vst [vmem:[%s69 + $0x1078] sm:$0xff] %v1124
        %v1126 = vld [vmem:[%s68 + $0x1080] sm:$0xff]
        %1127 = vst [vmem:[%s69 + $0x1080] sm:$0xff] %v1126
        %v1128 = vld [vmem:[%s68 + $0x1088] sm:$0xff]
        %1129 = vst [vmem:[%s69 + $0x1088] sm:$0xff] %v1128
        %v1130 = vld [vmem:[%s68 + $0x1090] sm:$0xff]
        %1131 = vst [vmem:[%s69 + $0x1090] sm:$0xff] %v1130
        %v1132 = vld [vmem:[%s68 + $0x1098] sm:$0xff]
        %1133 = vst [vmem:[%s69 + $0x1098] sm:$0xff] %v1132
        %v1134 = vld [vmem:[%s68 + $0x10a0] sm:$0xff]
        %1135 = vst [vmem:[%s69 + $0x10a0] sm:$0xff] %v1134
        %v1136 = vld [vmem:[%s68 + $0x10a8] sm:$0xff]
        %1137 = vst [vmem:[%s69 + $0x10a8] sm:$0xff] %v1136
        %v1138 = vld [vmem:[%s68 + $0x10b0] sm:$0xff]
        %1139 = vst [vmem:[%s69 + $0x10b0] sm:$0xff] %v1138
        %v1140 = vld [vmem:[%s68 + $0x10b8] sm:$0xff]
        %1141 = vst [vmem:[%s69 + $0x10b8] sm:$0xff] %v1140
        %v1142 = vld [vmem:[%s68 + $0x10c0] sm:$0xff]
        %1143 = vst [vmem:[%s69 + $0x10c0] sm:$0xff] %v1142
        %v1144 = vld [vmem:[%s68 + $0x10c8] sm:$0xff]
        %1145 = vst [vmem:[%s69 + $0x10c8] sm:$0xff] %v1144
        %v1146 = vld [vmem:[%s68 + $0x10d0] sm:$0xff]
        %1147 = vst [vmem:[%s69 + $0x10d0] sm:$0xff] %v1146
        %v1148 = vld [vmem:[%s68 + $0x10d8] sm:$0xff]
        %1149 = vst [vmem:[%s69 + $0x10d8] sm:$0xff] %v1148
        %v1150 = vld [vmem:[%s68 + $0x10e0] sm:$0xff]
        %1151 = vst [vmem:[%s69 + $0x10e0] sm:$0xff] %v1150
        %v1152 = vld [vmem:[%s68 + $0x10e8] sm:$0xff]
        %1153 = vst [vmem:[%s69 + $0x10e8] sm:$0xff] %v1152
        %v1154 = vld [vmem:[%s68 + $0x10f0] sm:$0xff]
        %1155 = vst [vmem:[%s69 + $0x10f0] sm:$0xff] %v1154
        %v1156 = vld [vmem:[%s68 + $0x10f8] sm:$0xff]
        %1157 = vst [vmem:[%s69 + $0x10f8] sm:$0xff] %v1156
        %v1158 = vld [vmem:[%s68 + $0x1100] sm:$0xff]
        %1159 = vst [vmem:[%s69 + $0x1100] sm:$0xff] %v1158
        %v1160 = vld [vmem:[%s68 + $0x1108] sm:$0xff]
        %1161 = vst [vmem:[%s69 + $0x1108] sm:$0xff] %v1160
        %v1162 = vld [vmem:[%s68 + $0x1110] sm:$0xff]
        %1163 = vst [vmem:[%s69 + $0x1110] sm:$0xff] %v1162
        %v1164 = vld [vmem:[%s68 + $0x1118] sm:$0xff]
        %1165 = vst [vmem:[%s69 + $0x1118] sm:$0xff] %v1164
        %v1166 = vld [vmem:[%s68 + $0x1120] sm:$0xff]
        %1167 = vst [vmem:[%s69 + $0x1120] sm:$0xff] %v1166
        %v1168 = vld [vmem:[%s68 + $0x1128] sm:$0xff]
        %1169 = vst [vmem:[%s69 + $0x1128] sm:$0xff] %v1168
        %v1170 = vld [vmem:[%s68 + $0x1130] sm:$0xff]
        %1171 = vst [vmem:[%s69 + $0x1130] sm:$0xff] %v1170
        %v1172 = vld [vmem:[%s68 + $0x1138] sm:$0xff]
        %1173 = vst [vmem:[%s69 + $0x1138] sm:$0xff] %v1172
        %v1174 = vld [vmem:[%s68 + $0x1140] sm:$0xff]
        %1175 = vst [vmem:[%s69 + $0x1140] sm:$0xff] %v1174
        %v1176 = vld [vmem:[%s68 + $0x1148] sm:$0xff]
        %1177 = vst [vmem:[%s69 + $0x1148] sm:$0xff] %v1176
        %v1178 = vld [vmem:[%s68 + $0x1150] sm:$0xff]
        %1179 = vst [vmem:[%s69 + $0x1150] sm:$0xff] %v1178
        %v1180 = vld [vmem:[%s68 + $0x1158] sm:$0xff]
        %1181 = vst [vmem:[%s69 + $0x1158] sm:$0xff] %v1180
        %v1182 = vld [vmem:[%s68 + $0x1160] sm:$0xff]
        %1183 = vst [vmem:[%s69 + $0x1160] sm:$0xff] %v1182
        %v1184 = vld [vmem:[%s68 + $0x1168] sm:$0xff]
        %1185 = vst [vmem:[%s69 + $0x1168] sm:$0xff] %v1184
        %v1186 = vld [vmem:[%s68 + $0x1170] sm:$0xff]
        %1187 = vst [vmem:[%s69 + $0x1170] sm:$0xff] %v1186
        %v1188 = vld [vmem:[%s68 + $0x1178] sm:$0xff]
        %1189 = vst [vmem:[%s69 + $0x1178] sm:$0xff] %v1188
        %v1190 = vld [vmem:[%s68 + $0x1180] sm:$0xff]
        %1191 = vst [vmem:[%s69 + $0x1180] sm:$0xff] %v1190
        %v1192 = vld [vmem:[%s68 + $0x1188] sm:$0xff]
        %1193 = vst [vmem:[%s69 + $0x1188] sm:$0xff] %v1192
        %v1194 = vld [vmem:[%s68 + $0x1190] sm:$0xff]
        %1195 = vst [vmem:[%s69 + $0x1190] sm:$0xff] %v1194
        %v1196 = vld [vmem:[%s68 + $0x1198] sm:$0xff]
        %1197 = vst [vmem:[%s69 + $0x1198] sm:$0xff] %v1196
        %v1198 = vld [vmem:[%s68 + $0x11a0] sm:$0xff]
        %1199 = vst [vmem:[%s69 + $0x11a0] sm:$0xff] %v1198
        %v1200 = vld [vmem:[%s68 + $0x11a8] sm:$0xff]
        %1201 = vst [vmem:[%s69 + $0x11a8] sm:$0xff] %v1200
        %v1202 = vld [vmem:[%s68 + $0x11b0] sm:$0xff]
        %1203 = vst [vmem:[%s69 + $0x11b0] sm:$0xff] %v1202
        %v1204 = vld [vmem:[%s68 + $0x11b8] sm:$0xff]
        %1205 = vst [vmem:[%s69 + $0x11b8] sm:$0xff] %v1204
        %v1206 = vld [vmem:[%s68 + $0x11c0] sm:$0xff]
        %1207 = vst [vmem:[%s69 + $0x11c0] sm:$0xff] %v1206
        %v1208 = vld [vmem:[%s68 + $0x11c8] sm:$0xff]
        %1209 = vst [vmem:[%s69 + $0x11c8] sm:$0xff] %v1208
        %v1210 = vld [vmem:[%s68 + $0x11d0] sm:$0xff]
        %1211 = vst [vmem:[%s69 + $0x11d0] sm:$0xff] %v1210
        %v1212 = vld [vmem:[%s68 + $0x11d8] sm:$0xff]
        %1213 = vst [vmem:[%s69 + $0x11d8] sm:$0xff] %v1212
        %v1214 = vld [vmem:[%s68 + $0x11e0] sm:$0xff]
        %1215 = vst [vmem:[%s69 + $0x11e0] sm:$0xff] %v1214
        %v1216 = vld [vmem:[%s68 + $0x11e8] sm:$0xff]
        %1217 = vst [vmem:[%s69 + $0x11e8] sm:$0xff] %v1216
        %v1218 = vld [vmem:[%s68 + $0x11f0] sm:$0xff]
        %1219 = vst [vmem:[%s69 + $0x11f0] sm:$0xff] %v1218
        %v1220 = vld [vmem:[%s68 + $0x11f8] sm:$0xff]
        %1221 = vst [vmem:[%s69 + $0x11f8] sm:$0xff] %v1220
      $region65: #{a3c_forward.1} parent=59 // loop_footer
        %s67 = sadd.s32 1, %s63
      $region66: #{a3c_forward.1} parent=59 // loop_footer_branch
        %62 = sbr.rel target = $region62
      $region67: #{a3c_forward.1} parent=59 // loop_exit
        _
    $region60: #{a3c_forward.1} parent=44 // pred_fallthru
      _
    %p1222 = pneg %p58
    // Predicated region
    $region68: #{a3c_forward.1} parent=44 // pred_check
      _
    $region69: #{a3c_forward.1} parent=44 // pred_check_branch
      %1224 = sbr.rel (%p58) target = $region71
    $region70: #{a3c_forward.1} parent=44 // pred_region
      %s1225 = sand.u32 4608, 7
    $region71: #{a3c_forward.1} parent=44 // pred_fallthru
      _
  $region45: #{a3c_forward.1} parent=0 // pred_fallthru
    _
  // Predicated region
  $region46: #{a3c_forward.1} parent=0 // pred_check
    %p42 = pneg %p38
  $region47: #{a3c_forward.1} parent=0 // pred_check_branch
    %44 = sbr.rel (%p42) target = $region49
  $region48: #{a3c_forward.1} parent=0 // pred_region
    %s45 = sshll.u32 1, 4608
    %s46 = ssub.s32 %s45, 1
    loop: start=0, step=1, limit=1
    $region50: #{a3c_forward.1} parent=48 // loop_pre_header
      _
    $region51: #{a3c_forward.1} parent=48 // loop_header
      %s48 = sphi 0, %s52
      %p49 = scmp.ge.s32.totalorder %s48, 1
      %s53 = sphi %s7, %s7
      %s54 = sphi [#allocation2], [#allocation2]
    $region52: #{a3c_forward.1} parent=48 // loop_header_branch
      %51 = sbr.rel (%p49) target = $region56
    $region53: #{a3c_forward.1} parent=48 // loop_body
      %v55 = vld [vmem:[%s53] sm:%s46]
      %56 = vst [vmem:[%s54] sm:%s46] %v55
    $region54: #{a3c_forward.1} parent=48 // loop_footer
      %s52 = sadd.s32 1, %s48
    $region55: #{a3c_forward.1} parent=48 // loop_footer_branch
      %47 = sbr.rel target = $region51
    $region56: #{a3c_forward.1} parent=48 // loop_exit
      _
  $region49: #{a3c_forward.1} parent=0 // pred_fallthru
    _
  // Predicated region
  $region72: #{a3c_forward.1} parent=0 // pred_check
    _
  $region73: #{a3c_forward.1} parent=0 // pred_check_branch
    %1228 = sbr.rel (0) target = $region75
  $region74: #{a3c_forward.1} parent=0 // pred_region
    %1229 = vsyncadd [#allocation3], 73728
  $region75: #{a3c_forward.1} parent=0 // pred_fallthru
    _
  %v1230 = vld [vmem:[%s0] sm:$0xff]
  %v1231 = vld [vmem:[%s0 + $0x8] sm:$0xff]
  %v1232 = vld [vmem:[%s0 + $0x10] sm:$0xff]
  %v1233 = vld [vmem:[%s0 + $0x18] sm:$0xff]
  %v1234 = vld [vmem:[%s0 + $0x20] sm:$0xff]
  %v1235 = vld [vmem:[%s0 + $0x28] sm:$0xff]
  %v1236 = vld [vmem:[%s0 + $0x30] sm:$0xff]
  %v1237 = vld [vmem:[%s0 + $0x38] sm:$0xff]
  %v1238 = vld [vmem:[%s0 + $0x40] sm:$0xff]
  %v1239 = vld [vmem:[%s0 + $0x48] sm:$0xff]
  %v1240 = vld [vmem:[%s0 + $0x50] sm:$0xff]
  %v1241 = vld [vmem:[%s0 + $0x58] sm:$0xff]
  %v1242 = vld [vmem:[%s0 + $0x60] sm:$0xff]
  %v1243 = vld [vmem:[%s0 + $0x68] sm:$0xff]
  %v1244 = vld [vmem:[%s0 + $0x70] sm:$0xff]
  %v1245 = vld [vmem:[%s0 + $0x78] sm:$0xff]
  %v1246 = vld [vmem:[%s0 + $0x80] sm:$0xff]
  %v1247 = vld [vmem:[%s0 + $0x88] sm:$0xff]
  %v1248 = vld [vmem:[%s0 + $0x90] sm:$0xff]
  %v1249 = vld [vmem:[%s0 + $0x98] sm:$0xff]
  %v1250 = vld [vmem:[%s0 + $0xa0] sm:$0xff]
  %v1251 = vld [vmem:[%s0 + $0xa8] sm:$0xff]
  %v1252 = vld [vmem:[%s0 + $0xb0] sm:$0xff]
  %v1253 = vld [vmem:[%s0 + $0xb8] sm:$0xff]
  %v1254 = vld [vmem:[%s0 + $0xc0] sm:$0xff]
  %v1255 = vld [vmem:[%s0 + $0xc8] sm:$0xff]
  %v1256 = vld [vmem:[%s0 + $0xd0] sm:$0xff]
  %v1257 = vld [vmem:[%s0 + $0xd8] sm:$0xff]
  %v1258 = vld [vmem:[%s0 + $0xe0] sm:$0xff]
  %v1259 = vld [vmem:[%s0 + $0xe8] sm:$0xff]
  %v1260 = vld [vmem:[%s0 + $0xf0] sm:$0xff]
  %v1261 = vld [vmem:[%s0 + $0xf8] sm:$0xff]
  %v1262 = vld [vmem:[%s0 + $0x100] sm:$0xff]
  %v1263 = vld [vmem:[%s0 + $0x108] sm:$0xff]
  %v1264 = vld [vmem:[%s0 + $0x110] sm:$0xff]
  %v1265 = vld [vmem:[%s0 + $0x118] sm:$0xff]
  %v1266 = vld [vmem:[%s0 + $0x120] sm:$0xff]
  %v1267 = vld [vmem:[%s0 + $0x128] sm:$0xff]
  %v1268 = vld [vmem:[%s0 + $0x130] sm:$0xff]
  %v1269 = vld [vmem:[%s0 + $0x138] sm:$0xff]
  %v1270 = vld [vmem:[%s0 + $0x140] sm:$0xff]
  %v1271 = vld [vmem:[%s0 + $0x148] sm:$0xff]
  %v1272 = vld [vmem:[%s0 + $0x150] sm:$0xff]
  %v1273 = vld [vmem:[%s0 + $0x158] sm:$0xff]
  %v1274 = vld [vmem:[%s0 + $0x160] sm:$0xff]
  %v1275 = vld [vmem:[%s0 + $0x168] sm:$0xff]
  %v1276 = vld [vmem:[%s0 + $0x170] sm:$0xff]
  %v1277 = vld [vmem:[%s0 + $0x178] sm:$0xff]
  %v1278 = vld [vmem:[%s0 + $0x180] sm:$0xff]
  %v1279 = vld [vmem:[%s0 + $0x188] sm:$0xff]
  %v1280 = vld [vmem:[%s0 + $0x190] sm:$0xff]
  %v1281 = vld [vmem:[%s0 + $0x198] sm:$0xff]
  %v1282 = vld [vmem:[%s0 + $0x1a0] sm:$0xff]
  %v1283 = vld [vmem:[%s0 + $0x1a8] sm:$0xff]
  %v1284 = vld [vmem:[%s0 + $0x1b0] sm:$0xff]
  %v1285 = vld [vmem:[%s0 + $0x1b8] sm:$0xff]
  %v1286 = vld [vmem:[%s0 + $0x1c0] sm:$0xff]
  %v1287 = vld [vmem:[%s0 + $0x1c8] sm:$0xff]
  %v1288 = vld [vmem:[%s0 + $0x1d0] sm:$0xff]
  %v1289 = vld [vmem:[%s0 + $0x1d8] sm:$0xff]
  %v1290 = vld [vmem:[%s0 + $0x1e0] sm:$0xff]
  %v1291 = vld [vmem:[%s0 + $0x1e8] sm:$0xff]
  %v1292 = vld [vmem:[%s0 + $0x1f0] sm:$0xff]
  %v1293 = vld [vmem:[%s0 + $0x1f8] sm:$0xff]
  %v1294 = vld [vmem:[%s0 + $0x200] sm:$0xff]
  %v1295 = vld [vmem:[%s0 + $0x208] sm:$0xff]
  %v1296 = vld [vmem:[%s0 + $0x210] sm:$0xff]
  %v1297 = vld [vmem:[%s0 + $0x218] sm:$0xff]
  %v1298 = vld [vmem:[%s0 + $0x220] sm:$0xff]
  %v1299 = vld [vmem:[%s0 + $0x228] sm:$0xff]
  %v1300 = vld [vmem:[%s0 + $0x230] sm:$0xff]
  %v1301 = vld [vmem:[%s0 + $0x238] sm:$0xff]
  %v1302 = vld [vmem:[%s0 + $0x240] sm:$0xff]
  %v1303 = vld [vmem:[%s0 + $0x248] sm:$0xff]
  %v1304 = vld [vmem:[%s0 + $0x250] sm:$0xff]
  %v1305 = vld [vmem:[%s0 + $0x258] sm:$0xff]
  %v1306 = vld [vmem:[%s0 + $0x260] sm:$0xff]
  %v1307 = vld [vmem:[%s0 + $0x268] sm:$0xff]
  %v1308 = vld [vmem:[%s0 + $0x270] sm:$0xff]
  %v1309 = vld [vmem:[%s0 + $0x278] sm:$0xff]
  %v1310 = vld [vmem:[%s1] sm:$0xf]
  %v1311 = vld [vmem:[%s1 + $0x4] sm:$0xf]
  %v1312 = vld [vmem:[%s1 + $0x8] sm:$0xf]
  %v1313 = vld [vmem:[%s1 + $0xc] sm:$0xf]
  %v1314 = vld [vmem:[%s1 + $0x10] sm:$0xf]
  %v1315 = vld [vmem:[%s1 + $0x14] sm:$0xf]
  %v1316 = vld [vmem:[%s1 + $0x18] sm:$0xf]
  %v1317 = vld [vmem:[%s1 + $0x1c] sm:$0xf]
  %v1318 = vld [vmem:[%s1 + $0x20] sm:$0xf]
  %v1319 = vld [vmem:[%s1 + $0x24] sm:$0xf]
  %v1320 = vld [vmem:[%s1 + $0x28] sm:$0xf]
  %v1321 = vld [vmem:[%s1 + $0x2c] sm:$0xf]
  %v1322 = vld [vmem:[%s1 + $0x30] sm:$0xf]
  %v1323 = vld [vmem:[%s1 + $0x34] sm:$0xf]
  %v1324 = vld [vmem:[%s1 + $0x38] sm:$0xf]
  %v1325 = vld [vmem:[%s1 + $0x3c] sm:$0xf]
  %v1326 = vld [vmem:[%s1 + $0x40] sm:$0xf]
  %v1327 = vld [vmem:[%s1 + $0x44] sm:$0xf]
  %v1328 = vld [vmem:[%s1 + $0x48] sm:$0xf]
  %v1329 = vld [vmem:[%s1 + $0x4c] sm:$0xf]
  %v1330 = vld [vmem:[%s1 + $0x50] sm:$0xf]
  %v1331 = vld [vmem:[%s1 + $0x54] sm:$0xf]
  %v1332 = vld [vmem:[%s1 + $0x58] sm:$0xf]
  %v1333 = vld [vmem:[%s1 + $0x5c] sm:$0xf]
  %v1334 = vld [vmem:[%s1 + $0x60] sm:$0xf]
  %v1335 = vld [vmem:[%s1 + $0x64] sm:$0xf]
  %v1336 = vld [vmem:[%s1 + $0x68] sm:$0xf]
  %v1337 = vld [vmem:[%s1 + $0x6c] sm:$0xf]
  %v1338 = vld [vmem:[%s1 + $0x70] sm:$0xf]
  %v1339 = vld [vmem:[%s1 + $0x74] sm:$0xf]
  %v1340 = vld [vmem:[%s1 + $0x78] sm:$0xf]
  %v1341 = vld [vmem:[%s1 + $0x7c] sm:$0xf]
  %v1342 = vld [vmem:[%s1 + $0x80] sm:$0xf]
  %v1343 = vld [vmem:[%s1 + $0x84] sm:$0xf]
  %v1344 = vld [vmem:[%s1 + $0x88] sm:$0xf]
  %v1345 = vld [vmem:[%s1 + $0x8c] sm:$0xf]
  %v1346 = vld [vmem:[%s1 + $0x90] sm:$0xf]
  %v1347 = vld [vmem:[%s1 + $0x94] sm:$0xf]
  %v1348 = vld [vmem:[%s1 + $0x98] sm:$0xf]
  %v1349 = vld [vmem:[%s1 + $0x9c] sm:$0xf]
  %v1350 = vld [vmem:[%s1 + $0xa0] sm:$0xf]
  %v1351 = vld [vmem:[%s1 + $0xa4] sm:$0xf]
  %v1352 = vld [vmem:[%s1 + $0xa8] sm:$0xf]
  %v1353 = vld [vmem:[%s1 + $0xac] sm:$0xf]
  %v1354 = vld [vmem:[%s1 + $0xb0] sm:$0xf]
  %v1355 = vld [vmem:[%s1 + $0xb4] sm:$0xf]
  %v1356 = vld [vmem:[%s1 + $0xb8] sm:$0xf]
  %v1357 = vld [vmem:[%s1 + $0xbc] sm:$0xf]
  %v1358 = vld [vmem:[%s1 + $0xc0] sm:$0xf]
  %v1359 = vld [vmem:[%s1 + $0xc4] sm:$0xf]
  %v1360 = vld [vmem:[%s1 + $0xc8] sm:$0xf]
  %v1361 = vld [vmem:[%s1 + $0xcc] sm:$0xf]
  %v1362 = vld [vmem:[%s1 + $0xd0] sm:$0xf]
  %v1363 = vld [vmem:[%s1 + $0xd4] sm:$0xf]
  %v1364 = vld [vmem:[%s2] sm:$0x1]
  %v1366 = vlaneseq
  %v1367 = vshrl.u32 %v1366, 7
  %v1368 = vsub.s32 0, %v1367
  %v1369 = vrot.slane %v1364, %v1368
  %v1451 = vunpack.c.l.b16 %v1230
  %v1452 = vunpack.c.h.b16 %v1230
  %v1453 = vunpack.c.l.b16 %v1231
  %v1454 = vunpack.c.h.b16 %v1231
  %v1455 = vunpack.c.l.b16 %v1232
  %v1456 = vunpack.c.h.b16 %v1232
  %v1457 = vunpack.c.l.b16 %v1233
  %v1458 = vunpack.c.h.b16 %v1233
  %v1459 = vunpack.c.l.b16 %v1234
  %v1460 = vunpack.c.h.b16 %v1234
  %v1461 = vunpack.c.l.b16 %v1235
  %v1462 = vunpack.c.h.b16 %v1235
  %v1463 = vunpack.c.l.b16 %v1236
  %v1464 = vunpack.c.h.b16 %v1236
  %v1465 = vunpack.c.l.b16 %v1237
  %v1466 = vunpack.c.h.b16 %v1237
  %v1467 = vunpack.c.l.b16 %v1238
  %v1468 = vunpack.c.h.b16 %v1238
  %v1469 = vunpack.c.l.b16 %v1239
  %v1470 = vunpack.c.h.b16 %v1239
  %v1471 = vunpack.c.l.b16 %v1240
  %v1472 = vunpack.c.h.b16 %v1240
  %v1473 = vunpack.c.l.b16 %v1241
  %v1474 = vunpack.c.h.b16 %v1241
  %v1475 = vunpack.c.l.b16 %v1242
  %v1476 = vunpack.c.h.b16 %v1242
  %v1477 = vunpack.c.l.b16 %v1243
  %v1478 = vunpack.c.h.b16 %v1243
  %v1479 = vunpack.c.l.b16 %v1244
  %v1480 = vunpack.c.h.b16 %v1244
  %v1481 = vunpack.c.l.b16 %v1245
  %v1482 = vunpack.c.h.b16 %v1245
  %v1483 = vunpack.c.l.b16 %v1246
  %v1484 = vunpack.c.h.b16 %v1246
  %v1485 = vunpack.c.l.b16 %v1247
  %v1486 = vunpack.c.h.b16 %v1247
  %v1487 = vunpack.c.l.b16 %v1248
  %v1488 = vunpack.c.h.b16 %v1248
  %v1489 = vunpack.c.l.b16 %v1249
  %v1490 = vunpack.c.h.b16 %v1249
  %v1491 = vunpack.c.l.b16 %v1250
  %v1492 = vunpack.c.h.b16 %v1250
  %v1493 = vunpack.c.l.b16 %v1251
  %v1494 = vunpack.c.h.b16 %v1251
  %v1495 = vunpack.c.l.b16 %v1252
  %v1496 = vunpack.c.h.b16 %v1252
  %v1497 = vunpack.c.l.b16 %v1253
  %v1498 = vunpack.c.h.b16 %v1253
  %v1499 = vunpack.c.l.b16 %v1254
  %v1500 = vunpack.c.h.b16 %v1254
  %v1501 = vunpack.c.l.b16 %v1255
  %v1502 = vunpack.c.h.b16 %v1255
  %v1503 = vunpack.c.l.b16 %v1256
  %v1504 = vunpack.c.h.b16 %v1256
  %v1505 = vunpack.c.l.b16 %v1257
  %v1506 = vunpack.c.h.b16 %v1257
  %v1507 = vunpack.c.l.b16 %v1258
  %v1508 = vunpack.c.h.b16 %v1258
  %v1509 = vunpack.c.l.b16 %v1259
  %v1510 = vunpack.c.h.b16 %v1259
  %v1511 = vunpack.c.l.b16 %v1260
  %v1512 = vunpack.c.h.b16 %v1260
  %v1513 = vunpack.c.l.b16 %v1261
  %v1514 = vunpack.c.h.b16 %v1261
  %v1515 = vunpack.c.l.b16 %v1262
  %v1516 = vunpack.c.h.b16 %v1262
  %v1517 = vunpack.c.l.b16 %v1263
  %v1518 = vunpack.c.h.b16 %v1263
  %v1519 = vunpack.c.l.b16 %v1264
  %v1520 = vunpack.c.h.b16 %v1264
  %v1521 = vunpack.c.l.b16 %v1265
  %v1522 = vunpack.c.h.b16 %v1265
  %v1523 = vunpack.c.l.b16 %v1266
  %v1524 = vunpack.c.h.b16 %v1266
  %v1525 = vunpack.c.l.b16 %v1267
  %v1526 = vunpack.c.h.b16 %v1267
  %v1527 = vunpack.c.l.b16 %v1268
  %v1528 = vunpack.c.h.b16 %v1268
  %v1529 = vunpack.c.l.b16 %v1269
  %v1530 = vunpack.c.h.b16 %v1269
  %v1531 = vunpack.c.l.b16 %v1270
  %v1532 = vunpack.c.h.b16 %v1270
  %v1533 = vunpack.c.l.b16 %v1271
  %v1534 = vunpack.c.h.b16 %v1271
  %v1535 = vunpack.c.l.b16 %v1272
  %v1536 = vunpack.c.h.b16 %v1272
  %v1537 = vunpack.c.l.b16 %v1273
  %v1538 = vunpack.c.h.b16 %v1273
  %v1539 = vunpack.c.l.b16 %v1274
  %v1540 = vunpack.c.h.b16 %v1274
  %v1541 = vunpack.c.l.b16 %v1275
  %v1542 = vunpack.c.h.b16 %v1275
  %v1543 = vunpack.c.l.b16 %v1276
  %v1544 = vunpack.c.h.b16 %v1276
  %v1545 = vunpack.c.l.b16 %v1277
  %v1546 = vunpack.c.h.b16 %v1277
  %v1547 = vunpack.c.l.b16 %v1278
  %v1548 = vunpack.c.h.b16 %v1278
  %v1549 = vunpack.c.l.b16 %v1279
  %v1550 = vunpack.c.h.b16 %v1279
  %v1551 = vunpack.c.l.b16 %v1280
  %v1552 = vunpack.c.h.b16 %v1280
  %v1553 = vunpack.c.l.b16 %v1281
  %v1554 = vunpack.c.h.b16 %v1281
  %v1555 = vunpack.c.l.b16 %v1282
  %v1556 = vunpack.c.h.b16 %v1282
  %v1557 = vunpack.c.l.b16 %v1283
  %v1558 = vunpack.c.h.b16 %v1283
  %v1559 = vunpack.c.l.b16 %v1284
  %v1560 = vunpack.c.h.b16 %v1284
  %v1561 = vunpack.c.l.b16 %v1285
  %v1562 = vunpack.c.h.b16 %v1285
  %v1563 = vunpack.c.l.b16 %v1286
  %v1564 = vunpack.c.h.b16 %v1286
  %v1565 = vunpack.c.l.b16 %v1287
  %v1566 = vunpack.c.h.b16 %v1287
  %v1567 = vunpack.c.l.b16 %v1288
  %v1568 = vunpack.c.h.b16 %v1288
  %v1569 = vunpack.c.l.b16 %v1289
  %v1570 = vunpack.c.h.b16 %v1289
  %v1571 = vunpack.c.l.b16 %v1290
  %v1572 = vunpack.c.h.b16 %v1290
  %v1573 = vunpack.c.l.b16 %v1291
  %v1574 = vunpack.c.h.b16 %v1291
  %v1575 = vunpack.c.l.b16 %v1292
  %v1576 = vunpack.c.h.b16 %v1292
  %v1577 = vunpack.c.l.b16 %v1293
  %v1578 = vunpack.c.h.b16 %v1293
  %v1579 = vunpack.c.l.b16 %v1294
  %v1580 = vunpack.c.h.b16 %v1294
  %v1581 = vunpack.c.l.b16 %v1295
  %v1582 = vunpack.c.h.b16 %v1295
  %v1583 = vunpack.c.l.b16 %v1296
  %v1584 = vunpack.c.h.b16 %v1296
  %v1585 = vunpack.c.l.b16 %v1297
  %v1586 = vunpack.c.h.b16 %v1297
  %v1587 = vunpack.c.l.b16 %v1298
  %v1588 = vunpack.c.h.b16 %v1298
  %v1589 = vunpack.c.l.b16 %v1299
  %v1590 = vunpack.c.h.b16 %v1299
  %v1591 = vunpack.c.l.b16 %v1300
  %v1592 = vunpack.c.h.b16 %v1300
  %v1593 = vunpack.c.l.b16 %v1301
  %v1594 = vunpack.c.h.b16 %v1301
  %v1595 = vunpack.c.l.b16 %v1302
  %v1596 = vunpack.c.h.b16 %v1302
  %v1597 = vunpack.c.l.b16 %v1303
  %v1598 = vunpack.c.h.b16 %v1303
  %v1599 = vunpack.c.l.b16 %v1304
  %v1600 = vunpack.c.h.b16 %v1304
  %v1601 = vunpack.c.l.b16 %v1305
  %v1602 = vunpack.c.h.b16 %v1305
  %v1603 = vunpack.c.l.b16 %v1306
  %v1604 = vunpack.c.h.b16 %v1306
  %v1605 = vunpack.c.l.b16 %v1307
  %v1606 = vunpack.c.h.b16 %v1307
  %v1607 = vunpack.c.l.b16 %v1308
  %v1608 = vunpack.c.h.b16 %v1308
  %v1609 = vunpack.c.l.b16 %v1309
  %v1610 = vunpack.c.h.b16 %v1309
  %v1611 = vpack.c.b16 %v1455, %v1451
  %v1612 = vpack.c.b16 %v1456, %v1452
  %v1613 = vpack.c.b16 %v1457, %v1453
  %v1614 = vpack.c.b16 %v1458, %v1454
  %v1615 = vpack.c.b16 %v1463, %v1459
  %v1616 = vpack.c.b16 %v1464, %v1460
  %v1617 = vpack.c.b16 %v1465, %v1461
  %v1618 = vpack.c.b16 %v1466, %v1462
  %v1619 = vpack.c.b16 %v1471, %v1467
  %v1620 = vpack.c.b16 %v1472, %v1468
  %v1621 = vpack.c.b16 %v1473, %v1469
  %v1622 = vpack.c.b16 %v1474, %v1470
  %v1623 = vpack.c.b16 %v1479, %v1475
  %v1624 = vpack.c.b16 %v1480, %v1476
  %v1625 = vpack.c.b16 %v1481, %v1477
  %v1626 = vpack.c.b16 %v1482, %v1478
  %v1627 = vpack.c.b16 %v1487, %v1483
  %v1628 = vpack.c.b16 %v1488, %v1484
  %v1629 = vpack.c.b16 %v1489, %v1485
  %v1630 = vpack.c.b16 %v1490, %v1486
  %v1631 = vpack.c.b16 %v1495, %v1491
  %v1632 = vpack.c.b16 %v1496, %v1492
  %v1633 = vpack.c.b16 %v1497, %v1493
  %v1634 = vpack.c.b16 %v1498, %v1494
  %v1635 = vpack.c.b16 %v1503, %v1499
  %v1636 = vpack.c.b16 %v1504, %v1500
  %v1637 = vpack.c.b16 %v1505, %v1501
  %v1638 = vpack.c.b16 %v1506, %v1502
  %v1639 = vpack.c.b16 %v1511, %v1507
  %v1640 = vpack.c.b16 %v1512, %v1508
  %v1641 = vpack.c.b16 %v1513, %v1509
  %v1642 = vpack.c.b16 %v1514, %v1510
  %v1643 = vpack.c.b16 %v1519, %v1515
  %v1644 = vpack.c.b16 %v1520, %v1516
  %v1645 = vpack.c.b16 %v1521, %v1517
  %v1646 = vpack.c.b16 %v1522, %v1518
  %v1647 = vpack.c.b16 %v1527, %v1523
  %v1648 = vpack.c.b16 %v1528, %v1524
  %v1649 = vpack.c.b16 %v1529, %v1525
  %v1650 = vpack.c.b16 %v1530, %v1526
  %v1651 = vpack.c.b16 %v1535, %v1531
  %v1652 = vpack.c.b16 %v1536, %v1532
  %v1653 = vpack.c.b16 %v1537, %v1533
  %v1654 = vpack.c.b16 %v1538, %v1534
  %v1655 = vpack.c.b16 %v1543, %v1539
  %v1656 = vpack.c.b16 %v1544, %v1540
  %v1657 = vpack.c.b16 %v1545, %v1541
  %v1658 = vpack.c.b16 %v1546, %v1542
  %v1659 = vpack.c.b16 %v1551, %v1547
  %v1660 = vpack.c.b16 %v1552, %v1548
  %v1661 = vpack.c.b16 %v1553, %v1549
  %v1662 = vpack.c.b16 %v1554, %v1550
  %v1663 = vpack.c.b16 %v1559, %v1555
  %v1664 = vpack.c.b16 %v1560, %v1556
  %v1665 = vpack.c.b16 %v1561, %v1557
  %v1666 = vpack.c.b16 %v1562, %v1558
  %v1667 = vpack.c.b16 %v1567, %v1563
  %v1668 = vpack.c.b16 %v1568, %v1564
  %v1669 = vpack.c.b16 %v1569, %v1565
  %v1670 = vpack.c.b16 %v1570, %v1566
  %v1671 = vpack.c.b16 %v1575, %v1571
  %v1672 = vpack.c.b16 %v1576, %v1572
  %v1673 = vpack.c.b16 %v1577, %v1573
  %v1674 = vpack.c.b16 %v1578, %v1574
  %v1675 = vpack.c.b16 %v1583, %v1579
  %v1676 = vpack.c.b16 %v1584, %v1580
  %v1677 = vpack.c.b16 %v1585, %v1581
  %v1678 = vpack.c.b16 %v1586, %v1582
  %v1679 = vpack.c.b16 %v1591, %v1587
  %v1680 = vpack.c.b16 %v1592, %v1588
  %v1681 = vpack.c.b16 %v1593, %v1589
  %v1682 = vpack.c.b16 %v1594, %v1590
  %v1683 = vpack.c.b16 %v1599, %v1595
  %v1684 = vpack.c.b16 %v1600, %v1596
  %v1685 = vpack.c.b16 %v1601, %v1597
  %v1686 = vpack.c.b16 %v1602, %v1598
  %v1687 = vpack.c.b16 %v1607, %v1603
  %v1688 = vpack.c.b16 %v1608, %v1604
  %v1689 = vpack.c.b16 %v1609, %v1605
  %v1690 = vpack.c.b16 %v1610, %v1606
  %v1805 = vunpack.c.l.b16 %v1310
  %v1806 = vunpack.c.l.b16 %v1311
  %v1807 = vunpack.c.l.b16 %v1312
  %v1808 = vunpack.c.l.b16 %v1313
  %v1809 = vunpack.c.l.b16 %v1314
  %v1810 = vunpack.c.l.b16 %v1315
  %v1811 = vunpack.c.l.b16 %v1316
  %v1812 = vunpack.c.l.b16 %v1317
  %v1813 = vunpack.c.l.b16 %v1318
  %v1814 = vunpack.c.l.b16 %v1319
  %v1815 = vunpack.c.l.b16 %v1320
  %v1816 = vunpack.c.l.b16 %v1321
  %v1817 = vunpack.c.l.b16 %v1322
  %v1818 = vunpack.c.l.b16 %v1323
  %v1819 = vunpack.c.l.b16 %v1324
  %v1820 = vunpack.c.l.b16 %v1325
  %v1821 = vunpack.c.l.b16 %v1326
  %v1822 = vunpack.c.l.b16 %v1327
  %v1823 = vunpack.c.l.b16 %v1328
  %v1824 = vunpack.c.l.b16 %v1329
  %v1825 = vunpack.c.l.b16 %v1330
  %v1826 = vunpack.c.l.b16 %v1331
  %v1827 = vunpack.c.l.b16 %v1332
  %v1828 = vunpack.c.l.b16 %v1333
  %v1829 = vunpack.c.l.b16 %v1334
  %v1830 = vunpack.c.l.b16 %v1335
  %v1831 = vunpack.c.l.b16 %v1336
  %v1832 = vunpack.c.l.b16 %v1337
  %v1833 = vunpack.c.l.b16 %v1338
  %v1834 = vunpack.c.l.b16 %v1339
  %v1835 = vunpack.c.l.b16 %v1340
  %v1836 = vunpack.c.l.b16 %v1341
  %v1837 = vunpack.c.l.b16 %v1342
  %v1838 = vunpack.c.l.b16 %v1343
  %v1839 = vunpack.c.l.b16 %v1344
  %v1840 = vunpack.c.l.b16 %v1345
  %v1841 = vunpack.c.l.b16 %v1346
  %v1842 = vunpack.c.l.b16 %v1347
  %v1843 = vunpack.c.l.b16 %v1348
  %v1844 = vunpack.c.l.b16 %v1349
  %v1845 = vunpack.c.l.b16 %v1350
  %v1846 = vunpack.c.l.b16 %v1351
  %v1847 = vunpack.c.l.b16 %v1352
  %v1848 = vunpack.c.l.b16 %v1353
  %v1849 = vunpack.c.l.b16 %v1354
  %v1850 = vunpack.c.l.b16 %v1355
  %v1851 = vunpack.c.l.b16 %v1356
  %v1852 = vunpack.c.l.b16 %v1357
  %v1853 = vunpack.c.l.b16 %v1358
  %v1854 = vunpack.c.l.b16 %v1359
  %v1855 = vunpack.c.l.b16 %v1360
  %v1856 = vunpack.c.l.b16 %v1361
  %v1857 = vunpack.c.l.b16 %v1362
  %v1858 = vunpack.c.l.b16 %v1363
  %v1859 = vpack.c.b16 %v1806, %v1805
  %v1860 = vpack.c.b16 %v1808, %v1807
  %v1861 = vpack.c.b16 %v1810, %v1809
  %v1862 = vpack.c.b16 %v1812, %v1811
  %v1863 = vpack.c.b16 %v1814, %v1813
  %v1864 = vpack.c.b16 %v1816, %v1815
  %v1865 = vpack.c.b16 %v1818, %v1817
  %v1866 = vpack.c.b16 %v1820, %v1819
  %v1867 = vpack.c.b16 %v1822, %v1821
  %v1868 = vpack.c.b16 %v1824, %v1823
  %v1869 = vpack.c.b16 %v1826, %v1825
  %v1870 = vpack.c.b16 %v1828, %v1827
  %v1871 = vpack.c.b16 %v1830, %v1829
  %v1872 = vpack.c.b16 %v1832, %v1831
  %v1873 = vpack.c.b16 %v1834, %v1833
  %v1874 = vpack.c.b16 %v1836, %v1835
  %v1875 = vpack.c.b16 %v1838, %v1837
  %v1876 = vpack.c.b16 %v1840, %v1839
  %v1877 = vpack.c.b16 %v1842, %v1841
  %v1878 = vpack.c.b16 %v1844, %v1843
  %v1879 = vpack.c.b16 %v1846, %v1845
  %v1880 = vpack.c.b16 %v1848, %v1847
  %v1881 = vpack.c.b16 %v1850, %v1849
  %v1882 = vpack.c.b16 %v1852, %v1851
  %v1883 = vpack.c.b16 %v1854, %v1853
  %v1884 = vpack.c.b16 %v1856, %v1855
  %v1885 = vpack.c.b16 %v1858, %v1857
  %vm1913 = vcmask 392192
  %v1915 = vsel %vm1913, %v1614, 0
  %v1918 = vsel %vm1913, %v1618, 0
  %v1921 = vsel %vm1913, %v1622, 0
  %v1924 = vsel %vm1913, %v1626, 0
  %v1927 = vsel %vm1913, %v1630, 0
  %v1930 = vsel %vm1913, %v1634, 0
  %v1933 = vsel %vm1913, %v1638, 0
  %v1936 = vsel %vm1913, %v1642, 0
  %v1939 = vsel %vm1913, %v1646, 0
  %v1942 = vsel %vm1913, %v1650, 0
  %v1945 = vsel %vm1913, %v1654, 0
  %v1948 = vsel %vm1913, %v1658, 0
  %v1951 = vsel %vm1913, %v1662, 0
  %v1954 = vsel %vm1913, %v1666, 0
  %v1957 = vsel %vm1913, %v1670, 0
  %v1960 = vsel %vm1913, %v1674, 0
  %v1963 = vsel %vm1913, %v1678, 0
  %v1966 = vsel %vm1913, %v1682, 0
  %v1969 = vsel %vm1913, %v1686, 0
  %v1972 = vsel %vm1913, %v1690, 0
  %1974 = vmatprep.subr.bf16.mxu0 0
  %1975 = vmatpush1.bf16.msra.mxu0 %v1866
  %1976 = vmatprep.subr.bf16.mxu0 0
  %1977 = vmatpush1.bf16.msra.mxu0 %v1865
  %1978 = vmatprep.subr.bf16.mxu0 0
  %1979 = vmatpush1.bf16.msra.mxu0 %v1864
  %1980 = vmatprep.subr.bf16.mxu0 0
  %1981 = vmatpush1.bf16.msra.mxu0 %v1863
  %1982 = vmatprep.subr.bf16.mxu0 0
  %1983 = vmatpush1.bf16.msra.mxu0 %v1862
  %1984 = vmatprep.subr.bf16.mxu0 0
  %1985 = vmatpush1.bf16.msra.mxu0 %v1861
  %1986 = vmatprep.subr.bf16.mxu0 0
  %1987 = vmatpush1.bf16.msra.mxu0 %v1860
  %1988 = vmatprep.subr.bf16.mxu0 0
  %1989 = vmatpush1.bf16.msra.mxu0 %v1859
  %1990 = vmatprep.subr.bf16.mxu0 0
  %1991 = vmatpush2.bf16.msra.mxu0 %v1874
  %1992 = vmatprep.subr.bf16.mxu0 0
  %1993 = vmatpush2.bf16.msra.mxu0 %v1873
  %1994 = vmatprep.subr.bf16.mxu0 0
  %1995 = vmatpush2.bf16.msra.mxu0 %v1872
  %1996 = vmatprep.subr.bf16.mxu0 0
  %1997 = vmatpush2.bf16.msra.mxu0 %v1871
  %1998 = vmatprep.subr.bf16.mxu0 0
  %1999 = vmatpush2.bf16.msra.mxu0 %v1870
  %2000 = vmatprep.subr.bf16.mxu0 0
  %2001 = vmatpush2.bf16.msra.mxu0 %v1869
  %2002 = vmatprep.subr.bf16.mxu0 0
  %2003 = vmatpush2.bf16.msra.mxu0 %v1868
  %2004 = vmatprep.subr.bf16.mxu0 0
  %2005 = vmatpush2.bf16.msra.mxu0 %v1867
  %2006 = vmatprep.mubr.bf16.mxu0 %v1612
  %2007 = vmatmul.mubr.bf16.gmra.mxu0 %v1611
  %v2008 = vpop.f32.mrf.mxu0
  %v2009 = vadd.f32 %v1369, %v2008
  %v2010 = vpop.f32.mrf.mxu0
  %v2011 = vpop.f32.mrf.mxu0
  %v2012 = vadd.f32 %v1369, %v2011
  %v2013 = vpop.f32.mrf.mxu0
  %2014 = vmatprep.mubr.bf16.mxu0 %v1616
  %2015 = vmatmul.mubr.bf16.gmra.mxu0 %v1615
  %v2016 = vpop.f32.mrf.mxu0
  %v2017 = vadd.f32 %v1369, %v2016
  %v2018 = vpop.f32.mrf.mxu0
  %v2019 = vpop.f32.mrf.mxu0
  %v2020 = vadd.f32 %v1369, %v2019
  %v2021 = vpop.f32.mrf.mxu0
  %2022 = vmatprep.mubr.bf16.mxu0 %v1620
  %2023 = vmatmul.mubr.bf16.gmra.mxu0 %v1619
  %v2024 = vpop.f32.mrf.mxu0
  %v2025 = vadd.f32 %v1369, %v2024
  %v2026 = vpop.f32.mrf.mxu0
  %v2027 = vpop.f32.mrf.mxu0
  %v2028 = vadd.f32 %v1369, %v2027
  %v2029 = vpop.f32.mrf.mxu0
  %2030 = vmatprep.mubr.bf16.mxu0 %v1624
  %2031 = vmatmul.mubr.bf16.gmra.mxu0 %v1623
  %v2032 = vpop.f32.mrf.mxu0
  %v2033 = vadd.f32 %v1369, %v2032
  %v2034 = vpop.f32.mrf.mxu0
  %v2035 = vpop.f32.mrf.mxu0
  %v2036 = vadd.f32 %v1369, %v2035
  %v2037 = vpop.f32.mrf.mxu0
  %2038 = vmatprep.mubr.bf16.mxu0 %v1628
  %2039 = vmatmul.mubr.bf16.gmra.mxu0 %v1627
  %v2040 = vpop.f32.mrf.mxu0
  %v2041 = vadd.f32 %v1369, %v2040
  %v2042 = vpop.f32.mrf.mxu0
  %v2043 = vpop.f32.mrf.mxu0
  %v2044 = vadd.f32 %v1369, %v2043
  %v2045 = vpop.f32.mrf.mxu0
  %2046 = vmatprep.mubr.bf16.mxu0 %v1632
  %2047 = vmatmul.mubr.bf16.gmra.mxu0 %v1631
  %v2048 = vpop.f32.mrf.mxu0
  %v2049 = vadd.f32 %v1369, %v2048
  %v2050 = vpop.f32.mrf.mxu0
  %v2051 = vpop.f32.mrf.mxu0
  %v2052 = vadd.f32 %v1369, %v2051
  %v2053 = vpop.f32.mrf.mxu0
  %2054 = vmatprep.mubr.bf16.mxu0 %v1636
  %2055 = vmatmul.mubr.bf16.gmra.mxu0 %v1635
  %v2056 = vpop.f32.mrf.mxu0
  %v2057 = vadd.f32 %v1369, %v2056
  %v2058 = vpop.f32.mrf.mxu0
  %v2059 = vpop.f32.mrf.mxu0
  %v2060 = vadd.f32 %v1369, %v2059
  %v2061 = vpop.f32.mrf.mxu0
  %2062 = vmatprep.mubr.bf16.mxu0 %v1640
  %2063 = vmatmul.mubr.bf16.gmra.mxu0 %v1639
  %v2064 = vpop.f32.mrf.mxu0
  %v2065 = vadd.f32 %v1369, %v2064
  %v2066 = vpop.f32.mrf.mxu0
  %v2067 = vpop.f32.mrf.mxu0
  %v2068 = vadd.f32 %v1369, %v2067
  %v2069 = vpop.f32.mrf.mxu0
  %2070 = vmatprep.mubr.bf16.mxu0 %v1644
  %2071 = vmatmul.mubr.bf16.gmra.mxu0 %v1643
  %v2072 = vpop.f32.mrf.mxu0
  %v2073 = vadd.f32 %v1369, %v2072
  %v2074 = vpop.f32.mrf.mxu0
  %v2075 = vpop.f32.mrf.mxu0
  %v2076 = vadd.f32 %v1369, %v2075
  %v2077 = vpop.f32.mrf.mxu0
  %2078 = vmatprep.mubr.bf16.mxu0 %v1648
  %2079 = vmatmul.mubr.bf16.gmra.mxu0 %v1647
  %v2080 = vpop.f32.mrf.mxu0
  %v2081 = vadd.f32 %v1369, %v2080
  %v2082 = vpop.f32.mrf.mxu0
  %v2083 = vpop.f32.mrf.mxu0
  %v2084 = vadd.f32 %v1369, %v2083
  %v2085 = vpop.f32.mrf.mxu0
  %2086 = vmatprep.mubr.bf16.mxu0 %v1652
  %2087 = vmatmul.mubr.bf16.gmra.mxu0 %v1651
  %v2088 = vpop.f32.mrf.mxu0
  %v2089 = vadd.f32 %v1369, %v2088
  %v2090 = vpop.f32.mrf.mxu0
  %v2091 = vpop.f32.mrf.mxu0
  %v2092 = vadd.f32 %v1369, %v2091
  %v2093 = vpop.f32.mrf.mxu0
  %2094 = vmatprep.mubr.bf16.mxu0 %v1656
  %2095 = vmatmul.mubr.bf16.gmra.mxu0 %v1655
  %v2096 = vpop.f32.mrf.mxu0
  %v2097 = vadd.f32 %v1369, %v2096
  %v2098 = vpop.f32.mrf.mxu0
  %v2099 = vpop.f32.mrf.mxu0
  %v2100 = vadd.f32 %v1369, %v2099
  %v2101 = vpop.f32.mrf.mxu0
  %2102 = vmatprep.mubr.bf16.mxu0 %v1660
  %2103 = vmatmul.mubr.bf16.gmra.mxu0 %v1659
  %v2104 = vpop.f32.mrf.mxu0
  %v2105 = vadd.f32 %v1369, %v2104
  %v2106 = vpop.f32.mrf.mxu0
  %v2107 = vpop.f32.mrf.mxu0
  %v2108 = vadd.f32 %v1369, %v2107
  %v2109 = vpop.f32.mrf.mxu0
  %2110 = vmatprep.mubr.bf16.mxu0 %v1664
  %2111 = vmatmul.mubr.bf16.gmra.mxu0 %v1663
  %v2112 = vpop.f32.mrf.mxu0
  %v2113 = vadd.f32 %v1369, %v2112
  %v2114 = vpop.f32.mrf.mxu0
  %v2115 = vpop.f32.mrf.mxu0
  %v2116 = vadd.f32 %v1369, %v2115
  %v2117 = vpop.f32.mrf.mxu0
  %2118 = vmatprep.mubr.bf16.mxu0 %v1668
  %2119 = vmatmul.mubr.bf16.gmra.mxu0 %v1667
  %v2120 = vpop.f32.mrf.mxu0
  %v2121 = vadd.f32 %v1369, %v2120
  %v2122 = vpop.f32.mrf.mxu0
  %v2123 = vpop.f32.mrf.mxu0
  %v2124 = vadd.f32 %v1369, %v2123
  %v2125 = vpop.f32.mrf.mxu0
  %2126 = vmatprep.mubr.bf16.mxu0 %v1672
  %2127 = vmatmul.mubr.bf16.gmra.mxu0 %v1671
  %v2128 = vpop.f32.mrf.mxu0
  %v2129 = vadd.f32 %v1369, %v2128
  %v2130 = vpop.f32.mrf.mxu0
  %v2131 = vpop.f32.mrf.mxu0
  %v2132 = vadd.f32 %v1369, %v2131
  %v2133 = vpop.f32.mrf.mxu0
  %2134 = vmatprep.mubr.bf16.mxu0 %v1676
  %2135 = vmatmul.mubr.bf16.gmra.mxu0 %v1675
  %v2136 = vpop.f32.mrf.mxu0
  %v2137 = vadd.f32 %v1369, %v2136
  %v2138 = vpop.f32.mrf.mxu0
  %v2139 = vpop.f32.mrf.mxu0
  %v2140 = vadd.f32 %v1369, %v2139
  %v2141 = vpop.f32.mrf.mxu0
  %2142 = vmatprep.mubr.bf16.mxu0 %v1680
  %2143 = vmatmul.mubr.bf16.gmra.mxu0 %v1679
  %v2144 = vpop.f32.mrf.mxu0
  %v2145 = vadd.f32 %v1369, %v2144
  %v2146 = vpop.f32.mrf.mxu0
  %v2147 = vpop.f32.mrf.mxu0
  %v2148 = vadd.f32 %v1369, %v2147
  %v2149 = vpop.f32.mrf.mxu0
  %2150 = vmatprep.mubr.bf16.mxu0 %v1684
  %2151 = vmatmul.mubr.bf16.gmra.mxu0 %v1683
  %v2152 = vpop.f32.mrf.mxu0
  %v2153 = vadd.f32 %v1369, %v2152
  %v2154 = vpop.f32.mrf.mxu0
  %v2155 = vpop.f32.mrf.mxu0
  %v2156 = vadd.f32 %v1369, %v2155
  %v2157 = vpop.f32.mrf.mxu0
  %2158 = vmatprep.mubr.bf16.mxu0 %v1688
  %2159 = vmatmul.mubr.bf16.gmra.mxu0 %v1687
  %v2160 = vpop.f32.mrf.mxu0
  %v2161 = vadd.f32 %v1369, %v2160
  %v2162 = vpop.f32.mrf.mxu0
  %v2163 = vpop.f32.mrf.mxu0
  %v2164 = vadd.f32 %v1369, %v2163
  %v2165 = vpop.f32.mrf.mxu0
  %2166 = vdwg.mxu0
  %2167 = vmatprep.subr.bf16.mxu0 0
  %2168 = vmatpush1.bf16.msra.mxu0 %v1882
  %2169 = vmatprep.subr.bf16.mxu0 0
  %2170 = vmatpush1.bf16.msra.mxu0 %v1881
  %2171 = vmatprep.subr.bf16.mxu0 0
  %2172 = vmatpush1.bf16.msra.mxu0 %v1880
  %2173 = vmatprep.subr.bf16.mxu0 0
  %2174 = vmatpush1.bf16.msra.mxu0 %v1879
  %2175 = vmatprep.subr.bf16.mxu0 0
  %2176 = vmatpush1.bf16.msra.mxu0 %v1878
  %2177 = vmatprep.subr.bf16.mxu0 0
  %2178 = vmatpush1.bf16.msra.mxu0 %v1877
  %2179 = vmatprep.subr.bf16.mxu0 0
  %2180 = vmatpush1.bf16.msra.mxu0 %v1876
  %2181 = vmatprep.subr.bf16.mxu0 0
  %2182 = vmatpush1.bf16.msra.mxu0 %v1875
  %2183 = vmatprep.subr.bf16.mxu0 0
  %2184 = vmatpush2.bf16.msra.mxu0 0
  %2185 = vmatprep.subr.bf16.mxu0 0
  %2186 = vmatpush2.bf16.msra.mxu0 0
  %2187 = vmatprep.subr.bf16.mxu0 0
  %2188 = vmatpush2.bf16.msra.mxu0 0
  %2189 = vmatprep.subr.bf16.mxu0 0
  %2190 = vmatpush2.bf16.msra.mxu0 0
  %2191 = vmatprep.subr.bf16.mxu0 0
  %2192 = vmatpush2.bf16.msra.mxu0 0
  %2193 = vmatprep.subr.bf16.mxu0 0
  %2194 = vmatpush2.bf16.msra.mxu0 %v1885
  %2195 = vmatprep.subr.bf16.mxu0 0
  %2196 = vmatpush2.bf16.msra.mxu0 %v1884
  %2197 = vmatprep.subr.bf16.mxu0 0
  %2198 = vmatpush2.bf16.msra.mxu0 %v1883
  %2199 = vmatprep.mubr.bf16.mxu0 %v1915
  %2200 = vmatmul.mubr.bf16.gmra.mxu0 %v1613
  %v2201 = vpop.f32.mrf.mxu0
  %v2202 = vadd.f32 %v2009, %v2201
  %v2203 = vpop.f32.mrf.mxu0
  %v2204 = vpop.f32.mrf.mxu0
  %v2205 = vadd.f32 %v2012, %v2204
  %v2206 = vpop.f32.mrf.mxu0
  %2207 = vmatprep.mubr.bf16.mxu0 %v1918
  %2208 = vmatmul.mubr.bf16.gmra.mxu0 %v1617
  %v2209 = vpop.f32.mrf.mxu0
  %v2210 = vadd.f32 %v2017, %v2209
  %v2211 = vpop.f32.mrf.mxu0
  %v2212 = vpop.f32.mrf.mxu0
  %v2213 = vadd.f32 %v2020, %v2212
  %v2214 = vpop.f32.mrf.mxu0
  %2215 = vmatprep.mubr.bf16.mxu0 %v1921
  %2216 = vmatmul.mubr.bf16.gmra.mxu0 %v1621
  %v2217 = vpop.f32.mrf.mxu0
  %v2218 = vadd.f32 %v2025, %v2217
  %v2219 = vpop.f32.mrf.mxu0
  %v2220 = vpop.f32.mrf.mxu0
  %v2221 = vadd.f32 %v2028, %v2220
  %v2222 = vpop.f32.mrf.mxu0
  %2223 = vmatprep.mubr.bf16.mxu0 %v1924
  %2224 = vmatmul.mubr.bf16.gmra.mxu0 %v1625
  %v2225 = vpop.f32.mrf.mxu0
  %v2226 = vadd.f32 %v2033, %v2225
  %v2227 = vpop.f32.mrf.mxu0
  %v2228 = vpop.f32.mrf.mxu0
  %v2229 = vadd.f32 %v2036, %v2228
  %v2230 = vpop.f32.mrf.mxu0
  %2231 = vmatprep.mubr.bf16.mxu0 %v1927
  %2232 = vmatmul.mubr.bf16.gmra.mxu0 %v1629
  %v2233 = vpop.f32.mrf.mxu0
  %v2234 = vadd.f32 %v2041, %v2233
  %v2235 = vpop.f32.mrf.mxu0
  %v2236 = vpop.f32.mrf.mxu0
  %v2237 = vadd.f32 %v2044, %v2236
  %v2238 = vpop.f32.mrf.mxu0
  %2239 = vmatprep.mubr.bf16.mxu0 %v1930
  %2240 = vmatmul.mubr.bf16.gmra.mxu0 %v1633
  %v2241 = vpop.f32.mrf.mxu0
  %v2242 = vadd.f32 %v2049, %v2241
  %v2243 = vpop.f32.mrf.mxu0
  %v2244 = vpop.f32.mrf.mxu0
  %v2245 = vadd.f32 %v2052, %v2244
  %v2246 = vpop.f32.mrf.mxu0
  %2247 = vmatprep.mubr.bf16.mxu0 %v1933
  %2248 = vmatmul.mubr.bf16.gmra.mxu0 %v1637
  %v2249 = vpop.f32.mrf.mxu0
  %v2250 = vadd.f32 %v2057, %v2249
  %v2251 = vpop.f32.mrf.mxu0
  %v2252 = vpop.f32.mrf.mxu0
  %v2253 = vadd.f32 %v2060, %v2252
  %v2254 = vpop.f32.mrf.mxu0
  %2255 = vmatprep.mubr.bf16.mxu0 %v1936
  %2256 = vmatmul.mubr.bf16.gmra.mxu0 %v1641
  %v2257 = vpop.f32.mrf.mxu0
  %v2258 = vadd.f32 %v2065, %v2257
  %v2259 = vpop.f32.mrf.mxu0
  %v2260 = vpop.f32.mrf.mxu0
  %v2261 = vadd.f32 %v2068, %v2260
  %v2262 = vpop.f32.mrf.mxu0
  %2263 = vmatprep.mubr.bf16.mxu0 %v1939
  %2264 = vmatmul.mubr.bf16.gmra.mxu0 %v1645
  %v2265 = vpop.f32.mrf.mxu0
  %v2266 = vadd.f32 %v2073, %v2265
  %v2267 = vpop.f32.mrf.mxu0
  %v2268 = vpop.f32.mrf.mxu0
  %v2269 = vadd.f32 %v2076, %v2268
  %v2270 = vpop.f32.mrf.mxu0
  %2271 = vmatprep.mubr.bf16.mxu0 %v1942
  %2272 = vmatmul.mubr.bf16.gmra.mxu0 %v1649
  %v2273 = vpop.f32.mrf.mxu0
  %v2274 = vadd.f32 %v2081, %v2273
  %v2275 = vpop.f32.mrf.mxu0
  %v2276 = vpop.f32.mrf.mxu0
  %v2277 = vadd.f32 %v2084, %v2276
  %v2278 = vpop.f32.mrf.mxu0
  %2279 = vmatprep.mubr.bf16.mxu0 %v1945
  %2280 = vmatmul.mubr.bf16.gmra.mxu0 %v1653
  %v2281 = vpop.f32.mrf.mxu0
  %v2282 = vadd.f32 %v2089, %v2281
  %v2283 = vpop.f32.mrf.mxu0
  %v2284 = vpop.f32.mrf.mxu0
  %v2285 = vadd.f32 %v2092, %v2284
  %v2286 = vpop.f32.mrf.mxu0
  %2287 = vmatprep.mubr.bf16.mxu0 %v1948
  %2288 = vmatmul.mubr.bf16.gmra.mxu0 %v1657
  %v2289 = vpop.f32.mrf.mxu0
  %v2290 = vadd.f32 %v2097, %v2289
  %v2291 = vpop.f32.mrf.mxu0
  %v2292 = vpop.f32.mrf.mxu0
  %v2293 = vadd.f32 %v2100, %v2292
  %v2294 = vpop.f32.mrf.mxu0
  %2295 = vmatprep.mubr.bf16.mxu0 %v1951
  %2296 = vmatmul.mubr.bf16.gmra.mxu0 %v1661
  %v2297 = vpop.f32.mrf.mxu0
  %v2298 = vadd.f32 %v2105, %v2297
  %v2299 = vpop.f32.mrf.mxu0
  %v2300 = vpop.f32.mrf.mxu0
  %v2301 = vadd.f32 %v2108, %v2300
  %v2302 = vpop.f32.mrf.mxu0
  %2303 = vmatprep.mubr.bf16.mxu0 %v1954
  %2304 = vmatmul.mubr.bf16.gmra.mxu0 %v1665
  %v2305 = vpop.f32.mrf.mxu0
  %v2306 = vadd.f32 %v2113, %v2305
  %v2307 = vpop.f32.mrf.mxu0
  %v2308 = vpop.f32.mrf.mxu0
  %v2309 = vadd.f32 %v2116, %v2308
  %v2310 = vpop.f32.mrf.mxu0
  %2311 = vmatprep.mubr.bf16.mxu0 %v1957
  %2312 = vmatmul.mubr.bf16.gmra.mxu0 %v1669
  %v2313 = vpop.f32.mrf.mxu0
  %v2314 = vadd.f32 %v2121, %v2313
  %v2315 = vpop.f32.mrf.mxu0
  %v2316 = vpop.f32.mrf.mxu0
  %v2317 = vadd.f32 %v2124, %v2316
  %v2318 = vpop.f32.mrf.mxu0
  %2319 = vmatprep.mubr.bf16.mxu0 %v1960
  %2320 = vmatmul.mubr.bf16.gmra.mxu0 %v1673
  %v2321 = vpop.f32.mrf.mxu0
  %v2322 = vadd.f32 %v2129, %v2321
  %v2323 = vpop.f32.mrf.mxu0
  %v2324 = vpop.f32.mrf.mxu0
  %v2325 = vadd.f32 %v2132, %v2324
  %v2326 = vpop.f32.mrf.mxu0
  %2327 = vmatprep.mubr.bf16.mxu0 %v1963
  %2328 = vmatmul.mubr.bf16.gmra.mxu0 %v1677
  %v2329 = vpop.f32.mrf.mxu0
  %v2330 = vadd.f32 %v2137, %v2329
  %v2331 = vpop.f32.mrf.mxu0
  %v2332 = vpop.f32.mrf.mxu0
  %v2333 = vadd.f32 %v2140, %v2332
  %v2334 = vpop.f32.mrf.mxu0
  %2335 = vmatprep.mubr.bf16.mxu0 %v1966
  %2336 = vmatmul.mubr.bf16.gmra.mxu0 %v1681
  %v2337 = vpop.f32.mrf.mxu0
  %v2338 = vadd.f32 %v2145, %v2337
  %v2339 = vpop.f32.mrf.mxu0
  %v2340 = vpop.f32.mrf.mxu0
  %v2341 = vadd.f32 %v2148, %v2340
  %v2342 = vpop.f32.mrf.mxu0
  %2343 = vmatprep.mubr.bf16.mxu0 %v1969
  %2344 = vmatmul.mubr.bf16.gmra.mxu0 %v1685
  %v2345 = vpop.f32.mrf.mxu0
  %v2346 = vadd.f32 %v2153, %v2345
  %v2347 = vpop.f32.mrf.mxu0
  %v2348 = vpop.f32.mrf.mxu0
  %v2349 = vadd.f32 %v2156, %v2348
  %v2350 = vpop.f32.mrf.mxu0
  %2351 = vmatprep.mubr.bf16.mxu0 %v1972
  %2352 = vmatmul.mubr.bf16.gmra.mxu0 %v1689
  %v2353 = vpop.f32.mrf.mxu0
  %v2354 = vadd.f32 %v2161, %v2353
  %v2355 = vpop.f32.mrf.mxu0
  %v2356 = vpop.f32.mrf.mxu0
  %v2357 = vadd.f32 %v2164, %v2356
  %v2358 = vpop.f32.mrf.mxu0
  %2359 = vdwg.mxu0
  %vm2360 = vcmp.gt.f32.partialorder %v2202, 0.0
  %vm2361 = vcmp.gt.f32.partialorder %v2205, 0.0
  %vm2362 = vcmp.gt.f32.partialorder %v2210, 0.0
  %vm2363 = vcmp.gt.f32.partialorder %v2213, 0.0
  %vm2364 = vcmp.gt.f32.partialorder %v2218, 0.0
  %vm2365 = vcmp.gt.f32.partialorder %v2221, 0.0
  %vm2366 = vcmp.gt.f32.partialorder %v2226, 0.0
  %vm2367 = vcmp.gt.f32.partialorder %v2229, 0.0
  %vm2368 = vcmp.gt.f32.partialorder %v2234, 0.0
  %vm2369 = vcmp.gt.f32.partialorder %v2237, 0.0
  %vm2370 = vcmp.gt.f32.partialorder %v2242, 0.0
  %vm2371 = vcmp.gt.f32.partialorder %v2245, 0.0
  %vm2372 = vcmp.gt.f32.partialorder %v2250, 0.0
  %vm2373 = vcmp.gt.f32.partialorder %v2253, 0.0
  %vm2374 = vcmp.gt.f32.partialorder %v2258, 0.0
  %vm2375 = vcmp.gt.f32.partialorder %v2261, 0.0
  %vm2376 = vcmp.gt.f32.partialorder %v2266, 0.0
  %vm2377 = vcmp.gt.f32.partialorder %v2269, 0.0
  %vm2378 = vcmp.gt.f32.partialorder %v2274, 0.0
  %vm2379 = vcmp.gt.f32.partialorder %v2277, 0.0
  %vm2380 = vcmp.gt.f32.partialorder %v2282, 0.0
  %vm2381 = vcmp.gt.f32.partialorder %v2285, 0.0
  %vm2382 = vcmp.gt.f32.partialorder %v2290, 0.0
  %vm2383 = vcmp.gt.f32.partialorder %v2293, 0.0
  %vm2384 = vcmp.gt.f32.partialorder %v2298, 0.0
  %vm2385 = vcmp.gt.f32.partialorder %v2301, 0.0
  %vm2386 = vcmp.gt.f32.partialorder %v2306, 0.0
  %vm2387 = vcmp.gt.f32.partialorder %v2309, 0.0
  %vm2388 = vcmp.gt.f32.partialorder %v2314, 0.0
  %vm2389 = vcmp.gt.f32.partialorder %v2317, 0.0
  %vm2390 = vcmp.gt.f32.partialorder %v2322, 0.0
  %vm2391 = vcmp.gt.f32.partialorder %v2325, 0.0
  %vm2392 = vcmp.gt.f32.partialorder %v2330, 0.0
  %vm2393 = vcmp.gt.f32.partialorder %v2333, 0.0
  %vm2394 = vcmp.gt.f32.partialorder %v2338, 0.0
  %vm2395 = vcmp.gt.f32.partialorder %v2341, 0.0
  %vm2396 = vcmp.gt.f32.partialorder %v2346, 0.0
  %vm2397 = vcmp.gt.f32.partialorder %v2349, 0.0
  %vm2398 = vcmp.gt.f32.partialorder %v2354, 0.0
  %vm2399 = vcmp.gt.f32.partialorder %v2357, 0.0
  %v2400 = vmul.f32 %v2202, 0.01
  %v2401 = vmul.f32 %v2205, 0.01
  %v2402 = vmul.f32 %v2210, 0.01
  %v2403 = vmul.f32 %v2213, 0.01
  %v2404 = vmul.f32 %v2218, 0.01
  %v2405 = vmul.f32 %v2221, 0.01
  %v2406 = vmul.f32 %v2226, 0.01
  %v2407 = vmul.f32 %v2229, 0.01
  %v2408 = vmul.f32 %v2234, 0.01
  %v2409 = vmul.f32 %v2237, 0.01
  %v2410 = vmul.f32 %v2242, 0.01
  %v2411 = vmul.f32 %v2245, 0.01
  %v2412 = vmul.f32 %v2250, 0.01
  %v2413 = vmul.f32 %v2253, 0.01
  %v2414 = vmul.f32 %v2258, 0.01
  %v2415 = vmul.f32 %v2261, 0.01
  %v2416 = vmul.f32 %v2266, 0.01
  %v2417 = vmul.f32 %v2269, 0.01
  %v2418 = vmul.f32 %v2274, 0.01
  %v2419 = vmul.f32 %v2277, 0.01
  %v2420 = vmul.f32 %v2282, 0.01
  %v2421 = vmul.f32 %v2285, 0.01
  %v2422 = vmul.f32 %v2290, 0.01
  %v2423 = vmul.f32 %v2293, 0.01
  %v2424 = vmul.f32 %v2298, 0.01
  %v2425 = vmul.f32 %v2301, 0.01
  %v2426 = vmul.f32 %v2306, 0.01
  %v2427 = vmul.f32 %v2309, 0.01
  %v2428 = vmul.f32 %v2314, 0.01
  %v2429 = vmul.f32 %v2317, 0.01
  %v2430 = vmul.f32 %v2322, 0.01
  %v2431 = vmul.f32 %v2325, 0.01
  %v2432 = vmul.f32 %v2330, 0.01
  %v2433 = vmul.f32 %v2333, 0.01
  %v2434 = vmul.f32 %v2338, 0.01
  %v2435 = vmul.f32 %v2341, 0.01
  %v2436 = vmul.f32 %v2346, 0.01
  %v2437 = vmul.f32 %v2349, 0.01
  %v2438 = vmul.f32 %v2354, 0.01
  %v2439 = vmul.f32 %v2357, 0.01
  %v2440 = vsel %vm2360, %v2202, %v2400
  %v2441 = vsel %vm2361, %v2205, %v2401
  %v2442 = vsel %vm2362, %v2210, %v2402
  %v2443 = vsel %vm2363, %v2213, %v2403
  %v2444 = vsel %vm2364, %v2218, %v2404
  %v2445 = vsel %vm2365, %v2221, %v2405
  %v2446 = vsel %vm2366, %v2226, %v2406
  %v2447 = vsel %vm2367, %v2229, %v2407
  %v2448 = vsel %vm2368, %v2234, %v2408
  %v2449 = vsel %vm2369, %v2237, %v2409
  %v2450 = vsel %vm2370, %v2242, %v2410
  %v2451 = vsel %vm2371, %v2245, %v2411
  %v2452 = vsel %vm2372, %v2250, %v2412
  %v2453 = vsel %vm2373, %v2253, %v2413
  %v2454 = vsel %vm2374, %v2258, %v2414
  %v2455 = vsel %vm2375, %v2261, %v2415
  %v2456 = vsel %vm2376, %v2266, %v2416
  %v2457 = vsel %vm2377, %v2269, %v2417
  %v2458 = vsel %vm2378, %v2274, %v2418
  %v2459 = vsel %vm2379, %v2277, %v2419
  %v2460 = vsel %vm2380, %v2282, %v2420
  %v2461 = vsel %vm2381, %v2285, %v2421
  %v2462 = vsel %vm2382, %v2290, %v2422
  %v2463 = vsel %vm2383, %v2293, %v2423
  %v2464 = vsel %vm2384, %v2298, %v2424
  %v2465 = vsel %vm2385, %v2301, %v2425
  %v2466 = vsel %vm2386, %v2306, %v2426
  %v2467 = vsel %vm2387, %v2309, %v2427
  %v2468 = vsel %vm2388, %v2314, %v2428
  %v2469 = vsel %vm2389, %v2317, %v2429
  %v2470 = vsel %vm2390, %v2322, %v2430
  %v2471 = vsel %vm2391, %v2325, %v2431
  %v2472 = vsel %vm2392, %v2330, %v2432
  %v2473 = vsel %vm2393, %v2333, %v2433
  %v2474 = vsel %vm2394, %v2338, %v2434
  %v2475 = vsel %vm2395, %v2341, %v2435
  %v2476 = vsel %vm2396, %v2346, %v2436
  %v2477 = vsel %vm2397, %v2349, %v2437
  %v2478 = vsel %vm2398, %v2354, %v2438
  %v2479 = vsel %vm2399, %v2357, %v2439
  %2480 = vst [vmem:[#allocation4] sm:$0xff] %v2440
  %2481 = vst [vmem:[#allocation4 + $0x8] sm:$0xff] %v2441
  %2482 = vst [vmem:[#allocation4 + $0x10] sm:$0xff] %v2442
  %2483 = vst [vmem:[#allocation4 + $0x18] sm:$0xff] %v2443
  %2484 = vst [vmem:[#allocation4 + $0x20] sm:$0xff] %v2444
  %2485 = vst [vmem:[#allocation4 + $0x28] sm:$0xff] %v2445
  %2486 = vst [vmem:[#allocation4 + $0x30] sm:$0xff] %v2446
  %2487 = vst [vmem:[#allocation4 + $0x38] sm:$0xff] %v2447
  %2488 = vst [vmem:[#allocation4 + $0x40] sm:$0xff] %v2448
  %2489 = vst [vmem:[#allocation4 + $0x48] sm:$0xff] %v2449
  %2490 = vst [vmem:[#allocation4 + $0x50] sm:$0xff] %v2450
  %2491 = vst [vmem:[#allocation4 + $0x58] sm:$0xff] %v2451
  %2492 = vst [vmem:[#allocation4 + $0x60] sm:$0xff] %v2452
  %2493 = vst [vmem:[#allocation4 + $0x68] sm:$0xff] %v2453
  %2494 = vst [vmem:[#allocation4 + $0x70] sm:$0xff] %v2454
  %2495 = vst [vmem:[#allocation4 + $0x78] sm:$0xff] %v2455
  %2496 = vst [vmem:[#allocation4 + $0x80] sm:$0xff] %v2456
  %2497 = vst [vmem:[#allocation4 + $0x88] sm:$0xff] %v2457
  %2498 = vst [vmem:[#allocation4 + $0x90] sm:$0xff] %v2458
  %2499 = vst [vmem:[#allocation4 + $0x98] sm:$0xff] %v2459
  %2500 = vst [vmem:[#allocation4 + $0xa0] sm:$0xff] %v2460
  %2501 = vst [vmem:[#allocation4 + $0xa8] sm:$0xff] %v2461
  %2502 = vst [vmem:[#allocation4 + $0xb0] sm:$0xff] %v2462
  %2503 = vst [vmem:[#allocation4 + $0xb8] sm:$0xff] %v2463
  %2504 = vst [vmem:[#allocation4 + $0xc0] sm:$0xff] %v2464
  %2505 = vst [vmem:[#allocation4 + $0xc8] sm:$0xff] %v2465
  %2506 = vst [vmem:[#allocation4 + $0xd0] sm:$0xff] %v2466
  %2507 = vst [vmem:[#allocation4 + $0xd8] sm:$0xff] %v2467
  %2508 = vst [vmem:[#allocation4 + $0xe0] sm:$0xff] %v2468
  %2509 = vst [vmem:[#allocation4 + $0xe8] sm:$0xff] %v2469
  %2510 = vst [vmem:[#allocation4 + $0xf0] sm:$0xff] %v2470
  %2511 = vst [vmem:[#allocation4 + $0xf8] sm:$0xff] %v2471
  %2512 = vst [vmem:[#allocation4 + $0x100] sm:$0xff] %v2472
  %2513 = vst [vmem:[#allocation4 + $0x108] sm:$0xff] %v2473
  %2514 = vst [vmem:[#allocation4 + $0x110] sm:$0xff] %v2474
  %2515 = vst [vmem:[#allocation4 + $0x118] sm:$0xff] %v2475
  %2516 = vst [vmem:[#allocation4 + $0x120] sm:$0xff] %v2476
  %2517 = vst [vmem:[#allocation4 + $0x128] sm:$0xff] %v2477
  %2518 = vst [vmem:[#allocation4 + $0x130] sm:$0xff] %v2478
  %2519 = vst [vmem:[#allocation4 + $0x138] sm:$0xff] %v2479
  %v2520 = vld [vmem:[#allocation4] sm:$0xff]
  %v2521 = vld [vmem:[#allocation4 + $0x10] sm:$0xff]
  %v2522 = vld [vmem:[#allocation4 + $0x20] sm:$0xff]
  %v2523 = vld [vmem:[#allocation4 + $0x30] sm:$0xff]
  %v2524 = vld [vmem:[#allocation4 + $0x40] sm:$0xff]
  %v2525 = vld [vmem:[#allocation4 + $0x50] sm:$0xff]
  %v2526 = vld [vmem:[#allocation4 + $0x60] sm:$0xff]
  %v2527 = vld [vmem:[#allocation4 + $0x70] sm:$0xff]
  %s2528 = scalar_lea.vmem [#allocation4], 160
  %v2529 = vld [vmem:[%s2528] sm:$0xff]
  %v2530 = vld [vmem:[%s2528 + $0x10] sm:$0xff]
  %v2531 = vld [vmem:[%s2528 + $0x20] sm:$0xff]
  %v2532 = vld [vmem:[%s2528 + $0x30] sm:$0xff]
  %v2533 = vld [vmem:[%s2528 + $0x40] sm:$0xff]
  %v2534 = vld [vmem:[%s2528 + $0x50] sm:$0xff]
  %v2535 = vld [vmem:[%s2528 + $0x60] sm:$0xff]
  %v2536 = vld [vmem:[%s2528 + $0x70] sm:$0xff]
  %v2537 = vpack.c.bf16 %v2521, %v2520
  %v2538 = vpack.c.bf16 %v2523, %v2522
  %v2539 = vpack.c.bf16 %v2525, %v2524
  %v2540 = vpack.c.bf16 %v2527, %v2526
  %v2541 = vpack.c.bf16 %v2530, %v2529
  %v2542 = vpack.c.bf16 %v2532, %v2531
  %v2543 = vpack.c.bf16 %v2534, %v2533
  %v2544 = vpack.c.bf16 %v2536, %v2535
  %v2545 = vld [vmem:[%s3] sm:$0xf]
  %v2546 = vld [vmem:[%s3 + $0x4] sm:$0xf]
  %v2547 = vld [vmem:[%s3 + $0x8] sm:$0xf]
  %v2548 = vld [vmem:[%s3 + $0xc] sm:$0xf]
  %v2549 = vld [vmem:[%s3 + $0x10] sm:$0xf]
  %v2550 = vld [vmem:[%s3 + $0x14] sm:$0xf]
  %v2551 = vld [vmem:[%s3 + $0x18] sm:$0xf]
  %v2552 = vld [vmem:[%s3 + $0x1c] sm:$0xf]
  %v2553 = vld [vmem:[%s3 + $0x20] sm:$0xf]
  %v2554 = vld [vmem:[%s3 + $0x24] sm:$0xf]
  %v2555 = vld [vmem:[%s3 + $0x28] sm:$0xf]
  %v2556 = vld [vmem:[%s3 + $0x2c] sm:$0xf]
  %v2557 = vld [vmem:[%s3 + $0x30] sm:$0xf]
  %v2558 = vld [vmem:[%s3 + $0x34] sm:$0xf]
  %v2559 = vld [vmem:[%s3 + $0x38] sm:$0xf]
  %v2560 = vld [vmem:[%s3 + $0x3c] sm:$0xf]
  %v2561 = vld [vmem:[#allocation4 + $0x1] sm:$0xff]
  %v2562 = vld [vmem:[#allocation4 + $0x11] sm:$0xff]
  %v2563 = vld [vmem:[#allocation4 + $0x21] sm:$0xff]
  %v2564 = vld [vmem:[#allocation4 + $0x31] sm:$0xff]
  %v2565 = vld [vmem:[#allocation4 + $0x41] sm:$0xff]
  %v2566 = vld [vmem:[#allocation4 + $0x51] sm:$0xff]
  %v2567 = vld [vmem:[#allocation4 + $0x61] sm:$0xff]
  %v2568 = vld [vmem:[#allocation4 + $0x71] sm:$0xff]
  %v2569 = vld [vmem:[%s2528 + $0x1] sm:$0xff]
  %v2570 = vld [vmem:[%s2528 + $0x11] sm:$0xff]
  %v2571 = vld [vmem:[%s2528 + $0x21] sm:$0xff]
  %v2572 = vld [vmem:[%s2528 + $0x31] sm:$0xff]
  %v2573 = vld [vmem:[%s2528 + $0x41] sm:$0xff]
  %v2574 = vld [vmem:[%s2528 + $0x51] sm:$0xff]
  %v2575 = vld [vmem:[%s2528 + $0x61] sm:$0xff]
  %v2576 = vld [vmem:[%s2528 + $0x71] sm:$0xff]
  %v2577 = vpack.c.bf16 %v2562, %v2561
  %v2578 = vpack.c.bf16 %v2564, %v2563
  %v2579 = vpack.c.bf16 %v2566, %v2565
  %v2580 = vpack.c.bf16 %v2568, %v2567
  %v2581 = vpack.c.bf16 %v2570, %v2569
  %v2582 = vpack.c.bf16 %v2572, %v2571
  %v2583 = vpack.c.bf16 %v2574, %v2573
  %v2584 = vpack.c.bf16 %v2576, %v2575
  %v2585 = vld [vmem:[%s3 + $0x40] sm:$0xf]
  %v2586 = vld [vmem:[%s3 + $0x44] sm:$0xf]
  %v2587 = vld [vmem:[%s3 + $0x48] sm:$0xf]
  %v2588 = vld [vmem:[%s3 + $0x4c] sm:$0xf]
  %v2589 = vld [vmem:[%s3 + $0x50] sm:$0xf]
  %v2590 = vld [vmem:[%s3 + $0x54] sm:$0xf]
  %v2591 = vld [vmem:[%s3 + $0x58] sm:$0xf]
  %v2592 = vld [vmem:[%s3 + $0x5c] sm:$0xf]
  %v2593 = vld [vmem:[%s3 + $0x60] sm:$0xf]
  %v2594 = vld [vmem:[%s3 + $0x64] sm:$0xf]
  %v2595 = vld [vmem:[%s3 + $0x68] sm:$0xf]
  %v2596 = vld [vmem:[%s3 + $0x6c] sm:$0xf]
  %v2597 = vld [vmem:[%s3 + $0x70] sm:$0xf]
  %v2598 = vld [vmem:[%s3 + $0x74] sm:$0xf]
  %v2599 = vld [vmem:[%s3 + $0x78] sm:$0xf]
  %v2600 = vld [vmem:[%s3 + $0x7c] sm:$0xf]
  %v2617 = vunpack.c.l.b16 %v2585
  %v2618 = vunpack.c.l.b16 %v2586
  %v2619 = vunpack.c.l.b16 %v2587
  %v2620 = vunpack.c.l.b16 %v2588
  %v2621 = vunpack.c.l.b16 %v2589
  %v2622 = vunpack.c.l.b16 %v2590
  %v2623 = vunpack.c.l.b16 %v2591
  %v2624 = vunpack.c.l.b16 %v2592
  %v2625 = vunpack.c.l.b16 %v2593
  %v2626 = vunpack.c.l.b16 %v2594
  %v2627 = vunpack.c.l.b16 %v2595
  %v2628 = vunpack.c.l.b16 %v2596
  %v2629 = vunpack.c.l.b16 %v2597
  %v2630 = vunpack.c.l.b16 %v2598
  %v2631 = vunpack.c.l.b16 %v2599
  %v2632 = vunpack.c.l.b16 %v2600
  %v2633 = vpack.c.b16 %v2618, %v2617
  %v2634 = vpack.c.b16 %v2620, %v2619
  %v2635 = vpack.c.b16 %v2622, %v2621
  %v2636 = vpack.c.b16 %v2624, %v2623
  %v2637 = vpack.c.b16 %v2626, %v2625
  %v2638 = vpack.c.b16 %v2628, %v2627
  %v2639 = vpack.c.b16 %v2630, %v2629
  %v2640 = vpack.c.b16 %v2632, %v2631
  %2649 = vmatprep.subr.bf16.mxu0 0
  %2650 = vmatpush1.bf16.msra.mxu0 %v2640
  %2651 = vmatprep.subr.bf16.mxu0 0
  %2652 = vmatpush1.bf16.msra.mxu0 %v2639
  %2653 = vmatprep.subr.bf16.mxu0 0
  %2654 = vmatpush1.bf16.msra.mxu0 %v2638
  %2655 = vmatprep.subr.bf16.mxu0 0
  %2656 = vmatpush1.bf16.msra.mxu0 %v2637
  %2657 = vmatprep.subr.bf16.mxu0 0
  %2658 = vmatpush1.bf16.msra.mxu0 %v2636
  %2659 = vmatprep.subr.bf16.mxu0 0
  %2660 = vmatpush1.bf16.msra.mxu0 %v2635
  %2661 = vmatprep.subr.bf16.mxu0 0
  %2662 = vmatpush1.bf16.msra.mxu0 %v2634
  %2663 = vmatprep.subr.bf16.mxu0 0
  %2664 = vmatpush1.bf16.msra.mxu0 %v2633
  %2665 = vmatprep.subr.bf16.mxu0 0
  %2666 = vmatpush2.bf16.msra.mxu0 0
  %2667 = vmatprep.subr.bf16.mxu0 0
  %2668 = vmatpush2.bf16.msra.mxu0 0
  %2669 = vmatprep.subr.bf16.mxu0 0
  %2670 = vmatpush2.bf16.msra.mxu0 0
  %2671 = vmatprep.subr.bf16.mxu0 0
  %2672 = vmatpush2.bf16.msra.mxu0 0
  %2673 = vmatprep.subr.bf16.mxu0 0
  %2674 = vmatpush2.bf16.msra.mxu0 0
  %2675 = vmatprep.subr.bf16.mxu0 0
  %2676 = vmatpush2.bf16.msra.mxu0 0
  %2677 = vmatprep.subr.bf16.mxu0 0
  %2678 = vmatpush2.bf16.msra.mxu0 0
  %2679 = vmatprep.subr.bf16.mxu0 0
  %2680 = vmatpush2.bf16.msra.mxu0 0
  %2681 = vmatprep.mubr.bf16.mxu0 0
  %2682 = vmatmul.mubr.bf16.gmra.mxu0 %v2577
  %v2683 = vpop.f32.mrf.mxu0
  %v2684 = vadd.f32 0.0, %v2683
  %v2685 = vpop.f32.mrf.mxu0
  %v2686 = vpop.f32.mrf.mxu0
  %v2687 = vadd.f32 0.0, %v2686
  %v2688 = vpop.f32.mrf.mxu0
  %2689 = vmatprep.mubr.bf16.mxu0 0
  %2690 = vmatmul.mubr.bf16.gmra.mxu0 %v2578
  %v2691 = vpop.f32.mrf.mxu0
  %v2692 = vadd.f32 0.0, %v2691
  %v2693 = vpop.f32.mrf.mxu0
  %v2694 = vpop.f32.mrf.mxu0
  %v2695 = vadd.f32 0.0, %v2694
  %v2696 = vpop.f32.mrf.mxu0
  %2697 = vmatprep.mubr.bf16.mxu0 0
  %2698 = vmatmul.mubr.bf16.gmra.mxu0 %v2579
  %v2699 = vpop.f32.mrf.mxu0
  %v2700 = vadd.f32 0.0, %v2699
  %v2701 = vpop.f32.mrf.mxu0
  %v2702 = vpop.f32.mrf.mxu0
  %v2703 = vadd.f32 0.0, %v2702
  %v2704 = vpop.f32.mrf.mxu0
  %2705 = vmatprep.mubr.bf16.mxu0 0
  %2706 = vmatmul.mubr.bf16.gmra.mxu0 %v2580
  %v2707 = vpop.f32.mrf.mxu0
  %v2708 = vadd.f32 0.0, %v2707
  %v2709 = vpop.f32.mrf.mxu0
  %v2710 = vpop.f32.mrf.mxu0
  %v2711 = vadd.f32 0.0, %v2710
  %v2712 = vpop.f32.mrf.mxu0
  %2713 = vmatprep.mubr.bf16.mxu0 0
  %2714 = vmatmul.mubr.bf16.gmra.mxu0 %v2581
  %v2715 = vpop.f32.mrf.mxu0
  %v2716 = vadd.f32 0.0, %v2715
  %v2717 = vpop.f32.mrf.mxu0
  %v2718 = vpop.f32.mrf.mxu0
  %v2719 = vadd.f32 0.0, %v2718
  %v2720 = vpop.f32.mrf.mxu0
  %2721 = vmatprep.mubr.bf16.mxu0 0
  %2722 = vmatmul.mubr.bf16.gmra.mxu0 %v2582
  %v2723 = vpop.f32.mrf.mxu0
  %v2724 = vadd.f32 0.0, %v2723
  %v2725 = vpop.f32.mrf.mxu0
  %v2726 = vpop.f32.mrf.mxu0
  %v2727 = vadd.f32 0.0, %v2726
  %v2728 = vpop.f32.mrf.mxu0
  %2729 = vmatprep.mubr.bf16.mxu0 0
  %2730 = vmatmul.mubr.bf16.gmra.mxu0 %v2583
  %v2731 = vpop.f32.mrf.mxu0
  %v2732 = vadd.f32 0.0, %v2731
  %v2733 = vpop.f32.mrf.mxu0
  %v2734 = vpop.f32.mrf.mxu0
  %v2735 = vadd.f32 0.0, %v2734
  %v2736 = vpop.f32.mrf.mxu0
  %2737 = vmatprep.mubr.bf16.mxu0 0
  %2738 = vmatmul.mubr.bf16.gmra.mxu0 %v2584
  %v2739 = vpop.f32.mrf.mxu0
  %v2740 = vadd.f32 0.0, %v2739
  %v2741 = vpop.f32.mrf.mxu0
  %v2742 = vpop.f32.mrf.mxu0
  %v2743 = vadd.f32 0.0, %v2742
  %v2744 = vpop.f32.mrf.mxu0
  %2745 = vdwg.mxu0
  %v2762 = vunpack.c.l.b16 %v2545
  %v2763 = vunpack.c.l.b16 %v2546
  %v2764 = vunpack.c.l.b16 %v2547
  %v2765 = vunpack.c.l.b16 %v2548
  %v2766 = vunpack.c.l.b16 %v2549
  %v2767 = vunpack.c.l.b16 %v2550
  %v2768 = vunpack.c.l.b16 %v2551
  %v2769 = vunpack.c.l.b16 %v2552
  %v2770 = vunpack.c.l.b16 %v2553
  %v2771 = vunpack.c.l.b16 %v2554
  %v2772 = vunpack.c.l.b16 %v2555
  %v2773 = vunpack.c.l.b16 %v2556
  %v2774 = vunpack.c.l.b16 %v2557
  %v2775 = vunpack.c.l.b16 %v2558
  %v2776 = vunpack.c.l.b16 %v2559
  %v2777 = vunpack.c.l.b16 %v2560
  %v2778 = vpack.c.b16 %v2763, %v2762
  %v2779 = vpack.c.b16 %v2765, %v2764
  %v2780 = vpack.c.b16 %v2767, %v2766
  %v2781 = vpack.c.b16 %v2769, %v2768
  %v2782 = vpack.c.b16 %v2771, %v2770
  %v2783 = vpack.c.b16 %v2773, %v2772
  %v2784 = vpack.c.b16 %v2775, %v2774
  %v2785 = vpack.c.b16 %v2777, %v2776
  %2794 = vmatprep.subr.bf16.mxu0 0
  %2795 = vmatpush1.bf16.msra.mxu0 %v2785
  %2796 = vmatprep.subr.bf16.mxu0 0
  %2797 = vmatpush1.bf16.msra.mxu0 %v2784
  %2798 = vmatprep.subr.bf16.mxu0 0
  %2799 = vmatpush1.bf16.msra.mxu0 %v2783
  %2800 = vmatprep.subr.bf16.mxu0 0
  %2801 = vmatpush1.bf16.msra.mxu0 %v2782
  %2802 = vmatprep.subr.bf16.mxu0 0
  %2803 = vmatpush1.bf16.msra.mxu0 %v2781
  %2804 = vmatprep.subr.bf16.mxu0 0
  %2805 = vmatpush1.bf16.msra.mxu0 %v2780
  %2806 = vmatprep.subr.bf16.mxu0 0
  %2807 = vmatpush1.bf16.msra.mxu0 %v2779
  %2808 = vmatprep.subr.bf16.mxu0 0
  %2809 = vmatpush1.bf16.msra.mxu0 %v2778
  %2810 = vmatprep.subr.bf16.mxu0 0
  %2811 = vmatpush2.bf16.msra.mxu0 0
  %2812 = vmatprep.subr.bf16.mxu0 0
  %2813 = vmatpush2.bf16.msra.mxu0 0
  %2814 = vmatprep.subr.bf16.mxu0 0
  %2815 = vmatpush2.bf16.msra.mxu0 0
  %2816 = vmatprep.subr.bf16.mxu0 0
  %2817 = vmatpush2.bf16.msra.mxu0 0
  %2818 = vmatprep.subr.bf16.mxu0 0
  %2819 = vmatpush2.bf16.msra.mxu0 0
  %2820 = vmatprep.subr.bf16.mxu0 0
  %2821 = vmatpush2.bf16.msra.mxu0 0
  %2822 = vmatprep.subr.bf16.mxu0 0
  %2823 = vmatpush2.bf16.msra.mxu0 0
  %2824 = vmatprep.subr.bf16.mxu0 0
  %2825 = vmatpush2.bf16.msra.mxu0 0
  %2826 = vmatprep.mubr.bf16.mxu0 0
  %2827 = vmatmul.mubr.bf16.gmra.mxu0 %v2537
  %v2828 = vpop.f32.mrf.mxu0
  %v2829 = vadd.f32 %v2684, %v2828
  %v2830 = vpop.f32.mrf.mxu0
  %v2831 = vpop.f32.mrf.mxu0
  %v2832 = vadd.f32 %v2687, %v2831
  %v2833 = vpop.f32.mrf.mxu0
  %2834 = vmatprep.mubr.bf16.mxu0 0
  %2835 = vmatmul.mubr.bf16.gmra.mxu0 %v2538
  %v2836 = vpop.f32.mrf.mxu0
  %v2837 = vadd.f32 %v2692, %v2836
  %v2838 = vpop.f32.mrf.mxu0
  %v2839 = vpop.f32.mrf.mxu0
  %v2840 = vadd.f32 %v2695, %v2839
  %v2841 = vpop.f32.mrf.mxu0
  %2842 = vmatprep.mubr.bf16.mxu0 0
  %2843 = vmatmul.mubr.bf16.gmra.mxu0 %v2539
  %v2844 = vpop.f32.mrf.mxu0
  %v2845 = vadd.f32 %v2700, %v2844
  %v2846 = vpop.f32.mrf.mxu0
  %v2847 = vpop.f32.mrf.mxu0
  %v2848 = vadd.f32 %v2703, %v2847
  %v2849 = vpop.f32.mrf.mxu0
  %2850 = vmatprep.mubr.bf16.mxu0 0
  %2851 = vmatmul.mubr.bf16.gmra.mxu0 %v2540
  %v2852 = vpop.f32.mrf.mxu0
  %v2853 = vadd.f32 %v2708, %v2852
  %v2854 = vpop.f32.mrf.mxu0
  %v2855 = vpop.f32.mrf.mxu0
  %v2856 = vadd.f32 %v2711, %v2855
  %v2857 = vpop.f32.mrf.mxu0
  %2858 = vmatprep.mubr.bf16.mxu0 0
  %2859 = vmatmul.mubr.bf16.gmra.mxu0 %v2541
  %v2860 = vpop.f32.mrf.mxu0
  %v2861 = vadd.f32 %v2716, %v2860
  %v2862 = vpop.f32.mrf.mxu0
  %v2863 = vpop.f32.mrf.mxu0
  %v2864 = vadd.f32 %v2719, %v2863
  %v2865 = vpop.f32.mrf.mxu0
  %2866 = vmatprep.mubr.bf16.mxu0 0
  %2867 = vmatmul.mubr.bf16.gmra.mxu0 %v2542
  %v2868 = vpop.f32.mrf.mxu0
  %v2869 = vadd.f32 %v2724, %v2868
  %v2870 = vpop.f32.mrf.mxu0
  %v2871 = vpop.f32.mrf.mxu0
  %v2872 = vadd.f32 %v2727, %v2871
  %v2873 = vpop.f32.mrf.mxu0
  %2874 = vmatprep.mubr.bf16.mxu0 0
  %2875 = vmatmul.mubr.bf16.gmra.mxu0 %v2543
  %v2876 = vpop.f32.mrf.mxu0
  %v2877 = vadd.f32 %v2732, %v2876
  %v2878 = vpop.f32.mrf.mxu0
  %v2879 = vpop.f32.mrf.mxu0
  %v2880 = vadd.f32 %v2735, %v2879
  %v2881 = vpop.f32.mrf.mxu0
  %2882 = vmatprep.mubr.bf16.mxu0 0
  %2883 = vmatmul.mubr.bf16.gmra.mxu0 %v2544
  %v2884 = vpop.f32.mrf.mxu0
  %v2885 = vadd.f32 %v2740, %v2884
  %v2886 = vpop.f32.mrf.mxu0
  %v2887 = vpop.f32.mrf.mxu0
  %v2888 = vadd.f32 %v2743, %v2887
  %v2889 = vpop.f32.mrf.mxu0
  %2890 = vdwg.mxu0
  %s2891 = scalar_lea.vmem [#allocation4], 16
  %v2892 = vld [vmem:[%s2891] sm:$0xff]
  %v2893 = vld [vmem:[%s2891 + $0x10] sm:$0xff]
  %v2894 = vld [vmem:[%s2891 + $0x20] sm:$0xff]
  %v2895 = vld [vmem:[%s2891 + $0x30] sm:$0xff]
  %v2896 = vld [vmem:[%s2891 + $0x40] sm:$0xff]
  %v2897 = vld [vmem:[%s2891 + $0x50] sm:$0xff]
  %v2898 = vld [vmem:[%s2891 + $0x60] sm:$0xff]
  %v2899 = vld [vmem:[%s2891 + $0x70] sm:$0xff]
  %s2900 = scalar_lea.vmem [#allocation4], 176
  %v2901 = vld [vmem:[%s2900] sm:$0xff]
  %v2902 = vld [vmem:[%s2900 + $0x10] sm:$0xff]
  %v2903 = vld [vmem:[%s2900 + $0x20] sm:$0xff]
  %v2904 = vld [vmem:[%s2900 + $0x30] sm:$0xff]
  %v2905 = vld [vmem:[%s2900 + $0x40] sm:$0xff]
  %v2906 = vld [vmem:[%s2900 + $0x50] sm:$0xff]
  %v2907 = vld [vmem:[%s2900 + $0x60] sm:$0xff]
  %v2908 = vld [vmem:[%s2900 + $0x70] sm:$0xff]
  %v2909 = vpack.c.bf16 %v2893, %v2892
  %v2910 = vpack.c.bf16 %v2895, %v2894
  %v2911 = vpack.c.bf16 %v2897, %v2896
  %v2912 = vpack.c.bf16 %v2899, %v2898
  %v2913 = vpack.c.bf16 %v2902, %v2901
  %v2914 = vpack.c.bf16 %v2904, %v2903
  %v2915 = vpack.c.bf16 %v2906, %v2905
  %v2916 = vpack.c.bf16 %v2908, %v2907
  %v2917 = vld [vmem:[%s3 + $0x80] sm:$0xf]
  %v2918 = vld [vmem:[%s3 + $0x84] sm:$0xf]
  %v2919 = vld [vmem:[%s3 + $0x88] sm:$0xf]
  %v2920 = vld [vmem:[%s3 + $0x8c] sm:$0xf]
  %v2921 = vld [vmem:[%s3 + $0x90] sm:$0xf]
  %v2922 = vld [vmem:[%s3 + $0x94] sm:$0xf]
  %v2923 = vld [vmem:[%s3 + $0x98] sm:$0xf]
  %v2924 = vld [vmem:[%s3 + $0x9c] sm:$0xf]
  %v2925 = vld [vmem:[%s3 + $0xa0] sm:$0xf]
  %v2926 = vld [vmem:[%s3 + $0xa4] sm:$0xf]
  %v2927 = vld [vmem:[%s3 + $0xa8] sm:$0xf]
  %v2928 = vld [vmem:[%s3 + $0xac] sm:$0xf]
  %v2929 = vld [vmem:[%s3 + $0xb0] sm:$0xf]
  %v2930 = vld [vmem:[%s3 + $0xb4] sm:$0xf]
  %v2931 = vld [vmem:[%s3 + $0xb8] sm:$0xf]
  %v2932 = vld [vmem:[%s3 + $0xbc] sm:$0xf]
  %v2949 = vunpack.c.l.b16 %v2917
  %v2950 = vunpack.c.l.b16 %v2918
  %v2951 = vunpack.c.l.b16 %v2919
  %v2952 = vunpack.c.l.b16 %v2920
  %v2953 = vunpack.c.l.b16 %v2921
  %v2954 = vunpack.c.l.b16 %v2922
  %v2955 = vunpack.c.l.b16 %v2923
  %v2956 = vunpack.c.l.b16 %v2924
  %v2957 = vunpack.c.l.b16 %v2925
  %v2958 = vunpack.c.l.b16 %v2926
  %v2959 = vunpack.c.l.b16 %v2927
  %v2960 = vunpack.c.l.b16 %v2928
  %v2961 = vunpack.c.l.b16 %v2929
  %v2962 = vunpack.c.l.b16 %v2930
  %v2963 = vunpack.c.l.b16 %v2931
  %v2964 = vunpack.c.l.b16 %v2932
  %v2965 = vpack.c.b16 %v2950, %v2949
  %v2966 = vpack.c.b16 %v2952, %v2951
  %v2967 = vpack.c.b16 %v2954, %v2953
  %v2968 = vpack.c.b16 %v2956, %v2955
  %v2969 = vpack.c.b16 %v2958, %v2957
  %v2970 = vpack.c.b16 %v2960, %v2959
  %v2971 = vpack.c.b16 %v2962, %v2961
  %v2972 = vpack.c.b16 %v2964, %v2963
  %2981 = vmatprep.subr.bf16.mxu0 0
  %2982 = vmatpush1.bf16.msra.mxu0 %v2972
  %2983 = vmatprep.subr.bf16.mxu0 0
  %2984 = vmatpush1.bf16.msra.mxu0 %v2971
  %2985 = vmatprep.subr.bf16.mxu0 0
  %2986 = vmatpush1.bf16.msra.mxu0 %v2970
  %2987 = vmatprep.subr.bf16.mxu0 0
  %2988 = vmatpush1.bf16.msra.mxu0 %v2969
  %2989 = vmatprep.subr.bf16.mxu0 0
  %2990 = vmatpush1.bf16.msra.mxu0 %v2968
  %2991 = vmatprep.subr.bf16.mxu0 0
  %2992 = vmatpush1.bf16.msra.mxu0 %v2967
  %2993 = vmatprep.subr.bf16.mxu0 0
  %2994 = vmatpush1.bf16.msra.mxu0 %v2966
  %2995 = vmatprep.subr.bf16.mxu0 0
  %2996 = vmatpush1.bf16.msra.mxu0 %v2965
  %2997 = vmatprep.subr.bf16.mxu0 0
  %2998 = vmatpush2.bf16.msra.mxu0 0
  %2999 = vmatprep.subr.bf16.mxu0 0
  %3000 = vmatpush2.bf16.msra.mxu0 0
  %3001 = vmatprep.subr.bf16.mxu0 0
  %3002 = vmatpush2.bf16.msra.mxu0 0
  %3003 = vmatprep.subr.bf16.mxu0 0
  %3004 = vmatpush2.bf16.msra.mxu0 0
  %3005 = vmatprep.subr.bf16.mxu0 0
  %3006 = vmatpush2.bf16.msra.mxu0 0
  %3007 = vmatprep.subr.bf16.mxu0 0
  %3008 = vmatpush2.bf16.msra.mxu0 0
  %3009 = vmatprep.subr.bf16.mxu0 0
  %3010 = vmatpush2.bf16.msra.mxu0 0
  %3011 = vmatprep.subr.bf16.mxu0 0
  %3012 = vmatpush2.bf16.msra.mxu0 0
  %3013 = vmatprep.mubr.bf16.mxu0 0
  %3014 = vmatmul.mubr.bf16.gmra.mxu0 %v2909
  %v3015 = vpop.f32.mrf.mxu0
  %v3016 = vadd.f32 0.0, %v3015
  %v3017 = vpop.f32.mrf.mxu0
  %v3018 = vpop.f32.mrf.mxu0
  %v3019 = vadd.f32 0.0, %v3018
  %v3020 = vpop.f32.mrf.mxu0
  %3021 = vmatprep.mubr.bf16.mxu0 0
  %3022 = vmatmul.mubr.bf16.gmra.mxu0 %v2910
  %v3023 = vpop.f32.mrf.mxu0
  %v3024 = vadd.f32 0.0, %v3023
  %v3025 = vpop.f32.mrf.mxu0
  %v3026 = vpop.f32.mrf.mxu0
  %v3027 = vadd.f32 0.0, %v3026
  %v3028 = vpop.f32.mrf.mxu0
  %3029 = vmatprep.mubr.bf16.mxu0 0
  %3030 = vmatmul.mubr.bf16.gmra.mxu0 %v2911
  %v3031 = vpop.f32.mrf.mxu0
  %v3032 = vadd.f32 0.0, %v3031
  %v3033 = vpop.f32.mrf.mxu0
  %v3034 = vpop.f32.mrf.mxu0
  %v3035 = vadd.f32 0.0, %v3034
  %v3036 = vpop.f32.mrf.mxu0
  %3037 = vmatprep.mubr.bf16.mxu0 0
  %3038 = vmatmul.mubr.bf16.gmra.mxu0 %v2912
  %v3039 = vpop.f32.mrf.mxu0
  %v3040 = vadd.f32 0.0, %v3039
  %v3041 = vpop.f32.mrf.mxu0
  %v3042 = vpop.f32.mrf.mxu0
  %v3043 = vadd.f32 0.0, %v3042
  %v3044 = vpop.f32.mrf.mxu0
  %3045 = vmatprep.mubr.bf16.mxu0 0
  %3046 = vmatmul.mubr.bf16.gmra.mxu0 %v2913
  %v3047 = vpop.f32.mrf.mxu0
  %v3048 = vadd.f32 0.0, %v3047
  %v3049 = vpop.f32.mrf.mxu0
  %v3050 = vpop.f32.mrf.mxu0
  %v3051 = vadd.f32 0.0, %v3050
  %v3052 = vpop.f32.mrf.mxu0
  %3053 = vmatprep.mubr.bf16.mxu0 0
  %3054 = vmatmul.mubr.bf16.gmra.mxu0 %v2914
  %v3055 = vpop.f32.mrf.mxu0
  %v3056 = vadd.f32 0.0, %v3055
  %v3057 = vpop.f32.mrf.mxu0
  %v3058 = vpop.f32.mrf.mxu0
  %v3059 = vadd.f32 0.0, %v3058
  %v3060 = vpop.f32.mrf.mxu0
  %3061 = vmatprep.mubr.bf16.mxu0 0
  %3062 = vmatmul.mubr.bf16.gmra.mxu0 %v2915
  %v3063 = vpop.f32.mrf.mxu0
  %v3064 = vadd.f32 0.0, %v3063
  %v3065 = vpop.f32.mrf.mxu0
  %v3066 = vpop.f32.mrf.mxu0
  %v3067 = vadd.f32 0.0, %v3066
  %v3068 = vpop.f32.mrf.mxu0
  %3069 = vmatprep.mubr.bf16.mxu0 0
  %3070 = vmatmul.mubr.bf16.gmra.mxu0 %v2916
  %v3071 = vpop.f32.mrf.mxu0
  %v3072 = vadd.f32 0.0, %v3071
  %v3073 = vpop.f32.mrf.mxu0
  %v3074 = vpop.f32.mrf.mxu0
  %v3075 = vadd.f32 0.0, %v3074
  %v3076 = vpop.f32.mrf.mxu0
  %3077 = vdwg.mxu0
  %v3078 = vadd.f32 %v2829, %v3016
  %v3079 = vadd.f32 %v2832, %v3019
  %v3080 = vadd.f32 %v2837, %v3024
  %v3081 = vadd.f32 %v2840, %v3027
  %v3082 = vadd.f32 %v2845, %v3032
  %v3083 = vadd.f32 %v2848, %v3035
  %v3084 = vadd.f32 %v2853, %v3040
  %v3085 = vadd.f32 %v2856, %v3043
  %v3086 = vadd.f32 %v2861, %v3048
  %v3087 = vadd.f32 %v2864, %v3051
  %v3088 = vadd.f32 %v2869, %v3056
  %v3089 = vadd.f32 %v2872, %v3059
  %v3090 = vadd.f32 %v2877, %v3064
  %v3091 = vadd.f32 %v2880, %v3067
  %v3092 = vadd.f32 %v2885, %v3072
  %v3093 = vadd.f32 %v2888, %v3075
  %v3094 = vld [vmem:[%s2891 + $0x1] sm:$0xff]
  %v3095 = vld [vmem:[%s2891 + $0x11] sm:$0xff]
  %v3096 = vld [vmem:[%s2891 + $0x21] sm:$0xff]
  %v3097 = vld [vmem:[%s2891 + $0x31] sm:$0xff]
  %v3098 = vld [vmem:[%s2891 + $0x41] sm:$0xff]
  %v3099 = vld [vmem:[%s2891 + $0x51] sm:$0xff]
  %v3100 = vld [vmem:[%s2891 + $0x61] sm:$0xff]
  %v3101 = vld [vmem:[%s2891 + $0x71] sm:$0xff]
  %v3102 = vld [vmem:[%s2900 + $0x1] sm:$0xff]
  %v3103 = vld [vmem:[%s2900 + $0x11] sm:$0xff]
  %v3104 = vld [vmem:[%s2900 + $0x21] sm:$0xff]
  %v3105 = vld [vmem:[%s2900 + $0x31] sm:$0xff]
  %v3106 = vld [vmem:[%s2900 + $0x41] sm:$0xff]
  %v3107 = vld [vmem:[%s2900 + $0x51] sm:$0xff]
  %v3108 = vld [vmem:[%s2900 + $0x61] sm:$0xff]
  %v3109 = vld [vmem:[%s2900 + $0x71] sm:$0xff]
  %v3110 = vpack.c.bf16 %v3095, %v3094
  %v3111 = vpack.c.bf16 %v3097, %v3096
  %v3112 = vpack.c.bf16 %v3099, %v3098
  %v3113 = vpack.c.bf16 %v3101, %v3100
  %v3114 = vpack.c.bf16 %v3103, %v3102
  %v3115 = vpack.c.bf16 %v3105, %v3104
  %v3116 = vpack.c.bf16 %v3107, %v3106
  %v3117 = vpack.c.bf16 %v3109, %v3108
  %v3118 = vld [vmem:[%s3 + $0xc0] sm:$0xf]
  %v3119 = vld [vmem:[%s3 + $0xc4] sm:$0xf]
  %v3120 = vld [vmem:[%s3 + $0xc8] sm:$0xf]
  %v3121 = vld [vmem:[%s3 + $0xcc] sm:$0xf]
  %v3122 = vld [vmem:[%s3 + $0xd0] sm:$0xf]
  %v3123 = vld [vmem:[%s3 + $0xd4] sm:$0xf]
  %v3124 = vld [vmem:[%s3 + $0xd8] sm:$0xf]
  %v3125 = vld [vmem:[%s3 + $0xdc] sm:$0xf]
  %v3126 = vld [vmem:[%s3 + $0xe0] sm:$0xf]
  %v3127 = vld [vmem:[%s3 + $0xe4] sm:$0xf]
  %v3128 = vld [vmem:[%s3 + $0xe8] sm:$0xf]
  %v3129 = vld [vmem:[%s3 + $0xec] sm:$0xf]
  %v3130 = vld [vmem:[%s3 + $0xf0] sm:$0xf]
  %v3131 = vld [vmem:[%s3 + $0xf4] sm:$0xf]
  %v3132 = vld [vmem:[%s3 + $0xf8] sm:$0xf]
  %v3133 = vld [vmem:[%s3 + $0xfc] sm:$0xf]
  %v3150 = vunpack.c.l.b16 %v3118
  %v3151 = vunpack.c.l.b16 %v3119
  %v3152 = vunpack.c.l.b16 %v3120
  %v3153 = vunpack.c.l.b16 %v3121
  %v3154 = vunpack.c.l.b16 %v3122
  %v3155 = vunpack.c.l.b16 %v3123
  %v3156 = vunpack.c.l.b16 %v3124
  %v3157 = vunpack.c.l.b16 %v3125
  %v3158 = vunpack.c.l.b16 %v3126
  %v3159 = vunpack.c.l.b16 %v3127
  %v3160 = vunpack.c.l.b16 %v3128
  %v3161 = vunpack.c.l.b16 %v3129
  %v3162 = vunpack.c.l.b16 %v3130
  %v3163 = vunpack.c.l.b16 %v3131
  %v3164 = vunpack.c.l.b16 %v3132
  %v3165 = vunpack.c.l.b16 %v3133
  %v3166 = vpack.c.b16 %v3151, %v3150
  %v3167 = vpack.c.b16 %v3153, %v3152
  %v3168 = vpack.c.b16 %v3155, %v3154
  %v3169 = vpack.c.b16 %v3157, %v3156
  %v3170 = vpack.c.b16 %v3159, %v3158
  %v3171 = vpack.c.b16 %v3161, %v3160
  %v3172 = vpack.c.b16 %v3163, %v3162
  %v3173 = vpack.c.b16 %v3165, %v3164
  %3182 = vmatprep.subr.bf16.mxu0 0
  %3183 = vmatpush1.bf16.msra.mxu0 %v3173
  %3184 = vmatprep.subr.bf16.mxu0 0
  %3185 = vmatpush1.bf16.msra.mxu0 %v3172
  %3186 = vmatprep.subr.bf16.mxu0 0
  %3187 = vmatpush1.bf16.msra.mxu0 %v3171
  %3188 = vmatprep.subr.bf16.mxu0 0
  %3189 = vmatpush1.bf16.msra.mxu0 %v3170
  %3190 = vmatprep.subr.bf16.mxu0 0
  %3191 = vmatpush1.bf16.msra.mxu0 %v3169
  %3192 = vmatprep.subr.bf16.mxu0 0
  %3193 = vmatpush1.bf16.msra.mxu0 %v3168
  %3194 = vmatprep.subr.bf16.mxu0 0
  %3195 = vmatpush1.bf16.msra.mxu0 %v3167
  %3196 = vmatprep.subr.bf16.mxu0 0
  %3197 = vmatpush1.bf16.msra.mxu0 %v3166
  %3198 = vmatprep.subr.bf16.mxu0 0
  %3199 = vmatpush2.bf16.msra.mxu0 0
  %3200 = vmatprep.subr.bf16.mxu0 0
  %3201 = vmatpush2.bf16.msra.mxu0 0
  %3202 = vmatprep.subr.bf16.mxu0 0
  %3203 = vmatpush2.bf16.msra.mxu0 0
  %3204 = vmatprep.subr.bf16.mxu0 0
  %3205 = vmatpush2.bf16.msra.mxu0 0
  %3206 = vmatprep.subr.bf16.mxu0 0
  %3207 = vmatpush2.bf16.msra.mxu0 0
  %3208 = vmatprep.subr.bf16.mxu0 0
  %3209 = vmatpush2.bf16.msra.mxu0 0
  %3210 = vmatprep.subr.bf16.mxu0 0
  %3211 = vmatpush2.bf16.msra.mxu0 0
  %3212 = vmatprep.subr.bf16.mxu0 0
  %3213 = vmatpush2.bf16.msra.mxu0 0
  %3214 = vmatprep.mubr.bf16.mxu0 0
  %3215 = vmatmul.mubr.bf16.gmra.mxu0 %v3110
  %v3216 = vpop.f32.mrf.mxu0
  %v3217 = vadd.f32 0.0, %v3216
  %v3218 = vpop.f32.mrf.mxu0
  %v3219 = vpop.f32.mrf.mxu0
  %v3220 = vadd.f32 0.0, %v3219
  %v3221 = vpop.f32.mrf.mxu0
  %3222 = vmatprep.mubr.bf16.mxu0 0
  %3223 = vmatmul.mubr.bf16.gmra.mxu0 %v3111
  %v3224 = vpop.f32.mrf.mxu0
  %v3225 = vadd.f32 0.0, %v3224
  %v3226 = vpop.f32.mrf.mxu0
  %v3227 = vpop.f32.mrf.mxu0
  %v3228 = vadd.f32 0.0, %v3227
  %v3229 = vpop.f32.mrf.mxu0
  %3230 = vmatprep.mubr.bf16.mxu0 0
  %3231 = vmatmul.mubr.bf16.gmra.mxu0 %v3112
  %v3232 = vpop.f32.mrf.mxu0
  %v3233 = vadd.f32 0.0, %v3232
  %v3234 = vpop.f32.mrf.mxu0
  %v3235 = vpop.f32.mrf.mxu0
  %v3236 = vadd.f32 0.0, %v3235
  %v3237 = vpop.f32.mrf.mxu0
  %3238 = vmatprep.mubr.bf16.mxu0 0
  %3239 = vmatmul.mubr.bf16.gmra.mxu0 %v3113
  %v3240 = vpop.f32.mrf.mxu0
  %v3241 = vadd.f32 0.0, %v3240
  %v3242 = vpop.f32.mrf.mxu0
  %v3243 = vpop.f32.mrf.mxu0
  %v3244 = vadd.f32 0.0, %v3243
  %v3245 = vpop.f32.mrf.mxu0
  %3246 = vmatprep.mubr.bf16.mxu0 0
  %3247 = vmatmul.mubr.bf16.gmra.mxu0 %v3114
  %v3248 = vpop.f32.mrf.mxu0
  %v3249 = vadd.f32 0.0, %v3248
  %v3250 = vpop.f32.mrf.mxu0
  %v3251 = vpop.f32.mrf.mxu0
  %v3252 = vadd.f32 0.0, %v3251
  %v3253 = vpop.f32.mrf.mxu0
  %3254 = vmatprep.mubr.bf16.mxu0 0
  %3255 = vmatmul.mubr.bf16.gmra.mxu0 %v3115
  %v3256 = vpop.f32.mrf.mxu0
  %v3257 = vadd.f32 0.0, %v3256
  %v3258 = vpop.f32.mrf.mxu0
  %v3259 = vpop.f32.mrf.mxu0
  %v3260 = vadd.f32 0.0, %v3259
  %v3261 = vpop.f32.mrf.mxu0
  %3262 = vmatprep.mubr.bf16.mxu0 0
  %3263 = vmatmul.mubr.bf16.gmra.mxu0 %v3116
  %v3264 = vpop.f32.mrf.mxu0
  %v3265 = vadd.f32 0.0, %v3264
  %v3266 = vpop.f32.mrf.mxu0
  %v3267 = vpop.f32.mrf.mxu0
  %v3268 = vadd.f32 0.0, %v3267
  %v3269 = vpop.f32.mrf.mxu0
  %3270 = vmatprep.mubr.bf16.mxu0 0
  %3271 = vmatmul.mubr.bf16.gmra.mxu0 %v3117
  %v3272 = vpop.f32.mrf.mxu0
  %v3273 = vadd.f32 0.0, %v3272
  %v3274 = vpop.f32.mrf.mxu0
  %v3275 = vpop.f32.mrf.mxu0
  %v3276 = vadd.f32 0.0, %v3275
  %v3277 = vpop.f32.mrf.mxu0
  %3278 = vdwg.mxu0
  %v3279 = vadd.f32 %v3078, %v3217
  %v3280 = vadd.f32 %v3079, %v3220
  %v3281 = vadd.f32 %v3080, %v3225
  %v3282 = vadd.f32 %v3081, %v3228
  %v3283 = vadd.f32 %v3082, %v3233
  %v3284 = vadd.f32 %v3083, %v3236
  %v3285 = vadd.f32 %v3084, %v3241
  %v3286 = vadd.f32 %v3085, %v3244
  %v3287 = vadd.f32 %v3086, %v3249
  %v3288 = vadd.f32 %v3087, %v3252
  %v3289 = vadd.f32 %v3088, %v3257
  %v3290 = vadd.f32 %v3089, %v3260
  %v3291 = vadd.f32 %v3090, %v3265
  %v3292 = vadd.f32 %v3091, %v3268
  %v3293 = vadd.f32 %v3092, %v3273
  %v3294 = vadd.f32 %v3093, %v3276
  %v3295 = vld [vmem:[%s4] sm:$0x1]
  %v3297 = vlaneseq
  %v3298 = vshrl.u32 %v3297, 7
  %v3299 = vsub.s32 0, %v3298
  %v3300 = vrot.slane %v3295, %v3299
  %v3302 = vadd.f32 %v3279, %v3300
  %v3303 = vadd.f32 %v3280, %v3300
  %v3304 = vadd.f32 %v3281, %v3300
  %v3305 = vadd.f32 %v3282, %v3300
  %v3306 = vadd.f32 %v3283, %v3300
  %v3307 = vadd.f32 %v3284, %v3300
  %v3308 = vadd.f32 %v3285, %v3300
  %v3309 = vadd.f32 %v3286, %v3300
  %v3310 = vadd.f32 %v3287, %v3300
  %v3311 = vadd.f32 %v3288, %v3300
  %v3312 = vadd.f32 %v3289, %v3300
  %v3313 = vadd.f32 %v3290, %v3300
  %v3314 = vadd.f32 %v3291, %v3300
  %v3315 = vadd.f32 %v3292, %v3300
  %v3316 = vadd.f32 %v3293, %v3300
  %v3317 = vadd.f32 %v3294, %v3300
  %vm3318 = vcmp.gt.f32.partialorder %v3302, 0.0
  %vm3319 = vcmp.gt.f32.partialorder %v3303, 0.0
  %vm3320 = vcmp.gt.f32.partialorder %v3304, 0.0
  %vm3321 = vcmp.gt.f32.partialorder %v3305, 0.0
  %vm3322 = vcmp.gt.f32.partialorder %v3306, 0.0
  %vm3323 = vcmp.gt.f32.partialorder %v3307, 0.0
  %vm3324 = vcmp.gt.f32.partialorder %v3308, 0.0
  %vm3325 = vcmp.gt.f32.partialorder %v3309, 0.0
  %vm3326 = vcmp.gt.f32.partialorder %v3310, 0.0
  %vm3327 = vcmp.gt.f32.partialorder %v3311, 0.0
  %vm3328 = vcmp.gt.f32.partialorder %v3312, 0.0
  %vm3329 = vcmp.gt.f32.partialorder %v3313, 0.0
  %vm3330 = vcmp.gt.f32.partialorder %v3314, 0.0
  %vm3331 = vcmp.gt.f32.partialorder %v3315, 0.0
  %vm3332 = vcmp.gt.f32.partialorder %v3316, 0.0
  %vm3333 = vcmp.gt.f32.partialorder %v3317, 0.0
  %v3334 = vmul.f32 %v3302, 0.01
  %v3335 = vmul.f32 %v3303, 0.01
  %v3336 = vmul.f32 %v3304, 0.01
  %v3337 = vmul.f32 %v3305, 0.01
  %v3338 = vmul.f32 %v3306, 0.01
  %v3339 = vmul.f32 %v3307, 0.01
  %v3340 = vmul.f32 %v3308, 0.01
  %v3341 = vmul.f32 %v3309, 0.01
  %v3342 = vmul.f32 %v3310, 0.01
  %v3343 = vmul.f32 %v3311, 0.01
  %v3344 = vmul.f32 %v3312, 0.01
  %v3345 = vmul.f32 %v3313, 0.01
  %v3346 = vmul.f32 %v3314, 0.01
  %v3347 = vmul.f32 %v3315, 0.01
  %v3348 = vmul.f32 %v3316, 0.01
  %v3349 = vmul.f32 %v3317, 0.01
  %v3350 = vsel %vm3318, %v3302, %v3334
  %v3351 = vsel %vm3319, %v3303, %v3335
  %v3352 = vsel %vm3320, %v3304, %v3336
  %v3353 = vsel %vm3321, %v3305, %v3337
  %v3354 = vsel %vm3322, %v3306, %v3338
  %v3355 = vsel %vm3323, %v3307, %v3339
  %v3356 = vsel %vm3324, %v3308, %v3340
  %v3357 = vsel %vm3325, %v3309, %v3341
  %v3358 = vsel %vm3326, %v3310, %v3342
  %v3359 = vsel %vm3327, %v3311, %v3343
  %v3360 = vsel %vm3328, %v3312, %v3344
  %v3361 = vsel %vm3329, %v3313, %v3345
  %v3362 = vsel %vm3330, %v3314, %v3346
  %v3363 = vsel %vm3331, %v3315, %v3347
  %v3364 = vsel %vm3332, %v3316, %v3348
  %v3365 = vsel %vm3333, %v3317, %v3349
  %vm3366 = vcmask 523264
  %3367 = vst.msk [vmem:[#allocation5] sm:$0xff] %vm3366, 0.0
  %3368 = vst.msk [vmem:[#allocation5 + $0x8] sm:$0xff] %vm3366, 0.0
  %3369 = vst.msk [vmem:[#allocation5 + $0x10] sm:$0xff] %vm3366, 0.0
  %3370 = vst.msk [vmem:[#allocation5 + $0x18] sm:$0xff] %vm3366, 0.0
  %3371 = vst.msk [vmem:[#allocation5 + $0x20] sm:$0xff] %vm3366, 0.0
  %3372 = vst.msk [vmem:[#allocation5 + $0x28] sm:$0xff] %vm3366, 0.0
  %3373 = vst.msk [vmem:[#allocation5 + $0x30] sm:$0xff] %vm3366, 0.0
  %3374 = vst.msk [vmem:[#allocation5 + $0x38] sm:$0xff] %vm3366, 0.0
  %3375 = vst.msk [vmem:[#allocation5 + $0x40] sm:$0xff] %vm3366, 0.0
  %3376 = vst.msk [vmem:[#allocation5 + $0x48] sm:$0xff] %vm3366, 0.0
  %3377 = vst.msk [vmem:[#allocation5 + $0x50] sm:$0xff] %vm3366, 0.0
  %3378 = vst.msk [vmem:[#allocation5 + $0x58] sm:$0xff] %vm3366, 0.0
  %3379 = vst.msk [vmem:[#allocation5 + $0x60] sm:$0xff] %vm3366, 0.0
  %3380 = vst.msk [vmem:[#allocation5 + $0x68] sm:$0xff] %vm3366, 0.0
  %3381 = vst.msk [vmem:[#allocation5 + $0x70] sm:$0xff] %vm3366, 0.0
  %3382 = vst.msk [vmem:[#allocation5 + $0x78] sm:$0xff] %vm3366, 0.0
  %3383 = vst.msk [vmem:[#allocation5 + $0x80] sm:$0xff] %vm3366, 0.0
  %3384 = vst.msk [vmem:[#allocation5 + $0x88] sm:$0xff] %vm3366, 0.0
  %3385 = vst.msk [vmem:[#allocation5 + $0x90] sm:$0xff] %vm3366, 0.0
  %3386 = vst.msk [vmem:[#allocation5 + $0x98] sm:$0xff] %vm3366, 0.0
  %3387 = vst.msk [vmem:[#allocation5 + $0xa0] sm:$0xff] %vm3366, 0.0
  %3388 = vst.msk [vmem:[#allocation5 + $0xa8] sm:$0xff] %vm3366, 0.0
  %3389 = vst.msk [vmem:[#allocation5 + $0xb0] sm:$0xff] %vm3366, 0.0
  %3390 = vst.msk [vmem:[#allocation5 + $0xb8] sm:$0xff] %vm3366, 0.0
  %3391 = vst.msk [vmem:[#allocation5 + $0xc0] sm:$0xff] %vm3366, 0.0
  %3392 = vst.msk [vmem:[#allocation5 + $0xc8] sm:$0xff] %vm3366, 0.0
  %3393 = vst.msk [vmem:[#allocation5 + $0xd0] sm:$0xff] %vm3366, 0.0
  %3394 = vst.msk [vmem:[#allocation5 + $0xd8] sm:$0xff] %vm3366, 0.0
  %3395 = vst.msk [vmem:[#allocation5 + $0xe0] sm:$0xff] %vm3366, 0.0
  %3396 = vst.msk [vmem:[#allocation5 + $0xe8] sm:$0xff] %vm3366, 0.0
  %3397 = vst.msk [vmem:[#allocation5 + $0xf0] sm:$0xff] %vm3366, 0.0
  %3398 = vst.msk [vmem:[#allocation5 + $0xf8] sm:$0xff] %vm3366, 0.0
  %3399 = vst.msk [vmem:[#allocation5 + $0x100] sm:$0xff] %vm3366, 0.0
  %3400 = vst.msk [vmem:[#allocation5 + $0x108] sm:$0xff] %vm3366, 0.0
  %3401 = vst.msk [vmem:[#allocation5 + $0x110] sm:$0xff] %vm3366, 0.0
  %3402 = vst.msk [vmem:[#allocation5 + $0x118] sm:$0xff] %vm3366, 0.0
  %3403 = vst.msk [vmem:[#allocation5 + $0x120] sm:$0xff] %vm3366, 0.0
  %3404 = vst.msk [vmem:[#allocation5 + $0x128] sm:$0xff] %vm3366, 0.0
  %3405 = vst.msk [vmem:[#allocation5 + $0x130] sm:$0xff] %vm3366, 0.0
  %3406 = vst.msk [vmem:[#allocation5 + $0x138] sm:$0xff] %vm3366, 0.0
  %3407 = vst.msk [vmem:[#allocation5] sm:$0xff] %vm3366, %v3350
  %3408 = vst.msk [vmem:[#allocation5 + $0x10] sm:$0xff] %vm3366, %v3351
  %3409 = vst.msk [vmem:[#allocation5 + $0x20] sm:$0xff] %vm3366, %v3352
  %3410 = vst.msk [vmem:[#allocation5 + $0x30] sm:$0xff] %vm3366, %v3353
  %3411 = vst.msk [vmem:[#allocation5 + $0x40] sm:$0xff] %vm3366, %v3354
  %3412 = vst.msk [vmem:[#allocation5 + $0x50] sm:$0xff] %vm3366, %v3355
  %3413 = vst.msk [vmem:[#allocation5 + $0x60] sm:$0xff] %vm3366, %v3356
  %3414 = vst.msk [vmem:[#allocation5 + $0x70] sm:$0xff] %vm3366, %v3357
  %s3415 = scalar_lea.vmem [#allocation5], 160
  %3416 = vst.msk [vmem:[%s3415] sm:$0xff] %vm3366, %v3358
  %3417 = vst.msk [vmem:[%s3415 + $0x10] sm:$0xff] %vm3366, %v3359
  %3418 = vst.msk [vmem:[%s3415 + $0x20] sm:$0xff] %vm3366, %v3360
  %3419 = vst.msk [vmem:[%s3415 + $0x30] sm:$0xff] %vm3366, %v3361
  %3420 = vst.msk [vmem:[%s3415 + $0x40] sm:$0xff] %vm3366, %v3362
  %3421 = vst.msk [vmem:[%s3415 + $0x50] sm:$0xff] %vm3366, %v3363
  %3422 = vst.msk [vmem:[%s3415 + $0x60] sm:$0xff] %vm3366, %v3364
  %3423 = vst.msk [vmem:[%s3415 + $0x70] sm:$0xff] %vm3366, %v3365
  %v3424 = vld [vmem:[#allocation5] sm:$0xff]
  %v3425 = vld [vmem:[#allocation5 + $0x10] sm:$0xff]
  %v3426 = vld [vmem:[#allocation5 + $0x20] sm:$0xff]
  %v3427 = vld [vmem:[#allocation5 + $0x30] sm:$0xff]
  %v3428 = vld [vmem:[#allocation5 + $0x40] sm:$0xff]
  %v3429 = vld [vmem:[#allocation5 + $0x50] sm:$0xff]
  %v3430 = vld [vmem:[#allocation5 + $0x60] sm:$0xff]
  %v3431 = vld [vmem:[#allocation5 + $0x70] sm:$0xff]
  %v3432 = vpack.c.bf16 %v3425, %v3424
  %v3433 = vpack.c.bf16 %v3427, %v3426
  %v3434 = vpack.c.bf16 %v3429, %v3428
  %v3435 = vpack.c.bf16 %v3431, %v3430
  %v3440 = vunpack.c.l.b16 %v3432
  %v3441 = vunpack.c.h.b16 %v3432
  %v3442 = vunpack.c.l.b16 %v3433
  %v3443 = vunpack.c.h.b16 %v3433
  %v3444 = vunpack.c.l.b16 %v3434
  %v3445 = vunpack.c.h.b16 %v3434
  %v3446 = vunpack.c.l.b16 %v3435
  %v3447 = vunpack.c.h.b16 %v3435
  %v3448 = vpack.c.b16 %v3440, %v3440
  %v3449 = vpack.c.b16 %v3441, %v3441
  %v3450 = vpack.c.b16 %v3442, %v3442
  %v3451 = vpack.c.b16 %v3443, %v3443
  %v3452 = vpack.c.b16 %v3444, %v3444
  %v3453 = vpack.c.b16 %v3445, %v3445
  %v3454 = vpack.c.b16 %v3446, %v3446
  %v3455 = vpack.c.b16 %v3447, %v3447
  %vm3464 = vcmask 519168
  %3465 = vst.msk [vmem:[#allocation6] sm:$0xf] %vm3464, %v3448
  %3466 = vst.msk [vmem:[#allocation6 + $0x14] sm:$0xf] %vm3464, %v3449
  %3467 = vst.msk [vmem:[#allocation6 + $0x28] sm:$0xf] %vm3464, %v3450
  %3468 = vst.msk [vmem:[#allocation6 + $0x3c] sm:$0xf] %vm3464, %v3451
  %3469 = vst.msk [vmem:[#allocation6 + $0x50] sm:$0xf] %vm3464, %v3452
  %3470 = vst.msk [vmem:[#allocation6 + $0x64] sm:$0xf] %vm3464, %v3453
  %3471 = vst.msk [vmem:[#allocation6 + $0x78] sm:$0xf] %vm3464, %v3454
  %3472 = vst.msk [vmem:[#allocation6 + $0x8c] sm:$0xf] %vm3464, %v3455
  %v3473 = vld [vmem:[#allocation5 + $0x1] sm:$0xff]
  %v3474 = vld [vmem:[#allocation5 + $0x11] sm:$0xff]
  %v3475 = vld [vmem:[#allocation5 + $0x21] sm:$0xff]
  %v3476 = vld [vmem:[#allocation5 + $0x31] sm:$0xff]
  %v3477 = vld [vmem:[#allocation5 + $0x41] sm:$0xff]
  %v3478 = vld [vmem:[#allocation5 + $0x51] sm:$0xff]
  %v3479 = vld [vmem:[#allocation5 + $0x61] sm:$0xff]
  %v3480 = vld [vmem:[#allocation5 + $0x71] sm:$0xff]
  %v3481 = vpack.c.bf16 %v3474, %v3473
  %v3482 = vpack.c.bf16 %v3476, %v3475
  %v3483 = vpack.c.bf16 %v3478, %v3477
  %v3484 = vpack.c.bf16 %v3480, %v3479
  %v3489 = vunpack.c.l.b16 %v3481
  %v3490 = vunpack.c.h.b16 %v3481
  %v3491 = vunpack.c.l.b16 %v3482
  %v3492 = vunpack.c.h.b16 %v3482
  %v3493 = vunpack.c.l.b16 %v3483
  %v3494 = vunpack.c.h.b16 %v3483
  %v3495 = vunpack.c.l.b16 %v3484
  %v3496 = vunpack.c.h.b16 %v3484
  %v3497 = vpack.c.b16 %v3489, %v3489
  %v3498 = vpack.c.b16 %v3490, %v3490
  %v3499 = vpack.c.b16 %v3491, %v3491
  %v3500 = vpack.c.b16 %v3492, %v3492
  %v3501 = vpack.c.b16 %v3493, %v3493
  %v3502 = vpack.c.b16 %v3494, %v3494
  %v3503 = vpack.c.b16 %v3495, %v3495
  %v3504 = vpack.c.b16 %v3496, %v3496
  %3505 = vrot.lane.b32.xlu0 %v3497, 64
  %v3506 = vpop.permute.xlu0 %3505
  %3507 = vrot.lane.b32.xlu0 %v3498, 64
  %v3508 = vpop.permute.xlu0 %3507
  %3509 = vrot.lane.b32.xlu0 %v3499, 64
  %v3510 = vpop.permute.xlu0 %3509
  %3511 = vrot.lane.b32.xlu0 %v3500, 64
  %v3512 = vpop.permute.xlu0 %3511
  %3513 = vrot.lane.b32.xlu0 %v3501, 64
  %v3514 = vpop.permute.xlu0 %3513
  %3515 = vrot.lane.b32.xlu0 %v3502, 64
  %v3516 = vpop.permute.xlu0 %3515
  %3517 = vrot.lane.b32.xlu0 %v3503, 64
  %v3518 = vpop.permute.xlu0 %3517
  %3519 = vrot.lane.b32.xlu0 %v3504, 64
  %v3520 = vpop.permute.xlu0 %3519
  %vm3529 = vcmask 1043968
  %3530 = vst.msk [vmem:[#allocation6] sm:$0xf] %vm3529, %v3506
  %3531 = vst.msk [vmem:[#allocation6 + $0x14] sm:$0xf] %vm3529, %v3508
  %3532 = vst.msk [vmem:[#allocation6 + $0x28] sm:$0xf] %vm3529, %v3510
  %3533 = vst.msk [vmem:[#allocation6 + $0x3c] sm:$0xf] %vm3529, %v3512
  %3534 = vst.msk [vmem:[#allocation6 + $0x50] sm:$0xf] %vm3529, %v3514
  %3535 = vst.msk [vmem:[#allocation6 + $0x64] sm:$0xf] %vm3529, %v3516
  %3536 = vst.msk [vmem:[#allocation6 + $0x78] sm:$0xf] %vm3529, %v3518
  %3537 = vst.msk [vmem:[#allocation6 + $0x8c] sm:$0xf] %vm3529, %v3520
  %v3538 = vld [vmem:[#allocation5 + $0x2] sm:$0xff]
  %v3539 = vld [vmem:[#allocation5 + $0x12] sm:$0xff]
  %v3540 = vld [vmem:[#allocation5 + $0x22] sm:$0xff]
  %v3541 = vld [vmem:[#allocation5 + $0x32] sm:$0xff]
  %v3542 = vld [vmem:[#allocation5 + $0x42] sm:$0xff]
  %v3543 = vld [vmem:[#allocation5 + $0x52] sm:$0xff]
  %v3544 = vld [vmem:[#allocation5 + $0x62] sm:$0xff]
  %v3545 = vld [vmem:[#allocation5 + $0x72] sm:$0xff]
  %v3546 = vpack.c.bf16 %v3539, %v3538
  %v3547 = vpack.c.bf16 %v3541, %v3540
  %v3548 = vpack.c.bf16 %v3543, %v3542
  %v3549 = vpack.c.bf16 %v3545, %v3544
  %v3554 = vunpack.c.l.b16 %v3546
  %v3555 = vunpack.c.h.b16 %v3546
  %v3556 = vunpack.c.l.b16 %v3547
  %v3557 = vunpack.c.h.b16 %v3547
  %v3558 = vunpack.c.l.b16 %v3548
  %v3559 = vunpack.c.h.b16 %v3548
  %v3560 = vunpack.c.l.b16 %v3549
  %v3561 = vunpack.c.h.b16 %v3549
  %v3562 = vpack.c.b16 %v3554, %v3554
  %v3563 = vpack.c.b16 %v3555, %v3555
  %v3564 = vpack.c.b16 %v3556, %v3556
  %v3565 = vpack.c.b16 %v3557, %v3557
  %v3566 = vpack.c.b16 %v3558, %v3558
  %v3567 = vpack.c.b16 %v3559, %v3559
  %v3568 = vpack.c.b16 %v3560, %v3560
  %v3569 = vpack.c.b16 %v3561, %v3561
  %3578 = vst.msk [vmem:[#allocation6 + $0x4] sm:$0xf] %vm3464, %v3562
  %3579 = vst.msk [vmem:[#allocation6 + $0x18] sm:$0xf] %vm3464, %v3563
  %3580 = vst.msk [vmem:[#allocation6 + $0x2c] sm:$0xf] %vm3464, %v3564
  %3581 = vst.msk [vmem:[#allocation6 + $0x40] sm:$0xf] %vm3464, %v3565
  %3582 = vst.msk [vmem:[#allocation6 + $0x54] sm:$0xf] %vm3464, %v3566
  %3583 = vst.msk [vmem:[#allocation6 + $0x68] sm:$0xf] %vm3464, %v3567
  %3584 = vst.msk [vmem:[#allocation6 + $0x7c] sm:$0xf] %vm3464, %v3568
  %3585 = vst.msk [vmem:[#allocation6 + $0x90] sm:$0xf] %vm3464, %v3569
  %s3586 = scalar_lea.vmem [#allocation5], 16
  %v3587 = vld [vmem:[%s3586] sm:$0xff]
  %v3588 = vld [vmem:[%s3586 + $0x10] sm:$0xff]
  %v3589 = vld [vmem:[%s3586 + $0x20] sm:$0xff]
  %v3590 = vld [vmem:[%s3586 + $0x30] sm:$0xff]
  %v3591 = vld [vmem:[%s3586 + $0x40] sm:$0xff]
  %v3592 = vld [vmem:[%s3586 + $0x50] sm:$0xff]
  %v3593 = vld [vmem:[%s3586 + $0x60] sm:$0xff]
  %v3594 = vld [vmem:[%s3586 + $0x70] sm:$0xff]
  %v3595 = vpack.c.bf16 %v3588, %v3587
  %v3596 = vpack.c.bf16 %v3590, %v3589
  %v3597 = vpack.c.bf16 %v3592, %v3591
  %v3598 = vpack.c.bf16 %v3594, %v3593
  %v3603 = vunpack.c.l.b16 %v3595
  %v3604 = vunpack.c.h.b16 %v3595
  %v3605 = vunpack.c.l.b16 %v3596
  %v3606 = vunpack.c.h.b16 %v3596
  %v3607 = vunpack.c.l.b16 %v3597
  %v3608 = vunpack.c.h.b16 %v3597
  %v3609 = vunpack.c.l.b16 %v3598
  %v3610 = vunpack.c.h.b16 %v3598
  %v3611 = vpack.c.b16 %v3603, %v3603
  %v3612 = vpack.c.b16 %v3604, %v3604
  %v3613 = vpack.c.b16 %v3605, %v3605
  %v3614 = vpack.c.b16 %v3606, %v3606
  %v3615 = vpack.c.b16 %v3607, %v3607
  %v3616 = vpack.c.b16 %v3608, %v3608
  %v3617 = vpack.c.b16 %v3609, %v3609
  %v3618 = vpack.c.b16 %v3610, %v3610
  %3619 = vrot.lane.b32.xlu0 %v3611, 64
  %v3620 = vpop.permute.xlu0 %3619
  %3621 = vrot.lane.b32.xlu0 %v3612, 64
  %v3622 = vpop.permute.xlu0 %3621
  %3623 = vrot.lane.b32.xlu0 %v3613, 64
  %v3624 = vpop.permute.xlu0 %3623
  %3625 = vrot.lane.b32.xlu0 %v3614, 64
  %v3626 = vpop.permute.xlu0 %3625
  %3627 = vrot.lane.b32.xlu0 %v3615, 64
  %v3628 = vpop.permute.xlu0 %3627
  %3629 = vrot.lane.b32.xlu0 %v3616, 64
  %v3630 = vpop.permute.xlu0 %3629
  %3631 = vrot.lane.b32.xlu0 %v3617, 64
  %v3632 = vpop.permute.xlu0 %3631
  %3633 = vrot.lane.b32.xlu0 %v3618, 64
  %v3634 = vpop.permute.xlu0 %3633
  %3643 = vst.msk [vmem:[#allocation6 + $0x4] sm:$0xf] %vm3529, %v3620
  %3644 = vst.msk [vmem:[#allocation6 + $0x18] sm:$0xf] %vm3529, %v3622
  %3645 = vst.msk [vmem:[#allocation6 + $0x2c] sm:$0xf] %vm3529, %v3624
  %3646 = vst.msk [vmem:[#allocation6 + $0x40] sm:$0xf] %vm3529, %v3626
  %3647 = vst.msk [vmem:[#allocation6 + $0x54] sm:$0xf] %vm3529, %v3628
  %3648 = vst.msk [vmem:[#allocation6 + $0x68] sm:$0xf] %vm3529, %v3630
  %3649 = vst.msk [vmem:[#allocation6 + $0x7c] sm:$0xf] %vm3529, %v3632
  %3650 = vst.msk [vmem:[#allocation6 + $0x90] sm:$0xf] %vm3529, %v3634
  %v3651 = vld [vmem:[%s3586 + $0x1] sm:$0xff]
  %v3652 = vld [vmem:[%s3586 + $0x11] sm:$0xff]
  %v3653 = vld [vmem:[%s3586 + $0x21] sm:$0xff]
  %v3654 = vld [vmem:[%s3586 + $0x31] sm:$0xff]
  %v3655 = vld [vmem:[%s3586 + $0x41] sm:$0xff]
  %v3656 = vld [vmem:[%s3586 + $0x51] sm:$0xff]
  %v3657 = vld [vmem:[%s3586 + $0x61] sm:$0xff]
  %v3658 = vld [vmem:[%s3586 + $0x71] sm:$0xff]
  %v3659 = vpack.c.bf16 %v3652, %v3651
  %v3660 = vpack.c.bf16 %v3654, %v3653
  %v3661 = vpack.c.bf16 %v3656, %v3655
  %v3662 = vpack.c.bf16 %v3658, %v3657
  %v3667 = vunpack.c.l.b16 %v3659
  %v3668 = vunpack.c.h.b16 %v3659
  %v3669 = vunpack.c.l.b16 %v3660
  %v3670 = vunpack.c.h.b16 %v3660
  %v3671 = vunpack.c.l.b16 %v3661
  %v3672 = vunpack.c.h.b16 %v3661
  %v3673 = vunpack.c.l.b16 %v3662
  %v3674 = vunpack.c.h.b16 %v3662
  %v3675 = vpack.c.b16 %v3667, %v3667
  %v3676 = vpack.c.b16 %v3668, %v3668
  %v3677 = vpack.c.b16 %v3669, %v3669
  %v3678 = vpack.c.b16 %v3670, %v3670
  %v3679 = vpack.c.b16 %v3671, %v3671
  %v3680 = vpack.c.b16 %v3672, %v3672
  %v3681 = vpack.c.b16 %v3673, %v3673
  %v3682 = vpack.c.b16 %v3674, %v3674
  %3691 = vst.msk [vmem:[#allocation6 + $0x8] sm:$0xf] %vm3464, %v3675
  %3692 = vst.msk [vmem:[#allocation6 + $0x1c] sm:$0xf] %vm3464, %v3676
  %3693 = vst.msk [vmem:[#allocation6 + $0x30] sm:$0xf] %vm3464, %v3677
  %3694 = vst.msk [vmem:[#allocation6 + $0x44] sm:$0xf] %vm3464, %v3678
  %3695 = vst.msk [vmem:[#allocation6 + $0x58] sm:$0xf] %vm3464, %v3679
  %3696 = vst.msk [vmem:[#allocation6 + $0x6c] sm:$0xf] %vm3464, %v3680
  %3697 = vst.msk [vmem:[#allocation6 + $0x80] sm:$0xf] %vm3464, %v3681
  %3698 = vst.msk [vmem:[#allocation6 + $0x94] sm:$0xf] %vm3464, %v3682
  %v3699 = vld [vmem:[%s3586 + $0x2] sm:$0xff]
  %v3700 = vld [vmem:[%s3586 + $0x12] sm:$0xff]
  %v3701 = vld [vmem:[%s3586 + $0x22] sm:$0xff]
  %v3702 = vld [vmem:[%s3586 + $0x32] sm:$0xff]
  %v3703 = vld [vmem:[%s3586 + $0x42] sm:$0xff]
  %v3704 = vld [vmem:[%s3586 + $0x52] sm:$0xff]
  %v3705 = vld [vmem:[%s3586 + $0x62] sm:$0xff]
  %v3706 = vld [vmem:[%s3586 + $0x72] sm:$0xff]
  %v3707 = vpack.c.bf16 %v3700, %v3699
  %v3708 = vpack.c.bf16 %v3702, %v3701
  %v3709 = vpack.c.bf16 %v3704, %v3703
  %v3710 = vpack.c.bf16 %v3706, %v3705
  %v3715 = vunpack.c.l.b16 %v3707
  %v3716 = vunpack.c.h.b16 %v3707
  %v3717 = vunpack.c.l.b16 %v3708
  %v3718 = vunpack.c.h.b16 %v3708
  %v3719 = vunpack.c.l.b16 %v3709
  %v3720 = vunpack.c.h.b16 %v3709
  %v3721 = vunpack.c.l.b16 %v3710
  %v3722 = vunpack.c.h.b16 %v3710
  %v3723 = vpack.c.b16 %v3715, %v3715
  %v3724 = vpack.c.b16 %v3716, %v3716
  %v3725 = vpack.c.b16 %v3717, %v3717
  %v3726 = vpack.c.b16 %v3718, %v3718
  %v3727 = vpack.c.b16 %v3719, %v3719
  %v3728 = vpack.c.b16 %v3720, %v3720
  %v3729 = vpack.c.b16 %v3721, %v3721
  %v3730 = vpack.c.b16 %v3722, %v3722
  %3731 = vrot.lane.b32.xlu0 %v3723, 64
  %v3732 = vpop.permute.xlu0 %3731
  %3733 = vrot.lane.b32.xlu0 %v3724, 64
  %v3734 = vpop.permute.xlu0 %3733
  %3735 = vrot.lane.b32.xlu0 %v3725, 64
  %v3736 = vpop.permute.xlu0 %3735
  %3737 = vrot.lane.b32.xlu0 %v3726, 64
  %v3738 = vpop.permute.xlu0 %3737
  %3739 = vrot.lane.b32.xlu0 %v3727, 64
  %v3740 = vpop.permute.xlu0 %3739
  %3741 = vrot.lane.b32.xlu0 %v3728, 64
  %v3742 = vpop.permute.xlu0 %3741
  %3743 = vrot.lane.b32.xlu0 %v3729, 64
  %v3744 = vpop.permute.xlu0 %3743
  %3745 = vrot.lane.b32.xlu0 %v3730, 64
  %v3746 = vpop.permute.xlu0 %3745
  %3755 = vst.msk [vmem:[#allocation6 + $0x8] sm:$0xf] %vm3529, %v3732
  %3756 = vst.msk [vmem:[#allocation6 + $0x1c] sm:$0xf] %vm3529, %v3734
  %3757 = vst.msk [vmem:[#allocation6 + $0x30] sm:$0xf] %vm3529, %v3736
  %3758 = vst.msk [vmem:[#allocation6 + $0x44] sm:$0xf] %vm3529, %v3738
  %3759 = vst.msk [vmem:[#allocation6 + $0x58] sm:$0xf] %vm3529, %v3740
  %3760 = vst.msk [vmem:[#allocation6 + $0x6c] sm:$0xf] %vm3529, %v3742
  %3761 = vst.msk [vmem:[#allocation6 + $0x80] sm:$0xf] %vm3529, %v3744
  %3762 = vst.msk [vmem:[#allocation6 + $0x94] sm:$0xf] %vm3529, %v3746
  %s3763 = scalar_lea.vmem [#allocation5], 32
  %v3764 = vld [vmem:[%s3763] sm:$0xff]
  %v3765 = vld [vmem:[%s3763 + $0x10] sm:$0xff]
  %v3766 = vld [vmem:[%s3763 + $0x20] sm:$0xff]
  %v3767 = vld [vmem:[%s3763 + $0x30] sm:$0xff]
  %v3768 = vld [vmem:[%s3763 + $0x40] sm:$0xff]
  %v3769 = vld [vmem:[%s3763 + $0x50] sm:$0xff]
  %v3770 = vld [vmem:[%s3763 + $0x60] sm:$0xff]
  %v3771 = vld [vmem:[%s3763 + $0x70] sm:$0xff]
  %v3772 = vpack.c.bf16 %v3765, %v3764
  %v3773 = vpack.c.bf16 %v3767, %v3766
  %v3774 = vpack.c.bf16 %v3769, %v3768
  %v3775 = vpack.c.bf16 %v3771, %v3770
  %v3780 = vunpack.c.l.b16 %v3772
  %v3781 = vunpack.c.h.b16 %v3772
  %v3782 = vunpack.c.l.b16 %v3773
  %v3783 = vunpack.c.h.b16 %v3773
  %v3784 = vunpack.c.l.b16 %v3774
  %v3785 = vunpack.c.h.b16 %v3774
  %v3786 = vunpack.c.l.b16 %v3775
  %v3787 = vunpack.c.h.b16 %v3775
  %v3788 = vpack.c.b16 %v3780, %v3780
  %v3789 = vpack.c.b16 %v3781, %v3781
  %v3790 = vpack.c.b16 %v3782, %v3782
  %v3791 = vpack.c.b16 %v3783, %v3783
  %v3792 = vpack.c.b16 %v3784, %v3784
  %v3793 = vpack.c.b16 %v3785, %v3785
  %v3794 = vpack.c.b16 %v3786, %v3786
  %v3795 = vpack.c.b16 %v3787, %v3787
  %3804 = vst.msk [vmem:[#allocation6 + $0xc] sm:$0xf] %vm3464, %v3788
  %3805 = vst.msk [vmem:[#allocation6 + $0x20] sm:$0xf] %vm3464, %v3789
  %3806 = vst.msk [vmem:[#allocation6 + $0x34] sm:$0xf] %vm3464, %v3790
  %3807 = vst.msk [vmem:[#allocation6 + $0x48] sm:$0xf] %vm3464, %v3791
  %3808 = vst.msk [vmem:[#allocation6 + $0x5c] sm:$0xf] %vm3464, %v3792
  %3809 = vst.msk [vmem:[#allocation6 + $0x70] sm:$0xf] %vm3464, %v3793
  %3810 = vst.msk [vmem:[#allocation6 + $0x84] sm:$0xf] %vm3464, %v3794
  %3811 = vst.msk [vmem:[#allocation6 + $0x98] sm:$0xf] %vm3464, %v3795
  %v3812 = vld [vmem:[%s3763 + $0x1] sm:$0xff]
  %v3813 = vld [vmem:[%s3763 + $0x11] sm:$0xff]
  %v3814 = vld [vmem:[%s3763 + $0x21] sm:$0xff]
  %v3815 = vld [vmem:[%s3763 + $0x31] sm:$0xff]
  %v3816 = vld [vmem:[%s3763 + $0x41] sm:$0xff]
  %v3817 = vld [vmem:[%s3763 + $0x51] sm:$0xff]
  %v3818 = vld [vmem:[%s3763 + $0x61] sm:$0xff]
  %v3819 = vld [vmem:[%s3763 + $0x71] sm:$0xff]
  %v3820 = vpack.c.bf16 %v3813, %v3812
  %v3821 = vpack.c.bf16 %v3815, %v3814
  %v3822 = vpack.c.bf16 %v3817, %v3816
  %v3823 = vpack.c.bf16 %v3819, %v3818
  %v3828 = vunpack.c.l.b16 %v3820
  %v3829 = vunpack.c.h.b16 %v3820
  %v3830 = vunpack.c.l.b16 %v3821
  %v3831 = vunpack.c.h.b16 %v3821
  %v3832 = vunpack.c.l.b16 %v3822
  %v3833 = vunpack.c.h.b16 %v3822
  %v3834 = vunpack.c.l.b16 %v3823
  %v3835 = vunpack.c.h.b16 %v3823
  %v3836 = vpack.c.b16 %v3828, %v3828
  %v3837 = vpack.c.b16 %v3829, %v3829
  %v3838 = vpack.c.b16 %v3830, %v3830
  %v3839 = vpack.c.b16 %v3831, %v3831
  %v3840 = vpack.c.b16 %v3832, %v3832
  %v3841 = vpack.c.b16 %v3833, %v3833
  %v3842 = vpack.c.b16 %v3834, %v3834
  %v3843 = vpack.c.b16 %v3835, %v3835
  %3844 = vrot.lane.b32.xlu0 %v3836, 64
  %v3845 = vpop.permute.xlu0 %3844
  %3846 = vrot.lane.b32.xlu0 %v3837, 64
  %v3847 = vpop.permute.xlu0 %3846
  %3848 = vrot.lane.b32.xlu0 %v3838, 64
  %v3849 = vpop.permute.xlu0 %3848
  %3850 = vrot.lane.b32.xlu0 %v3839, 64
  %v3851 = vpop.permute.xlu0 %3850
  %3852 = vrot.lane.b32.xlu0 %v3840, 64
  %v3853 = vpop.permute.xlu0 %3852
  %3854 = vrot.lane.b32.xlu0 %v3841, 64
  %v3855 = vpop.permute.xlu0 %3854
  %3856 = vrot.lane.b32.xlu0 %v3842, 64
  %v3857 = vpop.permute.xlu0 %3856
  %3858 = vrot.lane.b32.xlu0 %v3843, 64
  %v3859 = vpop.permute.xlu0 %3858
  %3868 = vst.msk [vmem:[#allocation6 + $0xc] sm:$0xf] %vm3529, %v3845
  %3869 = vst.msk [vmem:[#allocation6 + $0x20] sm:$0xf] %vm3529, %v3847
  %3870 = vst.msk [vmem:[#allocation6 + $0x34] sm:$0xf] %vm3529, %v3849
  %3871 = vst.msk [vmem:[#allocation6 + $0x48] sm:$0xf] %vm3529, %v3851
  %3872 = vst.msk [vmem:[#allocation6 + $0x5c] sm:$0xf] %vm3529, %v3853
  %3873 = vst.msk [vmem:[#allocation6 + $0x70] sm:$0xf] %vm3529, %v3855
  %3874 = vst.msk [vmem:[#allocation6 + $0x84] sm:$0xf] %vm3529, %v3857
  %3875 = vst.msk [vmem:[#allocation6 + $0x98] sm:$0xf] %vm3529, %v3859
  %v3876 = vld [vmem:[%s3763 + $0x2] sm:$0xff]
  %v3877 = vld [vmem:[%s3763 + $0x12] sm:$0xff]
  %v3878 = vld [vmem:[%s3763 + $0x22] sm:$0xff]
  %v3879 = vld [vmem:[%s3763 + $0x32] sm:$0xff]
  %v3880 = vld [vmem:[%s3763 + $0x42] sm:$0xff]
  %v3881 = vld [vmem:[%s3763 + $0x52] sm:$0xff]
  %v3882 = vld [vmem:[%s3763 + $0x62] sm:$0xff]
  %v3883 = vld [vmem:[%s3763 + $0x72] sm:$0xff]
  %v3884 = vpack.c.bf16 %v3877, %v3876
  %v3885 = vpack.c.bf16 %v3879, %v3878
  %v3886 = vpack.c.bf16 %v3881, %v3880
  %v3887 = vpack.c.bf16 %v3883, %v3882
  %v3892 = vunpack.c.l.b16 %v3884
  %v3893 = vunpack.c.h.b16 %v3884
  %v3894 = vunpack.c.l.b16 %v3885
  %v3895 = vunpack.c.h.b16 %v3885
  %v3896 = vunpack.c.l.b16 %v3886
  %v3897 = vunpack.c.h.b16 %v3886
  %v3898 = vunpack.c.l.b16 %v3887
  %v3899 = vunpack.c.h.b16 %v3887
  %v3900 = vpack.c.b16 %v3892, %v3892
  %v3901 = vpack.c.b16 %v3893, %v3893
  %v3902 = vpack.c.b16 %v3894, %v3894
  %v3903 = vpack.c.b16 %v3895, %v3895
  %v3904 = vpack.c.b16 %v3896, %v3896
  %v3905 = vpack.c.b16 %v3897, %v3897
  %v3906 = vpack.c.b16 %v3898, %v3898
  %v3907 = vpack.c.b16 %v3899, %v3899
  %3916 = vst.msk [vmem:[#allocation6 + $0x10] sm:$0xf] %vm3464, %v3900
  %3917 = vst.msk [vmem:[#allocation6 + $0x24] sm:$0xf] %vm3464, %v3901
  %3918 = vst.msk [vmem:[#allocation6 + $0x38] sm:$0xf] %vm3464, %v3902
  %3919 = vst.msk [vmem:[#allocation6 + $0x4c] sm:$0xf] %vm3464, %v3903
  %3920 = vst.msk [vmem:[#allocation6 + $0x60] sm:$0xf] %vm3464, %v3904
  %3921 = vst.msk [vmem:[#allocation6 + $0x74] sm:$0xf] %vm3464, %v3905
  %3922 = vst.msk [vmem:[#allocation6 + $0x88] sm:$0xf] %vm3464, %v3906
  %3923 = vst.msk [vmem:[#allocation6 + $0x9c] sm:$0xf] %vm3464, %v3907
  %v3924 = vld [vmem:[%s3415] sm:$0xff]
  %v3925 = vld [vmem:[%s3415 + $0x10] sm:$0xff]
  %v3926 = vld [vmem:[%s3415 + $0x20] sm:$0xff]
  %v3927 = vld [vmem:[%s3415 + $0x30] sm:$0xff]
  %v3928 = vld [vmem:[%s3415 + $0x40] sm:$0xff]
  %v3929 = vld [vmem:[%s3415 + $0x50] sm:$0xff]
  %v3930 = vld [vmem:[%s3415 + $0x60] sm:$0xff]
  %v3931 = vld [vmem:[%s3415 + $0x70] sm:$0xff]
  %v3932 = vpack.c.bf16 %v3925, %v3924
  %v3933 = vpack.c.bf16 %v3927, %v3926
  %v3934 = vpack.c.bf16 %v3929, %v3928
  %v3935 = vpack.c.bf16 %v3931, %v3930
  %v3940 = vunpack.c.l.b16 %v3932
  %v3941 = vunpack.c.h.b16 %v3932
  %v3942 = vunpack.c.l.b16 %v3933
  %v3943 = vunpack.c.h.b16 %v3933
  %v3944 = vunpack.c.l.b16 %v3934
  %v3945 = vunpack.c.h.b16 %v3934
  %v3946 = vunpack.c.l.b16 %v3935
  %v3947 = vunpack.c.h.b16 %v3935
  %v3948 = vpack.c.b16 %v3940, %v3940
  %v3949 = vpack.c.b16 %v3941, %v3941
  %v3950 = vpack.c.b16 %v3942, %v3942
  %v3951 = vpack.c.b16 %v3943, %v3943
  %v3952 = vpack.c.b16 %v3944, %v3944
  %v3953 = vpack.c.b16 %v3945, %v3945
  %v3954 = vpack.c.b16 %v3946, %v3946
  %v3955 = vpack.c.b16 %v3947, %v3947
  %3964 = vst.msk [vmem:[#allocation6 + $0xa0] sm:$0xf] %vm3464, %v3948
  %3965 = vst.msk [vmem:[#allocation6 + $0xb4] sm:$0xf] %vm3464, %v3949
  %3966 = vst.msk [vmem:[#allocation6 + $0xc8] sm:$0xf] %vm3464, %v3950
  %3967 = vst.msk [vmem:[#allocation6 + $0xdc] sm:$0xf] %vm3464, %v3951
  %3968 = vst.msk [vmem:[#allocation6 + $0xf0] sm:$0xf] %vm3464, %v3952
  %3969 = vst.msk [vmem:[#allocation6 + $0x104] sm:$0xf] %vm3464, %v3953
  %3970 = vst.msk [vmem:[#allocation6 + $0x118] sm:$0xf] %vm3464, %v3954
  %3971 = vst.msk [vmem:[#allocation6 + $0x12c] sm:$0xf] %vm3464, %v3955
  %v3972 = vld [vmem:[%s3415 + $0x1] sm:$0xff]
  %v3973 = vld [vmem:[%s3415 + $0x11] sm:$0xff]
  %v3974 = vld [vmem:[%s3415 + $0x21] sm:$0xff]
  %v3975 = vld [vmem:[%s3415 + $0x31] sm:$0xff]
  %v3976 = vld [vmem:[%s3415 + $0x41] sm:$0xff]
  %v3977 = vld [vmem:[%s3415 + $0x51] sm:$0xff]
  %v3978 = vld [vmem:[%s3415 + $0x61] sm:$0xff]
  %v3979 = vld [vmem:[%s3415 + $0x71] sm:$0xff]
  %v3980 = vpack.c.bf16 %v3973, %v3972
  %v3981 = vpack.c.bf16 %v3975, %v3974
  %v3982 = vpack.c.bf16 %v3977, %v3976
  %v3983 = vpack.c.bf16 %v3979, %v3978
  %v3988 = vunpack.c.l.b16 %v3980
  %v3989 = vunpack.c.h.b16 %v3980
  %v3990 = vunpack.c.l.b16 %v3981
  %v3991 = vunpack.c.h.b16 %v3981
  %v3992 = vunpack.c.l.b16 %v3982
  %v3993 = vunpack.c.h.b16 %v3982
  %v3994 = vunpack.c.l.b16 %v3983
  %v3995 = vunpack.c.h.b16 %v3983
  %v3996 = vpack.c.b16 %v3988, %v3988
  %v3997 = vpack.c.b16 %v3989, %v3989
  %v3998 = vpack.c.b16 %v3990, %v3990
  %v3999 = vpack.c.b16 %v3991, %v3991
  %v4000 = vpack.c.b16 %v3992, %v3992
  %v4001 = vpack.c.b16 %v3993, %v3993
  %v4002 = vpack.c.b16 %v3994, %v3994
  %v4003 = vpack.c.b16 %v3995, %v3995
  %4004 = vrot.lane.b32.xlu0 %v3996, 64
  %v4005 = vpop.permute.xlu0 %4004
  %4006 = vrot.lane.b32.xlu0 %v3997, 64
  %v4007 = vpop.permute.xlu0 %4006
  %4008 = vrot.lane.b32.xlu0 %v3998, 64
  %v4009 = vpop.permute.xlu0 %4008
  %4010 = vrot.lane.b32.xlu0 %v3999, 64
  %v4011 = vpop.permute.xlu0 %4010
  %4012 = vrot.lane.b32.xlu0 %v4000, 64
  %v4013 = vpop.permute.xlu0 %4012
  %4014 = vrot.lane.b32.xlu0 %v4001, 64
  %v4015 = vpop.permute.xlu0 %4014
  %4016 = vrot.lane.b32.xlu0 %v4002, 64
  %v4017 = vpop.permute.xlu0 %4016
  %4018 = vrot.lane.b32.xlu0 %v4003, 64
  %v4019 = vpop.permute.xlu0 %4018
  %4028 = vst.msk [vmem:[#allocation6 + $0xa0] sm:$0xf] %vm3529, %v4005
  %4029 = vst.msk [vmem:[#allocation6 + $0xb4] sm:$0xf] %vm3529, %v4007
  %4030 = vst.msk [vmem:[#allocation6 + $0xc8] sm:$0xf] %vm3529, %v4009
  %4031 = vst.msk [vmem:[#allocation6 + $0xdc] sm:$0xf] %vm3529, %v4011
  %4032 = vst.msk [vmem:[#allocation6 + $0xf0] sm:$0xf] %vm3529, %v4013
  %4033 = vst.msk [vmem:[#allocation6 + $0x104] sm:$0xf] %vm3529, %v4015
  %4034 = vst.msk [vmem:[#allocation6 + $0x118] sm:$0xf] %vm3529, %v4017
  %4035 = vst.msk [vmem:[#allocation6 + $0x12c] sm:$0xf] %vm3529, %v4019
  %v4036 = vld [vmem:[%s3415 + $0x2] sm:$0xff]
  %v4037 = vld [vmem:[%s3415 + $0x12] sm:$0xff]
  %v4038 = vld [vmem:[%s3415 + $0x22] sm:$0xff]
  %v4039 = vld [vmem:[%s3415 + $0x32] sm:$0xff]
  %v4040 = vld [vmem:[%s3415 + $0x42] sm:$0xff]
  %v4041 = vld [vmem:[%s3415 + $0x52] sm:$0xff]
  %v4042 = vld [vmem:[%s3415 + $0x62] sm:$0xff]
  %v4043 = vld [vmem:[%s3415 + $0x72] sm:$0xff]
  %v4044 = vpack.c.bf16 %v4037, %v4036
  %v4045 = vpack.c.bf16 %v4039, %v4038
  %v4046 = vpack.c.bf16 %v4041, %v4040
  %v4047 = vpack.c.bf16 %v4043, %v4042
  %v4052 = vunpack.c.l.b16 %v4044
  %v4053 = vunpack.c.h.b16 %v4044
  %v4054 = vunpack.c.l.b16 %v4045
  %v4055 = vunpack.c.h.b16 %v4045
  %v4056 = vunpack.c.l.b16 %v4046
  %v4057 = vunpack.c.h.b16 %v4046
  %v4058 = vunpack.c.l.b16 %v4047
  %v4059 = vunpack.c.h.b16 %v4047
  %v4060 = vpack.c.b16 %v4052, %v4052
  %v4061 = vpack.c.b16 %v4053, %v4053
  %v4062 = vpack.c.b16 %v4054, %v4054
  %v4063 = vpack.c.b16 %v4055, %v4055
  %v4064 = vpack.c.b16 %v4056, %v4056
  %v4065 = vpack.c.b16 %v4057, %v4057
  %v4066 = vpack.c.b16 %v4058, %v4058
  %v4067 = vpack.c.b16 %v4059, %v4059
  %4076 = vst.msk [vmem:[#allocation6 + $0xa4] sm:$0xf] %vm3464, %v4060
  %4077 = vst.msk [vmem:[#allocation6 + $0xb8] sm:$0xf] %vm3464, %v4061
  %4078 = vst.msk [vmem:[#allocation6 + $0xcc] sm:$0xf] %vm3464, %v4062
  %4079 = vst.msk [vmem:[#allocation6 + $0xe0] sm:$0xf] %vm3464, %v4063
  %4080 = vst.msk [vmem:[#allocation6 + $0xf4] sm:$0xf] %vm3464, %v4064
  %4081 = vst.msk [vmem:[#allocation6 + $0x108] sm:$0xf] %vm3464, %v4065
  %4082 = vst.msk [vmem:[#allocation6 + $0x11c] sm:$0xf] %vm3464, %v4066
  %4083 = vst.msk [vmem:[#allocation6 + $0x130] sm:$0xf] %vm3464, %v4067
  %s4084 = scalar_lea.vmem [#allocation5], 176
  %v4085 = vld [vmem:[%s4084] sm:$0xff]
  %v4086 = vld [vmem:[%s4084 + $0x10] sm:$0xff]
  %v4087 = vld [vmem:[%s4084 + $0x20] sm:$0xff]
  %v4088 = vld [vmem:[%s4084 + $0x30] sm:$0xff]
  %v4089 = vld [vmem:[%s4084 + $0x40] sm:$0xff]
  %v4090 = vld [vmem:[%s4084 + $0x50] sm:$0xff]
  %v4091 = vld [vmem:[%s4084 + $0x60] sm:$0xff]
  %v4092 = vld [vmem:[%s4084 + $0x70] sm:$0xff]
  %v4093 = vpack.c.bf16 %v4086, %v4085
  %v4094 = vpack.c.bf16 %v4088, %v4087
  %v4095 = vpack.c.bf16 %v4090, %v4089
  %v4096 = vpack.c.bf16 %v4092, %v4091
  %v4101 = vunpack.c.l.b16 %v4093
  %v4102 = vunpack.c.h.b16 %v4093
  %v4103 = vunpack.c.l.b16 %v4094
  %v4104 = vunpack.c.h.b16 %v4094
  %v4105 = vunpack.c.l.b16 %v4095
  %v4106 = vunpack.c.h.b16 %v4095
  %v4107 = vunpack.c.l.b16 %v4096
  %v4108 = vunpack.c.h.b16 %v4096
  %v4109 = vpack.c.b16 %v4101, %v4101
  %v4110 = vpack.c.b16 %v4102, %v4102
  %v4111 = vpack.c.b16 %v4103, %v4103
  %v4112 = vpack.c.b16 %v4104, %v4104
  %v4113 = vpack.c.b16 %v4105, %v4105
  %v4114 = vpack.c.b16 %v4106, %v4106
  %v4115 = vpack.c.b16 %v4107, %v4107
  %v4116 = vpack.c.b16 %v4108, %v4108
  %4117 = vrot.lane.b32.xlu0 %v4109, 64
  %v4118 = vpop.permute.xlu0 %4117
  %4119 = vrot.lane.b32.xlu0 %v4110, 64
  %v4120 = vpop.permute.xlu0 %4119
  %4121 = vrot.lane.b32.xlu0 %v4111, 64
  %v4122 = vpop.permute.xlu0 %4121
  %4123 = vrot.lane.b32.xlu0 %v4112, 64
  %v4124 = vpop.permute.xlu0 %4123
  %4125 = vrot.lane.b32.xlu0 %v4113, 64
  %v4126 = vpop.permute.xlu0 %4125
  %4127 = vrot.lane.b32.xlu0 %v4114, 64
  %v4128 = vpop.permute.xlu0 %4127
  %4129 = vrot.lane.b32.xlu0 %v4115, 64
  %v4130 = vpop.permute.xlu0 %4129
  %4131 = vrot.lane.b32.xlu0 %v4116, 64
  %v4132 = vpop.permute.xlu0 %4131
  %4141 = vst.msk [vmem:[#allocation6 + $0xa4] sm:$0xf] %vm3529, %v4118
  %4142 = vst.msk [vmem:[#allocation6 + $0xb8] sm:$0xf] %vm3529, %v4120
  %4143 = vst.msk [vmem:[#allocation6 + $0xcc] sm:$0xf] %vm3529, %v4122
  %4144 = vst.msk [vmem:[#allocation6 + $0xe0] sm:$0xf] %vm3529, %v4124
  %4145 = vst.msk [vmem:[#allocation6 + $0xf4] sm:$0xf] %vm3529, %v4126
  %4146 = vst.msk [vmem:[#allocation6 + $0x108] sm:$0xf] %vm3529, %v4128
  %4147 = vst.msk [vmem:[#allocation6 + $0x11c] sm:$0xf] %vm3529, %v4130
  %4148 = vst.msk [vmem:[#allocation6 + $0x130] sm:$0xf] %vm3529, %v4132
  %v4149 = vld [vmem:[%s4084 + $0x1] sm:$0xff]
  %v4150 = vld [vmem:[%s4084 + $0x11] sm:$0xff]
  %v4151 = vld [vmem:[%s4084 + $0x21] sm:$0xff]
  %v4152 = vld [vmem:[%s4084 + $0x31] sm:$0xff]
  %v4153 = vld [vmem:[%s4084 + $0x41] sm:$0xff]
  %v4154 = vld [vmem:[%s4084 + $0x51] sm:$0xff]
  %v4155 = vld [vmem:[%s4084 + $0x61] sm:$0xff]
  %v4156 = vld [vmem:[%s4084 + $0x71] sm:$0xff]
  %v4157 = vpack.c.bf16 %v4150, %v4149
  %v4158 = vpack.c.bf16 %v4152, %v4151
  %v4159 = vpack.c.bf16 %v4154, %v4153
  %v4160 = vpack.c.bf16 %v4156, %v4155
  %v4165 = vunpack.c.l.b16 %v4157
  %v4166 = vunpack.c.h.b16 %v4157
  %v4167 = vunpack.c.l.b16 %v4158
  %v4168 = vunpack.c.h.b16 %v4158
  %v4169 = vunpack.c.l.b16 %v4159
  %v4170 = vunpack.c.h.b16 %v4159
  %v4171 = vunpack.c.l.b16 %v4160
  %v4172 = vunpack.c.h.b16 %v4160
  %v4173 = vpack.c.b16 %v4165, %v4165
  %v4174 = vpack.c.b16 %v4166, %v4166
  %v4175 = vpack.c.b16 %v4167, %v4167
  %v4176 = vpack.c.b16 %v4168, %v4168
  %v4177 = vpack.c.b16 %v4169, %v4169
  %v4178 = vpack.c.b16 %v4170, %v4170
  %v4179 = vpack.c.b16 %v4171, %v4171
  %v4180 = vpack.c.b16 %v4172, %v4172
  %4189 = vst.msk [vmem:[#allocation6 + $0xa8] sm:$0xf] %vm3464, %v4173
  %4190 = vst.msk [vmem:[#allocation6 + $0xbc] sm:$0xf] %vm3464, %v4174
  %4191 = vst.msk [vmem:[#allocation6 + $0xd0] sm:$0xf] %vm3464, %v4175
  %4192 = vst.msk [vmem:[#allocation6 + $0xe4] sm:$0xf] %vm3464, %v4176
  %4193 = vst.msk [vmem:[#allocation6 + $0xf8] sm:$0xf] %vm3464, %v4177
  %4194 = vst.msk [vmem:[#allocation6 + $0x10c] sm:$0xf] %vm3464, %v4178
  %4195 = vst.msk [vmem:[#allocation6 + $0x120] sm:$0xf] %vm3464, %v4179
  %4196 = vst.msk [vmem:[#allocation6 + $0x134] sm:$0xf] %vm3464, %v4180
  %v4197 = vld [vmem:[%s4084 + $0x2] sm:$0xff]
  %v4198 = vld [vmem:[%s4084 + $0x12] sm:$0xff]
  %v4199 = vld [vmem:[%s4084 + $0x22] sm:$0xff]
  %v4200 = vld [vmem:[%s4084 + $0x32] sm:$0xff]
  %v4201 = vld [vmem:[%s4084 + $0x42] sm:$0xff]
  %v4202 = vld [vmem:[%s4084 + $0x52] sm:$0xff]
  %v4203 = vld [vmem:[%s4084 + $0x62] sm:$0xff]
  %v4204 = vld [vmem:[%s4084 + $0x72] sm:$0xff]
  %v4205 = vpack.c.bf16 %v4198, %v4197
  %v4206 = vpack.c.bf16 %v4200, %v4199
  %v4207 = vpack.c.bf16 %v4202, %v4201
  %v4208 = vpack.c.bf16 %v4204, %v4203
  %v4213 = vunpack.c.l.b16 %v4205
  %v4214 = vunpack.c.h.b16 %v4205
  %v4215 = vunpack.c.l.b16 %v4206
  %v4216 = vunpack.c.h.b16 %v4206
  %v4217 = vunpack.c.l.b16 %v4207
  %v4218 = vunpack.c.h.b16 %v4207
  %v4219 = vunpack.c.l.b16 %v4208
  %v4220 = vunpack.c.h.b16 %v4208
  %v4221 = vpack.c.b16 %v4213, %v4213
  %v4222 = vpack.c.b16 %v4214, %v4214
  %v4223 = vpack.c.b16 %v4215, %v4215
  %v4224 = vpack.c.b16 %v4216, %v4216
  %v4225 = vpack.c.b16 %v4217, %v4217
  %v4226 = vpack.c.b16 %v4218, %v4218
  %v4227 = vpack.c.b16 %v4219, %v4219
  %v4228 = vpack.c.b16 %v4220, %v4220
  %4229 = vrot.lane.b32.xlu0 %v4221, 64
  %v4230 = vpop.permute.xlu0 %4229
  %4231 = vrot.lane.b32.xlu0 %v4222, 64
  %v4232 = vpop.permute.xlu0 %4231
  %4233 = vrot.lane.b32.xlu0 %v4223, 64
  %v4234 = vpop.permute.xlu0 %4233
  %4235 = vrot.lane.b32.xlu0 %v4224, 64
  %v4236 = vpop.permute.xlu0 %4235
  %4237 = vrot.lane.b32.xlu0 %v4225, 64
  %v4238 = vpop.permute.xlu0 %4237
  %4239 = vrot.lane.b32.xlu0 %v4226, 64
  %v4240 = vpop.permute.xlu0 %4239
  %4241 = vrot.lane.b32.xlu0 %v4227, 64
  %v4242 = vpop.permute.xlu0 %4241
  %4243 = vrot.lane.b32.xlu0 %v4228, 64
  %v4244 = vpop.permute.xlu0 %4243
  %4253 = vst.msk [vmem:[#allocation6 + $0xa8] sm:$0xf] %vm3529, %v4230
  %4254 = vst.msk [vmem:[#allocation6 + $0xbc] sm:$0xf] %vm3529, %v4232
  %4255 = vst.msk [vmem:[#allocation6 + $0xd0] sm:$0xf] %vm3529, %v4234
  %4256 = vst.msk [vmem:[#allocation6 + $0xe4] sm:$0xf] %vm3529, %v4236
  %4257 = vst.msk [vmem:[#allocation6 + $0xf8] sm:$0xf] %vm3529, %v4238
  %4258 = vst.msk [vmem:[#allocation6 + $0x10c] sm:$0xf] %vm3529, %v4240
  %4259 = vst.msk [vmem:[#allocation6 + $0x120] sm:$0xf] %vm3529, %v4242
  %4260 = vst.msk [vmem:[#allocation6 + $0x134] sm:$0xf] %vm3529, %v4244
  %s4261 = scalar_lea.vmem [#allocation5], 192
  %v4262 = vld [vmem:[%s4261] sm:$0xff]
  %v4263 = vld [vmem:[%s4261 + $0x10] sm:$0xff]
  %v4264 = vld [vmem:[%s4261 + $0x20] sm:$0xff]
  %v4265 = vld [vmem:[%s4261 + $0x30] sm:$0xff]
  %v4266 = vld [vmem:[%s4261 + $0x40] sm:$0xff]
  %v4267 = vld [vmem:[%s4261 + $0x50] sm:$0xff]
  %v4268 = vld [vmem:[%s4261 + $0x60] sm:$0xff]
  %v4269 = vld [vmem:[%s4261 + $0x70] sm:$0xff]
  %v4270 = vpack.c.bf16 %v4263, %v4262
  %v4271 = vpack.c.bf16 %v4265, %v4264
  %v4272 = vpack.c.bf16 %v4267, %v4266
  %v4273 = vpack.c.bf16 %v4269, %v4268
  %v4278 = vunpack.c.l.b16 %v4270
  %v4279 = vunpack.c.h.b16 %v4270
  %v4280 = vunpack.c.l.b16 %v4271
  %v4281 = vunpack.c.h.b16 %v4271
  %v4282 = vunpack.c.l.b16 %v4272
  %v4283 = vunpack.c.h.b16 %v4272
  %v4284 = vunpack.c.l.b16 %v4273
  %v4285 = vunpack.c.h.b16 %v4273
  %v4286 = vpack.c.b16 %v4278, %v4278
  %v4287 = vpack.c.b16 %v4279, %v4279
  %v4288 = vpack.c.b16 %v4280, %v4280
  %v4289 = vpack.c.b16 %v4281, %v4281
  %v4290 = vpack.c.b16 %v4282, %v4282
  %v4291 = vpack.c.b16 %v4283, %v4283
  %v4292 = vpack.c.b16 %v4284, %v4284
  %v4293 = vpack.c.b16 %v4285, %v4285
  %4302 = vst.msk [vmem:[#allocation6 + $0xac] sm:$0xf] %vm3464, %v4286
  %4303 = vst.msk [vmem:[#allocation6 + $0xc0] sm:$0xf] %vm3464, %v4287
  %4304 = vst.msk [vmem:[#allocation6 + $0xd4] sm:$0xf] %vm3464, %v4288
  %4305 = vst.msk [vmem:[#allocation6 + $0xe8] sm:$0xf] %vm3464, %v4289
  %4306 = vst.msk [vmem:[#allocation6 + $0xfc] sm:$0xf] %vm3464, %v4290
  %4307 = vst.msk [vmem:[#allocation6 + $0x110] sm:$0xf] %vm3464, %v4291
  %4308 = vst.msk [vmem:[#allocation6 + $0x124] sm:$0xf] %vm3464, %v4292
  %4309 = vst.msk [vmem:[#allocation6 + $0x138] sm:$0xf] %vm3464, %v4293
  %v4310 = vld [vmem:[%s4261 + $0x1] sm:$0xff]
  %v4311 = vld [vmem:[%s4261 + $0x11] sm:$0xff]
  %v4312 = vld [vmem:[%s4261 + $0x21] sm:$0xff]
  %v4313 = vld [vmem:[%s4261 + $0x31] sm:$0xff]
  %v4314 = vld [vmem:[%s4261 + $0x41] sm:$0xff]
  %v4315 = vld [vmem:[%s4261 + $0x51] sm:$0xff]
  %v4316 = vld [vmem:[%s4261 + $0x61] sm:$0xff]
  %v4317 = vld [vmem:[%s4261 + $0x71] sm:$0xff]
  %v4318 = vpack.c.bf16 %v4311, %v4310
  %v4319 = vpack.c.bf16 %v4313, %v4312
  %v4320 = vpack.c.bf16 %v4315, %v4314
  %v4321 = vpack.c.bf16 %v4317, %v4316
  %v4326 = vunpack.c.l.b16 %v4318
  %v4327 = vunpack.c.h.b16 %v4318
  %v4328 = vunpack.c.l.b16 %v4319
  %v4329 = vunpack.c.h.b16 %v4319
  %v4330 = vunpack.c.l.b16 %v4320
  %v4331 = vunpack.c.h.b16 %v4320
  %v4332 = vunpack.c.l.b16 %v4321
  %v4333 = vunpack.c.h.b16 %v4321
  %v4334 = vpack.c.b16 %v4326, %v4326
  %v4335 = vpack.c.b16 %v4327, %v4327
  %v4336 = vpack.c.b16 %v4328, %v4328
  %v4337 = vpack.c.b16 %v4329, %v4329
  %v4338 = vpack.c.b16 %v4330, %v4330
  %v4339 = vpack.c.b16 %v4331, %v4331
  %v4340 = vpack.c.b16 %v4332, %v4332
  %v4341 = vpack.c.b16 %v4333, %v4333
  %4342 = vrot.lane.b32.xlu0 %v4334, 64
  %v4343 = vpop.permute.xlu0 %4342
  %4344 = vrot.lane.b32.xlu0 %v4335, 64
  %v4345 = vpop.permute.xlu0 %4344
  %4346 = vrot.lane.b32.xlu0 %v4336, 64
  %v4347 = vpop.permute.xlu0 %4346
  %4348 = vrot.lane.b32.xlu0 %v4337, 64
  %v4349 = vpop.permute.xlu0 %4348
  %4350 = vrot.lane.b32.xlu0 %v4338, 64
  %v4351 = vpop.permute.xlu0 %4350
  %4352 = vrot.lane.b32.xlu0 %v4339, 64
  %v4353 = vpop.permute.xlu0 %4352
  %4354 = vrot.lane.b32.xlu0 %v4340, 64
  %v4355 = vpop.permute.xlu0 %4354
  %4356 = vrot.lane.b32.xlu0 %v4341, 64
  %v4357 = vpop.permute.xlu0 %4356
  %4366 = vst.msk [vmem:[#allocation6 + $0xac] sm:$0xf] %vm3529, %v4343
  %4367 = vst.msk [vmem:[#allocation6 + $0xc0] sm:$0xf] %vm3529, %v4345
  %4368 = vst.msk [vmem:[#allocation6 + $0xd4] sm:$0xf] %vm3529, %v4347
  %4369 = vst.msk [vmem:[#allocation6 + $0xe8] sm:$0xf] %vm3529, %v4349
  %4370 = vst.msk [vmem:[#allocation6 + $0xfc] sm:$0xf] %vm3529, %v4351
  %4371 = vst.msk [vmem:[#allocation6 + $0x110] sm:$0xf] %vm3529, %v4353
  %4372 = vst.msk [vmem:[#allocation6 + $0x124] sm:$0xf] %vm3529, %v4355
  %4373 = vst.msk [vmem:[#allocation6 + $0x138] sm:$0xf] %vm3529, %v4357
  %v4374 = vld [vmem:[%s4261 + $0x2] sm:$0xff]
  %v4375 = vld [vmem:[%s4261 + $0x12] sm:$0xff]
  %v4376 = vld [vmem:[%s4261 + $0x22] sm:$0xff]
  %v4377 = vld [vmem:[%s4261 + $0x32] sm:$0xff]
  %v4378 = vld [vmem:[%s4261 + $0x42] sm:$0xff]
  %v4379 = vld [vmem:[%s4261 + $0x52] sm:$0xff]
  %v4380 = vld [vmem:[%s4261 + $0x62] sm:$0xff]
  %v4381 = vld [vmem:[%s4261 + $0x72] sm:$0xff]
  %v4382 = vpack.c.bf16 %v4375, %v4374
  %v4383 = vpack.c.bf16 %v4377, %v4376
  %v4384 = vpack.c.bf16 %v4379, %v4378
  %v4385 = vpack.c.bf16 %v4381, %v4380
  %v4390 = vunpack.c.l.b16 %v4382
  %v4391 = vunpack.c.h.b16 %v4382
  %v4392 = vunpack.c.l.b16 %v4383
  %v4393 = vunpack.c.h.b16 %v4383
  %v4394 = vunpack.c.l.b16 %v4384
  %v4395 = vunpack.c.h.b16 %v4384
  %v4396 = vunpack.c.l.b16 %v4385
  %v4397 = vunpack.c.h.b16 %v4385
  %v4398 = vpack.c.b16 %v4390, %v4390
  %v4399 = vpack.c.b16 %v4391, %v4391
  %v4400 = vpack.c.b16 %v4392, %v4392
  %v4401 = vpack.c.b16 %v4393, %v4393
  %v4402 = vpack.c.b16 %v4394, %v4394
  %v4403 = vpack.c.b16 %v4395, %v4395
  %v4404 = vpack.c.b16 %v4396, %v4396
  %v4405 = vpack.c.b16 %v4397, %v4397
  %4414 = vst.msk [vmem:[#allocation6 + $0xb0] sm:$0xf] %vm3464, %v4398
  %4415 = vst.msk [vmem:[#allocation6 + $0xc4] sm:$0xf] %vm3464, %v4399
  %4416 = vst.msk [vmem:[#allocation6 + $0xd8] sm:$0xf] %vm3464, %v4400
  %4417 = vst.msk [vmem:[#allocation6 + $0xec] sm:$0xf] %vm3464, %v4401
  %4418 = vst.msk [vmem:[#allocation6 + $0x100] sm:$0xf] %vm3464, %v4402
  %4419 = vst.msk [vmem:[#allocation6 + $0x114] sm:$0xf] %vm3464, %v4403
  %4420 = vst.msk [vmem:[#allocation6 + $0x128] sm:$0xf] %vm3464, %v4404
  %4421 = vst.msk [vmem:[#allocation6 + $0x13c] sm:$0xf] %vm3464, %v4405
  %v4422 = vld [vmem:[#allocation6] sm:$0xff]
  %v4423 = vld [vmem:[#allocation6 + $0x8] sm:$0xff]
  %v4424 = vld [vmem:[#allocation6 + $0x10] sm:$0xf]
  %v4425 = vld [vmem:[#allocation6 + $0x14] sm:$0xff]
  %v4426 = vld [vmem:[#allocation6 + $0x1c] sm:$0xff]
  %v4427 = vld [vmem:[#allocation6 + $0x24] sm:$0xf]
  %v4428 = vld [vmem:[#allocation6 + $0x28] sm:$0xff]
  %v4429 = vld [vmem:[#allocation6 + $0x30] sm:$0xff]
  %v4430 = vld [vmem:[#allocation6 + $0x38] sm:$0xf]
  %v4431 = vld [vmem:[#allocation6 + $0x3c] sm:$0xff]
  %v4432 = vld [vmem:[#allocation6 + $0x44] sm:$0xff]
  %v4433 = vld [vmem:[#allocation6 + $0x4c] sm:$0xf]
  %v4434 = vld [vmem:[#allocation6 + $0x50] sm:$0xff]
  %v4435 = vld [vmem:[#allocation6 + $0x58] sm:$0xff]
  %v4436 = vld [vmem:[#allocation6 + $0x60] sm:$0xf]
  %v4437 = vld [vmem:[#allocation6 + $0x64] sm:$0xff]
  %v4438 = vld [vmem:[#allocation6 + $0x6c] sm:$0xff]
  %v4439 = vld [vmem:[#allocation6 + $0x74] sm:$0xf]
  %v4440 = vld [vmem:[#allocation6 + $0x78] sm:$0xff]
  %v4441 = vld [vmem:[#allocation6 + $0x80] sm:$0xff]
  %v4442 = vld [vmem:[#allocation6 + $0x88] sm:$0xf]
  %v4443 = vld [vmem:[#allocation6 + $0x8c] sm:$0xff]
  %v4444 = vld [vmem:[#allocation6 + $0x94] sm:$0xff]
  %v4445 = vld [vmem:[#allocation6 + $0x9c] sm:$0xf]
  %v4446 = vld [vmem:[#allocation6 + $0xa0] sm:$0xff]
  %v4447 = vld [vmem:[#allocation6 + $0xa8] sm:$0xff]
  %v4448 = vld [vmem:[#allocation6 + $0xb0] sm:$0xf]
  %v4449 = vld [vmem:[#allocation6 + $0xb4] sm:$0xff]
  %v4450 = vld [vmem:[#allocation6 + $0xbc] sm:$0xff]
  %v4451 = vld [vmem:[#allocation6 + $0xc4] sm:$0xf]
  %v4452 = vld [vmem:[#allocation6 + $0xc8] sm:$0xff]
  %v4453 = vld [vmem:[#allocation6 + $0xd0] sm:$0xff]
  %v4454 = vld [vmem:[#allocation6 + $0xd8] sm:$0xf]
  %v4455 = vld [vmem:[#allocation6 + $0xdc] sm:$0xff]
  %v4456 = vld [vmem:[#allocation6 + $0xe4] sm:$0xff]
  %v4457 = vld [vmem:[#allocation6 + $0xec] sm:$0xf]
  %v4458 = vld [vmem:[#allocation6 + $0xf0] sm:$0xff]
  %v4459 = vld [vmem:[#allocation6 + $0xf8] sm:$0xff]
  %v4460 = vld [vmem:[#allocation6 + $0x100] sm:$0xf]
  %v4461 = vld [vmem:[#allocation6 + $0x104] sm:$0xff]
  %v4462 = vld [vmem:[#allocation6 + $0x10c] sm:$0xff]
  %v4463 = vld [vmem:[#allocation6 + $0x114] sm:$0xf]
  %v4464 = vld [vmem:[#allocation6 + $0x118] sm:$0xff]
  %v4465 = vld [vmem:[#allocation6 + $0x120] sm:$0xff]
  %v4466 = vld [vmem:[#allocation6 + $0x128] sm:$0xf]
  %v4467 = vld [vmem:[#allocation6 + $0x12c] sm:$0xff]
  %v4468 = vld [vmem:[#allocation6 + $0x134] sm:$0xff]
  %v4469 = vld [vmem:[#allocation6 + $0x13c] sm:$0xf]
  %v4470 = vld [vmem:[%s5] sm:$0xf]
  %v4471 = vld [vmem:[%s5 + $0x4] sm:$0xf]
  %v4472 = vld [vmem:[%s5 + $0x8] sm:$0xf]
  %v4473 = vld [vmem:[%s5 + $0xc] sm:$0xf]
  %v4474 = vld [vmem:[%s5 + $0x10] sm:$0xf]
  %v4475 = vld [vmem:[%s5 + $0x14] sm:$0xf]
  %v4476 = vld [vmem:[%s5 + $0x18] sm:$0xf]
  %v4477 = vld [vmem:[%s5 + $0x1c] sm:$0xf]
  %v4478 = vld [vmem:[%s5 + $0x20] sm:$0xf]
  %v4479 = vld [vmem:[%s5 + $0x24] sm:$0xf]
  %v4480 = vld [vmem:[%s5 + $0x28] sm:$0xf]
  %v4481 = vld [vmem:[%s5 + $0x2c] sm:$0xf]
  %v4482 = vld [vmem:[%s5 + $0x30] sm:$0xf]
  %v4483 = vld [vmem:[%s5 + $0x34] sm:$0xf]
  %v4484 = vld [vmem:[%s5 + $0x38] sm:$0xf]
  %v4485 = vld [vmem:[%s5 + $0x3c] sm:$0xf]
  %v4486 = vld [vmem:[%s5 + $0x40] sm:$0xf]
  %v4487 = vld [vmem:[%s5 + $0x44] sm:$0xf]
  %v4488 = vld [vmem:[%s5 + $0x48] sm:$0xf]
  %v4489 = vld [vmem:[%s5 + $0x4c] sm:$0xf]
  %v4490 = vld [vmem:[%s5 + $0x50] sm:$0xf]
  %v4491 = vld [vmem:[%s5 + $0x54] sm:$0xf]
  %v4492 = vld [vmem:[%s5 + $0x58] sm:$0xf]
  %v4493 = vld [vmem:[%s5 + $0x5c] sm:$0xf]
  %v4494 = vld [vmem:[%s5 + $0x60] sm:$0xf]
  %v4495 = vld [vmem:[%s5 + $0x64] sm:$0xf]
  %v4496 = vld [vmem:[%s5 + $0x68] sm:$0xf]
  %v4497 = vld [vmem:[%s5 + $0x6c] sm:$0xf]
  %v4498 = vld [vmem:[%s5 + $0x70] sm:$0xf]
  %v4499 = vld [vmem:[%s5 + $0x74] sm:$0xf]
  %v4500 = vld [vmem:[%s5 + $0x78] sm:$0xf]
  %v4501 = vld [vmem:[%s5 + $0x7c] sm:$0xf]
  %v4502 = vld [vmem:[%s5 + $0x80] sm:$0xf]
  %v4503 = vld [vmem:[%s5 + $0x84] sm:$0xf]
  %v4504 = vld [vmem:[%s5 + $0x88] sm:$0xf]
  %v4505 = vld [vmem:[%s5 + $0x8c] sm:$0xf]
  %v4506 = vld [vmem:[%s5 + $0x90] sm:$0xf]
  %v4507 = vld [vmem:[%s5 + $0x94] sm:$0xf]
  %v4508 = vld [vmem:[%s5 + $0x98] sm:$0xf]
  %v4509 = vld [vmem:[%s5 + $0x9c] sm:$0xf]
  %v4510 = vld [vmem:[%s5 + $0xa0] sm:$0xf]
  %v4511 = vld [vmem:[%s5 + $0xa4] sm:$0xf]
  %v4512 = vld [vmem:[%s5 + $0xa8] sm:$0xf]
  %v4513 = vld [vmem:[%s5 + $0xac] sm:$0xf]
  %v4514 = vld [vmem:[%s5 + $0xb0] sm:$0xf]
  %v4515 = vld [vmem:[%s5 + $0xb4] sm:$0xf]
  %v4516 = vld [vmem:[%s5 + $0xb8] sm:$0xf]
  %v4517 = vld [vmem:[%s5 + $0xbc] sm:$0xf]
  %v4518 = vld [vmem:[%s5 + $0xc0] sm:$0xf]
  %v4519 = vld [vmem:[%s5 + $0xc4] sm:$0xf]
  %v4520 = vld [vmem:[%s5 + $0xc8] sm:$0xf]
  %v4521 = vld [vmem:[%s5 + $0xcc] sm:$0xf]
  %v4522 = vld [vmem:[%s5 + $0xd0] sm:$0xf]
  %v4523 = vld [vmem:[%s5 + $0xd4] sm:$0xf]
  %v4524 = vld [vmem:[%s5 + $0xd8] sm:$0xf]
  %v4525 = vld [vmem:[%s5 + $0xdc] sm:$0xf]
  %v4526 = vld [vmem:[%s5 + $0xe0] sm:$0xf]
  %v4527 = vld [vmem:[%s5 + $0xe4] sm:$0xf]
  %v4528 = vld [vmem:[%s5 + $0xe8] sm:$0xf]
  %v4529 = vld [vmem:[%s5 + $0xec] sm:$0xf]
  %v4530 = vld [vmem:[%s5 + $0xf0] sm:$0xf]
  %v4531 = vld [vmem:[%s5 + $0xf4] sm:$0xf]
  %v4532 = vld [vmem:[%s5 + $0xf8] sm:$0xf]
  %v4533 = vld [vmem:[%s5 + $0xfc] sm:$0xf]
  %v4534 = vld [vmem:[%s5 + $0x100] sm:$0xf]
  %v4535 = vld [vmem:[%s5 + $0x104] sm:$0xf]
  %v4536 = vld [vmem:[%s5 + $0x108] sm:$0xf]
  %v4537 = vld [vmem:[%s5 + $0x10c] sm:$0xf]
  %v4538 = vld [vmem:[%s5 + $0x110] sm:$0xf]
  %v4539 = vld [vmem:[%s5 + $0x114] sm:$0xf]
  %v4540 = vld [vmem:[%s5 + $0x118] sm:$0xf]
  %v4541 = vld [vmem:[%s5 + $0x11c] sm:$0xf]
  %v4542 = vld [vmem:[%s6] sm:$0x1]
  %v4544 = vlaneseq
  %v4545 = vshrl.u32 %v4544, 7
  %v4546 = vsub.s32 0, %v4545
  %v4547 = vrot.slane %v4542, %v4546
  %v4597 = vunpack.c.l.b16 %v4422
  %v4598 = vunpack.c.h.b16 %v4422
  %v4599 = vunpack.c.l.b16 %v4423
  %v4600 = vunpack.c.h.b16 %v4423
  %v4601 = vunpack.c.l.b16 %v4424
  %v4602 = vunpack.c.l.b16 %v4425
  %v4603 = vunpack.c.h.b16 %v4425
  %v4604 = vunpack.c.l.b16 %v4426
  %v4605 = vunpack.c.h.b16 %v4426
  %v4606 = vunpack.c.l.b16 %v4427
  %v4607 = vunpack.c.l.b16 %v4428
  %v4608 = vunpack.c.h.b16 %v4428
  %v4609 = vunpack.c.l.b16 %v4429
  %v4610 = vunpack.c.h.b16 %v4429
  %v4611 = vunpack.c.l.b16 %v4430
  %v4612 = vunpack.c.l.b16 %v4431
  %v4613 = vunpack.c.h.b16 %v4431
  %v4614 = vunpack.c.l.b16 %v4432
  %v4615 = vunpack.c.h.b16 %v4432
  %v4616 = vunpack.c.l.b16 %v4433
  %v4617 = vunpack.c.l.b16 %v4434
  %v4618 = vunpack.c.h.b16 %v4434
  %v4619 = vunpack.c.l.b16 %v4435
  %v4620 = vunpack.c.h.b16 %v4435
  %v4621 = vunpack.c.l.b16 %v4436
  %v4622 = vunpack.c.l.b16 %v4437
  %v4623 = vunpack.c.h.b16 %v4437
  %v4624 = vunpack.c.l.b16 %v4438
  %v4625 = vunpack.c.h.b16 %v4438
  %v4626 = vunpack.c.l.b16 %v4439
  %v4627 = vunpack.c.l.b16 %v4440
  %v4628 = vunpack.c.h.b16 %v4440
  %v4629 = vunpack.c.l.b16 %v4441
  %v4630 = vunpack.c.h.b16 %v4441
  %v4631 = vunpack.c.l.b16 %v4442
  %v4632 = vunpack.c.l.b16 %v4443
  %v4633 = vunpack.c.h.b16 %v4443
  %v4634 = vunpack.c.l.b16 %v4444
  %v4635 = vunpack.c.h.b16 %v4444
  %v4636 = vunpack.c.l.b16 %v4445
  %v4637 = vunpack.c.l.b16 %v4446
  %v4638 = vunpack.c.h.b16 %v4446
  %v4639 = vunpack.c.l.b16 %v4447
  %v4640 = vunpack.c.h.b16 %v4447
  %v4641 = vunpack.c.l.b16 %v4448
  %v4642 = vunpack.c.l.b16 %v4449
  %v4643 = vunpack.c.h.b16 %v4449
  %v4644 = vunpack.c.l.b16 %v4450
  %v4645 = vunpack.c.h.b16 %v4450
  %v4646 = vunpack.c.l.b16 %v4451
  %v4647 = vunpack.c.l.b16 %v4452
  %v4648 = vunpack.c.h.b16 %v4452
  %v4649 = vunpack.c.l.b16 %v4453
  %v4650 = vunpack.c.h.b16 %v4453
  %v4651 = vunpack.c.l.b16 %v4454
  %v4652 = vunpack.c.l.b16 %v4455
  %v4653 = vunpack.c.h.b16 %v4455
  %v4654 = vunpack.c.l.b16 %v4456
  %v4655 = vunpack.c.h.b16 %v4456
  %v4656 = vunpack.c.l.b16 %v4457
  %v4657 = vunpack.c.l.b16 %v4458
  %v4658 = vunpack.c.h.b16 %v4458
  %v4659 = vunpack.c.l.b16 %v4459
  %v4660 = vunpack.c.h.b16 %v4459
  %v4661 = vunpack.c.l.b16 %v4460
  %v4662 = vunpack.c.l.b16 %v4461
  %v4663 = vunpack.c.h.b16 %v4461
  %v4664 = vunpack.c.l.b16 %v4462
  %v4665 = vunpack.c.h.b16 %v4462
  %v4666 = vunpack.c.l.b16 %v4463
  %v4667 = vunpack.c.l.b16 %v4464
  %v4668 = vunpack.c.h.b16 %v4464
  %v4669 = vunpack.c.l.b16 %v4465
  %v4670 = vunpack.c.h.b16 %v4465
  %v4671 = vunpack.c.l.b16 %v4466
  %v4672 = vunpack.c.l.b16 %v4467
  %v4673 = vunpack.c.h.b16 %v4467
  %v4674 = vunpack.c.l.b16 %v4468
  %v4675 = vunpack.c.h.b16 %v4468
  %v4676 = vunpack.c.l.b16 %v4469
  %v4677 = vpack.c.b16 %v4602, %v4597
  %v4678 = vpack.c.b16 %v4603, %v4598
  %v4679 = vpack.c.b16 %v4604, %v4599
  %v4680 = vpack.c.b16 %v4605, %v4600
  %v4681 = vpack.c.b16 %v4606, %v4601
  %v4682 = vpack.c.b16 %v4612, %v4607
  %v4683 = vpack.c.b16 %v4613, %v4608
  %v4684 = vpack.c.b16 %v4614, %v4609
  %v4685 = vpack.c.b16 %v4615, %v4610
  %v4686 = vpack.c.b16 %v4616, %v4611
  %v4687 = vpack.c.b16 %v4622, %v4617
  %v4688 = vpack.c.b16 %v4623, %v4618
  %v4689 = vpack.c.b16 %v4624, %v4619
  %v4690 = vpack.c.b16 %v4625, %v4620
  %v4691 = vpack.c.b16 %v4626, %v4621
  %v4692 = vpack.c.b16 %v4632, %v4627
  %v4693 = vpack.c.b16 %v4633, %v4628
  %v4694 = vpack.c.b16 %v4634, %v4629
  %v4695 = vpack.c.b16 %v4635, %v4630
  %v4696 = vpack.c.b16 %v4636, %v4631
  %v4697 = vpack.c.b16 %v4642, %v4637
  %v4698 = vpack.c.b16 %v4643, %v4638
  %v4699 = vpack.c.b16 %v4644, %v4639
  %v4700 = vpack.c.b16 %v4645, %v4640
  %v4701 = vpack.c.b16 %v4646, %v4641
  %v4702 = vpack.c.b16 %v4652, %v4647
  %v4703 = vpack.c.b16 %v4653, %v4648
  %v4704 = vpack.c.b16 %v4654, %v4649
  %v4705 = vpack.c.b16 %v4655, %v4650
  %v4706 = vpack.c.b16 %v4656, %v4651
  %v4707 = vpack.c.b16 %v4662, %v4657
  %v4708 = vpack.c.b16 %v4663, %v4658
  %v4709 = vpack.c.b16 %v4664, %v4659
  %v4710 = vpack.c.b16 %v4665, %v4660
  %v4711 = vpack.c.b16 %v4666, %v4661
  %v4712 = vpack.c.b16 %v4672, %v4667
  %v4713 = vpack.c.b16 %v4673, %v4668
  %v4714 = vpack.c.b16 %v4674, %v4669
  %v4715 = vpack.c.b16 %v4675, %v4670
  %v4716 = vpack.c.b16 %v4676, %v4671
  %v4821 = vunpack.c.l.b16 %v4470
  %v4822 = vunpack.c.l.b16 %v4471
  %v4823 = vunpack.c.l.b16 %v4472
  %v4824 = vunpack.c.l.b16 %v4473
  %v4825 = vunpack.c.l.b16 %v4474
  %v4826 = vunpack.c.l.b16 %v4475
  %v4827 = vunpack.c.l.b16 %v4476
  %v4828 = vunpack.c.l.b16 %v4477
  %v4829 = vunpack.c.l.b16 %v4478
  %v4830 = vunpack.c.l.b16 %v4479
  %v4831 = vunpack.c.l.b16 %v4480
  %v4832 = vunpack.c.l.b16 %v4481
  %v4833 = vunpack.c.l.b16 %v4482
  %v4834 = vunpack.c.l.b16 %v4483
  %v4835 = vunpack.c.l.b16 %v4484
  %v4836 = vunpack.c.l.b16 %v4485
  %v4837 = vunpack.c.l.b16 %v4486
  %v4838 = vunpack.c.l.b16 %v4487
  %v4839 = vunpack.c.l.b16 %v4488
  %v4840 = vunpack.c.l.b16 %v4489
  %v4841 = vunpack.c.l.b16 %v4490
  %v4842 = vunpack.c.l.b16 %v4491
  %v4843 = vunpack.c.l.b16 %v4492
  %v4844 = vunpack.c.l.b16 %v4493
  %v4845 = vunpack.c.l.b16 %v4494
  %v4846 = vunpack.c.l.b16 %v4495
  %v4847 = vunpack.c.l.b16 %v4496
  %v4848 = vunpack.c.l.b16 %v4497
  %v4849 = vunpack.c.l.b16 %v4498
  %v4850 = vunpack.c.l.b16 %v4499
  %v4851 = vunpack.c.l.b16 %v4500
  %v4852 = vunpack.c.l.b16 %v4501
  %v4853 = vunpack.c.l.b16 %v4502
  %v4854 = vunpack.c.l.b16 %v4503
  %v4855 = vunpack.c.l.b16 %v4504
  %v4856 = vunpack.c.l.b16 %v4505
  %v4857 = vunpack.c.l.b16 %v4506
  %v4858 = vunpack.c.l.b16 %v4507
  %v4859 = vunpack.c.l.b16 %v4508
  %v4860 = vunpack.c.l.b16 %v4509
  %v4861 = vunpack.c.l.b16 %v4510
  %v4862 = vunpack.c.l.b16 %v4511
  %v4863 = vunpack.c.l.b16 %v4512
  %v4864 = vunpack.c.l.b16 %v4513
  %v4865 = vunpack.c.l.b16 %v4514
  %v4866 = vunpack.c.l.b16 %v4515
  %v4867 = vunpack.c.l.b16 %v4516
  %v4868 = vunpack.c.l.b16 %v4517
  %v4869 = vunpack.c.l.b16 %v4518
  %v4870 = vunpack.c.l.b16 %v4519
  %v4871 = vunpack.c.l.b16 %v4520
  %v4872 = vunpack.c.l.b16 %v4521
  %v4873 = vunpack.c.l.b16 %v4522
  %v4874 = vunpack.c.l.b16 %v4523
  %v4875 = vunpack.c.l.b16 %v4524
  %v4876 = vunpack.c.l.b16 %v4525
  %v4877 = vunpack.c.l.b16 %v4526
  %v4878 = vunpack.c.l.b16 %v4527
  %v4879 = vunpack.c.l.b16 %v4528
  %v4880 = vunpack.c.l.b16 %v4529
  %v4881 = vunpack.c.l.b16 %v4530
  %v4882 = vunpack.c.l.b16 %v4531
  %v4883 = vunpack.c.l.b16 %v4532
  %v4884 = vunpack.c.l.b16 %v4533
  %v4885 = vunpack.c.l.b16 %v4534
  %v4886 = vunpack.c.l.b16 %v4535
  %v4887 = vunpack.c.l.b16 %v4536
  %v4888 = vunpack.c.l.b16 %v4537
  %v4889 = vunpack.c.l.b16 %v4538
  %v4890 = vunpack.c.l.b16 %v4539
  %v4891 = vunpack.c.l.b16 %v4540
  %v4892 = vunpack.c.l.b16 %v4541
  %v4893 = vpack.c.b16 %v4822, %v4821
  %v4894 = vpack.c.b16 %v4824, %v4823
  %v4895 = vpack.c.b16 %v4826, %v4825
  %v4896 = vpack.c.b16 %v4828, %v4827
  %v4897 = vpack.c.b16 %v4830, %v4829
  %v4898 = vpack.c.b16 %v4832, %v4831
  %v4899 = vpack.c.b16 %v4834, %v4833
  %v4900 = vpack.c.b16 %v4836, %v4835
  %v4901 = vpack.c.b16 %v4838, %v4837
  %v4902 = vpack.c.b16 %v4840, %v4839
  %v4903 = vpack.c.b16 %v4842, %v4841
  %v4904 = vpack.c.b16 %v4844, %v4843
  %v4905 = vpack.c.b16 %v4846, %v4845
  %v4906 = vpack.c.b16 %v4848, %v4847
  %v4907 = vpack.c.b16 %v4850, %v4849
  %v4908 = vpack.c.b16 %v4852, %v4851
  %v4909 = vpack.c.b16 %v4854, %v4853
  %v4910 = vpack.c.b16 %v4856, %v4855
  %v4911 = vpack.c.b16 %v4858, %v4857
  %v4912 = vpack.c.b16 %v4860, %v4859
  %v4913 = vpack.c.b16 %v4862, %v4861
  %v4914 = vpack.c.b16 %v4864, %v4863
  %v4915 = vpack.c.b16 %v4866, %v4865
  %v4916 = vpack.c.b16 %v4868, %v4867
  %v4917 = vpack.c.b16 %v4870, %v4869
  %v4918 = vpack.c.b16 %v4872, %v4871
  %v4919 = vpack.c.b16 %v4874, %v4873
  %v4920 = vpack.c.b16 %v4876, %v4875
  %v4921 = vpack.c.b16 %v4878, %v4877
  %v4922 = vpack.c.b16 %v4880, %v4879
  %v4923 = vpack.c.b16 %v4882, %v4881
  %v4924 = vpack.c.b16 %v4884, %v4883
  %v4925 = vpack.c.b16 %v4886, %v4885
  %v4926 = vpack.c.b16 %v4888, %v4887
  %v4927 = vpack.c.b16 %v4890, %v4889
  %v4928 = vpack.c.b16 %v4892, %v4891
  %v4966 = vsel %vm3366, %v4681, 0
  %v4969 = vsel %vm3366, %v4686, 0
  %v4972 = vsel %vm3366, %v4691, 0
  %v4975 = vsel %vm3366, %v4696, 0
  %v4978 = vsel %vm3366, %v4701, 0
  %v4981 = vsel %vm3366, %v4706, 0
  %v4984 = vsel %vm3366, %v4711, 0
  %v4987 = vsel %vm3366, %v4716, 0
  %4989 = vmatprep.subr.bf16.mxu0 0
  %4990 = vmatpush1.bf16.msra.mxu0 %v4900
  %4991 = vmatprep.subr.bf16.mxu0 0
  %4992 = vmatpush1.bf16.msra.mxu0 %v4899
  %4993 = vmatprep.subr.bf16.mxu0 0
  %4994 = vmatpush1.bf16.msra.mxu0 %v4898
  %4995 = vmatprep.subr.bf16.mxu0 0
  %4996 = vmatpush1.bf16.msra.mxu0 %v4897
  %4997 = vmatprep.subr.bf16.mxu0 0
  %4998 = vmatpush1.bf16.msra.mxu0 %v4896
  %4999 = vmatprep.subr.bf16.mxu0 0
  %5000 = vmatpush1.bf16.msra.mxu0 %v4895
  %5001 = vmatprep.subr.bf16.mxu0 0
  %5002 = vmatpush1.bf16.msra.mxu0 %v4894
  %5003 = vmatprep.subr.bf16.mxu0 0
  %5004 = vmatpush1.bf16.msra.mxu0 %v4893
  %5005 = vmatprep.subr.bf16.mxu0 0
  %5006 = vmatpush2.bf16.msra.mxu0 %v4908
  %5007 = vmatprep.subr.bf16.mxu0 0
  %5008 = vmatpush2.bf16.msra.mxu0 %v4907
  %5009 = vmatprep.subr.bf16.mxu0 0
  %5010 = vmatpush2.bf16.msra.mxu0 %v4906
  %5011 = vmatprep.subr.bf16.mxu0 0
  %5012 = vmatpush2.bf16.msra.mxu0 %v4905
  %5013 = vmatprep.subr.bf16.mxu0 0
  %5014 = vmatpush2.bf16.msra.mxu0 %v4904
  %5015 = vmatprep.subr.bf16.mxu0 0
  %5016 = vmatpush2.bf16.msra.mxu0 %v4903
  %5017 = vmatprep.subr.bf16.mxu0 0
  %5018 = vmatpush2.bf16.msra.mxu0 %v4902
  %5019 = vmatprep.subr.bf16.mxu0 0
  %5020 = vmatpush2.bf16.msra.mxu0 %v4901
  %5021 = vmatprep.mubr.bf16.mxu0 %v4678
  %5022 = vmatmul.mubr.bf16.gmra.mxu0 %v4677
  %v5023 = vpop.f32.mrf.mxu0
  %v5024 = vadd.f32 %v4547, %v5023
  %v5025 = vpop.f32.mrf.mxu0
  %v5026 = vpop.f32.mrf.mxu0
  %v5027 = vadd.f32 %v4547, %v5026
  %v5028 = vpop.f32.mrf.mxu0
  %5029 = vmatprep.mubr.bf16.mxu0 %v4683
  %5030 = vmatmul.mubr.bf16.gmra.mxu0 %v4682
  %v5031 = vpop.f32.mrf.mxu0
  %v5032 = vadd.f32 %v4547, %v5031
  %v5033 = vpop.f32.mrf.mxu0
  %v5034 = vpop.f32.mrf.mxu0
  %v5035 = vadd.f32 %v4547, %v5034
  %v5036 = vpop.f32.mrf.mxu0
  %5037 = vmatprep.mubr.bf16.mxu0 %v4688
  %5038 = vmatmul.mubr.bf16.gmra.mxu0 %v4687
  %v5039 = vpop.f32.mrf.mxu0
  %v5040 = vadd.f32 %v4547, %v5039
  %v5041 = vpop.f32.mrf.mxu0
  %v5042 = vpop.f32.mrf.mxu0
  %v5043 = vadd.f32 %v4547, %v5042
  %v5044 = vpop.f32.mrf.mxu0
  %5045 = vmatprep.mubr.bf16.mxu0 %v4693
  %5046 = vmatmul.mubr.bf16.gmra.mxu0 %v4692
  %v5047 = vpop.f32.mrf.mxu0
  %v5048 = vadd.f32 %v4547, %v5047
  %v5049 = vpop.f32.mrf.mxu0
  %v5050 = vpop.f32.mrf.mxu0
  %v5051 = vadd.f32 %v4547, %v5050
  %v5052 = vpop.f32.mrf.mxu0
  %5053 = vmatprep.mubr.bf16.mxu0 %v4698
  %5054 = vmatmul.mubr.bf16.gmra.mxu0 %v4697
  %v5055 = vpop.f32.mrf.mxu0
  %v5056 = vadd.f32 %v4547, %v5055
  %v5057 = vpop.f32.mrf.mxu0
  %v5058 = vpop.f32.mrf.mxu0
  %v5059 = vadd.f32 %v4547, %v5058
  %v5060 = vpop.f32.mrf.mxu0
  %5061 = vmatprep.mubr.bf16.mxu0 %v4703
  %5062 = vmatmul.mubr.bf16.gmra.mxu0 %v4702
  %v5063 = vpop.f32.mrf.mxu0
  %v5064 = vadd.f32 %v4547, %v5063
  %v5065 = vpop.f32.mrf.mxu0
  %v5066 = vpop.f32.mrf.mxu0
  %v5067 = vadd.f32 %v4547, %v5066
  %v5068 = vpop.f32.mrf.mxu0
  %5069 = vmatprep.mubr.bf16.mxu0 %v4708
  %5070 = vmatmul.mubr.bf16.gmra.mxu0 %v4707
  %v5071 = vpop.f32.mrf.mxu0
  %v5072 = vadd.f32 %v4547, %v5071
  %v5073 = vpop.f32.mrf.mxu0
  %v5074 = vpop.f32.mrf.mxu0
  %v5075 = vadd.f32 %v4547, %v5074
  %v5076 = vpop.f32.mrf.mxu0
  %5077 = vmatprep.mubr.bf16.mxu0 %v4713
  %5078 = vmatmul.mubr.bf16.gmra.mxu0 %v4712
  %v5079 = vpop.f32.mrf.mxu0
  %v5080 = vadd.f32 %v4547, %v5079
  %v5081 = vpop.f32.mrf.mxu0
  %v5082 = vpop.f32.mrf.mxu0
  %v5083 = vadd.f32 %v4547, %v5082
  %v5084 = vpop.f32.mrf.mxu0
  %5085 = vdwg.mxu0
  %5086 = vmatprep.subr.bf16.mxu0 0
  %5087 = vmatpush1.bf16.msra.mxu0 %v4916
  %5088 = vmatprep.subr.bf16.mxu0 0
  %5089 = vmatpush1.bf16.msra.mxu0 %v4915
  %5090 = vmatprep.subr.bf16.mxu0 0
  %5091 = vmatpush1.bf16.msra.mxu0 %v4914
  %5092 = vmatprep.subr.bf16.mxu0 0
  %5093 = vmatpush1.bf16.msra.mxu0 %v4913
  %5094 = vmatprep.subr.bf16.mxu0 0
  %5095 = vmatpush1.bf16.msra.mxu0 %v4912
  %5096 = vmatprep.subr.bf16.mxu0 0
  %5097 = vmatpush1.bf16.msra.mxu0 %v4911
  %5098 = vmatprep.subr.bf16.mxu0 0
  %5099 = vmatpush1.bf16.msra.mxu0 %v4910
  %5100 = vmatprep.subr.bf16.mxu0 0
  %5101 = vmatpush1.bf16.msra.mxu0 %v4909
  %5102 = vmatprep.subr.bf16.mxu0 0
  %5103 = vmatpush2.bf16.msra.mxu0 %v4924
  %5104 = vmatprep.subr.bf16.mxu0 0
  %5105 = vmatpush2.bf16.msra.mxu0 %v4923
  %5106 = vmatprep.subr.bf16.mxu0 0
  %5107 = vmatpush2.bf16.msra.mxu0 %v4922
  %5108 = vmatprep.subr.bf16.mxu0 0
  %5109 = vmatpush2.bf16.msra.mxu0 %v4921
  %5110 = vmatprep.subr.bf16.mxu0 0
  %5111 = vmatpush2.bf16.msra.mxu0 %v4920
  %5112 = vmatprep.subr.bf16.mxu0 0
  %5113 = vmatpush2.bf16.msra.mxu0 %v4919
  %5114 = vmatprep.subr.bf16.mxu0 0
  %5115 = vmatpush2.bf16.msra.mxu0 %v4918
  %5116 = vmatprep.subr.bf16.mxu0 0
  %5117 = vmatpush2.bf16.msra.mxu0 %v4917
  %5118 = vmatprep.mubr.bf16.mxu0 %v4680
  %5119 = vmatmul.mubr.bf16.gmra.mxu0 %v4679
  %v5120 = vpop.f32.mrf.mxu0
  %v5121 = vadd.f32 %v5024, %v5120
  %v5122 = vpop.f32.mrf.mxu0
  %v5123 = vpop.f32.mrf.mxu0
  %v5124 = vadd.f32 %v5027, %v5123
  %v5125 = vpop.f32.mrf.mxu0
  %5126 = vmatprep.mubr.bf16.mxu0 %v4685
  %5127 = vmatmul.mubr.bf16.gmra.mxu0 %v4684
  %v5128 = vpop.f32.mrf.mxu0
  %v5129 = vadd.f32 %v5032, %v5128
  %v5130 = vpop.f32.mrf.mxu0
  %v5131 = vpop.f32.mrf.mxu0
  %v5132 = vadd.f32 %v5035, %v5131
  %v5133 = vpop.f32.mrf.mxu0
  %5134 = vmatprep.mubr.bf16.mxu0 %v4690
  %5135 = vmatmul.mubr.bf16.gmra.mxu0 %v4689
  %v5136 = vpop.f32.mrf.mxu0
  %v5137 = vadd.f32 %v5040, %v5136
  %v5138 = vpop.f32.mrf.mxu0
  %v5139 = vpop.f32.mrf.mxu0
  %v5140 = vadd.f32 %v5043, %v5139
  %v5141 = vpop.f32.mrf.mxu0
  %5142 = vmatprep.mubr.bf16.mxu0 %v4695
  %5143 = vmatmul.mubr.bf16.gmra.mxu0 %v4694
  %v5144 = vpop.f32.mrf.mxu0
  %v5145 = vadd.f32 %v5048, %v5144
  %v5146 = vpop.f32.mrf.mxu0
  %v5147 = vpop.f32.mrf.mxu0
  %v5148 = vadd.f32 %v5051, %v5147
  %v5149 = vpop.f32.mrf.mxu0
  %5150 = vmatprep.mubr.bf16.mxu0 %v4700
  %5151 = vmatmul.mubr.bf16.gmra.mxu0 %v4699
  %v5152 = vpop.f32.mrf.mxu0
  %v5153 = vadd.f32 %v5056, %v5152
  %v5154 = vpop.f32.mrf.mxu0
  %v5155 = vpop.f32.mrf.mxu0
  %v5156 = vadd.f32 %v5059, %v5155
  %v5157 = vpop.f32.mrf.mxu0
  %5158 = vmatprep.mubr.bf16.mxu0 %v4705
  %5159 = vmatmul.mubr.bf16.gmra.mxu0 %v4704
  %v5160 = vpop.f32.mrf.mxu0
  %v5161 = vadd.f32 %v5064, %v5160
  %v5162 = vpop.f32.mrf.mxu0
  %v5163 = vpop.f32.mrf.mxu0
  %v5164 = vadd.f32 %v5067, %v5163
  %v5165 = vpop.f32.mrf.mxu0
  %5166 = vmatprep.mubr.bf16.mxu0 %v4710
  %5167 = vmatmul.mubr.bf16.gmra.mxu0 %v4709
  %v5168 = vpop.f32.mrf.mxu0
  %v5169 = vadd.f32 %v5072, %v5168
  %v5170 = vpop.f32.mrf.mxu0
  %v5171 = vpop.f32.mrf.mxu0
  %v5172 = vadd.f32 %v5075, %v5171
  %v5173 = vpop.f32.mrf.mxu0
  %5174 = vmatprep.mubr.bf16.mxu0 %v4715
  %5175 = vmatmul.mubr.bf16.gmra.mxu0 %v4714
  %v5176 = vpop.f32.mrf.mxu0
  %v5177 = vadd.f32 %v5080, %v5176
  %v5178 = vpop.f32.mrf.mxu0
  %v5179 = vpop.f32.mrf.mxu0
  %v5180 = vadd.f32 %v5083, %v5179
  %v5181 = vpop.f32.mrf.mxu0
  %5182 = vdwg.mxu0
  %5183 = vmatprep.subr.bf16.mxu0 0
  %5184 = vmatpush1.bf16.msra.mxu0 0
  %5185 = vmatprep.subr.bf16.mxu0 0
  %5186 = vmatpush1.bf16.msra.mxu0 0
  %5187 = vmatprep.subr.bf16.mxu0 0
  %5188 = vmatpush1.bf16.msra.mxu0 0
  %5189 = vmatprep.subr.bf16.mxu0 0
  %5190 = vmatpush1.bf16.msra.mxu0 0
  %5191 = vmatprep.subr.bf16.mxu0 0
  %5192 = vmatpush1.bf16.msra.mxu0 %v4928
  %5193 = vmatprep.subr.bf16.mxu0 0
  %5194 = vmatpush1.bf16.msra.mxu0 %v4927
  %5195 = vmatprep.subr.bf16.mxu0 0
  %5196 = vmatpush1.bf16.msra.mxu0 %v4926
  %5197 = vmatprep.subr.bf16.mxu0 0
  %5198 = vmatpush1.bf16.msra.mxu0 %v4925
  %5199 = vmatprep.subr.bf16.mxu0 0
  %5200 = vmatpush2.bf16.msra.mxu0 0
  %5201 = vmatprep.subr.bf16.mxu0 0
  %5202 = vmatpush2.bf16.msra.mxu0 0
  %5203 = vmatprep.subr.bf16.mxu0 0
  %5204 = vmatpush2.bf16.msra.mxu0 0
  %5205 = vmatprep.subr.bf16.mxu0 0
  %5206 = vmatpush2.bf16.msra.mxu0 0
  %5207 = vmatprep.subr.bf16.mxu0 0
  %5208 = vmatpush2.bf16.msra.mxu0 0
  %5209 = vmatprep.subr.bf16.mxu0 0
  %5210 = vmatpush2.bf16.msra.mxu0 0
  %5211 = vmatprep.subr.bf16.mxu0 0
  %5212 = vmatpush2.bf16.msra.mxu0 0
  %5213 = vmatprep.subr.bf16.mxu0 0
  %5214 = vmatpush2.bf16.msra.mxu0 0
  %5215 = vmatprep.mubr.bf16.mxu0 0
  %5216 = vmatmul.mubr.bf16.gmra.mxu0 %v4966
  %v5217 = vpop.f32.mrf.mxu0
  %v5218 = vadd.f32 %v5121, %v5217
  %v5219 = vpop.f32.mrf.mxu0
  %v5220 = vpop.f32.mrf.mxu0
  %v5221 = vadd.f32 %v5124, %v5220
  %v5222 = vpop.f32.mrf.mxu0
  %5223 = vmatprep.mubr.bf16.mxu0 0
  %5224 = vmatmul.mubr.bf16.gmra.mxu0 %v4969
  %v5225 = vpop.f32.mrf.mxu0
  %v5226 = vadd.f32 %v5129, %v5225
  %v5227 = vpop.f32.mrf.mxu0
  %v5228 = vpop.f32.mrf.mxu0
  %v5229 = vadd.f32 %v5132, %v5228
  %v5230 = vpop.f32.mrf.mxu0
  %5231 = vmatprep.mubr.bf16.mxu0 0
  %5232 = vmatmul.mubr.bf16.gmra.mxu0 %v4972
  %v5233 = vpop.f32.mrf.mxu0
  %v5234 = vadd.f32 %v5137, %v5233
  %v5235 = vpop.f32.mrf.mxu0
  %v5236 = vpop.f32.mrf.mxu0
  %v5237 = vadd.f32 %v5140, %v5236
  %v5238 = vpop.f32.mrf.mxu0
  %5239 = vmatprep.mubr.bf16.mxu0 0
  %5240 = vmatmul.mubr.bf16.gmra.mxu0 %v4975
  %v5241 = vpop.f32.mrf.mxu0
  %v5242 = vadd.f32 %v5145, %v5241
  %v5243 = vpop.f32.mrf.mxu0
  %v5244 = vpop.f32.mrf.mxu0
  %v5245 = vadd.f32 %v5148, %v5244
  %v5246 = vpop.f32.mrf.mxu0
  %5247 = vmatprep.mubr.bf16.mxu0 0
  %5248 = vmatmul.mubr.bf16.gmra.mxu0 %v4978
  %v5249 = vpop.f32.mrf.mxu0
  %v5250 = vadd.f32 %v5153, %v5249
  %v5251 = vpop.f32.mrf.mxu0
  %v5252 = vpop.f32.mrf.mxu0
  %v5253 = vadd.f32 %v5156, %v5252
  %v5254 = vpop.f32.mrf.mxu0
  %5255 = vmatprep.mubr.bf16.mxu0 0
  %5256 = vmatmul.mubr.bf16.gmra.mxu0 %v4981
  %v5257 = vpop.f32.mrf.mxu0
  %v5258 = vadd.f32 %v5161, %v5257
  %v5259 = vpop.f32.mrf.mxu0
  %v5260 = vpop.f32.mrf.mxu0
  %v5261 = vadd.f32 %v5164, %v5260
  %v5262 = vpop.f32.mrf.mxu0
  %5263 = vmatprep.mubr.bf16.mxu0 0
  %5264 = vmatmul.mubr.bf16.gmra.mxu0 %v4984
  %v5265 = vpop.f32.mrf.mxu0
  %v5266 = vadd.f32 %v5169, %v5265
  %v5267 = vpop.f32.mrf.mxu0
  %v5268 = vpop.f32.mrf.mxu0
  %v5269 = vadd.f32 %v5172, %v5268
  %v5270 = vpop.f32.mrf.mxu0
  %5271 = vmatprep.mubr.bf16.mxu0 0
  %5272 = vmatmul.mubr.bf16.gmra.mxu0 %v4987
  %v5273 = vpop.f32.mrf.mxu0
  %v5274 = vadd.f32 %v5177, %v5273
  %v5275 = vpop.f32.mrf.mxu0
  %v5276 = vpop.f32.mrf.mxu0
  %v5277 = vadd.f32 %v5180, %v5276
  %v5278 = vpop.f32.mrf.mxu0
  %5279 = vdwg.mxu0
  %vm5280 = vcmp.gt.f32.partialorder %v5218, 0.0
  %vm5281 = vcmp.gt.f32.partialorder %v5221, 0.0
  %vm5282 = vcmp.gt.f32.partialorder %v5226, 0.0
  %vm5283 = vcmp.gt.f32.partialorder %v5229, 0.0
  %vm5284 = vcmp.gt.f32.partialorder %v5234, 0.0
  %vm5285 = vcmp.gt.f32.partialorder %v5237, 0.0
  %vm5286 = vcmp.gt.f32.partialorder %v5242, 0.0
  %vm5287 = vcmp.gt.f32.partialorder %v5245, 0.0
  %vm5288 = vcmp.gt.f32.partialorder %v5250, 0.0
  %vm5289 = vcmp.gt.f32.partialorder %v5253, 0.0
  %vm5290 = vcmp.gt.f32.partialorder %v5258, 0.0
  %vm5291 = vcmp.gt.f32.partialorder %v5261, 0.0
  %vm5292 = vcmp.gt.f32.partialorder %v5266, 0.0
  %vm5293 = vcmp.gt.f32.partialorder %v5269, 0.0
  %vm5294 = vcmp.gt.f32.partialorder %v5274, 0.0
  %vm5295 = vcmp.gt.f32.partialorder %v5277, 0.0
  %v5296 = vmul.f32 %v5218, 0.01
  %v5297 = vmul.f32 %v5221, 0.01
  %v5298 = vmul.f32 %v5226, 0.01
  %v5299 = vmul.f32 %v5229, 0.01
  %v5300 = vmul.f32 %v5234, 0.01
  %v5301 = vmul.f32 %v5237, 0.01
  %v5302 = vmul.f32 %v5242, 0.01
  %v5303 = vmul.f32 %v5245, 0.01
  %v5304 = vmul.f32 %v5250, 0.01
  %v5305 = vmul.f32 %v5253, 0.01
  %v5306 = vmul.f32 %v5258, 0.01
  %v5307 = vmul.f32 %v5261, 0.01
  %v5308 = vmul.f32 %v5266, 0.01
  %v5309 = vmul.f32 %v5269, 0.01
  %v5310 = vmul.f32 %v5274, 0.01
  %v5311 = vmul.f32 %v5277, 0.01
  %v5312 = vsel %vm5280, %v5218, %v5296
  %v5313 = vsel %vm5281, %v5221, %v5297
  %v5314 = vsel %vm5282, %v5226, %v5298
  %v5315 = vsel %vm5283, %v5229, %v5299
  %v5316 = vsel %vm5284, %v5234, %v5300
  %v5317 = vsel %vm5285, %v5237, %v5301
  %v5318 = vsel %vm5286, %v5242, %v5302
  %v5319 = vsel %vm5287, %v5245, %v5303
  %v5320 = vsel %vm5288, %v5250, %v5304
  %v5321 = vsel %vm5289, %v5253, %v5305
  %v5322 = vsel %vm5290, %v5258, %v5306
  %v5323 = vsel %vm5291, %v5261, %v5307
  %v5324 = vsel %vm5292, %v5266, %v5308
  %v5325 = vsel %vm5293, %v5269, %v5309
  %v5326 = vsel %vm5294, %v5274, %v5310
  %v5327 = vsel %vm5295, %v5277, %v5311
  %5328 = vst.msk [vmem:[#allocation7] sm:$0xff] %vm3366, %v5312
  %5329 = vst.msk [vmem:[#allocation7 + $0x8] sm:$0xff] %vm3366, %v5313
  %5330 = vst.msk [vmem:[#allocation7 + $0x10] sm:$0xff] %vm3366, %v5314
  %5331 = vst.msk [vmem:[#allocation7 + $0x18] sm:$0xff] %vm3366, %v5315
  %5332 = vst.msk [vmem:[#allocation7 + $0x20] sm:$0xff] %vm3366, %v5316
  %5333 = vst.msk [vmem:[#allocation7 + $0x28] sm:$0xff] %vm3366, %v5317
  %5334 = vst.msk [vmem:[#allocation7 + $0x30] sm:$0xff] %vm3366, %v5318
  %5335 = vst.msk [vmem:[#allocation7 + $0x38] sm:$0xff] %vm3366, %v5319
  %5336 = vst.msk [vmem:[#allocation7 + $0x40] sm:$0xff] %vm3366, %v5320
  %5337 = vst.msk [vmem:[#allocation7 + $0x48] sm:$0xff] %vm3366, %v5321
  %5338 = vst.msk [vmem:[#allocation7 + $0x50] sm:$0xff] %vm3366, %v5322
  %5339 = vst.msk [vmem:[#allocation7 + $0x58] sm:$0xff] %vm3366, %v5323
  %5340 = vst.msk [vmem:[#allocation7 + $0x60] sm:$0xff] %vm3366, %v5324
  %5341 = vst.msk [vmem:[#allocation7 + $0x68] sm:$0xff] %vm3366, %v5325
  %5342 = vst.msk [vmem:[#allocation7 + $0x70] sm:$0xff] %vm3366, %v5326
  %5343 = vst.msk [vmem:[#allocation7 + $0x78] sm:$0xff] %vm3366, %v5327
  %v5344 = vld [vmem:[#allocation7] sm:$0x1]
  %vm5345 = vcmask 516096
  %5346 = vst.msk [vmem:[#allocation8] sm:$0x1] %vm5345, %v5344
  %v5347 = vld [vmem:[#allocation7 + $0x1] sm:$0x1]
  %v5350 = vunpack.c.l.s4 1983009808
  %v5351 = vunpack.c.0.s8 %v5350
  %v5352 = vlaneseq
  %v5353 = vshrl.u32 %v5352, 7
  %v5354 = vsub.s32 %v5351, %v5353
  %v5355 = vrot.slane %v5347, %v5354
  %5356 = vrot.lane.b32.xlu0 %v5355, 64
  %v5357 = vpop.permute.xlu0 %5356
  %vm5359 = vcmask 1040896
  %5360 = vst.msk [vmem:[#allocation8] sm:$0x1] %vm5359, %v5357
  %v5361 = vld [vmem:[#allocation7 + $0x2] sm:$0x1]
  %5362 = vst.msk [vmem:[#allocation8 + $0x2] sm:$0x1] %vm5345, %v5361
  %v5363 = vld [vmem:[#allocation7 + $0x3] sm:$0x1]
  %v5366 = vunpack.c.l.s4 1983009808
  %v5367 = vunpack.c.0.s8 %v5366
  %v5368 = vlaneseq
  %v5369 = vshrl.u32 %v5368, 7
  %v5370 = vsub.s32 %v5367, %v5369
  %v5371 = vrot.slane %v5363, %v5370
  %5372 = vrot.lane.b32.xlu0 %v5371, 64
  %v5373 = vpop.permute.xlu0 %5372
  %5375 = vst.msk [vmem:[#allocation8 + $0x2] sm:$0x1] %vm5359, %v5373
  %v5376 = vld [vmem:[#allocation7 + $0x4] sm:$0x1]
  %5377 = vst.msk [vmem:[#allocation8 + $0x4] sm:$0x1] %vm5345, %v5376
  %v5378 = vld [vmem:[#allocation7 + $0x5] sm:$0x1]
  %v5381 = vunpack.c.l.s4 1983009808
  %v5382 = vunpack.c.0.s8 %v5381
  %v5383 = vlaneseq
  %v5384 = vshrl.u32 %v5383, 7
  %v5385 = vsub.s32 %v5382, %v5384
  %v5386 = vrot.slane %v5378, %v5385
  %5387 = vrot.lane.b32.xlu0 %v5386, 64
  %v5388 = vpop.permute.xlu0 %5387
  %5390 = vst.msk [vmem:[#allocation8 + $0x4] sm:$0x1] %vm5359, %v5388
  %v5391 = vld [vmem:[#allocation7 + $0x8] sm:$0x1]
  %5392 = vst.msk [vmem:[#allocation8 + $0x6] sm:$0x1] %vm5345, %v5391
  %v5393 = vld [vmem:[#allocation7 + $0x9] sm:$0x1]
  %v5396 = vunpack.c.l.s4 1983009808
  %v5397 = vunpack.c.0.s8 %v5396
  %v5398 = vlaneseq
  %v5399 = vshrl.u32 %v5398, 7
  %v5400 = vsub.s32 %v5397, %v5399
  %v5401 = vrot.slane %v5393, %v5400
  %5402 = vrot.lane.b32.xlu0 %v5401, 64
  %v5403 = vpop.permute.xlu0 %5402
  %5405 = vst.msk [vmem:[#allocation8 + $0x6] sm:$0x1] %vm5359, %v5403
  %v5406 = vld [vmem:[#allocation7 + $0xa] sm:$0x1]
  %5407 = vst.msk [vmem:[#allocation8 + $0x8] sm:$0x1] %vm5345, %v5406
  %v5408 = vld [vmem:[#allocation7 + $0xb] sm:$0x1]
  %v5411 = vunpack.c.l.s4 1983009808
  %v5412 = vunpack.c.0.s8 %v5411
  %v5413 = vlaneseq
  %v5414 = vshrl.u32 %v5413, 7
  %v5415 = vsub.s32 %v5412, %v5414
  %v5416 = vrot.slane %v5408, %v5415
  %5417 = vrot.lane.b32.xlu0 %v5416, 64
  %v5418 = vpop.permute.xlu0 %5417
  %5420 = vst.msk [vmem:[#allocation8 + $0x8] sm:$0x1] %vm5359, %v5418
  %v5421 = vld [vmem:[#allocation7 + $0xc] sm:$0x1]
  %5422 = vst.msk [vmem:[#allocation8 + $0xa] sm:$0x1] %vm5345, %v5421
  %v5423 = vld [vmem:[#allocation7 + $0xd] sm:$0x1]
  %v5426 = vunpack.c.l.s4 1983009808
  %v5427 = vunpack.c.0.s8 %v5426
  %v5428 = vlaneseq
  %v5429 = vshrl.u32 %v5428, 7
  %v5430 = vsub.s32 %v5427, %v5429
  %v5431 = vrot.slane %v5423, %v5430
  %5432 = vrot.lane.b32.xlu0 %v5431, 64
  %v5433 = vpop.permute.xlu0 %5432
  %5435 = vst.msk [vmem:[#allocation8 + $0xa] sm:$0x1] %vm5359, %v5433
  %v5436 = vld [vmem:[#allocation7 + $0x10] sm:$0x1]
  %5437 = vst.msk [vmem:[#allocation8 + $0xc] sm:$0x1] %vm5345, %v5436
  %v5438 = vld [vmem:[#allocation7 + $0x11] sm:$0x1]
  %v5441 = vunpack.c.l.s4 1983009808
  %v5442 = vunpack.c.0.s8 %v5441
  %v5443 = vlaneseq
  %v5444 = vshrl.u32 %v5443, 7
  %v5445 = vsub.s32 %v5442, %v5444
  %v5446 = vrot.slane %v5438, %v5445
  %5447 = vrot.lane.b32.xlu0 %v5446, 64
  %v5448 = vpop.permute.xlu0 %5447
  %5450 = vst.msk [vmem:[#allocation8 + $0xc] sm:$0x1] %vm5359, %v5448
  %v5451 = vld [vmem:[#allocation7 + $0x12] sm:$0x1]
  %5452 = vst.msk [vmem:[#allocation8 + $0xe] sm:$0x1] %vm5345, %v5451
  %v5453 = vld [vmem:[#allocation7 + $0x13] sm:$0x1]
  %v5456 = vunpack.c.l.s4 1983009808
  %v5457 = vunpack.c.0.s8 %v5456
  %v5458 = vlaneseq
  %v5459 = vshrl.u32 %v5458, 7
  %v5460 = vsub.s32 %v5457, %v5459
  %v5461 = vrot.slane %v5453, %v5460
  %5462 = vrot.lane.b32.xlu0 %v5461, 64
  %v5463 = vpop.permute.xlu0 %5462
  %5465 = vst.msk [vmem:[#allocation8 + $0xe] sm:$0x1] %vm5359, %v5463
  %v5466 = vld [vmem:[#allocation7 + $0x14] sm:$0x1]
  %5467 = vst.msk [vmem:[#allocation8 + $0x10] sm:$0x1] %vm5345, %v5466
  %v5468 = vld [vmem:[#allocation7 + $0x15] sm:$0x1]
  %v5471 = vunpack.c.l.s4 1983009808
  %v5472 = vunpack.c.0.s8 %v5471
  %v5473 = vlaneseq
  %v5474 = vshrl.u32 %v5473, 7
  %v5475 = vsub.s32 %v5472, %v5474
  %v5476 = vrot.slane %v5468, %v5475
  %5477 = vrot.lane.b32.xlu0 %v5476, 64
  %v5478 = vpop.permute.xlu0 %5477
  %5480 = vst.msk [vmem:[#allocation8 + $0x10] sm:$0x1] %vm5359, %v5478
  %v5481 = vld [vmem:[#allocation7 + $0x18] sm:$0x1]
  %5482 = vst.msk [vmem:[#allocation8 + $0x12] sm:$0x1] %vm5345, %v5481
  %v5483 = vld [vmem:[#allocation7 + $0x19] sm:$0x1]
  %v5486 = vunpack.c.l.s4 1983009808
  %v5487 = vunpack.c.0.s8 %v5486
  %v5488 = vlaneseq
  %v5489 = vshrl.u32 %v5488, 7
  %v5490 = vsub.s32 %v5487, %v5489
  %v5491 = vrot.slane %v5483, %v5490
  %5492 = vrot.lane.b32.xlu0 %v5491, 64
  %v5493 = vpop.permute.xlu0 %5492
  %5495 = vst.msk [vmem:[#allocation8 + $0x12] sm:$0x1] %vm5359, %v5493
  %v5496 = vld [vmem:[#allocation7 + $0x1a] sm:$0x1]
  %5497 = vst.msk [vmem:[#allocation8 + $0x14] sm:$0x1] %vm5345, %v5496
  %v5498 = vld [vmem:[#allocation7 + $0x1b] sm:$0x1]
  %v5501 = vunpack.c.l.s4 1983009808
  %v5502 = vunpack.c.0.s8 %v5501
  %v5503 = vlaneseq
  %v5504 = vshrl.u32 %v5503, 7
  %v5505 = vsub.s32 %v5502, %v5504
  %v5506 = vrot.slane %v5498, %v5505
  %5507 = vrot.lane.b32.xlu0 %v5506, 64
  %v5508 = vpop.permute.xlu0 %5507
  %5510 = vst.msk [vmem:[#allocation8 + $0x14] sm:$0x1] %vm5359, %v5508
  %v5511 = vld [vmem:[#allocation7 + $0x1c] sm:$0x1]
  %5512 = vst.msk [vmem:[#allocation8 + $0x16] sm:$0x1] %vm5345, %v5511
  %v5513 = vld [vmem:[#allocation7 + $0x1d] sm:$0x1]
  %v5516 = vunpack.c.l.s4 1983009808
  %v5517 = vunpack.c.0.s8 %v5516
  %v5518 = vlaneseq
  %v5519 = vshrl.u32 %v5518, 7
  %v5520 = vsub.s32 %v5517, %v5519
  %v5521 = vrot.slane %v5513, %v5520
  %5522 = vrot.lane.b32.xlu0 %v5521, 64
  %v5523 = vpop.permute.xlu0 %5522
  %5525 = vst.msk [vmem:[#allocation8 + $0x16] sm:$0x1] %vm5359, %v5523
  %v5526 = vld [vmem:[#allocation7 + $0x20] sm:$0x1]
  %5527 = vst.msk [vmem:[#allocation8 + $0x18] sm:$0x1] %vm5345, %v5526
  %v5528 = vld [vmem:[#allocation7 + $0x21] sm:$0x1]
  %v5531 = vunpack.c.l.s4 1983009808
  %v5532 = vunpack.c.0.s8 %v5531
  %v5533 = vlaneseq
  %v5534 = vshrl.u32 %v5533, 7
  %v5535 = vsub.s32 %v5532, %v5534
  %v5536 = vrot.slane %v5528, %v5535
  %5537 = vrot.lane.b32.xlu0 %v5536, 64
  %v5538 = vpop.permute.xlu0 %5537
  %5540 = vst.msk [vmem:[#allocation8 + $0x18] sm:$0x1] %vm5359, %v5538
  %v5541 = vld [vmem:[#allocation7 + $0x22] sm:$0x1]
  %5542 = vst.msk [vmem:[#allocation8 + $0x1a] sm:$0x1] %vm5345, %v5541
  %v5543 = vld [vmem:[#allocation7 + $0x23] sm:$0x1]
  %v5546 = vunpack.c.l.s4 1983009808
  %v5547 = vunpack.c.0.s8 %v5546
  %v5548 = vlaneseq
  %v5549 = vshrl.u32 %v5548, 7
  %v5550 = vsub.s32 %v5547, %v5549
  %v5551 = vrot.slane %v5543, %v5550
  %5552 = vrot.lane.b32.xlu0 %v5551, 64
  %v5553 = vpop.permute.xlu0 %5552
  %5555 = vst.msk [vmem:[#allocation8 + $0x1a] sm:$0x1] %vm5359, %v5553
  %v5556 = vld [vmem:[#allocation7 + $0x24] sm:$0x1]
  %5557 = vst.msk [vmem:[#allocation8 + $0x1c] sm:$0x1] %vm5345, %v5556
  %v5558 = vld [vmem:[#allocation7 + $0x25] sm:$0x1]
  %v5561 = vunpack.c.l.s4 1983009808
  %v5562 = vunpack.c.0.s8 %v5561
  %v5563 = vlaneseq
  %v5564 = vshrl.u32 %v5563, 7
  %v5565 = vsub.s32 %v5562, %v5564
  %v5566 = vrot.slane %v5558, %v5565
  %5567 = vrot.lane.b32.xlu0 %v5566, 64
  %v5568 = vpop.permute.xlu0 %5567
  %5570 = vst.msk [vmem:[#allocation8 + $0x1c] sm:$0x1] %vm5359, %v5568
  %v5571 = vld [vmem:[#allocation7 + $0x28] sm:$0x1]
  %5572 = vst.msk [vmem:[#allocation8 + $0x1e] sm:$0x1] %vm5345, %v5571
  %v5573 = vld [vmem:[#allocation7 + $0x29] sm:$0x1]
  %v5576 = vunpack.c.l.s4 1983009808
  %v5577 = vunpack.c.0.s8 %v5576
  %v5578 = vlaneseq
  %v5579 = vshrl.u32 %v5578, 7
  %v5580 = vsub.s32 %v5577, %v5579
  %v5581 = vrot.slane %v5573, %v5580
  %5582 = vrot.lane.b32.xlu0 %v5581, 64
  %v5583 = vpop.permute.xlu0 %5582
  %5585 = vst.msk [vmem:[#allocation8 + $0x1e] sm:$0x1] %vm5359, %v5583
  %v5586 = vld [vmem:[#allocation7 + $0x2a] sm:$0x1]
  %5587 = vst.msk [vmem:[#allocation8 + $0x20] sm:$0x1] %vm5345, %v5586
  %v5588 = vld [vmem:[#allocation7 + $0x2b] sm:$0x1]
  %v5591 = vunpack.c.l.s4 1983009808
  %v5592 = vunpack.c.0.s8 %v5591
  %v5593 = vlaneseq
  %v5594 = vshrl.u32 %v5593, 7
  %v5595 = vsub.s32 %v5592, %v5594
  %v5596 = vrot.slane %v5588, %v5595
  %5597 = vrot.lane.b32.xlu0 %v5596, 64
  %v5598 = vpop.permute.xlu0 %5597
  %5600 = vst.msk [vmem:[#allocation8 + $0x20] sm:$0x1] %vm5359, %v5598
  %v5601 = vld [vmem:[#allocation7 + $0x2c] sm:$0x1]
  %5602 = vst.msk [vmem:[#allocation8 + $0x22] sm:$0x1] %vm5345, %v5601
  %v5603 = vld [vmem:[#allocation7 + $0x2d] sm:$0x1]
  %v5606 = vunpack.c.l.s4 1983009808
  %v5607 = vunpack.c.0.s8 %v5606
  %v5608 = vlaneseq
  %v5609 = vshrl.u32 %v5608, 7
  %v5610 = vsub.s32 %v5607, %v5609
  %v5611 = vrot.slane %v5603, %v5610
  %5612 = vrot.lane.b32.xlu0 %v5611, 64
  %v5613 = vpop.permute.xlu0 %5612
  %5615 = vst.msk [vmem:[#allocation8 + $0x22] sm:$0x1] %vm5359, %v5613
  %v5616 = vld [vmem:[#allocation7 + $0x40] sm:$0x1]
  %5617 = vst.msk [vmem:[#allocation8 + $0x1] sm:$0x1] %vm5345, %v5616
  %v5618 = vld [vmem:[#allocation7 + $0x41] sm:$0x1]
  %v5621 = vunpack.c.l.s4 1983009808
  %v5622 = vunpack.c.0.s8 %v5621
  %v5623 = vlaneseq
  %v5624 = vshrl.u32 %v5623, 7
  %v5625 = vsub.s32 %v5622, %v5624
  %v5626 = vrot.slane %v5618, %v5625
  %5627 = vrot.lane.b32.xlu0 %v5626, 64
  %v5628 = vpop.permute.xlu0 %5627
  %5630 = vst.msk [vmem:[#allocation8 + $0x1] sm:$0x1] %vm5359, %v5628
  %v5631 = vld [vmem:[#allocation7 + $0x42] sm:$0x1]
  %5632 = vst.msk [vmem:[#allocation8 + $0x3] sm:$0x1] %vm5345, %v5631
  %v5633 = vld [vmem:[#allocation7 + $0x43] sm:$0x1]
  %v5636 = vunpack.c.l.s4 1983009808
  %v5637 = vunpack.c.0.s8 %v5636
  %v5638 = vlaneseq
  %v5639 = vshrl.u32 %v5638, 7
  %v5640 = vsub.s32 %v5637, %v5639
  %v5641 = vrot.slane %v5633, %v5640
  %5642 = vrot.lane.b32.xlu0 %v5641, 64
  %v5643 = vpop.permute.xlu0 %5642
  %5645 = vst.msk [vmem:[#allocation8 + $0x3] sm:$0x1] %vm5359, %v5643
  %v5646 = vld [vmem:[#allocation7 + $0x44] sm:$0x1]
  %5647 = vst.msk [vmem:[#allocation8 + $0x5] sm:$0x1] %vm5345, %v5646
  %v5648 = vld [vmem:[#allocation7 + $0x45] sm:$0x1]
  %v5651 = vunpack.c.l.s4 1983009808
  %v5652 = vunpack.c.0.s8 %v5651
  %v5653 = vlaneseq
  %v5654 = vshrl.u32 %v5653, 7
  %v5655 = vsub.s32 %v5652, %v5654
  %v5656 = vrot.slane %v5648, %v5655
  %5657 = vrot.lane.b32.xlu0 %v5656, 64
  %v5658 = vpop.permute.xlu0 %5657
  %5660 = vst.msk [vmem:[#allocation8 + $0x5] sm:$0x1] %vm5359, %v5658
  %v5661 = vld [vmem:[#allocation7 + $0x48] sm:$0x1]
  %5662 = vst.msk [vmem:[#allocation8 + $0x7] sm:$0x1] %vm5345, %v5661
  %v5663 = vld [vmem:[#allocation7 + $0x49] sm:$0x1]
  %v5666 = vunpack.c.l.s4 1983009808
  %v5667 = vunpack.c.0.s8 %v5666
  %v5668 = vlaneseq
  %v5669 = vshrl.u32 %v5668, 7
  %v5670 = vsub.s32 %v5667, %v5669
  %v5671 = vrot.slane %v5663, %v5670
  %5672 = vrot.lane.b32.xlu0 %v5671, 64
  %v5673 = vpop.permute.xlu0 %5672
  %5675 = vst.msk [vmem:[#allocation8 + $0x7] sm:$0x1] %vm5359, %v5673
  %v5676 = vld [vmem:[#allocation7 + $0x4a] sm:$0x1]
  %5677 = vst.msk [vmem:[#allocation8 + $0x9] sm:$0x1] %vm5345, %v5676
  %v5678 = vld [vmem:[#allocation7 + $0x4b] sm:$0x1]
  %v5681 = vunpack.c.l.s4 1983009808
  %v5682 = vunpack.c.0.s8 %v5681
  %v5683 = vlaneseq
  %v5684 = vshrl.u32 %v5683, 7
  %v5685 = vsub.s32 %v5682, %v5684
  %v5686 = vrot.slane %v5678, %v5685
  %5687 = vrot.lane.b32.xlu0 %v5686, 64
  %v5688 = vpop.permute.xlu0 %5687
  %5690 = vst.msk [vmem:[#allocation8 + $0x9] sm:$0x1] %vm5359, %v5688
  %v5691 = vld [vmem:[#allocation7 + $0x4c] sm:$0x1]
  %5692 = vst.msk [vmem:[#allocation8 + $0xb] sm:$0x1] %vm5345, %v5691
  %v5693 = vld [vmem:[#allocation7 + $0x4d] sm:$0x1]
  %v5696 = vunpack.c.l.s4 1983009808
  %v5697 = vunpack.c.0.s8 %v5696
  %v5698 = vlaneseq
  %v5699 = vshrl.u32 %v5698, 7
  %v5700 = vsub.s32 %v5697, %v5699
  %v5701 = vrot.slane %v5693, %v5700
  %5702 = vrot.lane.b32.xlu0 %v5701, 64
  %v5703 = vpop.permute.xlu0 %5702
  %5705 = vst.msk [vmem:[#allocation8 + $0xb] sm:$0x1] %vm5359, %v5703
  %v5706 = vld [vmem:[#allocation7 + $0x50] sm:$0x1]
  %5707 = vst.msk [vmem:[#allocation8 + $0xd] sm:$0x1] %vm5345, %v5706
  %v5708 = vld [vmem:[#allocation7 + $0x51] sm:$0x1]
  %v5711 = vunpack.c.l.s4 1983009808
  %v5712 = vunpack.c.0.s8 %v5711
  %v5713 = vlaneseq
  %v5714 = vshrl.u32 %v5713, 7
  %v5715 = vsub.s32 %v5712, %v5714
  %v5716 = vrot.slane %v5708, %v5715
  %5717 = vrot.lane.b32.xlu0 %v5716, 64
  %v5718 = vpop.permute.xlu0 %5717
  %5720 = vst.msk [vmem:[#allocation8 + $0xd] sm:$0x1] %vm5359, %v5718
  %v5721 = vld [vmem:[#allocation7 + $0x52] sm:$0x1]
  %5722 = vst.msk [vmem:[#allocation8 + $0xf] sm:$0x1] %vm5345, %v5721
  %v5723 = vld [vmem:[#allocation7 + $0x53] sm:$0x1]
  %v5726 = vunpack.c.l.s4 1983009808
  %v5727 = vunpack.c.0.s8 %v5726
  %v5728 = vlaneseq
  %v5729 = vshrl.u32 %v5728, 7
  %v5730 = vsub.s32 %v5727, %v5729
  %v5731 = vrot.slane %v5723, %v5730
  %5732 = vrot.lane.b32.xlu0 %v5731, 64
  %v5733 = vpop.permute.xlu0 %5732
  %5735 = vst.msk [vmem:[#allocation8 + $0xf] sm:$0x1] %vm5359, %v5733
  %v5736 = vld [vmem:[#allocation7 + $0x54] sm:$0x1]
  %5737 = vst.msk [vmem:[#allocation8 + $0x11] sm:$0x1] %vm5345, %v5736
  %v5738 = vld [vmem:[#allocation7 + $0x55] sm:$0x1]
  %v5741 = vunpack.c.l.s4 1983009808
  %v5742 = vunpack.c.0.s8 %v5741
  %v5743 = vlaneseq
  %v5744 = vshrl.u32 %v5743, 7
  %v5745 = vsub.s32 %v5742, %v5744
  %v5746 = vrot.slane %v5738, %v5745
  %5747 = vrot.lane.b32.xlu0 %v5746, 64
  %v5748 = vpop.permute.xlu0 %5747
  %5750 = vst.msk [vmem:[#allocation8 + $0x11] sm:$0x1] %vm5359, %v5748
  %v5751 = vld [vmem:[#allocation7 + $0x58] sm:$0x1]
  %5752 = vst.msk [vmem:[#allocation8 + $0x13] sm:$0x1] %vm5345, %v5751
  %v5753 = vld [vmem:[#allocation7 + $0x59] sm:$0x1]
  %v5756 = vunpack.c.l.s4 1983009808
  %v5757 = vunpack.c.0.s8 %v5756
  %v5758 = vlaneseq
  %v5759 = vshrl.u32 %v5758, 7
  %v5760 = vsub.s32 %v5757, %v5759
  %v5761 = vrot.slane %v5753, %v5760
  %5762 = vrot.lane.b32.xlu0 %v5761, 64
  %v5763 = vpop.permute.xlu0 %5762
  %5765 = vst.msk [vmem:[#allocation8 + $0x13] sm:$0x1] %vm5359, %v5763
  %v5766 = vld [vmem:[#allocation7 + $0x5a] sm:$0x1]
  %5767 = vst.msk [vmem:[#allocation8 + $0x15] sm:$0x1] %vm5345, %v5766
  %v5768 = vld [vmem:[#allocation7 + $0x5b] sm:$0x1]
  %v5771 = vunpack.c.l.s4 1983009808
  %v5772 = vunpack.c.0.s8 %v5771
  %v5773 = vlaneseq
  %v5774 = vshrl.u32 %v5773, 7
  %v5775 = vsub.s32 %v5772, %v5774
  %v5776 = vrot.slane %v5768, %v5775
  %5777 = vrot.lane.b32.xlu0 %v5776, 64
  %v5778 = vpop.permute.xlu0 %5777
  %5780 = vst.msk [vmem:[#allocation8 + $0x15] sm:$0x1] %vm5359, %v5778
  %v5781 = vld [vmem:[#allocation7 + $0x5c] sm:$0x1]
  %5782 = vst.msk [vmem:[#allocation8 + $0x17] sm:$0x1] %vm5345, %v5781
  %v5783 = vld [vmem:[#allocation7 + $0x5d] sm:$0x1]
  %v5786 = vunpack.c.l.s4 1983009808
  %v5787 = vunpack.c.0.s8 %v5786
  %v5788 = vlaneseq
  %v5789 = vshrl.u32 %v5788, 7
  %v5790 = vsub.s32 %v5787, %v5789
  %v5791 = vrot.slane %v5783, %v5790
  %5792 = vrot.lane.b32.xlu0 %v5791, 64
  %v5793 = vpop.permute.xlu0 %5792
  %5795 = vst.msk [vmem:[#allocation8 + $0x17] sm:$0x1] %vm5359, %v5793
  %v5796 = vld [vmem:[#allocation7 + $0x60] sm:$0x1]
  %5797 = vst.msk [vmem:[#allocation8 + $0x19] sm:$0x1] %vm5345, %v5796
  %v5798 = vld [vmem:[#allocation7 + $0x61] sm:$0x1]
  %v5801 = vunpack.c.l.s4 1983009808
  %v5802 = vunpack.c.0.s8 %v5801
  %v5803 = vlaneseq
  %v5804 = vshrl.u32 %v5803, 7
  %v5805 = vsub.s32 %v5802, %v5804
  %v5806 = vrot.slane %v5798, %v5805
  %5807 = vrot.lane.b32.xlu0 %v5806, 64
  %v5808 = vpop.permute.xlu0 %5807
  %5810 = vst.msk [vmem:[#allocation8 + $0x19] sm:$0x1] %vm5359, %v5808
  %v5811 = vld [vmem:[#allocation7 + $0x62] sm:$0x1]
  %5812 = vst.msk [vmem:[#allocation8 + $0x1b] sm:$0x1] %vm5345, %v5811
  %v5813 = vld [vmem:[#allocation7 + $0x63] sm:$0x1]
  %v5816 = vunpack.c.l.s4 1983009808
  %v5817 = vunpack.c.0.s8 %v5816
  %v5818 = vlaneseq
  %v5819 = vshrl.u32 %v5818, 7
  %v5820 = vsub.s32 %v5817, %v5819
  %v5821 = vrot.slane %v5813, %v5820
  %5822 = vrot.lane.b32.xlu0 %v5821, 64
  %v5823 = vpop.permute.xlu0 %5822
  %5825 = vst.msk [vmem:[#allocation8 + $0x1b] sm:$0x1] %vm5359, %v5823
  %v5826 = vld [vmem:[#allocation7 + $0x64] sm:$0x1]
  %5827 = vst.msk [vmem:[#allocation8 + $0x1d] sm:$0x1] %vm5345, %v5826
  %v5828 = vld [vmem:[#allocation7 + $0x65] sm:$0x1]
  %v5831 = vunpack.c.l.s4 1983009808
  %v5832 = vunpack.c.0.s8 %v5831
  %v5833 = vlaneseq
  %v5834 = vshrl.u32 %v5833, 7
  %v5835 = vsub.s32 %v5832, %v5834
  %v5836 = vrot.slane %v5828, %v5835
  %5837 = vrot.lane.b32.xlu0 %v5836, 64
  %v5838 = vpop.permute.xlu0 %5837
  %5840 = vst.msk [vmem:[#allocation8 + $0x1d] sm:$0x1] %vm5359, %v5838
  %v5841 = vld [vmem:[#allocation7 + $0x68] sm:$0x1]
  %5842 = vst.msk [vmem:[#allocation8 + $0x1f] sm:$0x1] %vm5345, %v5841
  %v5843 = vld [vmem:[#allocation7 + $0x69] sm:$0x1]
  %v5846 = vunpack.c.l.s4 1983009808
  %v5847 = vunpack.c.0.s8 %v5846
  %v5848 = vlaneseq
  %v5849 = vshrl.u32 %v5848, 7
  %v5850 = vsub.s32 %v5847, %v5849
  %v5851 = vrot.slane %v5843, %v5850
  %5852 = vrot.lane.b32.xlu0 %v5851, 64
  %v5853 = vpop.permute.xlu0 %5852
  %5855 = vst.msk [vmem:[#allocation8 + $0x1f] sm:$0x1] %vm5359, %v5853
  %v5856 = vld [vmem:[#allocation7 + $0x6a] sm:$0x1]
  %5857 = vst.msk [vmem:[#allocation8 + $0x21] sm:$0x1] %vm5345, %v5856
  %v5858 = vld [vmem:[#allocation7 + $0x6b] sm:$0x1]
  %v5861 = vunpack.c.l.s4 1983009808
  %v5862 = vunpack.c.0.s8 %v5861
  %v5863 = vlaneseq
  %v5864 = vshrl.u32 %v5863, 7
  %v5865 = vsub.s32 %v5862, %v5864
  %v5866 = vrot.slane %v5858, %v5865
  %5867 = vrot.lane.b32.xlu0 %v5866, 64
  %v5868 = vpop.permute.xlu0 %5867
  %5870 = vst.msk [vmem:[#allocation8 + $0x21] sm:$0x1] %vm5359, %v5868
  %v5871 = vld [vmem:[#allocation7 + $0x6c] sm:$0x1]
  %5872 = vst.msk [vmem:[#allocation8 + $0x23] sm:$0x1] %vm5345, %v5871
  %v5873 = vld [vmem:[#allocation7 + $0x6d] sm:$0x1]
  %v5876 = vunpack.c.l.s4 1983009808
  %v5877 = vunpack.c.0.s8 %v5876
  %v5878 = vlaneseq
  %v5879 = vshrl.u32 %v5878, 7
  %v5880 = vsub.s32 %v5877, %v5879
  %v5881 = vrot.slane %v5873, %v5880
  %5882 = vrot.lane.b32.xlu0 %v5881, 64
  %v5883 = vpop.permute.xlu0 %5882
  %5885 = vst.msk [vmem:[#allocation8 + $0x23] sm:$0x1] %vm5359, %v5883
  %s5886 = smul.u32 4, 288
  %s5887 = smul.u32 %s5886, 4
  %s5888 = sshll.u32 %s5887, 4
  %5889 = dma.done [#allocation3], %s5888
  %v5890 = vld [vmem:[#allocation8] sm:$0xff]
  %v5891 = vld [vmem:[#allocation8 + $0x8] sm:$0xff]
  %v5892 = vld [vmem:[#allocation8 + $0x10] sm:$0xff]
  %v5893 = vld [vmem:[#allocation8 + $0x18] sm:$0xff]
  %v5894 = vld [vmem:[#allocation8 + $0x20] sm:$0xf]
  %v5900 = vcombine.high %v5890, %v5890
  %v5902 = vunpack.c.l.s4 1983009808
  %v5903 = vunpack.c.0.s8 %v5902
  %v5904 = vlaneseq
  %v5905 = vshrl.u32 %v5904, 7
  %v5906 = vsub.s32 %v5903, %v5905
  %v5907 = vrot.slane %v5890, %v5906
  %v5909 = vunpack.c.l.s4 1983009808
  %v5910 = vunpack.c.0.s8 %v5909
  %v5911 = vlaneseq
  %v5912 = vshrl.u32 %v5911, 7
  %v5913 = vsub.s32 %v5910, %v5912
  %v5914 = vrot.slane %v5900, %v5913
  %v5915 = vcombine.high %v5907, %v5907
  %v5916 = vcombine.high %v5914, %v5914
  %v5917 = vcombine.high %v5891, %v5891
  %v5919 = vunpack.c.l.s4 1983009808
  %v5920 = vunpack.c.0.s8 %v5919
  %v5921 = vlaneseq
  %v5922 = vshrl.u32 %v5921, 7
  %v5923 = vsub.s32 %v5920, %v5922
  %v5924 = vrot.slane %v5891, %v5923
  %v5926 = vunpack.c.l.s4 1983009808
  %v5927 = vunpack.c.0.s8 %v5926
  %v5928 = vlaneseq
  %v5929 = vshrl.u32 %v5928, 7
  %v5930 = vsub.s32 %v5927, %v5929
  %v5931 = vrot.slane %v5917, %v5930
  %v5932 = vcombine.high %v5924, %v5924
  %v5933 = vcombine.high %v5931, %v5931
  %v5934 = vcombine.high %v5892, %v5892
  %v5936 = vunpack.c.l.s4 1983009808
  %v5937 = vunpack.c.0.s8 %v5936
  %v5938 = vlaneseq
  %v5939 = vshrl.u32 %v5938, 7
  %v5940 = vsub.s32 %v5937, %v5939
  %v5941 = vrot.slane %v5892, %v5940
  %v5943 = vunpack.c.l.s4 1983009808
  %v5944 = vunpack.c.0.s8 %v5943
  %v5945 = vlaneseq
  %v5946 = vshrl.u32 %v5945, 7
  %v5947 = vsub.s32 %v5944, %v5946
  %v5948 = vrot.slane %v5934, %v5947
  %v5949 = vcombine.high %v5941, %v5941
  %v5950 = vcombine.high %v5948, %v5948
  %v5951 = vcombine.high %v5893, %v5893
  %v5953 = vunpack.c.l.s4 1983009808
  %v5954 = vunpack.c.0.s8 %v5953
  %v5955 = vlaneseq
  %v5956 = vshrl.u32 %v5955, 7
  %v5957 = vsub.s32 %v5954, %v5956
  %v5958 = vrot.slane %v5893, %v5957
  %v5960 = vunpack.c.l.s4 1983009808
  %v5961 = vunpack.c.0.s8 %v5960
  %v5962 = vlaneseq
  %v5963 = vshrl.u32 %v5962, 7
  %v5964 = vsub.s32 %v5961, %v5963
  %v5965 = vrot.slane %v5951, %v5964
  %v5966 = vcombine.high %v5958, %v5958
  %v5967 = vcombine.high %v5965, %v5965
  %v5969 = vunpack.c.l.s4 1983009808
  %v5970 = vunpack.c.0.s8 %v5969
  %v5971 = vlaneseq
  %v5972 = vshrl.u32 %v5971, 7
  %v5973 = vsub.s32 %v5970, %v5972
  %v5974 = vrot.slane %v5894, %v5973
  %v5975 = vcombine.high %v5974, %v5974
  %v5994 = vpack.c.bf16 %v5907, %v5907
  %v5995 = vpack.c.bf16 %v5915, %v5915
  %v5996 = vpack.c.bf16 %v5914, %v5914
  %v5997 = vpack.c.bf16 %v5916, %v5916
  %v5998 = vpack.c.bf16 %v5924, %v5924
  %v5999 = vpack.c.bf16 %v5932, %v5932
  %v6000 = vpack.c.bf16 %v5931, %v5931
  %v6001 = vpack.c.bf16 %v5933, %v5933
  %v6002 = vpack.c.bf16 %v5941, %v5941
  %v6003 = vpack.c.bf16 %v5949, %v5949
  %v6004 = vpack.c.bf16 %v5948, %v5948
  %v6005 = vpack.c.bf16 %v5950, %v5950
  %v6006 = vpack.c.bf16 %v5958, %v5958
  %v6007 = vpack.c.bf16 %v5966, %v5966
  %v6008 = vpack.c.bf16 %v5965, %v5965
  %v6009 = vpack.c.bf16 %v5967, %v5967
  %v6010 = vpack.c.bf16 %v5974, %v5974
  %v6011 = vpack.c.bf16 %v5975, %v5975
  %v6012 = vld [vmem:[#allocation2] sm:$0xff]
  %v6013 = vld [vmem:[#allocation2 + $0x8] sm:$0xff]
  %v6014 = vld [vmem:[#allocation2 + $0x10] sm:$0xff]
  %v6015 = vld [vmem:[#allocation2 + $0x18] sm:$0xff]
  %v6016 = vld [vmem:[#allocation2 + $0x20] sm:$0xff]
  %v6017 = vld [vmem:[#allocation2 + $0x28] sm:$0xff]
  %v6018 = vld [vmem:[#allocation2 + $0x30] sm:$0xff]
  %v6019 = vld [vmem:[#allocation2 + $0x38] sm:$0xff]
  %v6020 = vld [vmem:[#allocation2 + $0x40] sm:$0xff]
  %v6021 = vld [vmem:[#allocation2 + $0x48] sm:$0xff]
  %v6022 = vld [vmem:[#allocation2 + $0x50] sm:$0xff]
  %v6023 = vld [vmem:[#allocation2 + $0x58] sm:$0xff]
  %v6024 = vld [vmem:[#allocation2 + $0x60] sm:$0xff]
  %v6025 = vld [vmem:[#allocation2 + $0x68] sm:$0xff]
  %v6026 = vld [vmem:[#allocation2 + $0x70] sm:$0xff]
  %v6027 = vld [vmem:[#allocation2 + $0x78] sm:$0xff]
  %v6028 = vld [vmem:[#allocation2 + $0x80] sm:$0xff]
  %v6029 = vld [vmem:[#allocation2 + $0x88] sm:$0xff]
  %v6030 = vld [vmem:[#allocation2 + $0x90] sm:$0xff]
  %v6031 = vld [vmem:[#allocation2 + $0x98] sm:$0xff]
  %v6032 = vld [vmem:[#allocation2 + $0xa0] sm:$0xff]
  %v6033 = vld [vmem:[#allocation2 + $0xa8] sm:$0xff]
  %v6034 = vld [vmem:[#allocation2 + $0xb0] sm:$0xff]
  %v6035 = vld [vmem:[#allocation2 + $0xb8] sm:$0xff]
  %v6036 = vld [vmem:[#allocation2 + $0xc0] sm:$0xff]
  %v6037 = vld [vmem:[#allocation2 + $0xc8] sm:$0xff]
  %v6038 = vld [vmem:[#allocation2 + $0xd0] sm:$0xff]
  %v6039 = vld [vmem:[#allocation2 + $0xd8] sm:$0xff]
  %v6040 = vld [vmem:[#allocation2 + $0xe0] sm:$0xff]
  %v6041 = vld [vmem:[#allocation2 + $0xe8] sm:$0xff]
  %v6042 = vld [vmem:[#allocation2 + $0xf0] sm:$0xff]
  %v6043 = vld [vmem:[#allocation2 + $0xf8] sm:$0xff]
  %v6044 = vld [vmem:[#allocation2 + $0x100] sm:$0xff]
  %v6045 = vld [vmem:[#allocation2 + $0x108] sm:$0xff]
  %v6046 = vld [vmem:[#allocation2 + $0x110] sm:$0xff]
  %v6047 = vld [vmem:[#allocation2 + $0x118] sm:$0xff]
  %v6048 = vld [vmem:[#allocation2 + $0x120] sm:$0xff]
  %v6049 = vld [vmem:[#allocation2 + $0x128] sm:$0xff]
  %v6050 = vld [vmem:[#allocation2 + $0x130] sm:$0xff]
  %v6051 = vld [vmem:[#allocation2 + $0x138] sm:$0xff]
  %v6052 = vld [vmem:[#allocation2 + $0x140] sm:$0xff]
  %v6053 = vld [vmem:[#allocation2 + $0x148] sm:$0xff]
  %v6054 = vld [vmem:[#allocation2 + $0x150] sm:$0xff]
  %v6055 = vld [vmem:[#allocation2 + $0x158] sm:$0xff]
  %v6056 = vld [vmem:[#allocation2 + $0x160] sm:$0xff]
  %v6057 = vld [vmem:[#allocation2 + $0x168] sm:$0xff]
  %v6058 = vld [vmem:[#allocation2 + $0x170] sm:$0xff]
  %v6059 = vld [vmem:[#allocation2 + $0x178] sm:$0xff]
  %v6060 = vld [vmem:[#allocation2 + $0x180] sm:$0xff]
  %v6061 = vld [vmem:[#allocation2 + $0x188] sm:$0xff]
  %v6062 = vld [vmem:[#allocation2 + $0x190] sm:$0xff]
  %v6063 = vld [vmem:[#allocation2 + $0x198] sm:$0xff]
  %v6064 = vld [vmem:[#allocation2 + $0x1a0] sm:$0xff]
  %v6065 = vld [vmem:[#allocation2 + $0x1a8] sm:$0xff]
  %v6066 = vld [vmem:[#allocation2 + $0x1b0] sm:$0xff]
  %v6067 = vld [vmem:[#allocation2 + $0x1b8] sm:$0xff]
  %v6068 = vld [vmem:[#allocation2 + $0x1c0] sm:$0xff]
  %v6069 = vld [vmem:[#allocation2 + $0x1c8] sm:$0xff]
  %v6070 = vld [vmem:[#allocation2 + $0x1d0] sm:$0xff]
  %v6071 = vld [vmem:[#allocation2 + $0x1d8] sm:$0xff]
  %v6072 = vld [vmem:[#allocation2 + $0x1e0] sm:$0xff]
  %v6073 = vld [vmem:[#allocation2 + $0x1e8] sm:$0xff]
  %v6074 = vld [vmem:[#allocation2 + $0x1f0] sm:$0xff]
  %v6075 = vld [vmem:[#allocation2 + $0x1f8] sm:$0xff]
  %v6076 = vld [vmem:[#allocation2 + $0x200] sm:$0xff]
  %v6077 = vld [vmem:[#allocation2 + $0x208] sm:$0xff]
  %v6078 = vld [vmem:[#allocation2 + $0x210] sm:$0xff]
  %v6079 = vld [vmem:[#allocation2 + $0x218] sm:$0xff]
  %v6080 = vld [vmem:[#allocation2 + $0x220] sm:$0xff]
  %v6081 = vld [vmem:[#allocation2 + $0x228] sm:$0xff]
  %v6082 = vld [vmem:[#allocation2 + $0x230] sm:$0xff]
  %v6083 = vld [vmem:[#allocation2 + $0x238] sm:$0xff]
  %v6084 = vld [vmem:[#allocation2 + $0x240] sm:$0xff]
  %v6085 = vld [vmem:[#allocation2 + $0x248] sm:$0xff]
  %v6086 = vld [vmem:[#allocation2 + $0x250] sm:$0xff]
  %v6087 = vld [vmem:[#allocation2 + $0x258] sm:$0xff]
  %v6088 = vld [vmem:[#allocation2 + $0x260] sm:$0xff]
  %v6089 = vld [vmem:[#allocation2 + $0x268] sm:$0xff]
  %v6090 = vld [vmem:[#allocation2 + $0x270] sm:$0xff]
  %v6091 = vld [vmem:[#allocation2 + $0x278] sm:$0xff]
  %v6092 = vld [vmem:[#allocation2 + $0x280] sm:$0xff]
  %v6093 = vld [vmem:[#allocation2 + $0x288] sm:$0xff]
  %v6094 = vld [vmem:[#allocation2 + $0x290] sm:$0xff]
  %v6095 = vld [vmem:[#allocation2 + $0x298] sm:$0xff]
  %v6096 = vld [vmem:[#allocation2 + $0x2a0] sm:$0xff]
  %v6097 = vld [vmem:[#allocation2 + $0x2a8] sm:$0xff]
  %v6098 = vld [vmem:[#allocation2 + $0x2b0] sm:$0xff]
  %v6099 = vld [vmem:[#allocation2 + $0x2b8] sm:$0xff]
  %v6100 = vld [vmem:[#allocation2 + $0x2c0] sm:$0xff]
  %v6101 = vld [vmem:[#allocation2 + $0x2c8] sm:$0xff]
  %v6102 = vld [vmem:[#allocation2 + $0x2d0] sm:$0xff]
  %v6103 = vld [vmem:[#allocation2 + $0x2d8] sm:$0xff]
  %v6104 = vld [vmem:[#allocation2 + $0x2e0] sm:$0xff]
  %v6105 = vld [vmem:[#allocation2 + $0x2e8] sm:$0xff]
  %v6106 = vld [vmem:[#allocation2 + $0x2f0] sm:$0xff]
  %v6107 = vld [vmem:[#allocation2 + $0x2f8] sm:$0xff]
  %v6108 = vld [vmem:[#allocation2 + $0x300] sm:$0xff]
  %v6109 = vld [vmem:[#allocation2 + $0x308] sm:$0xff]
  %v6110 = vld [vmem:[#allocation2 + $0x310] sm:$0xff]
  %v6111 = vld [vmem:[#allocation2 + $0x318] sm:$0xff]
  %v6112 = vld [vmem:[#allocation2 + $0x320] sm:$0xff]
  %v6113 = vld [vmem:[#allocation2 + $0x328] sm:$0xff]
  %v6114 = vld [vmem:[#allocation2 + $0x330] sm:$0xff]
  %v6115 = vld [vmem:[#allocation2 + $0x338] sm:$0xff]
  %v6116 = vld [vmem:[#allocation2 + $0x340] sm:$0xff]
  %v6117 = vld [vmem:[#allocation2 + $0x348] sm:$0xff]
  %v6118 = vld [vmem:[#allocation2 + $0x350] sm:$0xff]
  %v6119 = vld [vmem:[#allocation2 + $0x358] sm:$0xff]
  %v6120 = vld [vmem:[#allocation2 + $0x360] sm:$0xff]
  %v6121 = vld [vmem:[#allocation2 + $0x368] sm:$0xff]
  %v6122 = vld [vmem:[#allocation2 + $0x370] sm:$0xff]
  %v6123 = vld [vmem:[#allocation2 + $0x378] sm:$0xff]
  %v6124 = vld [vmem:[#allocation2 + $0x380] sm:$0xff]
  %v6125 = vld [vmem:[#allocation2 + $0x388] sm:$0xff]
  %v6126 = vld [vmem:[#allocation2 + $0x390] sm:$0xff]
  %v6127 = vld [vmem:[#allocation2 + $0x398] sm:$0xff]
  %v6128 = vld [vmem:[#allocation2 + $0x3a0] sm:$0xff]
  %v6129 = vld [vmem:[#allocation2 + $0x3a8] sm:$0xff]
  %v6130 = vld [vmem:[#allocation2 + $0x3b0] sm:$0xff]
  %v6131 = vld [vmem:[#allocation2 + $0x3b8] sm:$0xff]
  %v6132 = vld [vmem:[#allocation2 + $0x3c0] sm:$0xff]
  %v6133 = vld [vmem:[#allocation2 + $0x3c8] sm:$0xff]
  %v6134 = vld [vmem:[#allocation2 + $0x3d0] sm:$0xff]
  %v6135 = vld [vmem:[#allocation2 + $0x3d8] sm:$0xff]
  %v6136 = vld [vmem:[#allocation2 + $0x3e0] sm:$0xff]
  %v6137 = vld [vmem:[#allocation2 + $0x3e8] sm:$0xff]
  %v6138 = vld [vmem:[#allocation2 + $0x3f0] sm:$0xff]
  %v6139 = vld [vmem:[#allocation2 + $0x3f8] sm:$0xff]
  %v6140 = vld [vmem:[#allocation2 + $0x400] sm:$0xff]
  %v6141 = vld [vmem:[#allocation2 + $0x408] sm:$0xff]
  %v6142 = vld [vmem:[#allocation2 + $0x410] sm:$0xff]
  %v6143 = vld [vmem:[#allocation2 + $0x418] sm:$0xff]
  %v6144 = vld [vmem:[#allocation2 + $0x420] sm:$0xff]
  %v6145 = vld [vmem:[#allocation2 + $0x428] sm:$0xff]
  %v6146 = vld [vmem:[#allocation2 + $0x430] sm:$0xff]
  %v6147 = vld [vmem:[#allocation2 + $0x438] sm:$0xff]
  %v6148 = vld [vmem:[#allocation2 + $0x440] sm:$0xff]
  %v6149 = vld [vmem:[#allocation2 + $0x448] sm:$0xff]
  %v6150 = vld [vmem:[#allocation2 + $0x450] sm:$0xff]
  %v6151 = vld [vmem:[#allocation2 + $0x458] sm:$0xff]
  %v6152 = vld [vmem:[#allocation2 + $0x460] sm:$0xff]
  %v6153 = vld [vmem:[#allocation2 + $0x468] sm:$0xff]
  %v6154 = vld [vmem:[#allocation2 + $0x470] sm:$0xff]
  %v6155 = vld [vmem:[#allocation2 + $0x478] sm:$0xff]
  %v6156 = vld [vmem:[#allocation2 + $0x480] sm:$0xff]
  %v6157 = vld [vmem:[#allocation2 + $0x488] sm:$0xff]
  %v6158 = vld [vmem:[#allocation2 + $0x490] sm:$0xff]
  %v6159 = vld [vmem:[#allocation2 + $0x498] sm:$0xff]
  %v6160 = vld [vmem:[#allocation2 + $0x4a0] sm:$0xff]
  %v6161 = vld [vmem:[#allocation2 + $0x4a8] sm:$0xff]
  %v6162 = vld [vmem:[#allocation2 + $0x4b0] sm:$0xff]
  %v6163 = vld [vmem:[#allocation2 + $0x4b8] sm:$0xff]
  %v6164 = vld [vmem:[#allocation2 + $0x4c0] sm:$0xff]
  %v6165 = vld [vmem:[#allocation2 + $0x4c8] sm:$0xff]
  %v6166 = vld [vmem:[#allocation2 + $0x4d0] sm:$0xff]
  %v6167 = vld [vmem:[#allocation2 + $0x4d8] sm:$0xff]
  %v6168 = vld [vmem:[#allocation2 + $0x4e0] sm:$0xff]
  %v6169 = vld [vmem:[#allocation2 + $0x4e8] sm:$0xff]
  %v6170 = vld [vmem:[#allocation2 + $0x4f0] sm:$0xff]
  %v6171 = vld [vmem:[#allocation2 + $0x4f8] sm:$0xff]
  %v6172 = vld [vmem:[#allocation2 + $0x500] sm:$0xff]
  %v6173 = vld [vmem:[#allocation2 + $0x508] sm:$0xff]
  %v6174 = vld [vmem:[#allocation2 + $0x510] sm:$0xff]
  %v6175 = vld [vmem:[#allocation2 + $0x518] sm:$0xff]
  %v6176 = vld [vmem:[#allocation2 + $0x520] sm:$0xff]
  %v6177 = vld [vmem:[#allocation2 + $0x528] sm:$0xff]
  %v6178 = vld [vmem:[#allocation2 + $0x530] sm:$0xff]
  %v6179 = vld [vmem:[#allocation2 + $0x538] sm:$0xff]
  %v6180 = vld [vmem:[#allocation2 + $0x540] sm:$0xff]
  %v6181 = vld [vmem:[#allocation2 + $0x548] sm:$0xff]
  %v6182 = vld [vmem:[#allocation2 + $0x550] sm:$0xff]
  %v6183 = vld [vmem:[#allocation2 + $0x558] sm:$0xff]
  %v6184 = vld [vmem:[#allocation2 + $0x560] sm:$0xff]
  %v6185 = vld [vmem:[#allocation2 + $0x568] sm:$0xff]
  %v6186 = vld [vmem:[#allocation2 + $0x570] sm:$0xff]
  %v6187 = vld [vmem:[#allocation2 + $0x578] sm:$0xff]
  %v6188 = vld [vmem:[#allocation2 + $0x580] sm:$0xff]
  %v6189 = vld [vmem:[#allocation2 + $0x588] sm:$0xff]
  %v6190 = vld [vmem:[#allocation2 + $0x590] sm:$0xff]
  %v6191 = vld [vmem:[#allocation2 + $0x598] sm:$0xff]
  %v6192 = vld [vmem:[#allocation2 + $0x5a0] sm:$0xff]
  %v6193 = vld [vmem:[#allocation2 + $0x5a8] sm:$0xff]
  %v6194 = vld [vmem:[#allocation2 + $0x5b0] sm:$0xff]
  %v6195 = vld [vmem:[#allocation2 + $0x5b8] sm:$0xff]
  %v6196 = vld [vmem:[#allocation2 + $0x5c0] sm:$0xff]
  %v6197 = vld [vmem:[#allocation2 + $0x5c8] sm:$0xff]
  %v6198 = vld [vmem:[#allocation2 + $0x5d0] sm:$0xff]
  %v6199 = vld [vmem:[#allocation2 + $0x5d8] sm:$0xff]
  %v6200 = vld [vmem:[#allocation2 + $0x5e0] sm:$0xff]
  %v6201 = vld [vmem:[#allocation2 + $0x5e8] sm:$0xff]
  %v6202 = vld [vmem:[#allocation2 + $0x5f0] sm:$0xff]
  %v6203 = vld [vmem:[#allocation2 + $0x5f8] sm:$0xff]
  %v6204 = vld [vmem:[#allocation2 + $0x600] sm:$0xff]
  %v6205 = vld [vmem:[#allocation2 + $0x608] sm:$0xff]
  %v6206 = vld [vmem:[#allocation2 + $0x610] sm:$0xff]
  %v6207 = vld [vmem:[#allocation2 + $0x618] sm:$0xff]
  %v6208 = vld [vmem:[#allocation2 + $0x620] sm:$0xff]
  %v6209 = vld [vmem:[#allocation2 + $0x628] sm:$0xff]
  %v6210 = vld [vmem:[#allocation2 + $0x630] sm:$0xff]
  %v6211 = vld [vmem:[#allocation2 + $0x638] sm:$0xff]
  %v6212 = vld [vmem:[#allocation2 + $0x640] sm:$0xff]
  %v6213 = vld [vmem:[#allocation2 + $0x648] sm:$0xff]
  %v6214 = vld [vmem:[#allocation2 + $0x650] sm:$0xff]
  %v6215 = vld [vmem:[#allocation2 + $0x658] sm:$0xff]
  %v6216 = vld [vmem:[#allocation2 + $0x660] sm:$0xff]
  %v6217 = vld [vmem:[#allocation2 + $0x668] sm:$0xff]
  %v6218 = vld [vmem:[#allocation2 + $0x670] sm:$0xff]
  %v6219 = vld [vmem:[#allocation2 + $0x678] sm:$0xff]
  %v6220 = vld [vmem:[#allocation2 + $0x680] sm:$0xff]
  %v6221 = vld [vmem:[#allocation2 + $0x688] sm:$0xff]
  %v6222 = vld [vmem:[#allocation2 + $0x690] sm:$0xff]
  %v6223 = vld [vmem:[#allocation2 + $0x698] sm:$0xff]
  %v6224 = vld [vmem:[#allocation2 + $0x6a0] sm:$0xff]
  %v6225 = vld [vmem:[#allocation2 + $0x6a8] sm:$0xff]
  %v6226 = vld [vmem:[#allocation2 + $0x6b0] sm:$0xff]
  %v6227 = vld [vmem:[#allocation2 + $0x6b8] sm:$0xff]
  %v6228 = vld [vmem:[#allocation2 + $0x6c0] sm:$0xff]
  %v6229 = vld [vmem:[#allocation2 + $0x6c8] sm:$0xff]
  %v6230 = vld [vmem:[#allocation2 + $0x6d0] sm:$0xff]
  %v6231 = vld [vmem:[#allocation2 + $0x6d8] sm:$0xff]
  %v6232 = vld [vmem:[#allocation2 + $0x6e0] sm:$0xff]
  %v6233 = vld [vmem:[#allocation2 + $0x6e8] sm:$0xff]
  %v6234 = vld [vmem:[#allocation2 + $0x6f0] sm:$0xff]
  %v6235 = vld [vmem:[#allocation2 + $0x6f8] sm:$0xff]
  %v6236 = vld [vmem:[#allocation2 + $0x700] sm:$0xff]
  %v6237 = vld [vmem:[#allocation2 + $0x708] sm:$0xff]
  %v6238 = vld [vmem:[#allocation2 + $0x710] sm:$0xff]
  %v6239 = vld [vmem:[#allocation2 + $0x718] sm:$0xff]
  %v6240 = vld [vmem:[#allocation2 + $0x720] sm:$0xff]
  %v6241 = vld [vmem:[#allocation2 + $0x728] sm:$0xff]
  %v6242 = vld [vmem:[#allocation2 + $0x730] sm:$0xff]
  %v6243 = vld [vmem:[#allocation2 + $0x738] sm:$0xff]
  %v6244 = vld [vmem:[#allocation2 + $0x740] sm:$0xff]
  %v6245 = vld [vmem:[#allocation2 + $0x748] sm:$0xff]
  %v6246 = vld [vmem:[#allocation2 + $0x750] sm:$0xff]
  %v6247 = vld [vmem:[#allocation2 + $0x758] sm:$0xff]
  %v6248 = vld [vmem:[#allocation2 + $0x760] sm:$0xff]
  %v6249 = vld [vmem:[#allocation2 + $0x768] sm:$0xff]
  %v6250 = vld [vmem:[#allocation2 + $0x770] sm:$0xff]
  %v6251 = vld [vmem:[#allocation2 + $0x778] sm:$0xff]
  %v6252 = vld [vmem:[#allocation2 + $0x780] sm:$0xff]
  %v6253 = vld [vmem:[#allocation2 + $0x788] sm:$0xff]
  %v6254 = vld [vmem:[#allocation2 + $0x790] sm:$0xff]
  %v6255 = vld [vmem:[#allocation2 + $0x798] sm:$0xff]
  %v6256 = vld [vmem:[#allocation2 + $0x7a0] sm:$0xff]
  %v6257 = vld [vmem:[#allocation2 + $0x7a8] sm:$0xff]
  %v6258 = vld [vmem:[#allocation2 + $0x7b0] sm:$0xff]
  %v6259 = vld [vmem:[#allocation2 + $0x7b8] sm:$0xff]
  %v6260 = vld [vmem:[#allocation2 + $0x7c0] sm:$0xff]
  %v6261 = vld [vmem:[#allocation2 + $0x7c8] sm:$0xff]
  %v6262 = vld [vmem:[#allocation2 + $0x7d0] sm:$0xff]
  %v6263 = vld [vmem:[#allocation2 + $0x7d8] sm:$0xff]
  %v6264 = vld [vmem:[#allocation2 + $0x7e0] sm:$0xff]
  %v6265 = vld [vmem:[#allocation2 + $0x7e8] sm:$0xff]
  %v6266 = vld [vmem:[#allocation2 + $0x7f0] sm:$0xff]
  %v6267 = vld [vmem:[#allocation2 + $0x7f8] sm:$0xff]
  %v6268 = vld [vmem:[#allocation2 + $0x800] sm:$0xff]
  %v6269 = vld [vmem:[#allocation2 + $0x808] sm:$0xff]
  %v6270 = vld [vmem:[#allocation2 + $0x810] sm:$0xff]
  %v6271 = vld [vmem:[#allocation2 + $0x818] sm:$0xff]
  %v6272 = vld [vmem:[#allocation2 + $0x820] sm:$0xff]
  %v6273 = vld [vmem:[#allocation2 + $0x828] sm:$0xff]
  %v6274 = vld [vmem:[#allocation2 + $0x830] sm:$0xff]
  %v6275 = vld [vmem:[#allocation2 + $0x838] sm:$0xff]
  %v6276 = vld [vmem:[#allocation2 + $0x840] sm:$0xff]
  %v6277 = vld [vmem:[#allocation2 + $0x848] sm:$0xff]
  %v6278 = vld [vmem:[#allocation2 + $0x850] sm:$0xff]
  %v6279 = vld [vmem:[#allocation2 + $0x858] sm:$0xff]
  %v6280 = vld [vmem:[#allocation2 + $0x860] sm:$0xff]
  %v6281 = vld [vmem:[#allocation2 + $0x868] sm:$0xff]
  %v6282 = vld [vmem:[#allocation2 + $0x870] sm:$0xff]
  %v6283 = vld [vmem:[#allocation2 + $0x878] sm:$0xff]
  %v6284 = vld [vmem:[#allocation2 + $0x880] sm:$0xff]
  %v6285 = vld [vmem:[#allocation2 + $0x888] sm:$0xff]
  %v6286 = vld [vmem:[#allocation2 + $0x890] sm:$0xff]
  %v6287 = vld [vmem:[#allocation2 + $0x898] sm:$0xff]
  %v6288 = vld [vmem:[#allocation2 + $0x8a0] sm:$0xff]
  %v6289 = vld [vmem:[#allocation2 + $0x8a8] sm:$0xff]
  %v6290 = vld [vmem:[#allocation2 + $0x8b0] sm:$0xff]
  %v6291 = vld [vmem:[#allocation2 + $0x8b8] sm:$0xff]
  %v6292 = vld [vmem:[#allocation2 + $0x8c0] sm:$0xff]
  %v6293 = vld [vmem:[#allocation2 + $0x8c8] sm:$0xff]
  %v6294 = vld [vmem:[#allocation2 + $0x8d0] sm:$0xff]
  %v6295 = vld [vmem:[#allocation2 + $0x8d8] sm:$0xff]
  %v6296 = vld [vmem:[#allocation2 + $0x8e0] sm:$0xff]
  %v6297 = vld [vmem:[#allocation2 + $0x8e8] sm:$0xff]
  %v6298 = vld [vmem:[#allocation2 + $0x8f0] sm:$0xff]
  %v6299 = vld [vmem:[#allocation2 + $0x8f8] sm:$0xff]
  %v6300 = vld [vmem:[#allocation2 + $0x900] sm:$0xff]
  %v6301 = vld [vmem:[#allocation2 + $0x908] sm:$0xff]
  %v6302 = vld [vmem:[#allocation2 + $0x910] sm:$0xff]
  %v6303 = vld [vmem:[#allocation2 + $0x918] sm:$0xff]
  %v6304 = vld [vmem:[#allocation2 + $0x920] sm:$0xff]
  %v6305 = vld [vmem:[#allocation2 + $0x928] sm:$0xff]
  %v6306 = vld [vmem:[#allocation2 + $0x930] sm:$0xff]
  %v6307 = vld [vmem:[#allocation2 + $0x938] sm:$0xff]
  %v6308 = vld [vmem:[#allocation2 + $0x940] sm:$0xff]
  %v6309 = vld [vmem:[#allocation2 + $0x948] sm:$0xff]
  %v6310 = vld [vmem:[#allocation2 + $0x950] sm:$0xff]
  %v6311 = vld [vmem:[#allocation2 + $0x958] sm:$0xff]
  %v6312 = vld [vmem:[#allocation2 + $0x960] sm:$0xff]
  %v6313 = vld [vmem:[#allocation2 + $0x968] sm:$0xff]
  %v6314 = vld [vmem:[#allocation2 + $0x970] sm:$0xff]
  %v6315 = vld [vmem:[#allocation2 + $0x978] sm:$0xff]
  %v6316 = vld [vmem:[#allocation2 + $0x980] sm:$0xff]
  %v6317 = vld [vmem:[#allocation2 + $0x988] sm:$0xff]
  %v6318 = vld [vmem:[#allocation2 + $0x990] sm:$0xff]
  %v6319 = vld [vmem:[#allocation2 + $0x998] sm:$0xff]
  %v6320 = vld [vmem:[#allocation2 + $0x9a0] sm:$0xff]
  %v6321 = vld [vmem:[#allocation2 + $0x9a8] sm:$0xff]
  %v6322 = vld [vmem:[#allocation2 + $0x9b0] sm:$0xff]
  %v6323 = vld [vmem:[#allocation2 + $0x9b8] sm:$0xff]
  %v6324 = vld [vmem:[#allocation2 + $0x9c0] sm:$0xff]
  %v6325 = vld [vmem:[#allocation2 + $0x9c8] sm:$0xff]
  %v6326 = vld [vmem:[#allocation2 + $0x9d0] sm:$0xff]
  %v6327 = vld [vmem:[#allocation2 + $0x9d8] sm:$0xff]
  %v6328 = vld [vmem:[#allocation2 + $0x9e0] sm:$0xff]
  %v6329 = vld [vmem:[#allocation2 + $0x9e8] sm:$0xff]
  %v6330 = vld [vmem:[#allocation2 + $0x9f0] sm:$0xff]
  %v6331 = vld [vmem:[#allocation2 + $0x9f8] sm:$0xff]
  %v6332 = vld [vmem:[#allocation2 + $0xa00] sm:$0xff]
  %v6333 = vld [vmem:[#allocation2 + $0xa08] sm:$0xff]
  %v6334 = vld [vmem:[#allocation2 + $0xa10] sm:$0xff]
  %v6335 = vld [vmem:[#allocation2 + $0xa18] sm:$0xff]
  %v6336 = vld [vmem:[#allocation2 + $0xa20] sm:$0xff]
  %v6337 = vld [vmem:[#allocation2 + $0xa28] sm:$0xff]
  %v6338 = vld [vmem:[#allocation2 + $0xa30] sm:$0xff]
  %v6339 = vld [vmem:[#allocation2 + $0xa38] sm:$0xff]
  %v6340 = vld [vmem:[#allocation2 + $0xa40] sm:$0xff]
  %v6341 = vld [vmem:[#allocation2 + $0xa48] sm:$0xff]
  %v6342 = vld [vmem:[#allocation2 + $0xa50] sm:$0xff]
  %v6343 = vld [vmem:[#allocation2 + $0xa58] sm:$0xff]
  %v6344 = vld [vmem:[#allocation2 + $0xa60] sm:$0xff]
  %v6345 = vld [vmem:[#allocation2 + $0xa68] sm:$0xff]
  %v6346 = vld [vmem:[#allocation2 + $0xa70] sm:$0xff]
  %v6347 = vld [vmem:[#allocation2 + $0xa78] sm:$0xff]
  %v6348 = vld [vmem:[#allocation2 + $0xa80] sm:$0xff]
  %v6349 = vld [vmem:[#allocation2 + $0xa88] sm:$0xff]
  %v6350 = vld [vmem:[#allocation2 + $0xa90] sm:$0xff]
  %v6351 = vld [vmem:[#allocation2 + $0xa98] sm:$0xff]
  %v6352 = vld [vmem:[#allocation2 + $0xaa0] sm:$0xff]
  %v6353 = vld [vmem:[#allocation2 + $0xaa8] sm:$0xff]
  %v6354 = vld [vmem:[#allocation2 + $0xab0] sm:$0xff]
  %v6355 = vld [vmem:[#allocation2 + $0xab8] sm:$0xff]
  %v6356 = vld [vmem:[#allocation2 + $0xac0] sm:$0xff]
  %v6357 = vld [vmem:[#allocation2 + $0xac8] sm:$0xff]
  %v6358 = vld [vmem:[#allocation2 + $0xad0] sm:$0xff]
  %v6359 = vld [vmem:[#allocation2 + $0xad8] sm:$0xff]
  %v6360 = vld [vmem:[#allocation2 + $0xae0] sm:$0xff]
  %v6361 = vld [vmem:[#allocation2 + $0xae8] sm:$0xff]
  %v6362 = vld [vmem:[#allocation2 + $0xaf0] sm:$0xff]
  %v6363 = vld [vmem:[#allocation2 + $0xaf8] sm:$0xff]
  %v6364 = vld [vmem:[#allocation2 + $0xb00] sm:$0xff]
  %v6365 = vld [vmem:[#allocation2 + $0xb08] sm:$0xff]
  %v6366 = vld [vmem:[#allocation2 + $0xb10] sm:$0xff]
  %v6367 = vld [vmem:[#allocation2 + $0xb18] sm:$0xff]
  %v6368 = vld [vmem:[#allocation2 + $0xb20] sm:$0xff]
  %v6369 = vld [vmem:[#allocation2 + $0xb28] sm:$0xff]
  %v6370 = vld [vmem:[#allocation2 + $0xb30] sm:$0xff]
  %v6371 = vld [vmem:[#allocation2 + $0xb38] sm:$0xff]
  %v6372 = vld [vmem:[#allocation2 + $0xb40] sm:$0xff]
  %v6373 = vld [vmem:[#allocation2 + $0xb48] sm:$0xff]
  %v6374 = vld [vmem:[#allocation2 + $0xb50] sm:$0xff]
  %v6375 = vld [vmem:[#allocation2 + $0xb58] sm:$0xff]
  %v6376 = vld [vmem:[#allocation2 + $0xb60] sm:$0xff]
  %v6377 = vld [vmem:[#allocation2 + $0xb68] sm:$0xff]
  %v6378 = vld [vmem:[#allocation2 + $0xb70] sm:$0xff]
  %v6379 = vld [vmem:[#allocation2 + $0xb78] sm:$0xff]
  %v6380 = vld [vmem:[#allocation2 + $0xb80] sm:$0xff]
  %v6381 = vld [vmem:[#allocation2 + $0xb88] sm:$0xff]
  %v6382 = vld [vmem:[#allocation2 + $0xb90] sm:$0xff]
  %v6383 = vld [vmem:[#allocation2 + $0xb98] sm:$0xff]
  %v6384 = vld [vmem:[#allocation2 + $0xba0] sm:$0xff]
  %v6385 = vld [vmem:[#allocation2 + $0xba8] sm:$0xff]
  %v6386 = vld [vmem:[#allocation2 + $0xbb0] sm:$0xff]
  %v6387 = vld [vmem:[#allocation2 + $0xbb8] sm:$0xff]
  %v6388 = vld [vmem:[#allocation2 + $0xbc0] sm:$0xff]
  %v6389 = vld [vmem:[#allocation2 + $0xbc8] sm:$0xff]
  %v6390 = vld [vmem:[#allocation2 + $0xbd0] sm:$0xff]
  %v6391 = vld [vmem:[#allocation2 + $0xbd8] sm:$0xff]
  %v6392 = vld [vmem:[#allocation2 + $0xbe0] sm:$0xff]
  %v6393 = vld [vmem:[#allocation2 + $0xbe8] sm:$0xff]
  %v6394 = vld [vmem:[#allocation2 + $0xbf0] sm:$0xff]
  %v6395 = vld [vmem:[#allocation2 + $0xbf8] sm:$0xff]
  %v6396 = vld [vmem:[#allocation2 + $0xc00] sm:$0xff]
  %v6397 = vld [vmem:[#allocation2 + $0xc08] sm:$0xff]
  %v6398 = vld [vmem:[#allocation2 + $0xc10] sm:$0xff]
  %v6399 = vld [vmem:[#allocation2 + $0xc18] sm:$0xff]
  %v6400 = vld [vmem:[#allocation2 + $0xc20] sm:$0xff]
  %v6401 = vld [vmem:[#allocation2 + $0xc28] sm:$0xff]
  %v6402 = vld [vmem:[#allocation2 + $0xc30] sm:$0xff]
  %v6403 = vld [vmem:[#allocation2 + $0xc38] sm:$0xff]
  %v6404 = vld [vmem:[#allocation2 + $0xc40] sm:$0xff]
  %v6405 = vld [vmem:[#allocation2 + $0xc48] sm:$0xff]
  %v6406 = vld [vmem:[#allocation2 + $0xc50] sm:$0xff]
  %v6407 = vld [vmem:[#allocation2 + $0xc58] sm:$0xff]
  %v6408 = vld [vmem:[#allocation2 + $0xc60] sm:$0xff]
  %v6409 = vld [vmem:[#allocation2 + $0xc68] sm:$0xff]
  %v6410 = vld [vmem:[#allocation2 + $0xc70] sm:$0xff]
  %v6411 = vld [vmem:[#allocation2 + $0xc78] sm:$0xff]
  %v6412 = vld [vmem:[#allocation2 + $0xc80] sm:$0xff]
  %v6413 = vld [vmem:[#allocation2 + $0xc88] sm:$0xff]
  %v6414 = vld [vmem:[#allocation2 + $0xc90] sm:$0xff]
  %v6415 = vld [vmem:[#allocation2 + $0xc98] sm:$0xff]
  %v6416 = vld [vmem:[#allocation2 + $0xca0] sm:$0xff]
  %v6417 = vld [vmem:[#allocation2 + $0xca8] sm:$0xff]
  %v6418 = vld [vmem:[#allocation2 + $0xcb0] sm:$0xff]
  %v6419 = vld [vmem:[#allocation2 + $0xcb8] sm:$0xff]
  %v6420 = vld [vmem:[#allocation2 + $0xcc0] sm:$0xff]
  %v6421 = vld [vmem:[#allocation2 + $0xcc8] sm:$0xff]
  %v6422 = vld [vmem:[#allocation2 + $0xcd0] sm:$0xff]
  %v6423 = vld [vmem:[#allocation2 + $0xcd8] sm:$0xff]
  %v6424 = vld [vmem:[#allocation2 + $0xce0] sm:$0xff]
  %v6425 = vld [vmem:[#allocation2 + $0xce8] sm:$0xff]
  %v6426 = vld [vmem:[#allocation2 + $0xcf0] sm:$0xff]
  %v6427 = vld [vmem:[#allocation2 + $0xcf8] sm:$0xff]
  %v6428 = vld [vmem:[#allocation2 + $0xd00] sm:$0xff]
  %v6429 = vld [vmem:[#allocation2 + $0xd08] sm:$0xff]
  %v6430 = vld [vmem:[#allocation2 + $0xd10] sm:$0xff]
  %v6431 = vld [vmem:[#allocation2 + $0xd18] sm:$0xff]
  %v6432 = vld [vmem:[#allocation2 + $0xd20] sm:$0xff]
  %v6433 = vld [vmem:[#allocation2 + $0xd28] sm:$0xff]
  %v6434 = vld [vmem:[#allocation2 + $0xd30] sm:$0xff]
  %v6435 = vld [vmem:[#allocation2 + $0xd38] sm:$0xff]
  %v6436 = vld [vmem:[#allocation2 + $0xd40] sm:$0xff]
  %v6437 = vld [vmem:[#allocation2 + $0xd48] sm:$0xff]
  %v6438 = vld [vmem:[#allocation2 + $0xd50] sm:$0xff]
  %v6439 = vld [vmem:[#allocation2 + $0xd58] sm:$0xff]
  %v6440 = vld [vmem:[#allocation2 + $0xd60] sm:$0xff]
  %v6441 = vld [vmem:[#allocation2 + $0xd68] sm:$0xff]
  %v6442 = vld [vmem:[#allocation2 + $0xd70] sm:$0xff]
  %v6443 = vld [vmem:[#allocation2 + $0xd78] sm:$0xff]
  %v6444 = vld [vmem:[#allocation2 + $0xd80] sm:$0xff]
  %v6445 = vld [vmem:[#allocation2 + $0xd88] sm:$0xff]
  %v6446 = vld [vmem:[#allocation2 + $0xd90] sm:$0xff]
  %v6447 = vld [vmem:[#allocation2 + $0xd98] sm:$0xff]
  %v6448 = vld [vmem:[#allocation2 + $0xda0] sm:$0xff]
  %v6449 = vld [vmem:[#allocation2 + $0xda8] sm:$0xff]
  %v6450 = vld [vmem:[#allocation2 + $0xdb0] sm:$0xff]
  %v6451 = vld [vmem:[#allocation2 + $0xdb8] sm:$0xff]
  %v6452 = vld [vmem:[#allocation2 + $0xdc0] sm:$0xff]
  %v6453 = vld [vmem:[#allocation2 + $0xdc8] sm:$0xff]
  %v6454 = vld [vmem:[#allocation2 + $0xdd0] sm:$0xff]
  %v6455 = vld [vmem:[#allocation2 + $0xdd8] sm:$0xff]
  %v6456 = vld [vmem:[#allocation2 + $0xde0] sm:$0xff]
  %v6457 = vld [vmem:[#allocation2 + $0xde8] sm:$0xff]
  %v6458 = vld [vmem:[#allocation2 + $0xdf0] sm:$0xff]
  %v6459 = vld [vmem:[#allocation2 + $0xdf8] sm:$0xff]
  %v6460 = vld [vmem:[#allocation2 + $0xe00] sm:$0xff]
  %v6461 = vld [vmem:[#allocation2 + $0xe08] sm:$0xff]
  %v6462 = vld [vmem:[#allocation2 + $0xe10] sm:$0xff]
  %v6463 = vld [vmem:[#allocation2 + $0xe18] sm:$0xff]
  %v6464 = vld [vmem:[#allocation2 + $0xe20] sm:$0xff]
  %v6465 = vld [vmem:[#allocation2 + $0xe28] sm:$0xff]
  %v6466 = vld [vmem:[#allocation2 + $0xe30] sm:$0xff]
  %v6467 = vld [vmem:[#allocation2 + $0xe38] sm:$0xff]
  %v6468 = vld [vmem:[#allocation2 + $0xe40] sm:$0xff]
  %v6469 = vld [vmem:[#allocation2 + $0xe48] sm:$0xff]
  %v6470 = vld [vmem:[#allocation2 + $0xe50] sm:$0xff]
  %v6471 = vld [vmem:[#allocation2 + $0xe58] sm:$0xff]
  %v6472 = vld [vmem:[#allocation2 + $0xe60] sm:$0xff]
  %v6473 = vld [vmem:[#allocation2 + $0xe68] sm:$0xff]
  %v6474 = vld [vmem:[#allocation2 + $0xe70] sm:$0xff]
  %v6475 = vld [vmem:[#allocation2 + $0xe78] sm:$0xff]
  %v6476 = vld [vmem:[#allocation2 + $0xe80] sm:$0xff]
  %v6477 = vld [vmem:[#allocation2 + $0xe88] sm:$0xff]
  %v6478 = vld [vmem:[#allocation2 + $0xe90] sm:$0xff]
  %v6479 = vld [vmem:[#allocation2 + $0xe98] sm:$0xff]
  %v6480 = vld [vmem:[#allocation2 + $0xea0] sm:$0xff]
  %v6481 = vld [vmem:[#allocation2 + $0xea8] sm:$0xff]
  %v6482 = vld [vmem:[#allocation2 + $0xeb0] sm:$0xff]
  %v6483 = vld [vmem:[#allocation2 + $0xeb8] sm:$0xff]
  %v6484 = vld [vmem:[#allocation2 + $0xec0] sm:$0xff]
  %v6485 = vld [vmem:[#allocation2 + $0xec8] sm:$0xff]
  %v6486 = vld [vmem:[#allocation2 + $0xed0] sm:$0xff]
  %v6487 = vld [vmem:[#allocation2 + $0xed8] sm:$0xff]
  %v6488 = vld [vmem:[#allocation2 + $0xee0] sm:$0xff]
  %v6489 = vld [vmem:[#allocation2 + $0xee8] sm:$0xff]
  %v6490 = vld [vmem:[#allocation2 + $0xef0] sm:$0xff]
  %v6491 = vld [vmem:[#allocation2 + $0xef8] sm:$0xff]
  %v6492 = vld [vmem:[#allocation2 + $0xf00] sm:$0xff]
  %v6493 = vld [vmem:[#allocation2 + $0xf08] sm:$0xff]
  %v6494 = vld [vmem:[#allocation2 + $0xf10] sm:$0xff]
  %v6495 = vld [vmem:[#allocation2 + $0xf18] sm:$0xff]
  %v6496 = vld [vmem:[#allocation2 + $0xf20] sm:$0xff]
  %v6497 = vld [vmem:[#allocation2 + $0xf28] sm:$0xff]
  %v6498 = vld [vmem:[#allocation2 + $0xf30] sm:$0xff]
  %v6499 = vld [vmem:[#allocation2 + $0xf38] sm:$0xff]
  %v6500 = vld [vmem:[#allocation2 + $0xf40] sm:$0xff]
  %v6501 = vld [vmem:[#allocation2 + $0xf48] sm:$0xff]
  %v6502 = vld [vmem:[#allocation2 + $0xf50] sm:$0xff]
  %v6503 = vld [vmem:[#allocation2 + $0xf58] sm:$0xff]
  %v6504 = vld [vmem:[#allocation2 + $0xf60] sm:$0xff]
  %v6505 = vld [vmem:[#allocation2 + $0xf68] sm:$0xff]
  %v6506 = vld [vmem:[#allocation2 + $0xf70] sm:$0xff]
  %v6507 = vld [vmem:[#allocation2 + $0xf78] sm:$0xff]
  %v6508 = vld [vmem:[#allocation2 + $0xf80] sm:$0xff]
  %v6509 = vld [vmem:[#allocation2 + $0xf88] sm:$0xff]
  %v6510 = vld [vmem:[#allocation2 + $0xf90] sm:$0xff]
  %v6511 = vld [vmem:[#allocation2 + $0xf98] sm:$0xff]
  %v6512 = vld [vmem:[#allocation2 + $0xfa0] sm:$0xff]
  %v6513 = vld [vmem:[#allocation2 + $0xfa8] sm:$0xff]
  %v6514 = vld [vmem:[#allocation2 + $0xfb0] sm:$0xff]
  %v6515 = vld [vmem:[#allocation2 + $0xfb8] sm:$0xff]
  %v6516 = vld [vmem:[#allocation2 + $0xfc0] sm:$0xff]
  %v6517 = vld [vmem:[#allocation2 + $0xfc8] sm:$0xff]
  %v6518 = vld [vmem:[#allocation2 + $0xfd0] sm:$0xff]
  %v6519 = vld [vmem:[#allocation2 + $0xfd8] sm:$0xff]
  %v6520 = vld [vmem:[#allocation2 + $0xfe0] sm:$0xff]
  %v6521 = vld [vmem:[#allocation2 + $0xfe8] sm:$0xff]
  %v6522 = vld [vmem:[#allocation2 + $0xff0] sm:$0xff]
  %v6523 = vld [vmem:[#allocation2 + $0xff8] sm:$0xff]
  %v6524 = vld [vmem:[#allocation2 + $0x1000] sm:$0xff]
  %v6525 = vld [vmem:[#allocation2 + $0x1008] sm:$0xff]
  %v6526 = vld [vmem:[#allocation2 + $0x1010] sm:$0xff]
  %v6527 = vld [vmem:[#allocation2 + $0x1018] sm:$0xff]
  %v6528 = vld [vmem:[#allocation2 + $0x1020] sm:$0xff]
  %v6529 = vld [vmem:[#allocation2 + $0x1028] sm:$0xff]
  %v6530 = vld [vmem:[#allocation2 + $0x1030] sm:$0xff]
  %v6531 = vld [vmem:[#allocation2 + $0x1038] sm:$0xff]
  %v6532 = vld [vmem:[#allocation2 + $0x1040] sm:$0xff]
  %v6533 = vld [vmem:[#allocation2 + $0x1048] sm:$0xff]
  %v6534 = vld [vmem:[#allocation2 + $0x1050] sm:$0xff]
  %v6535 = vld [vmem:[#allocation2 + $0x1058] sm:$0xff]
  %v6536 = vld [vmem:[#allocation2 + $0x1060] sm:$0xff]
  %v6537 = vld [vmem:[#allocation2 + $0x1068] sm:$0xff]
  %v6538 = vld [vmem:[#allocation2 + $0x1070] sm:$0xff]
  %v6539 = vld [vmem:[#allocation2 + $0x1078] sm:$0xff]
  %v6540 = vld [vmem:[#allocation2 + $0x1080] sm:$0xff]
  %v6541 = vld [vmem:[#allocation2 + $0x1088] sm:$0xff]
  %v6542 = vld [vmem:[#allocation2 + $0x1090] sm:$0xff]
  %v6543 = vld [vmem:[#allocation2 + $0x1098] sm:$0xff]
  %v6544 = vld [vmem:[#allocation2 + $0x10a0] sm:$0xff]
  %v6545 = vld [vmem:[#allocation2 + $0x10a8] sm:$0xff]
  %v6546 = vld [vmem:[#allocation2 + $0x10b0] sm:$0xff]
  %v6547 = vld [vmem:[#allocation2 + $0x10b8] sm:$0xff]
  %v6548 = vld [vmem:[#allocation2 + $0x10c0] sm:$0xff]
  %v6549 = vld [vmem:[#allocation2 + $0x10c8] sm:$0xff]
  %v6550 = vld [vmem:[#allocation2 + $0x10d0] sm:$0xff]
  %v6551 = vld [vmem:[#allocation2 + $0x10d8] sm:$0xff]
  %v6552 = vld [vmem:[#allocation2 + $0x10e0] sm:$0xff]
  %v6553 = vld [vmem:[#allocation2 + $0x10e8] sm:$0xff]
  %v6554 = vld [vmem:[#allocation2 + $0x10f0] sm:$0xff]
  %v6555 = vld [vmem:[#allocation2 + $0x10f8] sm:$0xff]
  %v6556 = vld [vmem:[#allocation2 + $0x1100] sm:$0xff]
  %v6557 = vld [vmem:[#allocation2 + $0x1108] sm:$0xff]
  %v6558 = vld [vmem:[#allocation2 + $0x1110] sm:$0xff]
  %v6559 = vld [vmem:[#allocation2 + $0x1118] sm:$0xff]
  %v6560 = vld [vmem:[#allocation2 + $0x1120] sm:$0xff]
  %v6561 = vld [vmem:[#allocation2 + $0x1128] sm:$0xff]
  %v6562 = vld [vmem:[#allocation2 + $0x1130] sm:$0xff]
  %v6563 = vld [vmem:[#allocation2 + $0x1138] sm:$0xff]
  %v6564 = vld [vmem:[#allocation2 + $0x1140] sm:$0xff]
  %v6565 = vld [vmem:[#allocation2 + $0x1148] sm:$0xff]
  %v6566 = vld [vmem:[#allocation2 + $0x1150] sm:$0xff]
  %v6567 = vld [vmem:[#allocation2 + $0x1158] sm:$0xff]
  %v6568 = vld [vmem:[#allocation2 + $0x1160] sm:$0xff]
  %v6569 = vld [vmem:[#allocation2 + $0x1168] sm:$0xff]
  %v6570 = vld [vmem:[#allocation2 + $0x1170] sm:$0xff]
  %v6571 = vld [vmem:[#allocation2 + $0x1178] sm:$0xff]
  %v6572 = vld [vmem:[#allocation2 + $0x1180] sm:$0xff]
  %v6573 = vld [vmem:[#allocation2 + $0x1188] sm:$0xff]
  %v6574 = vld [vmem:[#allocation2 + $0x1190] sm:$0xff]
  %v6575 = vld [vmem:[#allocation2 + $0x1198] sm:$0xff]
  %v6576 = vld [vmem:[#allocation2 + $0x11a0] sm:$0xff]
  %v6577 = vld [vmem:[#allocation2 + $0x11a8] sm:$0xff]
  %v6578 = vld [vmem:[#allocation2 + $0x11b0] sm:$0xff]
  %v6579 = vld [vmem:[#allocation2 + $0x11b8] sm:$0xff]
  %v6580 = vld [vmem:[#allocation2 + $0x11c0] sm:$0xff]
  %v6581 = vld [vmem:[#allocation2 + $0x11c8] sm:$0xff]
  %v6582 = vld [vmem:[#allocation2 + $0x11d0] sm:$0xff]
  %v6583 = vld [vmem:[#allocation2 + $0x11d8] sm:$0xff]
  %v6584 = vld [vmem:[#allocation2 + $0x11e0] sm:$0xff]
  %v6585 = vld [vmem:[#allocation2 + $0x11e8] sm:$0xff]
  %v6586 = vld [vmem:[#allocation2 + $0x11f0] sm:$0xff]
  %v6587 = vld [vmem:[#allocation2 + $0x11f8] sm:$0xff]
  %v6588 = vld [vmem:[%s8] sm:$0xf]
  %v6590 = vlaneseq
  %v6591 = vshrl.u32 %v6590, 7
  %v6592 = vsub.s32 0, %v6591
  %v6593 = vrot.slane %v6588, %v6592
  %v6594 = vlaneseq
  %v6595 = vshrl.u32 %v6594, 7
  %v6596 = vsub.s32 1, %v6595
  %v6597 = vrot.slane %v6588, %v6596
  %v6598 = vlaneseq
  %v6599 = vshrl.u32 %v6598, 7
  %v6600 = vsub.s32 2, %v6599
  %v6601 = vrot.slane %v6588, %v6600
  %v6602 = vlaneseq
  %v6603 = vshrl.u32 %v6602, 7
  %v6604 = vsub.s32 3, %v6603
  %v6605 = vrot.slane %v6588, %v6604
  %v7186 = vunpack.c.l.b16 %v6012
  %v7187 = vunpack.c.h.b16 %v6012
  %v7188 = vunpack.c.l.b16 %v6013
  %v7189 = vunpack.c.h.b16 %v6013
  %v7190 = vunpack.c.l.b16 %v6014
  %v7191 = vunpack.c.h.b16 %v6014
  %v7192 = vunpack.c.l.b16 %v6015
  %v7193 = vunpack.c.h.b16 %v6015
  %v7194 = vunpack.c.l.b16 %v6016
  %v7195 = vunpack.c.h.b16 %v6016
  %v7196 = vunpack.c.l.b16 %v6017
  %v7197 = vunpack.c.h.b16 %v6017
  %v7198 = vunpack.c.l.b16 %v6018
  %v7199 = vunpack.c.h.b16 %v6018
  %v7200 = vunpack.c.l.b16 %v6019
  %v7201 = vunpack.c.h.b16 %v6019
  %v7202 = vunpack.c.l.b16 %v6020
  %v7203 = vunpack.c.h.b16 %v6020
  %v7204 = vunpack.c.l.b16 %v6021
  %v7205 = vunpack.c.h.b16 %v6021
  %v7206 = vunpack.c.l.b16 %v6022
  %v7207 = vunpack.c.h.b16 %v6022
  %v7208 = vunpack.c.l.b16 %v6023
  %v7209 = vunpack.c.h.b16 %v6023
  %v7210 = vunpack.c.l.b16 %v6024
  %v7211 = vunpack.c.h.b16 %v6024
  %v7212 = vunpack.c.l.b16 %v6025
  %v7213 = vunpack.c.h.b16 %v6025
  %v7214 = vunpack.c.l.b16 %v6026
  %v7215 = vunpack.c.h.b16 %v6026
  %v7216 = vunpack.c.l.b16 %v6027
  %v7217 = vunpack.c.h.b16 %v6027
  %v7218 = vunpack.c.l.b16 %v6028
  %v7219 = vunpack.c.h.b16 %v6028
  %v7220 = vunpack.c.l.b16 %v6029
  %v7221 = vunpack.c.h.b16 %v6029
  %v7222 = vunpack.c.l.b16 %v6030
  %v7223 = vunpack.c.h.b16 %v6030
  %v7224 = vunpack.c.l.b16 %v6031
  %v7225 = vunpack.c.h.b16 %v6031
  %v7226 = vunpack.c.l.b16 %v6032
  %v7227 = vunpack.c.h.b16 %v6032
  %v7228 = vunpack.c.l.b16 %v6033
  %v7229 = vunpack.c.h.b16 %v6033
  %v7230 = vunpack.c.l.b16 %v6034
  %v7231 = vunpack.c.h.b16 %v6034
  %v7232 = vunpack.c.l.b16 %v6035
  %v7233 = vunpack.c.h.b16 %v6035
  %v7234 = vunpack.c.l.b16 %v6036
  %v7235 = vunpack.c.h.b16 %v6036
  %v7236 = vunpack.c.l.b16 %v6037
  %v7237 = vunpack.c.h.b16 %v6037
  %v7238 = vunpack.c.l.b16 %v6038
  %v7239 = vunpack.c.h.b16 %v6038
  %v7240 = vunpack.c.l.b16 %v6039
  %v7241 = vunpack.c.h.b16 %v6039
  %v7242 = vunpack.c.l.b16 %v6040
  %v7243 = vunpack.c.h.b16 %v6040
  %v7244 = vunpack.c.l.b16 %v6041
  %v7245 = vunpack.c.h.b16 %v6041
  %v7246 = vunpack.c.l.b16 %v6042
  %v7247 = vunpack.c.h.b16 %v6042
  %v7248 = vunpack.c.l.b16 %v6043
  %v7249 = vunpack.c.h.b16 %v6043
  %v7250 = vunpack.c.l.b16 %v6044
  %v7251 = vunpack.c.h.b16 %v6044
  %v7252 = vunpack.c.l.b16 %v6045
  %v7253 = vunpack.c.h.b16 %v6045
  %v7254 = vunpack.c.l.b16 %v6046
  %v7255 = vunpack.c.h.b16 %v6046
  %v7256 = vunpack.c.l.b16 %v6047
  %v7257 = vunpack.c.h.b16 %v6047
  %v7258 = vunpack.c.l.b16 %v6048
  %v7259 = vunpack.c.h.b16 %v6048
  %v7260 = vunpack.c.l.b16 %v6049
  %v7261 = vunpack.c.h.b16 %v6049
  %v7262 = vunpack.c.l.b16 %v6050
  %v7263 = vunpack.c.h.b16 %v6050
  %v7264 = vunpack.c.l.b16 %v6051
  %v7265 = vunpack.c.h.b16 %v6051
  %v7266 = vunpack.c.l.b16 %v6052
  %v7267 = vunpack.c.h.b16 %v6052
  %v7268 = vunpack.c.l.b16 %v6053
  %v7269 = vunpack.c.h.b16 %v6053
  %v7270 = vunpack.c.l.b16 %v6054
  %v7271 = vunpack.c.h.b16 %v6054
  %v7272 = vunpack.c.l.b16 %v6055
  %v7273 = vunpack.c.h.b16 %v6055
  %v7274 = vunpack.c.l.b16 %v6056
  %v7275 = vunpack.c.h.b16 %v6056
  %v7276 = vunpack.c.l.b16 %v6057
  %v7277 = vunpack.c.h.b16 %v6057
  %v7278 = vunpack.c.l.b16 %v6058
  %v7279 = vunpack.c.h.b16 %v6058
  %v7280 = vunpack.c.l.b16 %v6059
  %v7281 = vunpack.c.h.b16 %v6059
  %v7282 = vunpack.c.l.b16 %v6060
  %v7283 = vunpack.c.h.b16 %v6060
  %v7284 = vunpack.c.l.b16 %v6061
  %v7285 = vunpack.c.h.b16 %v6061
  %v7286 = vunpack.c.l.b16 %v6062
  %v7287 = vunpack.c.h.b16 %v6062
  %v7288 = vunpack.c.l.b16 %v6063
  %v7289 = vunpack.c.h.b16 %v6063
  %v7290 = vunpack.c.l.b16 %v6064
  %v7291 = vunpack.c.h.b16 %v6064
  %v7292 = vunpack.c.l.b16 %v6065
  %v7293 = vunpack.c.h.b16 %v6065
  %v7294 = vunpack.c.l.b16 %v6066
  %v7295 = vunpack.c.h.b16 %v6066
  %v7296 = vunpack.c.l.b16 %v6067
  %v7297 = vunpack.c.h.b16 %v6067
  %v7298 = vunpack.c.l.b16 %v6068
  %v7299 = vunpack.c.h.b16 %v6068
  %v7300 = vunpack.c.l.b16 %v6069
  %v7301 = vunpack.c.h.b16 %v6069
  %v7302 = vunpack.c.l.b16 %v6070
  %v7303 = vunpack.c.h.b16 %v6070
  %v7304 = vunpack.c.l.b16 %v6071
  %v7305 = vunpack.c.h.b16 %v6071
  %v7306 = vunpack.c.l.b16 %v6072
  %v7307 = vunpack.c.h.b16 %v6072
  %v7308 = vunpack.c.l.b16 %v6073
  %v7309 = vunpack.c.h.b16 %v6073
  %v7310 = vunpack.c.l.b16 %v6074
  %v7311 = vunpack.c.h.b16 %v6074
  %v7312 = vunpack.c.l.b16 %v6075
  %v7313 = vunpack.c.h.b16 %v6075
  %v7314 = vunpack.c.l.b16 %v6076
  %v7315 = vunpack.c.h.b16 %v6076
  %v7316 = vunpack.c.l.b16 %v6077
  %v7317 = vunpack.c.h.b16 %v6077
  %v7318 = vunpack.c.l.b16 %v6078
  %v7319 = vunpack.c.h.b16 %v6078
  %v7320 = vunpack.c.l.b16 %v6079
  %v7321 = vunpack.c.h.b16 %v6079
  %v7322 = vunpack.c.l.b16 %v6080
  %v7323 = vunpack.c.h.b16 %v6080
  %v7324 = vunpack.c.l.b16 %v6081
  %v7325 = vunpack.c.h.b16 %v6081
  %v7326 = vunpack.c.l.b16 %v6082
  %v7327 = vunpack.c.h.b16 %v6082
  %v7328 = vunpack.c.l.b16 %v6083
  %v7329 = vunpack.c.h.b16 %v6083
  %v7330 = vunpack.c.l.b16 %v6084
  %v7331 = vunpack.c.h.b16 %v6084
  %v7332 = vunpack.c.l.b16 %v6085
  %v7333 = vunpack.c.h.b16 %v6085
  %v7334 = vunpack.c.l.b16 %v6086
  %v7335 = vunpack.c.h.b16 %v6086
  %v7336 = vunpack.c.l.b16 %v6087
  %v7337 = vunpack.c.h.b16 %v6087
  %v7338 = vunpack.c.l.b16 %v6088
  %v7339 = vunpack.c.h.b16 %v6088
  %v7340 = vunpack.c.l.b16 %v6089
  %v7341 = vunpack.c.h.b16 %v6089
  %v7342 = vunpack.c.l.b16 %v6090
  %v7343 = vunpack.c.h.b16 %v6090
  %v7344 = vunpack.c.l.b16 %v6091
  %v7345 = vunpack.c.h.b16 %v6091
  %v7346 = vunpack.c.l.b16 %v6092
  %v7347 = vunpack.c.h.b16 %v6092
  %v7348 = vunpack.c.l.b16 %v6093
  %v7349 = vunpack.c.h.b16 %v6093
  %v7350 = vunpack.c.l.b16 %v6094
  %v7351 = vunpack.c.h.b16 %v6094
  %v7352 = vunpack.c.l.b16 %v6095
  %v7353 = vunpack.c.h.b16 %v6095
  %v7354 = vunpack.c.l.b16 %v6096
  %v7355 = vunpack.c.h.b16 %v6096
  %v7356 = vunpack.c.l.b16 %v6097
  %v7357 = vunpack.c.h.b16 %v6097
  %v7358 = vunpack.c.l.b16 %v6098
  %v7359 = vunpack.c.h.b16 %v6098
  %v7360 = vunpack.c.l.b16 %v6099
  %v7361 = vunpack.c.h.b16 %v6099
  %v7362 = vunpack.c.l.b16 %v6100
  %v7363 = vunpack.c.h.b16 %v6100
  %v7364 = vunpack.c.l.b16 %v6101
  %v7365 = vunpack.c.h.b16 %v6101
  %v7366 = vunpack.c.l.b16 %v6102
  %v7367 = vunpack.c.h.b16 %v6102
  %v7368 = vunpack.c.l.b16 %v6103
  %v7369 = vunpack.c.h.b16 %v6103
  %v7370 = vunpack.c.l.b16 %v6104
  %v7371 = vunpack.c.h.b16 %v6104
  %v7372 = vunpack.c.l.b16 %v6105
  %v7373 = vunpack.c.h.b16 %v6105
  %v7374 = vunpack.c.l.b16 %v6106
  %v7375 = vunpack.c.h.b16 %v6106
  %v7376 = vunpack.c.l.b16 %v6107
  %v7377 = vunpack.c.h.b16 %v6107
  %v7378 = vunpack.c.l.b16 %v6108
  %v7379 = vunpack.c.h.b16 %v6108
  %v7380 = vunpack.c.l.b16 %v6109
  %v7381 = vunpack.c.h.b16 %v6109
  %v7382 = vunpack.c.l.b16 %v6110
  %v7383 = vunpack.c.h.b16 %v6110
  %v7384 = vunpack.c.l.b16 %v6111
  %v7385 = vunpack.c.h.b16 %v6111
  %v7386 = vunpack.c.l.b16 %v6112
  %v7387 = vunpack.c.h.b16 %v6112
  %v7388 = vunpack.c.l.b16 %v6113
  %v7389 = vunpack.c.h.b16 %v6113
  %v7390 = vunpack.c.l.b16 %v6114
  %v7391 = vunpack.c.h.b16 %v6114
  %v7392 = vunpack.c.l.b16 %v6115
  %v7393 = vunpack.c.h.b16 %v6115
  %v7394 = vunpack.c.l.b16 %v6116
  %v7395 = vunpack.c.h.b16 %v6116
  %v7396 = vunpack.c.l.b16 %v6117
  %v7397 = vunpack.c.h.b16 %v6117
  %v7398 = vunpack.c.l.b16 %v6118
  %v7399 = vunpack.c.h.b16 %v6118
  %v7400 = vunpack.c.l.b16 %v6119
  %v7401 = vunpack.c.h.b16 %v6119
  %v7402 = vunpack.c.l.b16 %v6120
  %v7403 = vunpack.c.h.b16 %v6120
  %v7404 = vunpack.c.l.b16 %v6121
  %v7405 = vunpack.c.h.b16 %v6121
  %v7406 = vunpack.c.l.b16 %v6122
  %v7407 = vunpack.c.h.b16 %v6122
  %v7408 = vunpack.c.l.b16 %v6123
  %v7409 = vunpack.c.h.b16 %v6123
  %v7410 = vunpack.c.l.b16 %v6124
  %v7411 = vunpack.c.h.b16 %v6124
  %v7412 = vunpack.c.l.b16 %v6125
  %v7413 = vunpack.c.h.b16 %v6125
  %v7414 = vunpack.c.l.b16 %v6126
  %v7415 = vunpack.c.h.b16 %v6126
  %v7416 = vunpack.c.l.b16 %v6127
  %v7417 = vunpack.c.h.b16 %v6127
  %v7418 = vunpack.c.l.b16 %v6128
  %v7419 = vunpack.c.h.b16 %v6128
  %v7420 = vunpack.c.l.b16 %v6129
  %v7421 = vunpack.c.h.b16 %v6129
  %v7422 = vunpack.c.l.b16 %v6130
  %v7423 = vunpack.c.h.b16 %v6130
  %v7424 = vunpack.c.l.b16 %v6131
  %v7425 = vunpack.c.h.b16 %v6131
  %v7426 = vunpack.c.l.b16 %v6132
  %v7427 = vunpack.c.h.b16 %v6132
  %v7428 = vunpack.c.l.b16 %v6133
  %v7429 = vunpack.c.h.b16 %v6133
  %v7430 = vunpack.c.l.b16 %v6134
  %v7431 = vunpack.c.h.b16 %v6134
  %v7432 = vunpack.c.l.b16 %v6135
  %v7433 = vunpack.c.h.b16 %v6135
  %v7434 = vunpack.c.l.b16 %v6136
  %v7435 = vunpack.c.h.b16 %v6136
  %v7436 = vunpack.c.l.b16 %v6137
  %v7437 = vunpack.c.h.b16 %v6137
  %v7438 = vunpack.c.l.b16 %v6138
  %v7439 = vunpack.c.h.b16 %v6138
  %v7440 = vunpack.c.l.b16 %v6139
  %v7441 = vunpack.c.h.b16 %v6139
  %v7442 = vunpack.c.l.b16 %v6140
  %v7443 = vunpack.c.h.b16 %v6140
  %v7444 = vunpack.c.l.b16 %v6141
  %v7445 = vunpack.c.h.b16 %v6141
  %v7446 = vunpack.c.l.b16 %v6142
  %v7447 = vunpack.c.h.b16 %v6142
  %v7448 = vunpack.c.l.b16 %v6143
  %v7449 = vunpack.c.h.b16 %v6143
  %v7450 = vunpack.c.l.b16 %v6144
  %v7451 = vunpack.c.h.b16 %v6144
  %v7452 = vunpack.c.l.b16 %v6145
  %v7453 = vunpack.c.h.b16 %v6145
  %v7454 = vunpack.c.l.b16 %v6146
  %v7455 = vunpack.c.h.b16 %v6146
  %v7456 = vunpack.c.l.b16 %v6147
  %v7457 = vunpack.c.h.b16 %v6147
  %v7458 = vunpack.c.l.b16 %v6148
  %v7459 = vunpack.c.h.b16 %v6148
  %v7460 = vunpack.c.l.b16 %v6149
  %v7461 = vunpack.c.h.b16 %v6149
  %v7462 = vunpack.c.l.b16 %v6150
  %v7463 = vunpack.c.h.b16 %v6150
  %v7464 = vunpack.c.l.b16 %v6151
  %v7465 = vunpack.c.h.b16 %v6151
  %v7466 = vunpack.c.l.b16 %v6152
  %v7467 = vunpack.c.h.b16 %v6152
  %v7468 = vunpack.c.l.b16 %v6153
  %v7469 = vunpack.c.h.b16 %v6153
  %v7470 = vunpack.c.l.b16 %v6154
  %v7471 = vunpack.c.h.b16 %v6154
  %v7472 = vunpack.c.l.b16 %v6155
  %v7473 = vunpack.c.h.b16 %v6155
  %v7474 = vunpack.c.l.b16 %v6156
  %v7475 = vunpack.c.h.b16 %v6156
  %v7476 = vunpack.c.l.b16 %v6157
  %v7477 = vunpack.c.h.b16 %v6157
  %v7478 = vunpack.c.l.b16 %v6158
  %v7479 = vunpack.c.h.b16 %v6158
  %v7480 = vunpack.c.l.b16 %v6159
  %v7481 = vunpack.c.h.b16 %v6159
  %v7482 = vunpack.c.l.b16 %v6160
  %v7483 = vunpack.c.h.b16 %v6160
  %v7484 = vunpack.c.l.b16 %v6161
  %v7485 = vunpack.c.h.b16 %v6161
  %v7486 = vunpack.c.l.b16 %v6162
  %v7487 = vunpack.c.h.b16 %v6162
  %v7488 = vunpack.c.l.b16 %v6163
  %v7489 = vunpack.c.h.b16 %v6163
  %v7490 = vunpack.c.l.b16 %v6164
  %v7491 = vunpack.c.h.b16 %v6164
  %v7492 = vunpack.c.l.b16 %v6165
  %v7493 = vunpack.c.h.b16 %v6165
  %v7494 = vunpack.c.l.b16 %v6166
  %v7495 = vunpack.c.h.b16 %v6166
  %v7496 = vunpack.c.l.b16 %v6167
  %v7497 = vunpack.c.h.b16 %v6167
  %v7498 = vunpack.c.l.b16 %v6168
  %v7499 = vunpack.c.h.b16 %v6168
  %v7500 = vunpack.c.l.b16 %v6169
  %v7501 = vunpack.c.h.b16 %v6169
  %v7502 = vunpack.c.l.b16 %v6170
  %v7503 = vunpack.c.h.b16 %v6170
  %v7504 = vunpack.c.l.b16 %v6171
  %v7505 = vunpack.c.h.b16 %v6171
  %v7506 = vunpack.c.l.b16 %v6172
  %v7507 = vunpack.c.h.b16 %v6172
  %v7508 = vunpack.c.l.b16 %v6173
  %v7509 = vunpack.c.h.b16 %v6173
  %v7510 = vunpack.c.l.b16 %v6174
  %v7511 = vunpack.c.h.b16 %v6174
  %v7512 = vunpack.c.l.b16 %v6175
  %v7513 = vunpack.c.h.b16 %v6175
  %v7514 = vunpack.c.l.b16 %v6176
  %v7515 = vunpack.c.h.b16 %v6176
  %v7516 = vunpack.c.l.b16 %v6177
  %v7517 = vunpack.c.h.b16 %v6177
  %v7518 = vunpack.c.l.b16 %v6178
  %v7519 = vunpack.c.h.b16 %v6178
  %v7520 = vunpack.c.l.b16 %v6179
  %v7521 = vunpack.c.h.b16 %v6179
  %v7522 = vunpack.c.l.b16 %v6180
  %v7523 = vunpack.c.h.b16 %v6180
  %v7524 = vunpack.c.l.b16 %v6181
  %v7525 = vunpack.c.h.b16 %v6181
  %v7526 = vunpack.c.l.b16 %v6182
  %v7527 = vunpack.c.h.b16 %v6182
  %v7528 = vunpack.c.l.b16 %v6183
  %v7529 = vunpack.c.h.b16 %v6183
  %v7530 = vunpack.c.l.b16 %v6184
  %v7531 = vunpack.c.h.b16 %v6184
  %v7532 = vunpack.c.l.b16 %v6185
  %v7533 = vunpack.c.h.b16 %v6185
  %v7534 = vunpack.c.l.b16 %v6186
  %v7535 = vunpack.c.h.b16 %v6186
  %v7536 = vunpack.c.l.b16 %v6187
  %v7537 = vunpack.c.h.b16 %v6187
  %v7538 = vunpack.c.l.b16 %v6188
  %v7539 = vunpack.c.h.b16 %v6188
  %v7540 = vunpack.c.l.b16 %v6189
  %v7541 = vunpack.c.h.b16 %v6189
  %v7542 = vunpack.c.l.b16 %v6190
  %v7543 = vunpack.c.h.b16 %v6190
  %v7544 = vunpack.c.l.b16 %v6191
  %v7545 = vunpack.c.h.b16 %v6191
  %v7546 = vunpack.c.l.b16 %v6192
  %v7547 = vunpack.c.h.b16 %v6192
  %v7548 = vunpack.c.l.b16 %v6193
  %v7549 = vunpack.c.h.b16 %v6193
  %v7550 = vunpack.c.l.b16 %v6194
  %v7551 = vunpack.c.h.b16 %v6194
  %v7552 = vunpack.c.l.b16 %v6195
  %v7553 = vunpack.c.h.b16 %v6195
  %v7554 = vunpack.c.l.b16 %v6196
  %v7555 = vunpack.c.h.b16 %v6196
  %v7556 = vunpack.c.l.b16 %v6197
  %v7557 = vunpack.c.h.b16 %v6197
  %v7558 = vunpack.c.l.b16 %v6198
  %v7559 = vunpack.c.h.b16 %v6198
  %v7560 = vunpack.c.l.b16 %v6199
  %v7561 = vunpack.c.h.b16 %v6199
  %v7562 = vunpack.c.l.b16 %v6200
  %v7563 = vunpack.c.h.b16 %v6200
  %v7564 = vunpack.c.l.b16 %v6201
  %v7565 = vunpack.c.h.b16 %v6201
  %v7566 = vunpack.c.l.b16 %v6202
  %v7567 = vunpack.c.h.b16 %v6202
  %v7568 = vunpack.c.l.b16 %v6203
  %v7569 = vunpack.c.h.b16 %v6203
  %v7570 = vunpack.c.l.b16 %v6204
  %v7571 = vunpack.c.h.b16 %v6204
  %v7572 = vunpack.c.l.b16 %v6205
  %v7573 = vunpack.c.h.b16 %v6205
  %v7574 = vunpack.c.l.b16 %v6206
  %v7575 = vunpack.c.h.b16 %v6206
  %v7576 = vunpack.c.l.b16 %v6207
  %v7577 = vunpack.c.h.b16 %v6207
  %v7578 = vunpack.c.l.b16 %v6208
  %v7579 = vunpack.c.h.b16 %v6208
  %v7580 = vunpack.c.l.b16 %v6209
  %v7581 = vunpack.c.h.b16 %v6209
  %v7582 = vunpack.c.l.b16 %v6210
  %v7583 = vunpack.c.h.b16 %v6210
  %v7584 = vunpack.c.l.b16 %v6211
  %v7585 = vunpack.c.h.b16 %v6211
  %v7586 = vunpack.c.l.b16 %v6212
  %v7587 = vunpack.c.h.b16 %v6212
  %v7588 = vunpack.c.l.b16 %v6213
  %v7589 = vunpack.c.h.b16 %v6213
  %v7590 = vunpack.c.l.b16 %v6214
  %v7591 = vunpack.c.h.b16 %v6214
  %v7592 = vunpack.c.l.b16 %v6215
  %v7593 = vunpack.c.h.b16 %v6215
  %v7594 = vunpack.c.l.b16 %v6216
  %v7595 = vunpack.c.h.b16 %v6216
  %v7596 = vunpack.c.l.b16 %v6217
  %v7597 = vunpack.c.h.b16 %v6217
  %v7598 = vunpack.c.l.b16 %v6218
  %v7599 = vunpack.c.h.b16 %v6218
  %v7600 = vunpack.c.l.b16 %v6219
  %v7601 = vunpack.c.h.b16 %v6219
  %v7602 = vunpack.c.l.b16 %v6220
  %v7603 = vunpack.c.h.b16 %v6220
  %v7604 = vunpack.c.l.b16 %v6221
  %v7605 = vunpack.c.h.b16 %v6221
  %v7606 = vunpack.c.l.b16 %v6222
  %v7607 = vunpack.c.h.b16 %v6222
  %v7608 = vunpack.c.l.b16 %v6223
  %v7609 = vunpack.c.h.b16 %v6223
  %v7610 = vunpack.c.l.b16 %v6224
  %v7611 = vunpack.c.h.b16 %v6224
  %v7612 = vunpack.c.l.b16 %v6225
  %v7613 = vunpack.c.h.b16 %v6225
  %v7614 = vunpack.c.l.b16 %v6226
  %v7615 = vunpack.c.h.b16 %v6226
  %v7616 = vunpack.c.l.b16 %v6227
  %v7617 = vunpack.c.h.b16 %v6227
  %v7618 = vunpack.c.l.b16 %v6228
  %v7619 = vunpack.c.h.b16 %v6228
  %v7620 = vunpack.c.l.b16 %v6229
  %v7621 = vunpack.c.h.b16 %v6229
  %v7622 = vunpack.c.l.b16 %v6230
  %v7623 = vunpack.c.h.b16 %v6230
  %v7624 = vunpack.c.l.b16 %v6231
  %v7625 = vunpack.c.h.b16 %v6231
  %v7626 = vunpack.c.l.b16 %v6232
  %v7627 = vunpack.c.h.b16 %v6232
  %v7628 = vunpack.c.l.b16 %v6233
  %v7629 = vunpack.c.h.b16 %v6233
  %v7630 = vunpack.c.l.b16 %v6234
  %v7631 = vunpack.c.h.b16 %v6234
  %v7632 = vunpack.c.l.b16 %v6235
  %v7633 = vunpack.c.h.b16 %v6235
  %v7634 = vunpack.c.l.b16 %v6236
  %v7635 = vunpack.c.h.b16 %v6236
  %v7636 = vunpack.c.l.b16 %v6237
  %v7637 = vunpack.c.h.b16 %v6237
  %v7638 = vunpack.c.l.b16 %v6238
  %v7639 = vunpack.c.h.b16 %v6238
  %v7640 = vunpack.c.l.b16 %v6239
  %v7641 = vunpack.c.h.b16 %v6239
  %v7642 = vunpack.c.l.b16 %v6240
  %v7643 = vunpack.c.h.b16 %v6240
  %v7644 = vunpack.c.l.b16 %v6241
  %v7645 = vunpack.c.h.b16 %v6241
  %v7646 = vunpack.c.l.b16 %v6242
  %v7647 = vunpack.c.h.b16 %v6242
  %v7648 = vunpack.c.l.b16 %v6243
  %v7649 = vunpack.c.h.b16 %v6243
  %v7650 = vunpack.c.l.b16 %v6244
  %v7651 = vunpack.c.h.b16 %v6244
  %v7652 = vunpack.c.l.b16 %v6245
  %v7653 = vunpack.c.h.b16 %v6245
  %v7654 = vunpack.c.l.b16 %v6246
  %v7655 = vunpack.c.h.b16 %v6246
  %v7656 = vunpack.c.l.b16 %v6247
  %v7657 = vunpack.c.h.b16 %v6247
  %v7658 = vunpack.c.l.b16 %v6248
  %v7659 = vunpack.c.h.b16 %v6248
  %v7660 = vunpack.c.l.b16 %v6249
  %v7661 = vunpack.c.h.b16 %v6249
  %v7662 = vunpack.c.l.b16 %v6250
  %v7663 = vunpack.c.h.b16 %v6250
  %v7664 = vunpack.c.l.b16 %v6251
  %v7665 = vunpack.c.h.b16 %v6251
  %v7666 = vunpack.c.l.b16 %v6252
  %v7667 = vunpack.c.h.b16 %v6252
  %v7668 = vunpack.c.l.b16 %v6253
  %v7669 = vunpack.c.h.b16 %v6253
  %v7670 = vunpack.c.l.b16 %v6254
  %v7671 = vunpack.c.h.b16 %v6254
  %v7672 = vunpack.c.l.b16 %v6255
  %v7673 = vunpack.c.h.b16 %v6255
  %v7674 = vunpack.c.l.b16 %v6256
  %v7675 = vunpack.c.h.b16 %v6256
  %v7676 = vunpack.c.l.b16 %v6257
  %v7677 = vunpack.c.h.b16 %v6257
  %v7678 = vunpack.c.l.b16 %v6258
  %v7679 = vunpack.c.h.b16 %v6258
  %v7680 = vunpack.c.l.b16 %v6259
  %v7681 = vunpack.c.h.b16 %v6259
  %v7682 = vunpack.c.l.b16 %v6260
  %v7683 = vunpack.c.h.b16 %v6260
  %v7684 = vunpack.c.l.b16 %v6261
  %v7685 = vunpack.c.h.b16 %v6261
  %v7686 = vunpack.c.l.b16 %v6262
  %v7687 = vunpack.c.h.b16 %v6262
  %v7688 = vunpack.c.l.b16 %v6263
  %v7689 = vunpack.c.h.b16 %v6263
  %v7690 = vunpack.c.l.b16 %v6264
  %v7691 = vunpack.c.h.b16 %v6264
  %v7692 = vunpack.c.l.b16 %v6265
  %v7693 = vunpack.c.h.b16 %v6265
  %v7694 = vunpack.c.l.b16 %v6266
  %v7695 = vunpack.c.h.b16 %v6266
  %v7696 = vunpack.c.l.b16 %v6267
  %v7697 = vunpack.c.h.b16 %v6267
  %v7698 = vunpack.c.l.b16 %v6268
  %v7699 = vunpack.c.h.b16 %v6268
  %v7700 = vunpack.c.l.b16 %v6269
  %v7701 = vunpack.c.h.b16 %v6269
  %v7702 = vunpack.c.l.b16 %v6270
  %v7703 = vunpack.c.h.b16 %v6270
  %v7704 = vunpack.c.l.b16 %v6271
  %v7705 = vunpack.c.h.b16 %v6271
  %v7706 = vunpack.c.l.b16 %v6272
  %v7707 = vunpack.c.h.b16 %v6272
  %v7708 = vunpack.c.l.b16 %v6273
  %v7709 = vunpack.c.h.b16 %v6273
  %v7710 = vunpack.c.l.b16 %v6274
  %v7711 = vunpack.c.h.b16 %v6274
  %v7712 = vunpack.c.l.b16 %v6275
  %v7713 = vunpack.c.h.b16 %v6275
  %v7714 = vunpack.c.l.b16 %v6276
  %v7715 = vunpack.c.h.b16 %v6276
  %v7716 = vunpack.c.l.b16 %v6277
  %v7717 = vunpack.c.h.b16 %v6277
  %v7718 = vunpack.c.l.b16 %v6278
  %v7719 = vunpack.c.h.b16 %v6278
  %v7720 = vunpack.c.l.b16 %v6279
  %v7721 = vunpack.c.h.b16 %v6279
  %v7722 = vunpack.c.l.b16 %v6280
  %v7723 = vunpack.c.h.b16 %v6280
  %v7724 = vunpack.c.l.b16 %v6281
  %v7725 = vunpack.c.h.b16 %v6281
  %v7726 = vunpack.c.l.b16 %v6282
  %v7727 = vunpack.c.h.b16 %v6282
  %v7728 = vunpack.c.l.b16 %v6283
  %v7729 = vunpack.c.h.b16 %v6283
  %v7730 = vunpack.c.l.b16 %v6284
  %v7731 = vunpack.c.h.b16 %v6284
  %v7732 = vunpack.c.l.b16 %v6285
  %v7733 = vunpack.c.h.b16 %v6285
  %v7734 = vunpack.c.l.b16 %v6286
  %v7735 = vunpack.c.h.b16 %v6286
  %v7736 = vunpack.c.l.b16 %v6287
  %v7737 = vunpack.c.h.b16 %v6287
  %v7738 = vunpack.c.l.b16 %v6288
  %v7739 = vunpack.c.h.b16 %v6288
  %v7740 = vunpack.c.l.b16 %v6289
  %v7741 = vunpack.c.h.b16 %v6289
  %v7742 = vunpack.c.l.b16 %v6290
  %v7743 = vunpack.c.h.b16 %v6290
  %v7744 = vunpack.c.l.b16 %v6291
  %v7745 = vunpack.c.h.b16 %v6291
  %v7746 = vunpack.c.l.b16 %v6292
  %v7747 = vunpack.c.h.b16 %v6292
  %v7748 = vunpack.c.l.b16 %v6293
  %v7749 = vunpack.c.h.b16 %v6293
  %v7750 = vunpack.c.l.b16 %v6294
  %v7751 = vunpack.c.h.b16 %v6294
  %v7752 = vunpack.c.l.b16 %v6295
  %v7753 = vunpack.c.h.b16 %v6295
  %v7754 = vunpack.c.l.b16 %v6296
  %v7755 = vunpack.c.h.b16 %v6296
  %v7756 = vunpack.c.l.b16 %v6297
  %v7757 = vunpack.c.h.b16 %v6297
  %v7758 = vunpack.c.l.b16 %v6298
  %v7759 = vunpack.c.h.b16 %v6298
  %v7760 = vunpack.c.l.b16 %v6299
  %v7761 = vunpack.c.h.b16 %v6299
  %v7762 = vunpack.c.l.b16 %v6300
  %v7763 = vunpack.c.h.b16 %v6300
  %v7764 = vunpack.c.l.b16 %v6301
  %v7765 = vunpack.c.h.b16 %v6301
  %v7766 = vunpack.c.l.b16 %v6302
  %v7767 = vunpack.c.h.b16 %v6302
  %v7768 = vunpack.c.l.b16 %v6303
  %v7769 = vunpack.c.h.b16 %v6303
  %v7770 = vunpack.c.l.b16 %v6304
  %v7771 = vunpack.c.h.b16 %v6304
  %v7772 = vunpack.c.l.b16 %v6305
  %v7773 = vunpack.c.h.b16 %v6305
  %v7774 = vunpack.c.l.b16 %v6306
  %v7775 = vunpack.c.h.b16 %v6306
  %v7776 = vunpack.c.l.b16 %v6307
  %v7777 = vunpack.c.h.b16 %v6307
  %v7778 = vunpack.c.l.b16 %v6308
  %v7779 = vunpack.c.h.b16 %v6308
  %v7780 = vunpack.c.l.b16 %v6309
  %v7781 = vunpack.c.h.b16 %v6309
  %v7782 = vunpack.c.l.b16 %v6310
  %v7783 = vunpack.c.h.b16 %v6310
  %v7784 = vunpack.c.l.b16 %v6311
  %v7785 = vunpack.c.h.b16 %v6311
  %v7786 = vunpack.c.l.b16 %v6312
  %v7787 = vunpack.c.h.b16 %v6312
  %v7788 = vunpack.c.l.b16 %v6313
  %v7789 = vunpack.c.h.b16 %v6313
  %v7790 = vunpack.c.l.b16 %v6314
  %v7791 = vunpack.c.h.b16 %v6314
  %v7792 = vunpack.c.l.b16 %v6315
  %v7793 = vunpack.c.h.b16 %v6315
  %v7794 = vunpack.c.l.b16 %v6316
  %v7795 = vunpack.c.h.b16 %v6316
  %v7796 = vunpack.c.l.b16 %v6317
  %v7797 = vunpack.c.h.b16 %v6317
  %v7798 = vunpack.c.l.b16 %v6318
  %v7799 = vunpack.c.h.b16 %v6318
  %v7800 = vunpack.c.l.b16 %v6319
  %v7801 = vunpack.c.h.b16 %v6319
  %v7802 = vunpack.c.l.b16 %v6320
  %v7803 = vunpack.c.h.b16 %v6320
  %v7804 = vunpack.c.l.b16 %v6321
  %v7805 = vunpack.c.h.b16 %v6321
  %v7806 = vunpack.c.l.b16 %v6322
  %v7807 = vunpack.c.h.b16 %v6322
  %v7808 = vunpack.c.l.b16 %v6323
  %v7809 = vunpack.c.h.b16 %v6323
  %v7810 = vunpack.c.l.b16 %v6324
  %v7811 = vunpack.c.h.b16 %v6324
  %v7812 = vunpack.c.l.b16 %v6325
  %v7813 = vunpack.c.h.b16 %v6325
  %v7814 = vunpack.c.l.b16 %v6326
  %v7815 = vunpack.c.h.b16 %v6326
  %v7816 = vunpack.c.l.b16 %v6327
  %v7817 = vunpack.c.h.b16 %v6327
  %v7818 = vunpack.c.l.b16 %v6328
  %v7819 = vunpack.c.h.b16 %v6328
  %v7820 = vunpack.c.l.b16 %v6329
  %v7821 = vunpack.c.h.b16 %v6329
  %v7822 = vunpack.c.l.b16 %v6330
  %v7823 = vunpack.c.h.b16 %v6330
  %v7824 = vunpack.c.l.b16 %v6331
  %v7825 = vunpack.c.h.b16 %v6331
  %v7826 = vunpack.c.l.b16 %v6332
  %v7827 = vunpack.c.h.b16 %v6332
  %v7828 = vunpack.c.l.b16 %v6333
  %v7829 = vunpack.c.h.b16 %v6333
  %v7830 = vunpack.c.l.b16 %v6334
  %v7831 = vunpack.c.h.b16 %v6334
  %v7832 = vunpack.c.l.b16 %v6335
  %v7833 = vunpack.c.h.b16 %v6335
  %v7834 = vunpack.c.l.b16 %v6336
  %v7835 = vunpack.c.h.b16 %v6336
  %v7836 = vunpack.c.l.b16 %v6337
  %v7837 = vunpack.c.h.b16 %v6337
  %v7838 = vunpack.c.l.b16 %v6338
  %v7839 = vunpack.c.h.b16 %v6338
  %v7840 = vunpack.c.l.b16 %v6339
  %v7841 = vunpack.c.h.b16 %v6339
  %v7842 = vunpack.c.l.b16 %v6340
  %v7843 = vunpack.c.h.b16 %v6340
  %v7844 = vunpack.c.l.b16 %v6341
  %v7845 = vunpack.c.h.b16 %v6341
  %v7846 = vunpack.c.l.b16 %v6342
  %v7847 = vunpack.c.h.b16 %v6342
  %v7848 = vunpack.c.l.b16 %v6343
  %v7849 = vunpack.c.h.b16 %v6343
  %v7850 = vunpack.c.l.b16 %v6344
  %v7851 = vunpack.c.h.b16 %v6344
  %v7852 = vunpack.c.l.b16 %v6345
  %v7853 = vunpack.c.h.b16 %v6345
  %v7854 = vunpack.c.l.b16 %v6346
  %v7855 = vunpack.c.h.b16 %v6346
  %v7856 = vunpack.c.l.b16 %v6347
  %v7857 = vunpack.c.h.b16 %v6347
  %v7858 = vunpack.c.l.b16 %v6348
  %v7859 = vunpack.c.h.b16 %v6348
  %v7860 = vunpack.c.l.b16 %v6349
  %v7861 = vunpack.c.h.b16 %v6349
  %v7862 = vunpack.c.l.b16 %v6350
  %v7863 = vunpack.c.h.b16 %v6350
  %v7864 = vunpack.c.l.b16 %v6351
  %v7865 = vunpack.c.h.b16 %v6351
  %v7866 = vunpack.c.l.b16 %v6352
  %v7867 = vunpack.c.h.b16 %v6352
  %v7868 = vunpack.c.l.b16 %v6353
  %v7869 = vunpack.c.h.b16 %v6353
  %v7870 = vunpack.c.l.b16 %v6354
  %v7871 = vunpack.c.h.b16 %v6354
  %v7872 = vunpack.c.l.b16 %v6355
  %v7873 = vunpack.c.h.b16 %v6355
  %v7874 = vunpack.c.l.b16 %v6356
  %v7875 = vunpack.c.h.b16 %v6356
  %v7876 = vunpack.c.l.b16 %v6357
  %v7877 = vunpack.c.h.b16 %v6357
  %v7878 = vunpack.c.l.b16 %v6358
  %v7879 = vunpack.c.h.b16 %v6358
  %v7880 = vunpack.c.l.b16 %v6359
  %v7881 = vunpack.c.h.b16 %v6359
  %v7882 = vunpack.c.l.b16 %v6360
  %v7883 = vunpack.c.h.b16 %v6360
  %v7884 = vunpack.c.l.b16 %v6361
  %v7885 = vunpack.c.h.b16 %v6361
  %v7886 = vunpack.c.l.b16 %v6362
  %v7887 = vunpack.c.h.b16 %v6362
  %v7888 = vunpack.c.l.b16 %v6363
  %v7889 = vunpack.c.h.b16 %v6363
  %v7890 = vunpack.c.l.b16 %v6364
  %v7891 = vunpack.c.h.b16 %v6364
  %v7892 = vunpack.c.l.b16 %v6365
  %v7893 = vunpack.c.h.b16 %v6365
  %v7894 = vunpack.c.l.b16 %v6366
  %v7895 = vunpack.c.h.b16 %v6366
  %v7896 = vunpack.c.l.b16 %v6367
  %v7897 = vunpack.c.h.b16 %v6367
  %v7898 = vunpack.c.l.b16 %v6368
  %v7899 = vunpack.c.h.b16 %v6368
  %v7900 = vunpack.c.l.b16 %v6369
  %v7901 = vunpack.c.h.b16 %v6369
  %v7902 = vunpack.c.l.b16 %v6370
  %v7903 = vunpack.c.h.b16 %v6370
  %v7904 = vunpack.c.l.b16 %v6371
  %v7905 = vunpack.c.h.b16 %v6371
  %v7906 = vunpack.c.l.b16 %v6372
  %v7907 = vunpack.c.h.b16 %v6372
  %v7908 = vunpack.c.l.b16 %v6373
  %v7909 = vunpack.c.h.b16 %v6373
  %v7910 = vunpack.c.l.b16 %v6374
  %v7911 = vunpack.c.h.b16 %v6374
  %v7912 = vunpack.c.l.b16 %v6375
  %v7913 = vunpack.c.h.b16 %v6375
  %v7914 = vunpack.c.l.b16 %v6376
  %v7915 = vunpack.c.h.b16 %v6376
  %v7916 = vunpack.c.l.b16 %v6377
  %v7917 = vunpack.c.h.b16 %v6377
  %v7918 = vunpack.c.l.b16 %v6378
  %v7919 = vunpack.c.h.b16 %v6378
  %v7920 = vunpack.c.l.b16 %v6379
  %v7921 = vunpack.c.h.b16 %v6379
  %v7922 = vunpack.c.l.b16 %v6380
  %v7923 = vunpack.c.h.b16 %v6380
  %v7924 = vunpack.c.l.b16 %v6381
  %v7925 = vunpack.c.h.b16 %v6381
  %v7926 = vunpack.c.l.b16 %v6382
  %v7927 = vunpack.c.h.b16 %v6382
  %v7928 = vunpack.c.l.b16 %v6383
  %v7929 = vunpack.c.h.b16 %v6383
  %v7930 = vunpack.c.l.b16 %v6384
  %v7931 = vunpack.c.h.b16 %v6384
  %v7932 = vunpack.c.l.b16 %v6385
  %v7933 = vunpack.c.h.b16 %v6385
  %v7934 = vunpack.c.l.b16 %v6386
  %v7935 = vunpack.c.h.b16 %v6386
  %v7936 = vunpack.c.l.b16 %v6387
  %v7937 = vunpack.c.h.b16 %v6387
  %v7938 = vunpack.c.l.b16 %v6388
  %v7939 = vunpack.c.h.b16 %v6388
  %v7940 = vunpack.c.l.b16 %v6389
  %v7941 = vunpack.c.h.b16 %v6389
  %v7942 = vunpack.c.l.b16 %v6390
  %v7943 = vunpack.c.h.b16 %v6390
  %v7944 = vunpack.c.l.b16 %v6391
  %v7945 = vunpack.c.h.b16 %v6391
  %v7946 = vunpack.c.l.b16 %v6392
  %v7947 = vunpack.c.h.b16 %v6392
  %v7948 = vunpack.c.l.b16 %v6393
  %v7949 = vunpack.c.h.b16 %v6393
  %v7950 = vunpack.c.l.b16 %v6394
  %v7951 = vunpack.c.h.b16 %v6394
  %v7952 = vunpack.c.l.b16 %v6395
  %v7953 = vunpack.c.h.b16 %v6395
  %v7954 = vunpack.c.l.b16 %v6396
  %v7955 = vunpack.c.h.b16 %v6396
  %v7956 = vunpack.c.l.b16 %v6397
  %v7957 = vunpack.c.h.b16 %v6397
  %v7958 = vunpack.c.l.b16 %v6398
  %v7959 = vunpack.c.h.b16 %v6398
  %v7960 = vunpack.c.l.b16 %v6399
  %v7961 = vunpack.c.h.b16 %v6399
  %v7962 = vunpack.c.l.b16 %v6400
  %v7963 = vunpack.c.h.b16 %v6400
  %v7964 = vunpack.c.l.b16 %v6401
  %v7965 = vunpack.c.h.b16 %v6401
  %v7966 = vunpack.c.l.b16 %v6402
  %v7967 = vunpack.c.h.b16 %v6402
  %v7968 = vunpack.c.l.b16 %v6403
  %v7969 = vunpack.c.h.b16 %v6403
  %v7970 = vunpack.c.l.b16 %v6404
  %v7971 = vunpack.c.h.b16 %v6404
  %v7972 = vunpack.c.l.b16 %v6405
  %v7973 = vunpack.c.h.b16 %v6405
  %v7974 = vunpack.c.l.b16 %v6406
  %v7975 = vunpack.c.h.b16 %v6406
  %v7976 = vunpack.c.l.b16 %v6407
  %v7977 = vunpack.c.h.b16 %v6407
  %v7978 = vunpack.c.l.b16 %v6408
  %v7979 = vunpack.c.h.b16 %v6408
  %v7980 = vunpack.c.l.b16 %v6409
  %v7981 = vunpack.c.h.b16 %v6409
  %v7982 = vunpack.c.l.b16 %v6410
  %v7983 = vunpack.c.h.b16 %v6410
  %v7984 = vunpack.c.l.b16 %v6411
  %v7985 = vunpack.c.h.b16 %v6411
  %v7986 = vunpack.c.l.b16 %v6412
  %v7987 = vunpack.c.h.b16 %v6412
  %v7988 = vunpack.c.l.b16 %v6413
  %v7989 = vunpack.c.h.b16 %v6413
  %v7990 = vunpack.c.l.b16 %v6414
  %v7991 = vunpack.c.h.b16 %v6414
  %v7992 = vunpack.c.l.b16 %v6415
  %v7993 = vunpack.c.h.b16 %v6415
  %v7994 = vunpack.c.l.b16 %v6416
  %v7995 = vunpack.c.h.b16 %v6416
  %v7996 = vunpack.c.l.b16 %v6417
  %v7997 = vunpack.c.h.b16 %v6417
  %v7998 = vunpack.c.l.b16 %v6418
  %v7999 = vunpack.c.h.b16 %v6418
  %v8000 = vunpack.c.l.b16 %v6419
  %v8001 = vunpack.c.h.b16 %v6419
  %v8002 = vunpack.c.l.b16 %v6420
  %v8003 = vunpack.c.h.b16 %v6420
  %v8004 = vunpack.c.l.b16 %v6421
  %v8005 = vunpack.c.h.b16 %v6421
  %v8006 = vunpack.c.l.b16 %v6422
  %v8007 = vunpack.c.h.b16 %v6422
  %v8008 = vunpack.c.l.b16 %v6423
  %v8009 = vunpack.c.h.b16 %v6423
  %v8010 = vunpack.c.l.b16 %v6424
  %v8011 = vunpack.c.h.b16 %v6424
  %v8012 = vunpack.c.l.b16 %v6425
  %v8013 = vunpack.c.h.b16 %v6425
  %v8014 = vunpack.c.l.b16 %v6426
  %v8015 = vunpack.c.h.b16 %v6426
  %v8016 = vunpack.c.l.b16 %v6427
  %v8017 = vunpack.c.h.b16 %v6427
  %v8018 = vunpack.c.l.b16 %v6428
  %v8019 = vunpack.c.h.b16 %v6428
  %v8020 = vunpack.c.l.b16 %v6429
  %v8021 = vunpack.c.h.b16 %v6429
  %v8022 = vunpack.c.l.b16 %v6430
  %v8023 = vunpack.c.h.b16 %v6430
  %v8024 = vunpack.c.l.b16 %v6431
  %v8025 = vunpack.c.h.b16 %v6431
  %v8026 = vunpack.c.l.b16 %v6432
  %v8027 = vunpack.c.h.b16 %v6432
  %v8028 = vunpack.c.l.b16 %v6433
  %v8029 = vunpack.c.h.b16 %v6433
  %v8030 = vunpack.c.l.b16 %v6434
  %v8031 = vunpack.c.h.b16 %v6434
  %v8032 = vunpack.c.l.b16 %v6435
  %v8033 = vunpack.c.h.b16 %v6435
  %v8034 = vunpack.c.l.b16 %v6436
  %v8035 = vunpack.c.h.b16 %v6436
  %v8036 = vunpack.c.l.b16 %v6437
  %v8037 = vunpack.c.h.b16 %v6437
  %v8038 = vunpack.c.l.b16 %v6438
  %v8039 = vunpack.c.h.b16 %v6438
  %v8040 = vunpack.c.l.b16 %v6439
  %v8041 = vunpack.c.h.b16 %v6439
  %v8042 = vunpack.c.l.b16 %v6440
  %v8043 = vunpack.c.h.b16 %v6440
  %v8044 = vunpack.c.l.b16 %v6441
  %v8045 = vunpack.c.h.b16 %v6441
  %v8046 = vunpack.c.l.b16 %v6442
  %v8047 = vunpack.c.h.b16 %v6442
  %v8048 = vunpack.c.l.b16 %v6443
  %v8049 = vunpack.c.h.b16 %v6443
  %v8050 = vunpack.c.l.b16 %v6444
  %v8051 = vunpack.c.h.b16 %v6444
  %v8052 = vunpack.c.l.b16 %v6445
  %v8053 = vunpack.c.h.b16 %v6445
  %v8054 = vunpack.c.l.b16 %v6446
  %v8055 = vunpack.c.h.b16 %v6446
  %v8056 = vunpack.c.l.b16 %v6447
  %v8057 = vunpack.c.h.b16 %v6447
  %v8058 = vunpack.c.l.b16 %v6448
  %v8059 = vunpack.c.h.b16 %v6448
  %v8060 = vunpack.c.l.b16 %v6449
  %v8061 = vunpack.c.h.b16 %v6449
  %v8062 = vunpack.c.l.b16 %v6450
  %v8063 = vunpack.c.h.b16 %v6450
  %v8064 = vunpack.c.l.b16 %v6451
  %v8065 = vunpack.c.h.b16 %v6451
  %v8066 = vunpack.c.l.b16 %v6452
  %v8067 = vunpack.c.h.b16 %v6452
  %v8068 = vunpack.c.l.b16 %v6453
  %v8069 = vunpack.c.h.b16 %v6453
  %v8070 = vunpack.c.l.b16 %v6454
  %v8071 = vunpack.c.h.b16 %v6454
  %v8072 = vunpack.c.l.b16 %v6455
  %v8073 = vunpack.c.h.b16 %v6455
  %v8074 = vunpack.c.l.b16 %v6456
  %v8075 = vunpack.c.h.b16 %v6456
  %v8076 = vunpack.c.l.b16 %v6457
  %v8077 = vunpack.c.h.b16 %v6457
  %v8078 = vunpack.c.l.b16 %v6458
  %v8079 = vunpack.c.h.b16 %v6458
  %v8080 = vunpack.c.l.b16 %v6459
  %v8081 = vunpack.c.h.b16 %v6459
  %v8082 = vunpack.c.l.b16 %v6460
  %v8083 = vunpack.c.h.b16 %v6460
  %v8084 = vunpack.c.l.b16 %v6461
  %v8085 = vunpack.c.h.b16 %v6461
  %v8086 = vunpack.c.l.b16 %v6462
  %v8087 = vunpack.c.h.b16 %v6462
  %v8088 = vunpack.c.l.b16 %v6463
  %v8089 = vunpack.c.h.b16 %v6463
  %v8090 = vunpack.c.l.b16 %v6464
  %v8091 = vunpack.c.h.b16 %v6464
  %v8092 = vunpack.c.l.b16 %v6465
  %v8093 = vunpack.c.h.b16 %v6465
  %v8094 = vunpack.c.l.b16 %v6466
  %v8095 = vunpack.c.h.b16 %v6466
  %v8096 = vunpack.c.l.b16 %v6467
  %v8097 = vunpack.c.h.b16 %v6467
  %v8098 = vunpack.c.l.b16 %v6468
  %v8099 = vunpack.c.h.b16 %v6468
  %v8100 = vunpack.c.l.b16 %v6469
  %v8101 = vunpack.c.h.b16 %v6469
  %v8102 = vunpack.c.l.b16 %v6470
  %v8103 = vunpack.c.h.b16 %v6470
  %v8104 = vunpack.c.l.b16 %v6471
  %v8105 = vunpack.c.h.b16 %v6471
  %v8106 = vunpack.c.l.b16 %v6472
  %v8107 = vunpack.c.h.b16 %v6472
  %v8108 = vunpack.c.l.b16 %v6473
  %v8109 = vunpack.c.h.b16 %v6473
  %v8110 = vunpack.c.l.b16 %v6474
  %v8111 = vunpack.c.h.b16 %v6474
  %v8112 = vunpack.c.l.b16 %v6475
  %v8113 = vunpack.c.h.b16 %v6475
  %v8114 = vunpack.c.l.b16 %v6476
  %v8115 = vunpack.c.h.b16 %v6476
  %v8116 = vunpack.c.l.b16 %v6477
  %v8117 = vunpack.c.h.b16 %v6477
  %v8118 = vunpack.c.l.b16 %v6478
  %v8119 = vunpack.c.h.b16 %v6478
  %v8120 = vunpack.c.l.b16 %v6479
  %v8121 = vunpack.c.h.b16 %v6479
  %v8122 = vunpack.c.l.b16 %v6480
  %v8123 = vunpack.c.h.b16 %v6480
  %v8124 = vunpack.c.l.b16 %v6481
  %v8125 = vunpack.c.h.b16 %v6481
  %v8126 = vunpack.c.l.b16 %v6482
  %v8127 = vunpack.c.h.b16 %v6482
  %v8128 = vunpack.c.l.b16 %v6483
  %v8129 = vunpack.c.h.b16 %v6483
  %v8130 = vunpack.c.l.b16 %v6484
  %v8131 = vunpack.c.h.b16 %v6484
  %v8132 = vunpack.c.l.b16 %v6485
  %v8133 = vunpack.c.h.b16 %v6485
  %v8134 = vunpack.c.l.b16 %v6486
  %v8135 = vunpack.c.h.b16 %v6486
  %v8136 = vunpack.c.l.b16 %v6487
  %v8137 = vunpack.c.h.b16 %v6487
  %v8138 = vunpack.c.l.b16 %v6488
  %v8139 = vunpack.c.h.b16 %v6488
  %v8140 = vunpack.c.l.b16 %v6489
  %v8141 = vunpack.c.h.b16 %v6489
  %v8142 = vunpack.c.l.b16 %v6490
  %v8143 = vunpack.c.h.b16 %v6490
  %v8144 = vunpack.c.l.b16 %v6491
  %v8145 = vunpack.c.h.b16 %v6491
  %v8146 = vunpack.c.l.b16 %v6492
  %v8147 = vunpack.c.h.b16 %v6492
  %v8148 = vunpack.c.l.b16 %v6493
  %v8149 = vunpack.c.h.b16 %v6493
  %v8150 = vunpack.c.l.b16 %v6494
  %v8151 = vunpack.c.h.b16 %v6494
  %v8152 = vunpack.c.l.b16 %v6495
  %v8153 = vunpack.c.h.b16 %v6495
  %v8154 = vunpack.c.l.b16 %v6496
  %v8155 = vunpack.c.h.b16 %v6496
  %v8156 = vunpack.c.l.b16 %v6497
  %v8157 = vunpack.c.h.b16 %v6497
  %v8158 = vunpack.c.l.b16 %v6498
  %v8159 = vunpack.c.h.b16 %v6498
  %v8160 = vunpack.c.l.b16 %v6499
  %v8161 = vunpack.c.h.b16 %v6499
  %v8162 = vunpack.c.l.b16 %v6500
  %v8163 = vunpack.c.h.b16 %v6500
  %v8164 = vunpack.c.l.b16 %v6501
  %v8165 = vunpack.c.h.b16 %v6501
  %v8166 = vunpack.c.l.b16 %v6502
  %v8167 = vunpack.c.h.b16 %v6502
  %v8168 = vunpack.c.l.b16 %v6503
  %v8169 = vunpack.c.h.b16 %v6503
  %v8170 = vunpack.c.l.b16 %v6504
  %v8171 = vunpack.c.h.b16 %v6504
  %v8172 = vunpack.c.l.b16 %v6505
  %v8173 = vunpack.c.h.b16 %v6505
  %v8174 = vunpack.c.l.b16 %v6506
  %v8175 = vunpack.c.h.b16 %v6506
  %v8176 = vunpack.c.l.b16 %v6507
  %v8177 = vunpack.c.h.b16 %v6507
  %v8178 = vunpack.c.l.b16 %v6508
  %v8179 = vunpack.c.h.b16 %v6508
  %v8180 = vunpack.c.l.b16 %v6509
  %v8181 = vunpack.c.h.b16 %v6509
  %v8182 = vunpack.c.l.b16 %v6510
  %v8183 = vunpack.c.h.b16 %v6510
  %v8184 = vunpack.c.l.b16 %v6511
  %v8185 = vunpack.c.h.b16 %v6511
  %v8186 = vunpack.c.l.b16 %v6512
  %v8187 = vunpack.c.h.b16 %v6512
  %v8188 = vunpack.c.l.b16 %v6513
  %v8189 = vunpack.c.h.b16 %v6513
  %v8190 = vunpack.c.l.b16 %v6514
  %v8191 = vunpack.c.h.b16 %v6514
  %v8192 = vunpack.c.l.b16 %v6515
  %v8193 = vunpack.c.h.b16 %v6515
  %v8194 = vunpack.c.l.b16 %v6516
  %v8195 = vunpack.c.h.b16 %v6516
  %v8196 = vunpack.c.l.b16 %v6517
  %v8197 = vunpack.c.h.b16 %v6517
  %v8198 = vunpack.c.l.b16 %v6518
  %v8199 = vunpack.c.h.b16 %v6518
  %v8200 = vunpack.c.l.b16 %v6519
  %v8201 = vunpack.c.h.b16 %v6519
  %v8202 = vunpack.c.l.b16 %v6520
  %v8203 = vunpack.c.h.b16 %v6520
  %v8204 = vunpack.c.l.b16 %v6521
  %v8205 = vunpack.c.h.b16 %v6521
  %v8206 = vunpack.c.l.b16 %v6522
  %v8207 = vunpack.c.h.b16 %v6522
  %v8208 = vunpack.c.l.b16 %v6523
  %v8209 = vunpack.c.h.b16 %v6523
  %v8210 = vunpack.c.l.b16 %v6524
  %v8211 = vunpack.c.h.b16 %v6524
  %v8212 = vunpack.c.l.b16 %v6525
  %v8213 = vunpack.c.h.b16 %v6525
  %v8214 = vunpack.c.l.b16 %v6526
  %v8215 = vunpack.c.h.b16 %v6526
  %v8216 = vunpack.c.l.b16 %v6527
  %v8217 = vunpack.c.h.b16 %v6527
  %v8218 = vunpack.c.l.b16 %v6528
  %v8219 = vunpack.c.h.b16 %v6528
  %v8220 = vunpack.c.l.b16 %v6529
  %v8221 = vunpack.c.h.b16 %v6529
  %v8222 = vunpack.c.l.b16 %v6530
  %v8223 = vunpack.c.h.b16 %v6530
  %v8224 = vunpack.c.l.b16 %v6531
  %v8225 = vunpack.c.h.b16 %v6531
  %v8226 = vunpack.c.l.b16 %v6532
  %v8227 = vunpack.c.h.b16 %v6532
  %v8228 = vunpack.c.l.b16 %v6533
  %v8229 = vunpack.c.h.b16 %v6533
  %v8230 = vunpack.c.l.b16 %v6534
  %v8231 = vunpack.c.h.b16 %v6534
  %v8232 = vunpack.c.l.b16 %v6535
  %v8233 = vunpack.c.h.b16 %v6535
  %v8234 = vunpack.c.l.b16 %v6536
  %v8235 = vunpack.c.h.b16 %v6536
  %v8236 = vunpack.c.l.b16 %v6537
  %v8237 = vunpack.c.h.b16 %v6537
  %v8238 = vunpack.c.l.b16 %v6538
  %v8239 = vunpack.c.h.b16 %v6538
  %v8240 = vunpack.c.l.b16 %v6539
  %v8241 = vunpack.c.h.b16 %v6539
  %v8242 = vunpack.c.l.b16 %v6540
  %v8243 = vunpack.c.h.b16 %v6540
  %v8244 = vunpack.c.l.b16 %v6541
  %v8245 = vunpack.c.h.b16 %v6541
  %v8246 = vunpack.c.l.b16 %v6542
  %v8247 = vunpack.c.h.b16 %v6542
  %v8248 = vunpack.c.l.b16 %v6543
  %v8249 = vunpack.c.h.b16 %v6543
  %v8250 = vunpack.c.l.b16 %v6544
  %v8251 = vunpack.c.h.b16 %v6544
  %v8252 = vunpack.c.l.b16 %v6545
  %v8253 = vunpack.c.h.b16 %v6545
  %v8254 = vunpack.c.l.b16 %v6546
  %v8255 = vunpack.c.h.b16 %v6546
  %v8256 = vunpack.c.l.b16 %v6547
  %v8257 = vunpack.c.h.b16 %v6547
  %v8258 = vunpack.c.l.b16 %v6548
  %v8259 = vunpack.c.h.b16 %v6548
  %v8260 = vunpack.c.l.b16 %v6549
  %v8261 = vunpack.c.h.b16 %v6549
  %v8262 = vunpack.c.l.b16 %v6550
  %v8263 = vunpack.c.h.b16 %v6550
  %v8264 = vunpack.c.l.b16 %v6551
  %v8265 = vunpack.c.h.b16 %v6551
  %v8266 = vunpack.c.l.b16 %v6552
  %v8267 = vunpack.c.h.b16 %v6552
  %v8268 = vunpack.c.l.b16 %v6553
  %v8269 = vunpack.c.h.b16 %v6553
  %v8270 = vunpack.c.l.b16 %v6554
  %v8271 = vunpack.c.h.b16 %v6554
  %v8272 = vunpack.c.l.b16 %v6555
  %v8273 = vunpack.c.h.b16 %v6555
  %v8274 = vunpack.c.l.b16 %v6556
  %v8275 = vunpack.c.h.b16 %v6556
  %v8276 = vunpack.c.l.b16 %v6557
  %v8277 = vunpack.c.h.b16 %v6557
  %v8278 = vunpack.c.l.b16 %v6558
  %v8279 = vunpack.c.h.b16 %v6558
  %v8280 = vunpack.c.l.b16 %v6559
  %v8281 = vunpack.c.h.b16 %v6559
  %v8282 = vunpack.c.l.b16 %v6560
  %v8283 = vunpack.c.h.b16 %v6560
  %v8284 = vunpack.c.l.b16 %v6561
  %v8285 = vunpack.c.h.b16 %v6561
  %v8286 = vunpack.c.l.b16 %v6562
  %v8287 = vunpack.c.h.b16 %v6562
  %v8288 = vunpack.c.l.b16 %v6563
  %v8289 = vunpack.c.h.b16 %v6563
  %v8290 = vunpack.c.l.b16 %v6564
  %v8291 = vunpack.c.h.b16 %v6564
  %v8292 = vunpack.c.l.b16 %v6565
  %v8293 = vunpack.c.h.b16 %v6565
  %v8294 = vunpack.c.l.b16 %v6566
  %v8295 = vunpack.c.h.b16 %v6566
  %v8296 = vunpack.c.l.b16 %v6567
  %v8297 = vunpack.c.h.b16 %v6567
  %v8298 = vunpack.c.l.b16 %v6568
  %v8299 = vunpack.c.h.b16 %v6568
  %v8300 = vunpack.c.l.b16 %v6569
  %v8301 = vunpack.c.h.b16 %v6569
  %v8302 = vunpack.c.l.b16 %v6570
  %v8303 = vunpack.c.h.b16 %v6570
  %v8304 = vunpack.c.l.b16 %v6571
  %v8305 = vunpack.c.h.b16 %v6571
  %v8306 = vunpack.c.l.b16 %v6572
  %v8307 = vunpack.c.h.b16 %v6572
  %v8308 = vunpack.c.l.b16 %v6573
  %v8309 = vunpack.c.h.b16 %v6573
  %v8310 = vunpack.c.l.b16 %v6574
  %v8311 = vunpack.c.h.b16 %v6574
  %v8312 = vunpack.c.l.b16 %v6575
  %v8313 = vunpack.c.h.b16 %v6575
  %v8314 = vunpack.c.l.b16 %v6576
  %v8315 = vunpack.c.h.b16 %v6576
  %v8316 = vunpack.c.l.b16 %v6577
  %v8317 = vunpack.c.h.b16 %v6577
  %v8318 = vunpack.c.l.b16 %v6578
  %v8319 = vunpack.c.h.b16 %v6578
  %v8320 = vunpack.c.l.b16 %v6579
  %v8321 = vunpack.c.h.b16 %v6579
  %v8322 = vunpack.c.l.b16 %v6580
  %v8323 = vunpack.c.h.b16 %v6580
  %v8324 = vunpack.c.l.b16 %v6581
  %v8325 = vunpack.c.h.b16 %v6581
  %v8326 = vunpack.c.l.b16 %v6582
  %v8327 = vunpack.c.h.b16 %v6582
  %v8328 = vunpack.c.l.b16 %v6583
  %v8329 = vunpack.c.h.b16 %v6583
  %v8330 = vunpack.c.l.b16 %v6584
  %v8331 = vunpack.c.h.b16 %v6584
  %v8332 = vunpack.c.l.b16 %v6585
  %v8333 = vunpack.c.h.b16 %v6585
  %v8334 = vunpack.c.l.b16 %v6586
  %v8335 = vunpack.c.h.b16 %v6586
  %v8336 = vunpack.c.l.b16 %v6587
  %v8337 = vunpack.c.h.b16 %v6587
  %v8338 = vpack.c.b16 %v7190, %v7186
  %v8339 = vpack.c.b16 %v7191, %v7187
  %v8340 = vpack.c.b16 %v7192, %v7188
  %v8341 = vpack.c.b16 %v7193, %v7189
  %v8342 = vpack.c.b16 %v7198, %v7194
  %v8343 = vpack.c.b16 %v7199, %v7195
  %v8344 = vpack.c.b16 %v7200, %v7196
  %v8345 = vpack.c.b16 %v7201, %v7197
  %v8346 = vpack.c.b16 %v7206, %v7202
  %v8347 = vpack.c.b16 %v7207, %v7203
  %v8348 = vpack.c.b16 %v7208, %v7204
  %v8349 = vpack.c.b16 %v7209, %v7205
  %v8350 = vpack.c.b16 %v7214, %v7210
  %v8351 = vpack.c.b16 %v7215, %v7211
  %v8352 = vpack.c.b16 %v7216, %v7212
  %v8353 = vpack.c.b16 %v7217, %v7213
  %v8354 = vpack.c.b16 %v7222, %v7218
  %v8355 = vpack.c.b16 %v7223, %v7219
  %v8356 = vpack.c.b16 %v7224, %v7220
  %v8357 = vpack.c.b16 %v7225, %v7221
  %v8358 = vpack.c.b16 %v7230, %v7226
  %v8359 = vpack.c.b16 %v7231, %v7227
  %v8360 = vpack.c.b16 %v7232, %v7228
  %v8361 = vpack.c.b16 %v7233, %v7229
  %v8362 = vpack.c.b16 %v7238, %v7234
  %v8363 = vpack.c.b16 %v7239, %v7235
  %v8364 = vpack.c.b16 %v7240, %v7236
  %v8365 = vpack.c.b16 %v7241, %v7237
  %v8366 = vpack.c.b16 %v7246, %v7242
  %v8367 = vpack.c.b16 %v7247, %v7243
  %v8368 = vpack.c.b16 %v7248, %v7244
  %v8369 = vpack.c.b16 %v7249, %v7245
  %v8370 = vpack.c.b16 %v7254, %v7250
  %v8371 = vpack.c.b16 %v7255, %v7251
  %v8372 = vpack.c.b16 %v7256, %v7252
  %v8373 = vpack.c.b16 %v7257, %v7253
  %v8374 = vpack.c.b16 %v7262, %v7258
  %v8375 = vpack.c.b16 %v7263, %v7259
  %v8376 = vpack.c.b16 %v7264, %v7260
  %v8377 = vpack.c.b16 %v7265, %v7261
  %v8378 = vpack.c.b16 %v7270, %v7266
  %v8379 = vpack.c.b16 %v7271, %v7267
  %v8380 = vpack.c.b16 %v7272, %v7268
  %v8381 = vpack.c.b16 %v7273, %v7269
  %v8382 = vpack.c.b16 %v7278, %v7274
  %v8383 = vpack.c.b16 %v7279, %v7275
  %v8384 = vpack.c.b16 %v7280, %v7276
  %v8385 = vpack.c.b16 %v7281, %v7277
  %v8386 = vpack.c.b16 %v7286, %v7282
  %v8387 = vpack.c.b16 %v7287, %v7283
  %v8388 = vpack.c.b16 %v7288, %v7284
  %v8389 = vpack.c.b16 %v7289, %v7285
  %v8390 = vpack.c.b16 %v7294, %v7290
  %v8391 = vpack.c.b16 %v7295, %v7291
  %v8392 = vpack.c.b16 %v7296, %v7292
  %v8393 = vpack.c.b16 %v7297, %v7293
  %v8394 = vpack.c.b16 %v7302, %v7298
  %v8395 = vpack.c.b16 %v7303, %v7299
  %v8396 = vpack.c.b16 %v7304, %v7300
  %v8397 = vpack.c.b16 %v7305, %v7301
  %v8398 = vpack.c.b16 %v7310, %v7306
  %v8399 = vpack.c.b16 %v7311, %v7307
  %v8400 = vpack.c.b16 %v7312, %v7308
  %v8401 = vpack.c.b16 %v7313, %v7309
  %v8402 = vpack.c.b16 %v7318, %v7314
  %v8403 = vpack.c.b16 %v7319, %v7315
  %v8404 = vpack.c.b16 %v7320, %v7316
  %v8405 = vpack.c.b16 %v7321, %v7317
  %v8406 = vpack.c.b16 %v7326, %v7322
  %v8407 = vpack.c.b16 %v7327, %v7323
  %v8408 = vpack.c.b16 %v7328, %v7324
  %v8409 = vpack.c.b16 %v7329, %v7325
  %v8410 = vpack.c.b16 %v7334, %v7330
  %v8411 = vpack.c.b16 %v7335, %v7331
  %v8412 = vpack.c.b16 %v7336, %v7332
  %v8413 = vpack.c.b16 %v7337, %v7333
  %v8414 = vpack.c.b16 %v7342, %v7338
  %v8415 = vpack.c.b16 %v7343, %v7339
  %v8416 = vpack.c.b16 %v7344, %v7340
  %v8417 = vpack.c.b16 %v7345, %v7341
  %v8418 = vpack.c.b16 %v7350, %v7346
  %v8419 = vpack.c.b16 %v7351, %v7347
  %v8420 = vpack.c.b16 %v7352, %v7348
  %v8421 = vpack.c.b16 %v7353, %v7349
  %v8422 = vpack.c.b16 %v7358, %v7354
  %v8423 = vpack.c.b16 %v7359, %v7355
  %v8424 = vpack.c.b16 %v7360, %v7356
  %v8425 = vpack.c.b16 %v7361, %v7357
  %v8426 = vpack.c.b16 %v7366, %v7362
  %v8427 = vpack.c.b16 %v7367, %v7363
  %v8428 = vpack.c.b16 %v7368, %v7364
  %v8429 = vpack.c.b16 %v7369, %v7365
  %v8430 = vpack.c.b16 %v7374, %v7370
  %v8431 = vpack.c.b16 %v7375, %v7371
  %v8432 = vpack.c.b16 %v7376, %v7372
  %v8433 = vpack.c.b16 %v7377, %v7373
  %v8434 = vpack.c.b16 %v7382, %v7378
  %v8435 = vpack.c.b16 %v7383, %v7379
  %v8436 = vpack.c.b16 %v7384, %v7380
  %v8437 = vpack.c.b16 %v7385, %v7381
  %v8438 = vpack.c.b16 %v7390, %v7386
  %v8439 = vpack.c.b16 %v7391, %v7387
  %v8440 = vpack.c.b16 %v7392, %v7388
  %v8441 = vpack.c.b16 %v7393, %v7389
  %v8442 = vpack.c.b16 %v7398, %v7394
  %v8443 = vpack.c.b16 %v7399, %v7395
  %v8444 = vpack.c.b16 %v7400, %v7396
  %v8445 = vpack.c.b16 %v7401, %v7397
  %v8446 = vpack.c.b16 %v7406, %v7402
  %v8447 = vpack.c.b16 %v7407, %v7403
  %v8448 = vpack.c.b16 %v7408, %v7404
  %v8449 = vpack.c.b16 %v7409, %v7405
  %v8450 = vpack.c.b16 %v7414, %v7410
  %v8451 = vpack.c.b16 %v7415, %v7411
  %v8452 = vpack.c.b16 %v7416, %v7412
  %v8453 = vpack.c.b16 %v7417, %v7413
  %v8454 = vpack.c.b16 %v7422, %v7418
  %v8455 = vpack.c.b16 %v7423, %v7419
  %v8456 = vpack.c.b16 %v7424, %v7420
  %v8457 = vpack.c.b16 %v7425, %v7421
  %v8458 = vpack.c.b16 %v7430, %v7426
  %v8459 = vpack.c.b16 %v7431, %v7427
  %v8460 = vpack.c.b16 %v7432, %v7428
  %v8461 = vpack.c.b16 %v7433, %v7429
  %v8462 = vpack.c.b16 %v7438, %v7434
  %v8463 = vpack.c.b16 %v7439, %v7435
  %v8464 = vpack.c.b16 %v7440, %v7436
  %v8465 = vpack.c.b16 %v7441, %v7437
  %v8466 = vpack.c.b16 %v7446, %v7442
  %v8467 = vpack.c.b16 %v7447, %v7443
  %v8468 = vpack.c.b16 %v7448, %v7444
  %v8469 = vpack.c.b16 %v7449, %v7445
  %v8470 = vpack.c.b16 %v7454, %v7450
  %v8471 = vpack.c.b16 %v7455, %v7451
  %v8472 = vpack.c.b16 %v7456, %v7452
  %v8473 = vpack.c.b16 %v7457, %v7453
  %v8474 = vpack.c.b16 %v7462, %v7458
  %v8475 = vpack.c.b16 %v7463, %v7459
  %v8476 = vpack.c.b16 %v7464, %v7460
  %v8477 = vpack.c.b16 %v7465, %v7461
  %v8478 = vpack.c.b16 %v7470, %v7466
  %v8479 = vpack.c.b16 %v7471, %v7467
  %v8480 = vpack.c.b16 %v7472, %v7468
  %v8481 = vpack.c.b16 %v7473, %v7469
  %v8482 = vpack.c.b16 %v7478, %v7474
  %v8483 = vpack.c.b16 %v7479, %v7475
  %v8484 = vpack.c.b16 %v7480, %v7476
  %v8485 = vpack.c.b16 %v7481, %v7477
  %v8486 = vpack.c.b16 %v7486, %v7482
  %v8487 = vpack.c.b16 %v7487, %v7483
  %v8488 = vpack.c.b16 %v7488, %v7484
  %v8489 = vpack.c.b16 %v7489, %v7485
  %v8490 = vpack.c.b16 %v7494, %v7490
  %v8491 = vpack.c.b16 %v7495, %v7491
  %v8492 = vpack.c.b16 %v7496, %v7492
  %v8493 = vpack.c.b16 %v7497, %v7493
  %v8494 = vpack.c.b16 %v7502, %v7498
  %v8495 = vpack.c.b16 %v7503, %v7499
  %v8496 = vpack.c.b16 %v7504, %v7500
  %v8497 = vpack.c.b16 %v7505, %v7501
  %v8498 = vpack.c.b16 %v7510, %v7506
  %v8499 = vpack.c.b16 %v7511, %v7507
  %v8500 = vpack.c.b16 %v7512, %v7508
  %v8501 = vpack.c.b16 %v7513, %v7509
  %v8502 = vpack.c.b16 %v7518, %v7514
  %v8503 = vpack.c.b16 %v7519, %v7515
  %v8504 = vpack.c.b16 %v7520, %v7516
  %v8505 = vpack.c.b16 %v7521, %v7517
  %v8506 = vpack.c.b16 %v7526, %v7522
  %v8507 = vpack.c.b16 %v7527, %v7523
  %v8508 = vpack.c.b16 %v7528, %v7524
  %v8509 = vpack.c.b16 %v7529, %v7525
  %v8510 = vpack.c.b16 %v7534, %v7530
  %v8511 = vpack.c.b16 %v7535, %v7531
  %v8512 = vpack.c.b16 %v7536, %v7532
  %v8513 = vpack.c.b16 %v7537, %v7533
  %v8514 = vpack.c.b16 %v7542, %v7538
  %v8515 = vpack.c.b16 %v7543, %v7539
  %v8516 = vpack.c.b16 %v7544, %v7540
  %v8517 = vpack.c.b16 %v7545, %v7541
  %v8518 = vpack.c.b16 %v7550, %v7546
  %v8519 = vpack.c.b16 %v7551, %v7547
  %v8520 = vpack.c.b16 %v7552, %v7548
  %v8521 = vpack.c.b16 %v7553, %v7549
  %v8522 = vpack.c.b16 %v7558, %v7554
  %v8523 = vpack.c.b16 %v7559, %v7555
  %v8524 = vpack.c.b16 %v7560, %v7556
  %v8525 = vpack.c.b16 %v7561, %v7557
  %v8526 = vpack.c.b16 %v7566, %v7562
  %v8527 = vpack.c.b16 %v7567, %v7563
  %v8528 = vpack.c.b16 %v7568, %v7564
  %v8529 = vpack.c.b16 %v7569, %v7565
  %v8530 = vpack.c.b16 %v7574, %v7570
  %v8531 = vpack.c.b16 %v7575, %v7571
  %v8532 = vpack.c.b16 %v7576, %v7572
  %v8533 = vpack.c.b16 %v7577, %v7573
  %v8534 = vpack.c.b16 %v7582, %v7578
  %v8535 = vpack.c.b16 %v7583, %v7579
  %v8536 = vpack.c.b16 %v7584, %v7580
  %v8537 = vpack.c.b16 %v7585, %v7581
  %v8538 = vpack.c.b16 %v7590, %v7586
  %v8539 = vpack.c.b16 %v7591, %v7587
  %v8540 = vpack.c.b16 %v7592, %v7588
  %v8541 = vpack.c.b16 %v7593, %v7589
  %v8542 = vpack.c.b16 %v7598, %v7594
  %v8543 = vpack.c.b16 %v7599, %v7595
  %v8544 = vpack.c.b16 %v7600, %v7596
  %v8545 = vpack.c.b16 %v7601, %v7597
  %v8546 = vpack.c.b16 %v7606, %v7602
  %v8547 = vpack.c.b16 %v7607, %v7603
  %v8548 = vpack.c.b16 %v7608, %v7604
  %v8549 = vpack.c.b16 %v7609, %v7605
  %v8550 = vpack.c.b16 %v7614, %v7610
  %v8551 = vpack.c.b16 %v7615, %v7611
  %v8552 = vpack.c.b16 %v7616, %v7612
  %v8553 = vpack.c.b16 %v7617, %v7613
  %v8554 = vpack.c.b16 %v7622, %v7618
  %v8555 = vpack.c.b16 %v7623, %v7619
  %v8556 = vpack.c.b16 %v7624, %v7620
  %v8557 = vpack.c.b16 %v7625, %v7621
  %v8558 = vpack.c.b16 %v7630, %v7626
  %v8559 = vpack.c.b16 %v7631, %v7627
  %v8560 = vpack.c.b16 %v7632, %v7628
  %v8561 = vpack.c.b16 %v7633, %v7629
  %v8562 = vpack.c.b16 %v7638, %v7634
  %v8563 = vpack.c.b16 %v7639, %v7635
  %v8564 = vpack.c.b16 %v7640, %v7636
  %v8565 = vpack.c.b16 %v7641, %v7637
  %v8566 = vpack.c.b16 %v7646, %v7642
  %v8567 = vpack.c.b16 %v7647, %v7643
  %v8568 = vpack.c.b16 %v7648, %v7644
  %v8569 = vpack.c.b16 %v7649, %v7645
  %v8570 = vpack.c.b16 %v7654, %v7650
  %v8571 = vpack.c.b16 %v7655, %v7651
  %v8572 = vpack.c.b16 %v7656, %v7652
  %v8573 = vpack.c.b16 %v7657, %v7653
  %v8574 = vpack.c.b16 %v7662, %v7658
  %v8575 = vpack.c.b16 %v7663, %v7659
  %v8576 = vpack.c.b16 %v7664, %v7660
  %v8577 = vpack.c.b16 %v7665, %v7661
  %v8578 = vpack.c.b16 %v7670, %v7666
  %v8579 = vpack.c.b16 %v7671, %v7667
  %v8580 = vpack.c.b16 %v7672, %v7668
  %v8581 = vpack.c.b16 %v7673, %v7669
  %v8582 = vpack.c.b16 %v7678, %v7674
  %v8583 = vpack.c.b16 %v7679, %v7675
  %v8584 = vpack.c.b16 %v7680, %v7676
  %v8585 = vpack.c.b16 %v7681, %v7677
  %v8586 = vpack.c.b16 %v7686, %v7682
  %v8587 = vpack.c.b16 %v7687, %v7683
  %v8588 = vpack.c.b16 %v7688, %v7684
  %v8589 = vpack.c.b16 %v7689, %v7685
  %v8590 = vpack.c.b16 %v7694, %v7690
  %v8591 = vpack.c.b16 %v7695, %v7691
  %v8592 = vpack.c.b16 %v7696, %v7692
  %v8593 = vpack.c.b16 %v7697, %v7693
  %v8594 = vpack.c.b16 %v7702, %v7698
  %v8595 = vpack.c.b16 %v7703, %v7699
  %v8596 = vpack.c.b16 %v7704, %v7700
  %v8597 = vpack.c.b16 %v7705, %v7701
  %v8598 = vpack.c.b16 %v7710, %v7706
  %v8599 = vpack.c.b16 %v7711, %v7707
  %v8600 = vpack.c.b16 %v7712, %v7708
  %v8601 = vpack.c.b16 %v7713, %v7709
  %v8602 = vpack.c.b16 %v7718, %v7714
  %v8603 = vpack.c.b16 %v7719, %v7715
  %v8604 = vpack.c.b16 %v7720, %v7716
  %v8605 = vpack.c.b16 %v7721, %v7717
  %v8606 = vpack.c.b16 %v7726, %v7722
  %v8607 = vpack.c.b16 %v7727, %v7723
  %v8608 = vpack.c.b16 %v7728, %v7724
  %v8609 = vpack.c.b16 %v7729, %v7725
  %v8610 = vpack.c.b16 %v7734, %v7730
  %v8611 = vpack.c.b16 %v7735, %v7731
  %v8612 = vpack.c.b16 %v7736, %v7732
  %v8613 = vpack.c.b16 %v7737, %v7733
  %v8614 = vpack.c.b16 %v7742, %v7738
  %v8615 = vpack.c.b16 %v7743, %v7739
  %v8616 = vpack.c.b16 %v7744, %v7740
  %v8617 = vpack.c.b16 %v7745, %v7741
  %v8618 = vpack.c.b16 %v7750, %v7746
  %v8619 = vpack.c.b16 %v7751, %v7747
  %v8620 = vpack.c.b16 %v7752, %v7748
  %v8621 = vpack.c.b16 %v7753, %v7749
  %v8622 = vpack.c.b16 %v7758, %v7754
  %v8623 = vpack.c.b16 %v7759, %v7755
  %v8624 = vpack.c.b16 %v7760, %v7756
  %v8625 = vpack.c.b16 %v7761, %v7757
  %v8626 = vpack.c.b16 %v7766, %v7762
  %v8627 = vpack.c.b16 %v7767, %v7763
  %v8628 = vpack.c.b16 %v7768, %v7764
  %v8629 = vpack.c.b16 %v7769, %v7765
  %v8630 = vpack.c.b16 %v7774, %v7770
  %v8631 = vpack.c.b16 %v7775, %v7771
  %v8632 = vpack.c.b16 %v7776, %v7772
  %v8633 = vpack.c.b16 %v7777, %v7773
  %v8634 = vpack.c.b16 %v7782, %v7778
  %v8635 = vpack.c.b16 %v7783, %v7779
  %v8636 = vpack.c.b16 %v7784, %v7780
  %v8637 = vpack.c.b16 %v7785, %v7781
  %v8638 = vpack.c.b16 %v7790, %v7786
  %v8639 = vpack.c.b16 %v7791, %v7787
  %v8640 = vpack.c.b16 %v7792, %v7788
  %v8641 = vpack.c.b16 %v7793, %v7789
  %v8642 = vpack.c.b16 %v7798, %v7794
  %v8643 = vpack.c.b16 %v7799, %v7795
  %v8644 = vpack.c.b16 %v7800, %v7796
  %v8645 = vpack.c.b16 %v7801, %v7797
  %v8646 = vpack.c.b16 %v7806, %v7802
  %v8647 = vpack.c.b16 %v7807, %v7803
  %v8648 = vpack.c.b16 %v7808, %v7804
  %v8649 = vpack.c.b16 %v7809, %v7805
  %v8650 = vpack.c.b16 %v7814, %v7810
  %v8651 = vpack.c.b16 %v7815, %v7811
  %v8652 = vpack.c.b16 %v7816, %v7812
  %v8653 = vpack.c.b16 %v7817, %v7813
  %v8654 = vpack.c.b16 %v7822, %v7818
  %v8655 = vpack.c.b16 %v7823, %v7819
  %v8656 = vpack.c.b16 %v7824, %v7820
  %v8657 = vpack.c.b16 %v7825, %v7821
  %v8658 = vpack.c.b16 %v7830, %v7826
  %v8659 = vpack.c.b16 %v7831, %v7827
  %v8660 = vpack.c.b16 %v7832, %v7828
  %v8661 = vpack.c.b16 %v7833, %v7829
  %v8662 = vpack.c.b16 %v7838, %v7834
  %v8663 = vpack.c.b16 %v7839, %v7835
  %v8664 = vpack.c.b16 %v7840, %v7836
  %v8665 = vpack.c.b16 %v7841, %v7837
  %v8666 = vpack.c.b16 %v7846, %v7842
  %v8667 = vpack.c.b16 %v7847, %v7843
  %v8668 = vpack.c.b16 %v7848, %v7844
  %v8669 = vpack.c.b16 %v7849, %v7845
  %v8670 = vpack.c.b16 %v7854, %v7850
  %v8671 = vpack.c.b16 %v7855, %v7851
  %v8672 = vpack.c.b16 %v7856, %v7852
  %v8673 = vpack.c.b16 %v7857, %v7853
  %v8674 = vpack.c.b16 %v7862, %v7858
  %v8675 = vpack.c.b16 %v7863, %v7859
  %v8676 = vpack.c.b16 %v7864, %v7860
  %v8677 = vpack.c.b16 %v7865, %v7861
  %v8678 = vpack.c.b16 %v7870, %v7866
  %v8679 = vpack.c.b16 %v7871, %v7867
  %v8680 = vpack.c.b16 %v7872, %v7868
  %v8681 = vpack.c.b16 %v7873, %v7869
  %v8682 = vpack.c.b16 %v7878, %v7874
  %v8683 = vpack.c.b16 %v7879, %v7875
  %v8684 = vpack.c.b16 %v7880, %v7876
  %v8685 = vpack.c.b16 %v7881, %v7877
  %v8686 = vpack.c.b16 %v7886, %v7882
  %v8687 = vpack.c.b16 %v7887, %v7883
  %v8688 = vpack.c.b16 %v7888, %v7884
  %v8689 = vpack.c.b16 %v7889, %v7885
  %v8690 = vpack.c.b16 %v7894, %v7890
  %v8691 = vpack.c.b16 %v7895, %v7891
  %v8692 = vpack.c.b16 %v7896, %v7892
  %v8693 = vpack.c.b16 %v7897, %v7893
  %v8694 = vpack.c.b16 %v7902, %v7898
  %v8695 = vpack.c.b16 %v7903, %v7899
  %v8696 = vpack.c.b16 %v7904, %v7900
  %v8697 = vpack.c.b16 %v7905, %v7901
  %v8698 = vpack.c.b16 %v7910, %v7906
  %v8699 = vpack.c.b16 %v7911, %v7907
  %v8700 = vpack.c.b16 %v7912, %v7908
  %v8701 = vpack.c.b16 %v7913, %v7909
  %v8702 = vpack.c.b16 %v7918, %v7914
  %v8703 = vpack.c.b16 %v7919, %v7915
  %v8704 = vpack.c.b16 %v7920, %v7916
  %v8705 = vpack.c.b16 %v7921, %v7917
  %v8706 = vpack.c.b16 %v7926, %v7922
  %v8707 = vpack.c.b16 %v7927, %v7923
  %v8708 = vpack.c.b16 %v7928, %v7924
  %v8709 = vpack.c.b16 %v7929, %v7925
  %v8710 = vpack.c.b16 %v7934, %v7930
  %v8711 = vpack.c.b16 %v7935, %v7931
  %v8712 = vpack.c.b16 %v7936, %v7932
  %v8713 = vpack.c.b16 %v7937, %v7933
  %v8714 = vpack.c.b16 %v7942, %v7938
  %v8715 = vpack.c.b16 %v7943, %v7939
  %v8716 = vpack.c.b16 %v7944, %v7940
  %v8717 = vpack.c.b16 %v7945, %v7941
  %v8718 = vpack.c.b16 %v7950, %v7946
  %v8719 = vpack.c.b16 %v7951, %v7947
  %v8720 = vpack.c.b16 %v7952, %v7948
  %v8721 = vpack.c.b16 %v7953, %v7949
  %v8722 = vpack.c.b16 %v7958, %v7954
  %v8723 = vpack.c.b16 %v7959, %v7955
  %v8724 = vpack.c.b16 %v7960, %v7956
  %v8725 = vpack.c.b16 %v7961, %v7957
  %v8726 = vpack.c.b16 %v7966, %v7962
  %v8727 = vpack.c.b16 %v7967, %v7963
  %v8728 = vpack.c.b16 %v7968, %v7964
  %v8729 = vpack.c.b16 %v7969, %v7965
  %v8730 = vpack.c.b16 %v7974, %v7970
  %v8731 = vpack.c.b16 %v7975, %v7971
  %v8732 = vpack.c.b16 %v7976, %v7972
  %v8733 = vpack.c.b16 %v7977, %v7973
  %v8734 = vpack.c.b16 %v7982, %v7978
  %v8735 = vpack.c.b16 %v7983, %v7979
  %v8736 = vpack.c.b16 %v7984, %v7980
  %v8737 = vpack.c.b16 %v7985, %v7981
  %v8738 = vpack.c.b16 %v7990, %v7986
  %v8739 = vpack.c.b16 %v7991, %v7987
  %v8740 = vpack.c.b16 %v7992, %v7988
  %v8741 = vpack.c.b16 %v7993, %v7989
  %v8742 = vpack.c.b16 %v7998, %v7994
  %v8743 = vpack.c.b16 %v7999, %v7995
  %v8744 = vpack.c.b16 %v8000, %v7996
  %v8745 = vpack.c.b16 %v8001, %v7997
  %v8746 = vpack.c.b16 %v8006, %v8002
  %v8747 = vpack.c.b16 %v8007, %v8003
  %v8748 = vpack.c.b16 %v8008, %v8004
  %v8749 = vpack.c.b16 %v8009, %v8005
  %v8750 = vpack.c.b16 %v8014, %v8010
  %v8751 = vpack.c.b16 %v8015, %v8011
  %v8752 = vpack.c.b16 %v8016, %v8012
  %v8753 = vpack.c.b16 %v8017, %v8013
  %v8754 = vpack.c.b16 %v8022, %v8018
  %v8755 = vpack.c.b16 %v8023, %v8019
  %v8756 = vpack.c.b16 %v8024, %v8020
  %v8757 = vpack.c.b16 %v8025, %v8021
  %v8758 = vpack.c.b16 %v8030, %v8026
  %v8759 = vpack.c.b16 %v8031, %v8027
  %v8760 = vpack.c.b16 %v8032, %v8028
  %v8761 = vpack.c.b16 %v8033, %v8029
  %v8762 = vpack.c.b16 %v8038, %v8034
  %v8763 = vpack.c.b16 %v8039, %v8035
  %v8764 = vpack.c.b16 %v8040, %v8036
  %v8765 = vpack.c.b16 %v8041, %v8037
  %v8766 = vpack.c.b16 %v8046, %v8042
  %v8767 = vpack.c.b16 %v8047, %v8043
  %v8768 = vpack.c.b16 %v8048, %v8044
  %v8769 = vpack.c.b16 %v8049, %v8045
  %v8770 = vpack.c.b16 %v8054, %v8050
  %v8771 = vpack.c.b16 %v8055, %v8051
  %v8772 = vpack.c.b16 %v8056, %v8052
  %v8773 = vpack.c.b16 %v8057, %v8053
  %v8774 = vpack.c.b16 %v8062, %v8058
  %v8775 = vpack.c.b16 %v8063, %v8059
  %v8776 = vpack.c.b16 %v8064, %v8060
  %v8777 = vpack.c.b16 %v8065, %v8061
  %v8778 = vpack.c.b16 %v8070, %v8066
  %v8779 = vpack.c.b16 %v8071, %v8067
  %v8780 = vpack.c.b16 %v8072, %v8068
  %v8781 = vpack.c.b16 %v8073, %v8069
  %v8782 = vpack.c.b16 %v8078, %v8074
  %v8783 = vpack.c.b16 %v8079, %v8075
  %v8784 = vpack.c.b16 %v8080, %v8076
  %v8785 = vpack.c.b16 %v8081, %v8077
  %v8786 = vpack.c.b16 %v8086, %v8082
  %v8787 = vpack.c.b16 %v8087, %v8083
  %v8788 = vpack.c.b16 %v8088, %v8084
  %v8789 = vpack.c.b16 %v8089, %v8085
  %v8790 = vpack.c.b16 %v8094, %v8090
  %v8791 = vpack.c.b16 %v8095, %v8091
  %v8792 = vpack.c.b16 %v8096, %v8092
  %v8793 = vpack.c.b16 %v8097, %v8093
  %v8794 = vpack.c.b16 %v8102, %v8098
  %v8795 = vpack.c.b16 %v8103, %v8099
  %v8796 = vpack.c.b16 %v8104, %v8100
  %v8797 = vpack.c.b16 %v8105, %v8101
  %v8798 = vpack.c.b16 %v8110, %v8106
  %v8799 = vpack.c.b16 %v8111, %v8107
  %v8800 = vpack.c.b16 %v8112, %v8108
  %v8801 = vpack.c.b16 %v8113, %v8109
  %v8802 = vpack.c.b16 %v8118, %v8114
  %v8803 = vpack.c.b16 %v8119, %v8115
  %v8804 = vpack.c.b16 %v8120, %v8116
  %v8805 = vpack.c.b16 %v8121, %v8117
  %v8806 = vpack.c.b16 %v8126, %v8122
  %v8807 = vpack.c.b16 %v8127, %v8123
  %v8808 = vpack.c.b16 %v8128, %v8124
  %v8809 = vpack.c.b16 %v8129, %v8125
  %v8810 = vpack.c.b16 %v8134, %v8130
  %v8811 = vpack.c.b16 %v8135, %v8131
  %v8812 = vpack.c.b16 %v8136, %v8132
  %v8813 = vpack.c.b16 %v8137, %v8133
  %v8814 = vpack.c.b16 %v8142, %v8138
  %v8815 = vpack.c.b16 %v8143, %v8139
  %v8816 = vpack.c.b16 %v8144, %v8140
  %v8817 = vpack.c.b16 %v8145, %v8141
  %v8818 = vpack.c.b16 %v8150, %v8146
  %v8819 = vpack.c.b16 %v8151, %v8147
  %v8820 = vpack.c.b16 %v8152, %v8148
  %v8821 = vpack.c.b16 %v8153, %v8149
  %v8822 = vpack.c.b16 %v8158, %v8154
  %v8823 = vpack.c.b16 %v8159, %v8155
  %v8824 = vpack.c.b16 %v8160, %v8156
  %v8825 = vpack.c.b16 %v8161, %v8157
  %v8826 = vpack.c.b16 %v8166, %v8162
  %v8827 = vpack.c.b16 %v8167, %v8163
  %v8828 = vpack.c.b16 %v8168, %v8164
  %v8829 = vpack.c.b16 %v8169, %v8165
  %v8830 = vpack.c.b16 %v8174, %v8170
  %v8831 = vpack.c.b16 %v8175, %v8171
  %v8832 = vpack.c.b16 %v8176, %v8172
  %v8833 = vpack.c.b16 %v8177, %v8173
  %v8834 = vpack.c.b16 %v8182, %v8178
  %v8835 = vpack.c.b16 %v8183, %v8179
  %v8836 = vpack.c.b16 %v8184, %v8180
  %v8837 = vpack.c.b16 %v8185, %v8181
  %v8838 = vpack.c.b16 %v8190, %v8186
  %v8839 = vpack.c.b16 %v8191, %v8187
  %v8840 = vpack.c.b16 %v8192, %v8188
  %v8841 = vpack.c.b16 %v8193, %v8189
  %v8842 = vpack.c.b16 %v8198, %v8194
  %v8843 = vpack.c.b16 %v8199, %v8195
  %v8844 = vpack.c.b16 %v8200, %v8196
  %v8845 = vpack.c.b16 %v8201, %v8197
  %v8846 = vpack.c.b16 %v8206, %v8202
  %v8847 = vpack.c.b16 %v8207, %v8203
  %v8848 = vpack.c.b16 %v8208, %v8204
  %v8849 = vpack.c.b16 %v8209, %v8205
  %v8850 = vpack.c.b16 %v8214, %v8210
  %v8851 = vpack.c.b16 %v8215, %v8211
  %v8852 = vpack.c.b16 %v8216, %v8212
  %v8853 = vpack.c.b16 %v8217, %v8213
  %v8854 = vpack.c.b16 %v8222, %v8218
  %v8855 = vpack.c.b16 %v8223, %v8219
  %v8856 = vpack.c.b16 %v8224, %v8220
  %v8857 = vpack.c.b16 %v8225, %v8221
  %v8858 = vpack.c.b16 %v8230, %v8226
  %v8859 = vpack.c.b16 %v8231, %v8227
  %v8860 = vpack.c.b16 %v8232, %v8228
  %v8861 = vpack.c.b16 %v8233, %v8229
  %v8862 = vpack.c.b16 %v8238, %v8234
  %v8863 = vpack.c.b16 %v8239, %v8235
  %v8864 = vpack.c.b16 %v8240, %v8236
  %v8865 = vpack.c.b16 %v8241, %v8237
  %v8866 = vpack.c.b16 %v8246, %v8242
  %v8867 = vpack.c.b16 %v8247, %v8243
  %v8868 = vpack.c.b16 %v8248, %v8244
  %v8869 = vpack.c.b16 %v8249, %v8245
  %v8870 = vpack.c.b16 %v8254, %v8250
  %v8871 = vpack.c.b16 %v8255, %v8251
  %v8872 = vpack.c.b16 %v8256, %v8252
  %v8873 = vpack.c.b16 %v8257, %v8253
  %v8874 = vpack.c.b16 %v8262, %v8258
  %v8875 = vpack.c.b16 %v8263, %v8259
  %v8876 = vpack.c.b16 %v8264, %v8260
  %v8877 = vpack.c.b16 %v8265, %v8261
  %v8878 = vpack.c.b16 %v8270, %v8266
  %v8879 = vpack.c.b16 %v8271, %v8267
  %v8880 = vpack.c.b16 %v8272, %v8268
  %v8881 = vpack.c.b16 %v8273, %v8269
  %v8882 = vpack.c.b16 %v8278, %v8274
  %v8883 = vpack.c.b16 %v8279, %v8275
  %v8884 = vpack.c.b16 %v8280, %v8276
  %v8885 = vpack.c.b16 %v8281, %v8277
  %v8886 = vpack.c.b16 %v8286, %v8282
  %v8887 = vpack.c.b16 %v8287, %v8283
  %v8888 = vpack.c.b16 %v8288, %v8284
  %v8889 = vpack.c.b16 %v8289, %v8285
  %v8890 = vpack.c.b16 %v8294, %v8290
  %v8891 = vpack.c.b16 %v8295, %v8291
  %v8892 = vpack.c.b16 %v8296, %v8292
  %v8893 = vpack.c.b16 %v8297, %v8293
  %v8894 = vpack.c.b16 %v8302, %v8298
  %v8895 = vpack.c.b16 %v8303, %v8299
  %v8896 = vpack.c.b16 %v8304, %v8300
  %v8897 = vpack.c.b16 %v8305, %v8301
  %v8898 = vpack.c.b16 %v8310, %v8306
  %v8899 = vpack.c.b16 %v8311, %v8307
  %v8900 = vpack.c.b16 %v8312, %v8308
  %v8901 = vpack.c.b16 %v8313, %v8309
  %v8902 = vpack.c.b16 %v8318, %v8314
  %v8903 = vpack.c.b16 %v8319, %v8315
  %v8904 = vpack.c.b16 %v8320, %v8316
  %v8905 = vpack.c.b16 %v8321, %v8317
  %v8906 = vpack.c.b16 %v8326, %v8322
  %v8907 = vpack.c.b16 %v8327, %v8323
  %v8908 = vpack.c.b16 %v8328, %v8324
  %v8909 = vpack.c.b16 %v8329, %v8325
  %v8910 = vpack.c.b16 %v8334, %v8330
  %v8911 = vpack.c.b16 %v8335, %v8331
  %v8912 = vpack.c.b16 %v8336, %v8332
  %v8913 = vpack.c.b16 %v8337, %v8333
  %9490 = vmatprep.subr.bf16.mxu0 %v8367
  %9491 = vmatpush1.bf16.msra.mxu0 %v8366
  %9492 = vmatprep.subr.bf16.mxu0 %v8363
  %9493 = vmatpush1.bf16.msra.mxu0 %v8362
  %9494 = vmatprep.subr.bf16.mxu0 %v8359
  %9495 = vmatpush1.bf16.msra.mxu0 %v8358
  %9496 = vmatprep.subr.bf16.mxu0 %v8355
  %9497 = vmatpush1.bf16.msra.mxu0 %v8354
  %9498 = vmatprep.subr.bf16.mxu0 %v8351
  %9499 = vmatpush1.bf16.msra.mxu0 %v8350
  %9500 = vmatprep.subr.bf16.mxu0 %v8347
  %9501 = vmatpush1.bf16.msra.mxu0 %v8346
  %9502 = vmatprep.subr.bf16.mxu0 %v8343
  %9503 = vmatpush1.bf16.msra.mxu0 %v8342
  %9504 = vmatprep.subr.bf16.mxu0 %v8339
  %9505 = vmatpush1.bf16.msra.mxu0 %v8338
  %9506 = vmatprep.subr.bf16.mxu0 %v8399
  %9507 = vmatpush2.bf16.msra.mxu0 %v8398
  %9508 = vmatprep.subr.bf16.mxu0 %v8395
  %9509 = vmatpush2.bf16.msra.mxu0 %v8394
  %9510 = vmatprep.subr.bf16.mxu0 %v8391
  %9511 = vmatpush2.bf16.msra.mxu0 %v8390
  %9512 = vmatprep.subr.bf16.mxu0 %v8387
  %9513 = vmatpush2.bf16.msra.mxu0 %v8386
  %9514 = vmatprep.subr.bf16.mxu0 %v8383
  %9515 = vmatpush2.bf16.msra.mxu0 %v8382
  %9516 = vmatprep.subr.bf16.mxu0 %v8379
  %9517 = vmatpush2.bf16.msra.mxu0 %v8378
  %9518 = vmatprep.subr.bf16.mxu0 %v8375
  %9519 = vmatpush2.bf16.msra.mxu0 %v8374
  %9520 = vmatprep.subr.bf16.mxu0 %v8371
  %9521 = vmatpush2.bf16.msra.mxu0 %v8370
  %9522 = vmatprep.mubr.bf16.mxu0 %v5995
  %9523 = vmatmul.mubr.bf16.gmra.mxu0 %v5994
  %v9524 = vpop.f32.mrf.mxu0
  %v9525 = vadd.f32 %v6593, %v9524
  %v9526 = vpop.f32.mrf.mxu0
  %v9527 = vadd.f32 %v6597, %v9526
  %v9528 = vpop.f32.mrf.mxu0
  %v9529 = vpop.f32.mrf.mxu0
  %9530 = vdwg.mxu0
  %9531 = vmatprep.subr.bf16.mxu0 %v8431
  %9532 = vmatpush1.bf16.msra.mxu0 %v8430
  %9533 = vmatprep.subr.bf16.mxu0 %v8427
  %9534 = vmatpush1.bf16.msra.mxu0 %v8426
  %9535 = vmatprep.subr.bf16.mxu0 %v8423
  %9536 = vmatpush1.bf16.msra.mxu0 %v8422
  %9537 = vmatprep.subr.bf16.mxu0 %v8419
  %9538 = vmatpush1.bf16.msra.mxu0 %v8418
  %9539 = vmatprep.subr.bf16.mxu0 %v8415
  %9540 = vmatpush1.bf16.msra.mxu0 %v8414
  %9541 = vmatprep.subr.bf16.mxu0 %v8411
  %9542 = vmatpush1.bf16.msra.mxu0 %v8410
  %9543 = vmatprep.subr.bf16.mxu0 %v8407
  %9544 = vmatpush1.bf16.msra.mxu0 %v8406
  %9545 = vmatprep.subr.bf16.mxu0 %v8403
  %9546 = vmatpush1.bf16.msra.mxu0 %v8402
  %9547 = vmatprep.subr.bf16.mxu0 %v8463
  %9548 = vmatpush2.bf16.msra.mxu0 %v8462
  %9549 = vmatprep.subr.bf16.mxu0 %v8459
  %9550 = vmatpush2.bf16.msra.mxu0 %v8458
  %9551 = vmatprep.subr.bf16.mxu0 %v8455
  %9552 = vmatpush2.bf16.msra.mxu0 %v8454
  %9553 = vmatprep.subr.bf16.mxu0 %v8451
  %9554 = vmatpush2.bf16.msra.mxu0 %v8450
  %9555 = vmatprep.subr.bf16.mxu0 %v8447
  %9556 = vmatpush2.bf16.msra.mxu0 %v8446
  %9557 = vmatprep.subr.bf16.mxu0 %v8443
  %9558 = vmatpush2.bf16.msra.mxu0 %v8442
  %9559 = vmatprep.subr.bf16.mxu0 %v8439
  %9560 = vmatpush2.bf16.msra.mxu0 %v8438
  %9561 = vmatprep.subr.bf16.mxu0 %v8435
  %9562 = vmatpush2.bf16.msra.mxu0 %v8434
  %9563 = vmatprep.mubr.bf16.mxu0 %v5997
  %9564 = vmatmul.mubr.bf16.gmra.mxu0 %v5996
  %v9565 = vpop.f32.mrf.mxu0
  %v9566 = vadd.f32 %v9525, %v9565
  %v9567 = vpop.f32.mrf.mxu0
  %v9568 = vadd.f32 %v9527, %v9567
  %v9569 = vpop.f32.mrf.mxu0
  %v9570 = vpop.f32.mrf.mxu0
  %9571 = vdwg.mxu0
  %9572 = vmatprep.subr.bf16.mxu0 %v8495
  %9573 = vmatpush1.bf16.msra.mxu0 %v8494
  %9574 = vmatprep.subr.bf16.mxu0 %v8491
  %9575 = vmatpush1.bf16.msra.mxu0 %v8490
  %9576 = vmatprep.subr.bf16.mxu0 %v8487
  %9577 = vmatpush1.bf16.msra.mxu0 %v8486
  %9578 = vmatprep.subr.bf16.mxu0 %v8483
  %9579 = vmatpush1.bf16.msra.mxu0 %v8482
  %9580 = vmatprep.subr.bf16.mxu0 %v8479
  %9581 = vmatpush1.bf16.msra.mxu0 %v8478
  %9582 = vmatprep.subr.bf16.mxu0 %v8475
  %9583 = vmatpush1.bf16.msra.mxu0 %v8474
  %9584 = vmatprep.subr.bf16.mxu0 %v8471
  %9585 = vmatpush1.bf16.msra.mxu0 %v8470
  %9586 = vmatprep.subr.bf16.mxu0 %v8467
  %9587 = vmatpush1.bf16.msra.mxu0 %v8466
  %9588 = vmatprep.subr.bf16.mxu0 %v8527
  %9589 = vmatpush2.bf16.msra.mxu0 %v8526
  %9590 = vmatprep.subr.bf16.mxu0 %v8523
  %9591 = vmatpush2.bf16.msra.mxu0 %v8522
  %9592 = vmatprep.subr.bf16.mxu0 %v8519
  %9593 = vmatpush2.bf16.msra.mxu0 %v8518
  %9594 = vmatprep.subr.bf16.mxu0 %v8515
  %9595 = vmatpush2.bf16.msra.mxu0 %v8514
  %9596 = vmatprep.subr.bf16.mxu0 %v8511
  %9597 = vmatpush2.bf16.msra.mxu0 %v8510
  %9598 = vmatprep.subr.bf16.mxu0 %v8507
  %9599 = vmatpush2.bf16.msra.mxu0 %v8506
  %9600 = vmatprep.subr.bf16.mxu0 %v8503
  %9601 = vmatpush2.bf16.msra.mxu0 %v8502
  %9602 = vmatprep.subr.bf16.mxu0 %v8499
  %9603 = vmatpush2.bf16.msra.mxu0 %v8498
  %9604 = vmatprep.mubr.bf16.mxu0 %v5999
  %9605 = vmatmul.mubr.bf16.gmra.mxu0 %v5998
  %v9606 = vpop.f32.mrf.mxu0
  %v9607 = vadd.f32 %v9566, %v9606
  %v9608 = vpop.f32.mrf.mxu0
  %v9609 = vadd.f32 %v9568, %v9608
  %v9610 = vpop.f32.mrf.mxu0
  %v9611 = vpop.f32.mrf.mxu0
  %9612 = vdwg.mxu0
  %9613 = vmatprep.subr.bf16.mxu0 %v8559
  %9614 = vmatpush1.bf16.msra.mxu0 %v8558
  %9615 = vmatprep.subr.bf16.mxu0 %v8555
  %9616 = vmatpush1.bf16.msra.mxu0 %v8554
  %9617 = vmatprep.subr.bf16.mxu0 %v8551
  %9618 = vmatpush1.bf16.msra.mxu0 %v8550
  %9619 = vmatprep.subr.bf16.mxu0 %v8547
  %9620 = vmatpush1.bf16.msra.mxu0 %v8546
  %9621 = vmatprep.subr.bf16.mxu0 %v8543
  %9622 = vmatpush1.bf16.msra.mxu0 %v8542
  %9623 = vmatprep.subr.bf16.mxu0 %v8539
  %9624 = vmatpush1.bf16.msra.mxu0 %v8538
  %9625 = vmatprep.subr.bf16.mxu0 %v8535
  %9626 = vmatpush1.bf16.msra.mxu0 %v8534
  %9627 = vmatprep.subr.bf16.mxu0 %v8531
  %9628 = vmatpush1.bf16.msra.mxu0 %v8530
  %9629 = vmatprep.subr.bf16.mxu0 %v8591
  %9630 = vmatpush2.bf16.msra.mxu0 %v8590
  %9631 = vmatprep.subr.bf16.mxu0 %v8587
  %9632 = vmatpush2.bf16.msra.mxu0 %v8586
  %9633 = vmatprep.subr.bf16.mxu0 %v8583
  %9634 = vmatpush2.bf16.msra.mxu0 %v8582
  %9635 = vmatprep.subr.bf16.mxu0 %v8579
  %9636 = vmatpush2.bf16.msra.mxu0 %v8578
  %9637 = vmatprep.subr.bf16.mxu0 %v8575
  %9638 = vmatpush2.bf16.msra.mxu0 %v8574
  %9639 = vmatprep.subr.bf16.mxu0 %v8571
  %9640 = vmatpush2.bf16.msra.mxu0 %v8570
  %9641 = vmatprep.subr.bf16.mxu0 %v8567
  %9642 = vmatpush2.bf16.msra.mxu0 %v8566
  %9643 = vmatprep.subr.bf16.mxu0 %v8563
  %9644 = vmatpush2.bf16.msra.mxu0 %v8562
  %9645 = vmatprep.mubr.bf16.mxu0 %v6001
  %9646 = vmatmul.mubr.bf16.gmra.mxu0 %v6000
  %v9647 = vpop.f32.mrf.mxu0
  %v9648 = vadd.f32 %v9607, %v9647
  %v9649 = vpop.f32.mrf.mxu0
  %v9650 = vadd.f32 %v9609, %v9649
  %v9651 = vpop.f32.mrf.mxu0
  %v9652 = vpop.f32.mrf.mxu0
  %9653 = vdwg.mxu0
  %9654 = vmatprep.subr.bf16.mxu0 %v8623
  %9655 = vmatpush1.bf16.msra.mxu0 %v8622
  %9656 = vmatprep.subr.bf16.mxu0 %v8619
  %9657 = vmatpush1.bf16.msra.mxu0 %v8618
  %9658 = vmatprep.subr.bf16.mxu0 %v8615
  %9659 = vmatpush1.bf16.msra.mxu0 %v8614
  %9660 = vmatprep.subr.bf16.mxu0 %v8611
  %9661 = vmatpush1.bf16.msra.mxu0 %v8610
  %9662 = vmatprep.subr.bf16.mxu0 %v8607
  %9663 = vmatpush1.bf16.msra.mxu0 %v8606
  %9664 = vmatprep.subr.bf16.mxu0 %v8603
  %9665 = vmatpush1.bf16.msra.mxu0 %v8602
  %9666 = vmatprep.subr.bf16.mxu0 %v8599
  %9667 = vmatpush1.bf16.msra.mxu0 %v8598
  %9668 = vmatprep.subr.bf16.mxu0 %v8595
  %9669 = vmatpush1.bf16.msra.mxu0 %v8594
  %9670 = vmatprep.subr.bf16.mxu0 %v8655
  %9671 = vmatpush2.bf16.msra.mxu0 %v8654
  %9672 = vmatprep.subr.bf16.mxu0 %v8651
  %9673 = vmatpush2.bf16.msra.mxu0 %v8650
  %9674 = vmatprep.subr.bf16.mxu0 %v8647
  %9675 = vmatpush2.bf16.msra.mxu0 %v8646
  %9676 = vmatprep.subr.bf16.mxu0 %v8643
  %9677 = vmatpush2.bf16.msra.mxu0 %v8642
  %9678 = vmatprep.subr.bf16.mxu0 %v8639
  %9679 = vmatpush2.bf16.msra.mxu0 %v8638
  %9680 = vmatprep.subr.bf16.mxu0 %v8635
  %9681 = vmatpush2.bf16.msra.mxu0 %v8634
  %9682 = vmatprep.subr.bf16.mxu0 %v8631
  %9683 = vmatpush2.bf16.msra.mxu0 %v8630
  %9684 = vmatprep.subr.bf16.mxu0 %v8627
  %9685 = vmatpush2.bf16.msra.mxu0 %v8626
  %9686 = vmatprep.mubr.bf16.mxu0 %v6003
  %9687 = vmatmul.mubr.bf16.gmra.mxu0 %v6002
  %v9688 = vpop.f32.mrf.mxu0
  %v9689 = vadd.f32 %v9648, %v9688
  %v9690 = vpop.f32.mrf.mxu0
  %v9691 = vadd.f32 %v9650, %v9690
  %v9692 = vpop.f32.mrf.mxu0
  %v9693 = vpop.f32.mrf.mxu0
  %9694 = vdwg.mxu0
  %9695 = vmatprep.subr.bf16.mxu0 %v8687
  %9696 = vmatpush1.bf16.msra.mxu0 %v8686
  %9697 = vmatprep.subr.bf16.mxu0 %v8683
  %9698 = vmatpush1.bf16.msra.mxu0 %v8682
  %9699 = vmatprep.subr.bf16.mxu0 %v8679
  %9700 = vmatpush1.bf16.msra.mxu0 %v8678
  %9701 = vmatprep.subr.bf16.mxu0 %v8675
  %9702 = vmatpush1.bf16.msra.mxu0 %v8674
  %9703 = vmatprep.subr.bf16.mxu0 %v8671
  %9704 = vmatpush1.bf16.msra.mxu0 %v8670
  %9705 = vmatprep.subr.bf16.mxu0 %v8667
  %9706 = vmatpush1.bf16.msra.mxu0 %v8666
  %9707 = vmatprep.subr.bf16.mxu0 %v8663
  %9708 = vmatpush1.bf16.msra.mxu0 %v8662
  %9709 = vmatprep.subr.bf16.mxu0 %v8659
  %9710 = vmatpush1.bf16.msra.mxu0 %v8658
  %9711 = vmatprep.subr.bf16.mxu0 %v8719
  %9712 = vmatpush2.bf16.msra.mxu0 %v8718
  %9713 = vmatprep.subr.bf16.mxu0 %v8715
  %9714 = vmatpush2.bf16.msra.mxu0 %v8714
  %9715 = vmatprep.subr.bf16.mxu0 %v8711
  %9716 = vmatpush2.bf16.msra.mxu0 %v8710
  %9717 = vmatprep.subr.bf16.mxu0 %v8707
  %9718 = vmatpush2.bf16.msra.mxu0 %v8706
  %9719 = vmatprep.subr.bf16.mxu0 %v8703
  %9720 = vmatpush2.bf16.msra.mxu0 %v8702
  %9721 = vmatprep.subr.bf16.mxu0 %v8699
  %9722 = vmatpush2.bf16.msra.mxu0 %v8698
  %9723 = vmatprep.subr.bf16.mxu0 %v8695
  %9724 = vmatpush2.bf16.msra.mxu0 %v8694
  %9725 = vmatprep.subr.bf16.mxu0 %v8691
  %9726 = vmatpush2.bf16.msra.mxu0 %v8690
  %9727 = vmatprep.mubr.bf16.mxu0 %v6005
  %9728 = vmatmul.mubr.bf16.gmra.mxu0 %v6004
  %v9729 = vpop.f32.mrf.mxu0
  %v9730 = vadd.f32 %v9689, %v9729
  %v9731 = vpop.f32.mrf.mxu0
  %v9732 = vadd.f32 %v9691, %v9731
  %v9733 = vpop.f32.mrf.mxu0
  %v9734 = vpop.f32.mrf.mxu0
  %9735 = vdwg.mxu0
  %9736 = vmatprep.subr.bf16.mxu0 %v8751
  %9737 = vmatpush1.bf16.msra.mxu0 %v8750
  %9738 = vmatprep.subr.bf16.mxu0 %v8747
  %9739 = vmatpush1.bf16.msra.mxu0 %v8746
  %9740 = vmatprep.subr.bf16.mxu0 %v8743
  %9741 = vmatpush1.bf16.msra.mxu0 %v8742
  %9742 = vmatprep.subr.bf16.mxu0 %v8739
  %9743 = vmatpush1.bf16.msra.mxu0 %v8738
  %9744 = vmatprep.subr.bf16.mxu0 %v8735
  %9745 = vmatpush1.bf16.msra.mxu0 %v8734
  %9746 = vmatprep.subr.bf16.mxu0 %v8731
  %9747 = vmatpush1.bf16.msra.mxu0 %v8730
  %9748 = vmatprep.subr.bf16.mxu0 %v8727
  %9749 = vmatpush1.bf16.msra.mxu0 %v8726
  %9750 = vmatprep.subr.bf16.mxu0 %v8723
  %9751 = vmatpush1.bf16.msra.mxu0 %v8722
  %9752 = vmatprep.subr.bf16.mxu0 %v8783
  %9753 = vmatpush2.bf16.msra.mxu0 %v8782
  %9754 = vmatprep.subr.bf16.mxu0 %v8779
  %9755 = vmatpush2.bf16.msra.mxu0 %v8778
  %9756 = vmatprep.subr.bf16.mxu0 %v8775
  %9757 = vmatpush2.bf16.msra.mxu0 %v8774
  %9758 = vmatprep.subr.bf16.mxu0 %v8771
  %9759 = vmatpush2.bf16.msra.mxu0 %v8770
  %9760 = vmatprep.subr.bf16.mxu0 %v8767
  %9761 = vmatpush2.bf16.msra.mxu0 %v8766
  %9762 = vmatprep.subr.bf16.mxu0 %v8763
  %9763 = vmatpush2.bf16.msra.mxu0 %v8762
  %9764 = vmatprep.subr.bf16.mxu0 %v8759
  %9765 = vmatpush2.bf16.msra.mxu0 %v8758
  %9766 = vmatprep.subr.bf16.mxu0 %v8755
  %9767 = vmatpush2.bf16.msra.mxu0 %v8754
  %9768 = vmatprep.mubr.bf16.mxu0 %v6007
  %9769 = vmatmul.mubr.bf16.gmra.mxu0 %v6006
  %v9770 = vpop.f32.mrf.mxu0
  %v9771 = vadd.f32 %v9730, %v9770
  %v9772 = vpop.f32.mrf.mxu0
  %v9773 = vadd.f32 %v9732, %v9772
  %v9774 = vpop.f32.mrf.mxu0
  %v9775 = vpop.f32.mrf.mxu0
  %9776 = vdwg.mxu0
  %9777 = vmatprep.subr.bf16.mxu0 %v8815
  %9778 = vmatpush1.bf16.msra.mxu0 %v8814
  %9779 = vmatprep.subr.bf16.mxu0 %v8811
  %9780 = vmatpush1.bf16.msra.mxu0 %v8810
  %9781 = vmatprep.subr.bf16.mxu0 %v8807
  %9782 = vmatpush1.bf16.msra.mxu0 %v8806
  %9783 = vmatprep.subr.bf16.mxu0 %v8803
  %9784 = vmatpush1.bf16.msra.mxu0 %v8802
  %9785 = vmatprep.subr.bf16.mxu0 %v8799
  %9786 = vmatpush1.bf16.msra.mxu0 %v8798
  %9787 = vmatprep.subr.bf16.mxu0 %v8795
  %9788 = vmatpush1.bf16.msra.mxu0 %v8794
  %9789 = vmatprep.subr.bf16.mxu0 %v8791
  %9790 = vmatpush1.bf16.msra.mxu0 %v8790
  %9791 = vmatprep.subr.bf16.mxu0 %v8787
  %9792 = vmatpush1.bf16.msra.mxu0 %v8786
  %9793 = vmatprep.subr.bf16.mxu0 %v8847
  %9794 = vmatpush2.bf16.msra.mxu0 %v8846
  %9795 = vmatprep.subr.bf16.mxu0 %v8843
  %9796 = vmatpush2.bf16.msra.mxu0 %v8842
  %9797 = vmatprep.subr.bf16.mxu0 %v8839
  %9798 = vmatpush2.bf16.msra.mxu0 %v8838
  %9799 = vmatprep.subr.bf16.mxu0 %v8835
  %9800 = vmatpush2.bf16.msra.mxu0 %v8834
  %9801 = vmatprep.subr.bf16.mxu0 %v8831
  %9802 = vmatpush2.bf16.msra.mxu0 %v8830
  %9803 = vmatprep.subr.bf16.mxu0 %v8827
  %9804 = vmatpush2.bf16.msra.mxu0 %v8826
  %9805 = vmatprep.subr.bf16.mxu0 %v8823
  %9806 = vmatpush2.bf16.msra.mxu0 %v8822
  %9807 = vmatprep.subr.bf16.mxu0 %v8819
  %9808 = vmatpush2.bf16.msra.mxu0 %v8818
  %9809 = vmatprep.mubr.bf16.mxu0 %v6009
  %9810 = vmatmul.mubr.bf16.gmra.mxu0 %v6008
  %v9811 = vpop.f32.mrf.mxu0
  %v9812 = vadd.f32 %v9771, %v9811
  %v9813 = vpop.f32.mrf.mxu0
  %v9814 = vadd.f32 %v9773, %v9813
  %v9815 = vpop.f32.mrf.mxu0
  %v9816 = vpop.f32.mrf.mxu0
  %9817 = vdwg.mxu0
  %9818 = vmatprep.subr.bf16.mxu0 %v8879
  %9819 = vmatpush1.bf16.msra.mxu0 %v8878
  %9820 = vmatprep.subr.bf16.mxu0 %v8875
  %9821 = vmatpush1.bf16.msra.mxu0 %v8874
  %9822 = vmatprep.subr.bf16.mxu0 %v8871
  %9823 = vmatpush1.bf16.msra.mxu0 %v8870
  %9824 = vmatprep.subr.bf16.mxu0 %v8867
  %9825 = vmatpush1.bf16.msra.mxu0 %v8866
  %9826 = vmatprep.subr.bf16.mxu0 %v8863
  %9827 = vmatpush1.bf16.msra.mxu0 %v8862
  %9828 = vmatprep.subr.bf16.mxu0 %v8859
  %9829 = vmatpush1.bf16.msra.mxu0 %v8858
  %9830 = vmatprep.subr.bf16.mxu0 %v8855
  %9831 = vmatpush1.bf16.msra.mxu0 %v8854
  %9832 = vmatprep.subr.bf16.mxu0 %v8851
  %9833 = vmatpush1.bf16.msra.mxu0 %v8850
  %9834 = vmatprep.subr.bf16.mxu0 %v8911
  %9835 = vmatpush2.bf16.msra.mxu0 %v8910
  %9836 = vmatprep.subr.bf16.mxu0 %v8907
  %9837 = vmatpush2.bf16.msra.mxu0 %v8906
  %9838 = vmatprep.subr.bf16.mxu0 %v8903
  %9839 = vmatpush2.bf16.msra.mxu0 %v8902
  %9840 = vmatprep.subr.bf16.mxu0 %v8899
  %9841 = vmatpush2.bf16.msra.mxu0 %v8898
  %9842 = vmatprep.subr.bf16.mxu0 %v8895
  %9843 = vmatpush2.bf16.msra.mxu0 %v8894
  %9844 = vmatprep.subr.bf16.mxu0 %v8891
  %9845 = vmatpush2.bf16.msra.mxu0 %v8890
  %9846 = vmatprep.subr.bf16.mxu0 %v8887
  %9847 = vmatpush2.bf16.msra.mxu0 %v8886
  %9848 = vmatprep.subr.bf16.mxu0 %v8883
  %9849 = vmatpush2.bf16.msra.mxu0 %v8882
  %9850 = vmatprep.mubr.bf16.mxu0 %v6011
  %9851 = vmatmul.mubr.bf16.gmra.mxu0 %v6010
  %v9852 = vpop.f32.mrf.mxu0
  %v9853 = vadd.f32 %v9812, %v9852
  %v9854 = vpop.f32.mrf.mxu0
  %v9855 = vadd.f32 %v9814, %v9854
  %v9856 = vpop.f32.mrf.mxu0
  %v9857 = vpop.f32.mrf.mxu0
  %9858 = vdwg.mxu0
  %9859 = vmatprep.subr.bf16.mxu0 %v8369
  %9860 = vmatpush1.bf16.msra.mxu0 %v8368
  %9861 = vmatprep.subr.bf16.mxu0 %v8365
  %9862 = vmatpush1.bf16.msra.mxu0 %v8364
  %9863 = vmatprep.subr.bf16.mxu0 %v8361
  %9864 = vmatpush1.bf16.msra.mxu0 %v8360
  %9865 = vmatprep.subr.bf16.mxu0 %v8357
  %9866 = vmatpush1.bf16.msra.mxu0 %v8356
  %9867 = vmatprep.subr.bf16.mxu0 %v8353
  %9868 = vmatpush1.bf16.msra.mxu0 %v8352
  %9869 = vmatprep.subr.bf16.mxu0 %v8349
  %9870 = vmatpush1.bf16.msra.mxu0 %v8348
  %9871 = vmatprep.subr.bf16.mxu0 %v8345
  %9872 = vmatpush1.bf16.msra.mxu0 %v8344
  %9873 = vmatprep.subr.bf16.mxu0 %v8341
  %9874 = vmatpush1.bf16.msra.mxu0 %v8340
  %9875 = vmatprep.subr.bf16.mxu0 %v8401
  %9876 = vmatpush2.bf16.msra.mxu0 %v8400
  %9877 = vmatprep.subr.bf16.mxu0 %v8397
  %9878 = vmatpush2.bf16.msra.mxu0 %v8396
  %9879 = vmatprep.subr.bf16.mxu0 %v8393
  %9880 = vmatpush2.bf16.msra.mxu0 %v8392
  %9881 = vmatprep.subr.bf16.mxu0 %v8389
  %9882 = vmatpush2.bf16.msra.mxu0 %v8388
  %9883 = vmatprep.subr.bf16.mxu0 %v8385
  %9884 = vmatpush2.bf16.msra.mxu0 %v8384
  %9885 = vmatprep.subr.bf16.mxu0 %v8381
  %9886 = vmatpush2.bf16.msra.mxu0 %v8380
  %9887 = vmatprep.subr.bf16.mxu0 %v8377
  %9888 = vmatpush2.bf16.msra.mxu0 %v8376
  %9889 = vmatprep.subr.bf16.mxu0 %v8373
  %9890 = vmatpush2.bf16.msra.mxu0 %v8372
  %9891 = vmatprep.mubr.bf16.mxu0 %v5995
  %9892 = vmatmul.mubr.bf16.gmra.mxu0 %v5994
  %v9893 = vpop.f32.mrf.mxu0
  %v9894 = vadd.f32 %v6601, %v9893
  %v9895 = vpop.f32.mrf.mxu0
  %v9896 = vadd.f32 %v6605, %v9895
  %v9897 = vpop.f32.mrf.mxu0
  %v9898 = vpop.f32.mrf.mxu0
  %9899 = vdwg.mxu0
  %9900 = vmatprep.subr.bf16.mxu0 %v8433
  %9901 = vmatpush1.bf16.msra.mxu0 %v8432
  %9902 = vmatprep.subr.bf16.mxu0 %v8429
  %9903 = vmatpush1.bf16.msra.mxu0 %v8428
  %9904 = vmatprep.subr.bf16.mxu0 %v8425
  %9905 = vmatpush1.bf16.msra.mxu0 %v8424
  %9906 = vmatprep.subr.bf16.mxu0 %v8421
  %9907 = vmatpush1.bf16.msra.mxu0 %v8420
  %9908 = vmatprep.subr.bf16.mxu0 %v8417
  %9909 = vmatpush1.bf16.msra.mxu0 %v8416
  %9910 = vmatprep.subr.bf16.mxu0 %v8413
  %9911 = vmatpush1.bf16.msra.mxu0 %v8412
  %9912 = vmatprep.subr.bf16.mxu0 %v8409
  %9913 = vmatpush1.bf16.msra.mxu0 %v8408
  %9914 = vmatprep.subr.bf16.mxu0 %v8405
  %9915 = vmatpush1.bf16.msra.mxu0 %v8404
  %9916 = vmatprep.subr.bf16.mxu0 %v8465
  %9917 = vmatpush2.bf16.msra.mxu0 %v8464
  %9918 = vmatprep.subr.bf16.mxu0 %v8461
  %9919 = vmatpush2.bf16.msra.mxu0 %v8460
  %9920 = vmatprep.subr.bf16.mxu0 %v8457
  %9921 = vmatpush2.bf16.msra.mxu0 %v8456
  %9922 = vmatprep.subr.bf16.mxu0 %v8453
  %9923 = vmatpush2.bf16.msra.mxu0 %v8452
  %9924 = vmatprep.subr.bf16.mxu0 %v8449
  %9925 = vmatpush2.bf16.msra.mxu0 %v8448
  %9926 = vmatprep.subr.bf16.mxu0 %v8445
  %9927 = vmatpush2.bf16.msra.mxu0 %v8444
  %9928 = vmatprep.subr.bf16.mxu0 %v8441
  %9929 = vmatpush2.bf16.msra.mxu0 %v8440
  %9930 = vmatprep.subr.bf16.mxu0 %v8437
  %9931 = vmatpush2.bf16.msra.mxu0 %v8436
  %9932 = vmatprep.mubr.bf16.mxu0 %v5997
  %9933 = vmatmul.mubr.bf16.gmra.mxu0 %v5996
  %v9934 = vpop.f32.mrf.mxu0
  %v9935 = vadd.f32 %v9894, %v9934
  %v9936 = vpop.f32.mrf.mxu0
  %v9937 = vadd.f32 %v9896, %v9936
  %v9938 = vpop.f32.mrf.mxu0
  %v9939 = vpop.f32.mrf.mxu0
  %9940 = vdwg.mxu0
  %9941 = vmatprep.subr.bf16.mxu0 %v8497
  %9942 = vmatpush1.bf16.msra.mxu0 %v8496
  %9943 = vmatprep.subr.bf16.mxu0 %v8493
  %9944 = vmatpush1.bf16.msra.mxu0 %v8492
  %9945 = vmatprep.subr.bf16.mxu0 %v8489
  %9946 = vmatpush1.bf16.msra.mxu0 %v8488
  %9947 = vmatprep.subr.bf16.mxu0 %v8485
  %9948 = vmatpush1.bf16.msra.mxu0 %v8484
  %9949 = vmatprep.subr.bf16.mxu0 %v8481
  %9950 = vmatpush1.bf16.msra.mxu0 %v8480
  %9951 = vmatprep.subr.bf16.mxu0 %v8477
  %9952 = vmatpush1.bf16.msra.mxu0 %v8476
  %9953 = vmatprep.subr.bf16.mxu0 %v8473
  %9954 = vmatpush1.bf16.msra.mxu0 %v8472
  %9955 = vmatprep.subr.bf16.mxu0 %v8469
  %9956 = vmatpush1.bf16.msra.mxu0 %v8468
  %9957 = vmatprep.subr.bf16.mxu0 %v8529
  %9958 = vmatpush2.bf16.msra.mxu0 %v8528
  %9959 = vmatprep.subr.bf16.mxu0 %v8525
  %9960 = vmatpush2.bf16.msra.mxu0 %v8524
  %9961 = vmatprep.subr.bf16.mxu0 %v8521
  %9962 = vmatpush2.bf16.msra.mxu0 %v8520
  %9963 = vmatprep.subr.bf16.mxu0 %v8517
  %9964 = vmatpush2.bf16.msra.mxu0 %v8516
  %9965 = vmatprep.subr.bf16.mxu0 %v8513
  %9966 = vmatpush2.bf16.msra.mxu0 %v8512
  %9967 = vmatprep.subr.bf16.mxu0 %v8509
  %9968 = vmatpush2.bf16.msra.mxu0 %v8508
  %9969 = vmatprep.subr.bf16.mxu0 %v8505
  %9970 = vmatpush2.bf16.msra.mxu0 %v8504
  %9971 = vmatprep.subr.bf16.mxu0 %v8501
  %9972 = vmatpush2.bf16.msra.mxu0 %v8500
  %9973 = vmatprep.mubr.bf16.mxu0 %v5999
  %9974 = vmatmul.mubr.bf16.gmra.mxu0 %v5998
  %v9975 = vpop.f32.mrf.mxu0
  %v9976 = vadd.f32 %v9935, %v9975
  %v9977 = vpop.f32.mrf.mxu0
  %v9978 = vadd.f32 %v9937, %v9977
  %v9979 = vpop.f32.mrf.mxu0
  %v9980 = vpop.f32.mrf.mxu0
  %9981 = vdwg.mxu0
  %9982 = vmatprep.subr.bf16.mxu0 %v8561
  %9983 = vmatpush1.bf16.msra.mxu0 %v8560
  %9984 = vmatprep.subr.bf16.mxu0 %v8557
  %9985 = vmatpush1.bf16.msra.mxu0 %v8556
  %9986 = vmatprep.subr.bf16.mxu0 %v8553
  %9987 = vmatpush1.bf16.msra.mxu0 %v8552
  %9988 = vmatprep.subr.bf16.mxu0 %v8549
  %9989 = vmatpush1.bf16.msra.mxu0 %v8548
  %9990 = vmatprep.subr.bf16.mxu0 %v8545
  %9991 = vmatpush1.bf16.msra.mxu0 %v8544
  %9992 = vmatprep.subr.bf16.mxu0 %v8541
  %9993 = vmatpush1.bf16.msra.mxu0 %v8540
  %9994 = vmatprep.subr.bf16.mxu0 %v8537
  %9995 = vmatpush1.bf16.msra.mxu0 %v8536
  %9996 = vmatprep.subr.bf16.mxu0 %v8533
  %9997 = vmatpush1.bf16.msra.mxu0 %v8532
  %9998 = vmatprep.subr.bf16.mxu0 %v8593
  %9999 = vmatpush2.bf16.msra.mxu0 %v8592
  %10000 = vmatprep.subr.bf16.mxu0 %v8589
  %10001 = vmatpush2.bf16.msra.mxu0 %v8588
  %10002 = vmatprep.subr.bf16.mxu0 %v8585
  %10003 = vmatpush2.bf16.msra.mxu0 %v8584
  %10004 = vmatprep.subr.bf16.mxu0 %v8581
  %10005 = vmatpush2.bf16.msra.mxu0 %v8580
  %10006 = vmatprep.subr.bf16.mxu0 %v8577
  %10007 = vmatpush2.bf16.msra.mxu0 %v8576
  %10008 = vmatprep.subr.bf16.mxu0 %v8573
  %10009 = vmatpush2.bf16.msra.mxu0 %v8572
  %10010 = vmatprep.subr.bf16.mxu0 %v8569
  %10011 = vmatpush2.bf16.msra.mxu0 %v8568
  %10012 = vmatprep.subr.bf16.mxu0 %v8565
  %10013 = vmatpush2.bf16.msra.mxu0 %v8564
  %10014 = vmatprep.mubr.bf16.mxu0 %v6001
  %10015 = vmatmul.mubr.bf16.gmra.mxu0 %v6000
  %v10016 = vpop.f32.mrf.mxu0
  %v10017 = vadd.f32 %v9976, %v10016
  %v10018 = vpop.f32.mrf.mxu0
  %v10019 = vadd.f32 %v9978, %v10018
  %v10020 = vpop.f32.mrf.mxu0
  %v10021 = vpop.f32.mrf.mxu0
  %10022 = vdwg.mxu0
  %10023 = vmatprep.subr.bf16.mxu0 %v8625
  %10024 = vmatpush1.bf16.msra.mxu0 %v8624
  %10025 = vmatprep.subr.bf16.mxu0 %v8621
  %10026 = vmatpush1.bf16.msra.mxu0 %v8620
  %10027 = vmatprep.subr.bf16.mxu0 %v8617
  %10028 = vmatpush1.bf16.msra.mxu0 %v8616
  %10029 = vmatprep.subr.bf16.mxu0 %v8613
  %10030 = vmatpush1.bf16.msra.mxu0 %v8612
  %10031 = vmatprep.subr.bf16.mxu0 %v8609
  %10032 = vmatpush1.bf16.msra.mxu0 %v8608
  %10033 = vmatprep.subr.bf16.mxu0 %v8605
  %10034 = vmatpush1.bf16.msra.mxu0 %v8604
  %10035 = vmatprep.subr.bf16.mxu0 %v8601
  %10036 = vmatpush1.bf16.msra.mxu0 %v8600
  %10037 = vmatprep.subr.bf16.mxu0 %v8597
  %10038 = vmatpush1.bf16.msra.mxu0 %v8596
  %10039 = vmatprep.subr.bf16.mxu0 %v8657
  %10040 = vmatpush2.bf16.msra.mxu0 %v8656
  %10041 = vmatprep.subr.bf16.mxu0 %v8653
  %10042 = vmatpush2.bf16.msra.mxu0 %v8652
  %10043 = vmatprep.subr.bf16.mxu0 %v8649
  %10044 = vmatpush2.bf16.msra.mxu0 %v8648
  %10045 = vmatprep.subr.bf16.mxu0 %v8645
  %10046 = vmatpush2.bf16.msra.mxu0 %v8644
  %10047 = vmatprep.subr.bf16.mxu0 %v8641
  %10048 = vmatpush2.bf16.msra.mxu0 %v8640
  %10049 = vmatprep.subr.bf16.mxu0 %v8637
  %10050 = vmatpush2.bf16.msra.mxu0 %v8636
  %10051 = vmatprep.subr.bf16.mxu0 %v8633
  %10052 = vmatpush2.bf16.msra.mxu0 %v8632
  %10053 = vmatprep.subr.bf16.mxu0 %v8629
  %10054 = vmatpush2.bf16.msra.mxu0 %v8628
  %10055 = vmatprep.mubr.bf16.mxu0 %v6003
  %10056 = vmatmul.mubr.bf16.gmra.mxu0 %v6002
  %v10057 = vpop.f32.mrf.mxu0
  %v10058 = vadd.f32 %v10017, %v10057
  %v10059 = vpop.f32.mrf.mxu0
  %v10060 = vadd.f32 %v10019, %v10059
  %v10061 = vpop.f32.mrf.mxu0
  %v10062 = vpop.f32.mrf.mxu0
  %10063 = vdwg.mxu0
  %10064 = vmatprep.subr.bf16.mxu0 %v8689
  %10065 = vmatpush1.bf16.msra.mxu0 %v8688
  %10066 = vmatprep.subr.bf16.mxu0 %v8685
  %10067 = vmatpush1.bf16.msra.mxu0 %v8684
  %10068 = vmatprep.subr.bf16.mxu0 %v8681
  %10069 = vmatpush1.bf16.msra.mxu0 %v8680
  %10070 = vmatprep.subr.bf16.mxu0 %v8677
  %10071 = vmatpush1.bf16.msra.mxu0 %v8676
  %10072 = vmatprep.subr.bf16.mxu0 %v8673
  %10073 = vmatpush1.bf16.msra.mxu0 %v8672
  %10074 = vmatprep.subr.bf16.mxu0 %v8669
  %10075 = vmatpush1.bf16.msra.mxu0 %v8668
  %10076 = vmatprep.subr.bf16.mxu0 %v8665
  %10077 = vmatpush1.bf16.msra.mxu0 %v8664
  %10078 = vmatprep.subr.bf16.mxu0 %v8661
  %10079 = vmatpush1.bf16.msra.mxu0 %v8660
  %10080 = vmatprep.subr.bf16.mxu0 %v8721
  %10081 = vmatpush2.bf16.msra.mxu0 %v8720
  %10082 = vmatprep.subr.bf16.mxu0 %v8717
  %10083 = vmatpush2.bf16.msra.mxu0 %v8716
  %10084 = vmatprep.subr.bf16.mxu0 %v8713
  %10085 = vmatpush2.bf16.msra.mxu0 %v8712
  %10086 = vmatprep.subr.bf16.mxu0 %v8709
  %10087 = vmatpush2.bf16.msra.mxu0 %v8708
  %10088 = vmatprep.subr.bf16.mxu0 %v8705
  %10089 = vmatpush2.bf16.msra.mxu0 %v8704
  %10090 = vmatprep.subr.bf16.mxu0 %v8701
  %10091 = vmatpush2.bf16.msra.mxu0 %v8700
  %10092 = vmatprep.subr.bf16.mxu0 %v8697
  %10093 = vmatpush2.bf16.msra.mxu0 %v8696
  %10094 = vmatprep.subr.bf16.mxu0 %v8693
  %10095 = vmatpush2.bf16.msra.mxu0 %v8692
  %10096 = vmatprep.mubr.bf16.mxu0 %v6005
  %10097 = vmatmul.mubr.bf16.gmra.mxu0 %v6004
  %v10098 = vpop.f32.mrf.mxu0
  %v10099 = vadd.f32 %v10058, %v10098
  %v10100 = vpop.f32.mrf.mxu0
  %v10101 = vadd.f32 %v10060, %v10100
  %v10102 = vpop.f32.mrf.mxu0
  %v10103 = vpop.f32.mrf.mxu0
  %10104 = vdwg.mxu0
  %10105 = vmatprep.subr.bf16.mxu0 %v8753
  %10106 = vmatpush1.bf16.msra.mxu0 %v8752
  %10107 = vmatprep.subr.bf16.mxu0 %v8749
  %10108 = vmatpush1.bf16.msra.mxu0 %v8748
  %10109 = vmatprep.subr.bf16.mxu0 %v8745
  %10110 = vmatpush1.bf16.msra.mxu0 %v8744
  %10111 = vmatprep.subr.bf16.mxu0 %v8741
  %10112 = vmatpush1.bf16.msra.mxu0 %v8740
  %10113 = vmatprep.subr.bf16.mxu0 %v8737
  %10114 = vmatpush1.bf16.msra.mxu0 %v8736
  %10115 = vmatprep.subr.bf16.mxu0 %v8733
  %10116 = vmatpush1.bf16.msra.mxu0 %v8732
  %10117 = vmatprep.subr.bf16.mxu0 %v8729
  %10118 = vmatpush1.bf16.msra.mxu0 %v8728
  %10119 = vmatprep.subr.bf16.mxu0 %v8725
  %10120 = vmatpush1.bf16.msra.mxu0 %v8724
  %10121 = vmatprep.subr.bf16.mxu0 %v8785
  %10122 = vmatpush2.bf16.msra.mxu0 %v8784
  %10123 = vmatprep.subr.bf16.mxu0 %v8781
  %10124 = vmatpush2.bf16.msra.mxu0 %v8780
  %10125 = vmatprep.subr.bf16.mxu0 %v8777
  %10126 = vmatpush2.bf16.msra.mxu0 %v8776
  %10127 = vmatprep.subr.bf16.mxu0 %v8773
  %10128 = vmatpush2.bf16.msra.mxu0 %v8772
  %10129 = vmatprep.subr.bf16.mxu0 %v8769
  %10130 = vmatpush2.bf16.msra.mxu0 %v8768
  %10131 = vmatprep.subr.bf16.mxu0 %v8765
  %10132 = vmatpush2.bf16.msra.mxu0 %v8764
  %10133 = vmatprep.subr.bf16.mxu0 %v8761
  %10134 = vmatpush2.bf16.msra.mxu0 %v8760
  %10135 = vmatprep.subr.bf16.mxu0 %v8757
  %10136 = vmatpush2.bf16.msra.mxu0 %v8756
  %10137 = vmatprep.mubr.bf16.mxu0 %v6007
  %10138 = vmatmul.mubr.bf16.gmra.mxu0 %v6006
  %v10139 = vpop.f32.mrf.mxu0
  %v10140 = vadd.f32 %v10099, %v10139
  %v10141 = vpop.f32.mrf.mxu0
  %v10142 = vadd.f32 %v10101, %v10141
  %v10143 = vpop.f32.mrf.mxu0
  %v10144 = vpop.f32.mrf.mxu0
  %10145 = vdwg.mxu0
  %10146 = vmatprep.subr.bf16.mxu0 %v8817
  %10147 = vmatpush1.bf16.msra.mxu0 %v8816
  %10148 = vmatprep.subr.bf16.mxu0 %v8813
  %10149 = vmatpush1.bf16.msra.mxu0 %v8812
  %10150 = vmatprep.subr.bf16.mxu0 %v8809
  %10151 = vmatpush1.bf16.msra.mxu0 %v8808
  %10152 = vmatprep.subr.bf16.mxu0 %v8805
  %10153 = vmatpush1.bf16.msra.mxu0 %v8804
  %10154 = vmatprep.subr.bf16.mxu0 %v8801
  %10155 = vmatpush1.bf16.msra.mxu0 %v8800
  %10156 = vmatprep.subr.bf16.mxu0 %v8797
  %10157 = vmatpush1.bf16.msra.mxu0 %v8796
  %10158 = vmatprep.subr.bf16.mxu0 %v8793
  %10159 = vmatpush1.bf16.msra.mxu0 %v8792
  %10160 = vmatprep.subr.bf16.mxu0 %v8789
  %10161 = vmatpush1.bf16.msra.mxu0 %v8788
  %10162 = vmatprep.subr.bf16.mxu0 %v8849
  %10163 = vmatpush2.bf16.msra.mxu0 %v8848
  %10164 = vmatprep.subr.bf16.mxu0 %v8845
  %10165 = vmatpush2.bf16.msra.mxu0 %v8844
  %10166 = vmatprep.subr.bf16.mxu0 %v8841
  %10167 = vmatpush2.bf16.msra.mxu0 %v8840
  %10168 = vmatprep.subr.bf16.mxu0 %v8837
  %10169 = vmatpush2.bf16.msra.mxu0 %v8836
  %10170 = vmatprep.subr.bf16.mxu0 %v8833
  %10171 = vmatpush2.bf16.msra.mxu0 %v8832
  %10172 = vmatprep.subr.bf16.mxu0 %v8829
  %10173 = vmatpush2.bf16.msra.mxu0 %v8828
  %10174 = vmatprep.subr.bf16.mxu0 %v8825
  %10175 = vmatpush2.bf16.msra.mxu0 %v8824
  %10176 = vmatprep.subr.bf16.mxu0 %v8821
  %10177 = vmatpush2.bf16.msra.mxu0 %v8820
  %10178 = vmatprep.mubr.bf16.mxu0 %v6009
  %10179 = vmatmul.mubr.bf16.gmra.mxu0 %v6008
  %v10180 = vpop.f32.mrf.mxu0
  %v10181 = vadd.f32 %v10140, %v10180
  %v10182 = vpop.f32.mrf.mxu0
  %v10183 = vadd.f32 %v10142, %v10182
  %v10184 = vpop.f32.mrf.mxu0
  %v10185 = vpop.f32.mrf.mxu0
  %10186 = vdwg.mxu0
  %10187 = vmatprep.subr.bf16.mxu0 %v8881
  %10188 = vmatpush1.bf16.msra.mxu0 %v8880
  %10189 = vmatprep.subr.bf16.mxu0 %v8877
  %10190 = vmatpush1.bf16.msra.mxu0 %v8876
  %10191 = vmatprep.subr.bf16.mxu0 %v8873
  %10192 = vmatpush1.bf16.msra.mxu0 %v8872
  %10193 = vmatprep.subr.bf16.mxu0 %v8869
  %10194 = vmatpush1.bf16.msra.mxu0 %v8868
  %10195 = vmatprep.subr.bf16.mxu0 %v8865
  %10196 = vmatpush1.bf16.msra.mxu0 %v8864
  %10197 = vmatprep.subr.bf16.mxu0 %v8861
  %10198 = vmatpush1.bf16.msra.mxu0 %v8860
  %10199 = vmatprep.subr.bf16.mxu0 %v8857
  %10200 = vmatpush1.bf16.msra.mxu0 %v8856
  %10201 = vmatprep.subr.bf16.mxu0 %v8853
  %10202 = vmatpush1.bf16.msra.mxu0 %v8852
  %10203 = vmatprep.subr.bf16.mxu0 %v8913
  %10204 = vmatpush2.bf16.msra.mxu0 %v8912
  %10205 = vmatprep.subr.bf16.mxu0 %v8909
  %10206 = vmatpush2.bf16.msra.mxu0 %v8908
  %10207 = vmatprep.subr.bf16.mxu0 %v8905
  %10208 = vmatpush2.bf16.msra.mxu0 %v8904
  %10209 = vmatprep.subr.bf16.mxu0 %v8901
  %10210 = vmatpush2.bf16.msra.mxu0 %v8900
  %10211 = vmatprep.subr.bf16.mxu0 %v8897
  %10212 = vmatpush2.bf16.msra.mxu0 %v8896
  %10213 = vmatprep.subr.bf16.mxu0 %v8893
  %10214 = vmatpush2.bf16.msra.mxu0 %v8892
  %10215 = vmatprep.subr.bf16.mxu0 %v8889
  %10216 = vmatpush2.bf16.msra.mxu0 %v8888
  %10217 = vmatprep.subr.bf16.mxu0 %v8885
  %10218 = vmatpush2.bf16.msra.mxu0 %v8884
  %10219 = vmatprep.mubr.bf16.mxu0 %v6011
  %10220 = vmatmul.mubr.bf16.gmra.mxu0 %v6010
  %v10221 = vpop.f32.mrf.mxu0
  %v10222 = vadd.f32 %v10181, %v10221
  %v10223 = vpop.f32.mrf.mxu0
  %v10224 = vadd.f32 %v10183, %v10223
  %v10225 = vpop.f32.mrf.mxu0
  %v10226 = vpop.f32.mrf.mxu0
  %10227 = vdwg.mxu0
  %vm10228 = vcmp.gt.f32.partialorder %v9853, 0.0
  %vm10229 = vcmp.gt.f32.partialorder %v9855, 0.0
  %vm10230 = vcmp.gt.f32.partialorder %v10222, 0.0
  %vm10231 = vcmp.gt.f32.partialorder %v10224, 0.0
  %v10232 = vmul.f32 %v9853, 0.01
  %v10233 = vmul.f32 %v9855, 0.01
  %v10234 = vmul.f32 %v10222, 0.01
  %v10235 = vmul.f32 %v10224, 0.01
  %v10236 = vsel %vm10228, %v9853, %v10232
  %v10237 = vsel %vm10229, %v9855, %v10233
  %v10238 = vsel %vm10230, %v10222, %v10234
  %v10239 = vsel %vm10231, %v10224, %v10235
  %v10240 = vpack.c.bf16 %v10236, %v10236
  %v10241 = vpack.c.bf16 %v10237, %v10237
  %v10242 = vpack.c.bf16 %v10238, %v10238
  %v10243 = vpack.c.bf16 %v10239, %v10239
  %v10244 = vld [vmem:[%s9] sm:$0xf]
  %v10245 = vld [vmem:[%s9 + $0x4] sm:$0xf]
  %v10246 = vld [vmem:[%s9 + $0x8] sm:$0xf]
  %v10247 = vld [vmem:[%s9 + $0xc] sm:$0xf]
  %v10248 = vld [vmem:[%s9 + $0x10] sm:$0xf]
  %v10249 = vld [vmem:[%s9 + $0x14] sm:$0xf]
  %v10250 = vld [vmem:[%s9 + $0x18] sm:$0xf]
  %v10251 = vld [vmem:[%s9 + $0x1c] sm:$0xf]
  %v10252 = vld [vmem:[%s9 + $0x20] sm:$0xf]
  %v10253 = vld [vmem:[%s9 + $0x24] sm:$0xf]
  %v10254 = vld [vmem:[%s9 + $0x28] sm:$0xf]
  %v10255 = vld [vmem:[%s9 + $0x2c] sm:$0xf]
  %v10256 = vld [vmem:[%s9 + $0x30] sm:$0xf]
  %v10257 = vld [vmem:[%s9 + $0x34] sm:$0xf]
  %v10258 = vld [vmem:[%s9 + $0x38] sm:$0xf]
  %v10259 = vld [vmem:[%s9 + $0x3c] sm:$0xf]
  %v10260 = vld [vmem:[%s9 + $0x40] sm:$0xf]
  %v10261 = vld [vmem:[%s9 + $0x44] sm:$0xf]
  %v10262 = vld [vmem:[%s9 + $0x48] sm:$0xf]
  %v10263 = vld [vmem:[%s9 + $0x4c] sm:$0xf]
  %v10264 = vld [vmem:[%s9 + $0x50] sm:$0xf]
  %v10265 = vld [vmem:[%s9 + $0x54] sm:$0xf]
  %v10266 = vld [vmem:[%s9 + $0x58] sm:$0xf]
  %v10267 = vld [vmem:[%s9 + $0x5c] sm:$0xf]
  %v10268 = vld [vmem:[%s9 + $0x60] sm:$0xf]
  %v10269 = vld [vmem:[%s9 + $0x64] sm:$0xf]
  %v10270 = vld [vmem:[%s9 + $0x68] sm:$0xf]
  %v10271 = vld [vmem:[%s9 + $0x6c] sm:$0xf]
  %v10272 = vld [vmem:[%s9 + $0x70] sm:$0xf]
  %v10273 = vld [vmem:[%s9 + $0x74] sm:$0xf]
  %v10274 = vld [vmem:[%s9 + $0x78] sm:$0xf]
  %v10275 = vld [vmem:[%s9 + $0x7c] sm:$0xf]
  %v10276 = vld [vmem:[%s9 + $0x80] sm:$0xf]
  %v10277 = vld [vmem:[%s9 + $0x84] sm:$0xf]
  %v10278 = vld [vmem:[%s9 + $0x88] sm:$0xf]
  %v10279 = vld [vmem:[%s9 + $0x8c] sm:$0xf]
  %v10280 = vld [vmem:[%s9 + $0x90] sm:$0xf]
  %v10281 = vld [vmem:[%s9 + $0x94] sm:$0xf]
  %v10282 = vld [vmem:[%s9 + $0x98] sm:$0xf]
  %v10283 = vld [vmem:[%s9 + $0x9c] sm:$0xf]
  %v10284 = vld [vmem:[%s9 + $0xa0] sm:$0xf]
  %v10285 = vld [vmem:[%s9 + $0xa4] sm:$0xf]
  %v10286 = vld [vmem:[%s9 + $0xa8] sm:$0xf]
  %v10287 = vld [vmem:[%s9 + $0xac] sm:$0xf]
  %v10288 = vld [vmem:[%s9 + $0xb0] sm:$0xf]
  %v10289 = vld [vmem:[%s9 + $0xb4] sm:$0xf]
  %v10290 = vld [vmem:[%s9 + $0xb8] sm:$0xf]
  %v10291 = vld [vmem:[%s9 + $0xbc] sm:$0xf]
  %v10292 = vld [vmem:[%s9 + $0xc0] sm:$0xf]
  %v10293 = vld [vmem:[%s9 + $0xc4] sm:$0xf]
  %v10294 = vld [vmem:[%s9 + $0xc8] sm:$0xf]
  %v10295 = vld [vmem:[%s9 + $0xcc] sm:$0xf]
  %v10296 = vld [vmem:[%s9 + $0xd0] sm:$0xf]
  %v10297 = vld [vmem:[%s9 + $0xd4] sm:$0xf]
  %v10298 = vld [vmem:[%s9 + $0xd8] sm:$0xf]
  %v10299 = vld [vmem:[%s9 + $0xdc] sm:$0xf]
  %v10300 = vld [vmem:[%s9 + $0xe0] sm:$0xf]
  %v10301 = vld [vmem:[%s9 + $0xe4] sm:$0xf]
  %v10302 = vld [vmem:[%s9 + $0xe8] sm:$0xf]
  %v10303 = vld [vmem:[%s9 + $0xec] sm:$0xf]
  %v10304 = vld [vmem:[%s9 + $0xf0] sm:$0xf]
  %v10305 = vld [vmem:[%s9 + $0xf4] sm:$0xf]
  %v10306 = vld [vmem:[%s9 + $0xf8] sm:$0xf]
  %v10307 = vld [vmem:[%s9 + $0xfc] sm:$0xf]
  %v10308 = vld [vmem:[%s10] sm:$0x1]
  %v10310 = vlaneseq
  %v10311 = vshrl.u32 %v10310, 7
  %v10312 = vsub.s32 0, %v10311
  %v10313 = vrot.slane %v10308, %v10312
  %v10379 = vunpack.c.l.b16 %v10244
  %v10380 = vunpack.c.l.b16 %v10245
  %v10381 = vunpack.c.l.b16 %v10246
  %v10382 = vunpack.c.l.b16 %v10247
  %v10383 = vunpack.c.l.b16 %v10248
  %v10384 = vunpack.c.l.b16 %v10249
  %v10385 = vunpack.c.l.b16 %v10250
  %v10386 = vunpack.c.l.b16 %v10251
  %v10387 = vunpack.c.l.b16 %v10252
  %v10388 = vunpack.c.l.b16 %v10253
  %v10389 = vunpack.c.l.b16 %v10254
  %v10390 = vunpack.c.l.b16 %v10255
  %v10391 = vunpack.c.l.b16 %v10256
  %v10392 = vunpack.c.l.b16 %v10257
  %v10393 = vunpack.c.l.b16 %v10258
  %v10394 = vunpack.c.l.b16 %v10259
  %v10395 = vunpack.c.l.b16 %v10260
  %v10396 = vunpack.c.l.b16 %v10261
  %v10397 = vunpack.c.l.b16 %v10262
  %v10398 = vunpack.c.l.b16 %v10263
  %v10399 = vunpack.c.l.b16 %v10264
  %v10400 = vunpack.c.l.b16 %v10265
  %v10401 = vunpack.c.l.b16 %v10266
  %v10402 = vunpack.c.l.b16 %v10267
  %v10403 = vunpack.c.l.b16 %v10268
  %v10404 = vunpack.c.l.b16 %v10269
  %v10405 = vunpack.c.l.b16 %v10270
  %v10406 = vunpack.c.l.b16 %v10271
  %v10407 = vunpack.c.l.b16 %v10272
  %v10408 = vunpack.c.l.b16 %v10273
  %v10409 = vunpack.c.l.b16 %v10274
  %v10410 = vunpack.c.l.b16 %v10275
  %v10411 = vunpack.c.l.b16 %v10276
  %v10412 = vunpack.c.l.b16 %v10277
  %v10413 = vunpack.c.l.b16 %v10278
  %v10414 = vunpack.c.l.b16 %v10279
  %v10415 = vunpack.c.l.b16 %v10280
  %v10416 = vunpack.c.l.b16 %v10281
  %v10417 = vunpack.c.l.b16 %v10282
  %v10418 = vunpack.c.l.b16 %v10283
  %v10419 = vunpack.c.l.b16 %v10284
  %v10420 = vunpack.c.l.b16 %v10285
  %v10421 = vunpack.c.l.b16 %v10286
  %v10422 = vunpack.c.l.b16 %v10287
  %v10423 = vunpack.c.l.b16 %v10288
  %v10424 = vunpack.c.l.b16 %v10289
  %v10425 = vunpack.c.l.b16 %v10290
  %v10426 = vunpack.c.l.b16 %v10291
  %v10427 = vunpack.c.l.b16 %v10292
  %v10428 = vunpack.c.l.b16 %v10293
  %v10429 = vunpack.c.l.b16 %v10294
  %v10430 = vunpack.c.l.b16 %v10295
  %v10431 = vunpack.c.l.b16 %v10296
  %v10432 = vunpack.c.l.b16 %v10297
  %v10433 = vunpack.c.l.b16 %v10298
  %v10434 = vunpack.c.l.b16 %v10299
  %v10435 = vunpack.c.l.b16 %v10300
  %v10436 = vunpack.c.l.b16 %v10301
  %v10437 = vunpack.c.l.b16 %v10302
  %v10438 = vunpack.c.l.b16 %v10303
  %v10439 = vunpack.c.l.b16 %v10304
  %v10440 = vunpack.c.l.b16 %v10305
  %v10441 = vunpack.c.l.b16 %v10306
  %v10442 = vunpack.c.l.b16 %v10307
  %v10443 = vpack.c.b16 %v10380, %v10379
  %v10444 = vpack.c.b16 %v10382, %v10381
  %v10445 = vpack.c.b16 %v10384, %v10383
  %v10446 = vpack.c.b16 %v10386, %v10385
  %v10447 = vpack.c.b16 %v10388, %v10387
  %v10448 = vpack.c.b16 %v10390, %v10389
  %v10449 = vpack.c.b16 %v10392, %v10391
  %v10450 = vpack.c.b16 %v10394, %v10393
  %v10451 = vpack.c.b16 %v10396, %v10395
  %v10452 = vpack.c.b16 %v10398, %v10397
  %v10453 = vpack.c.b16 %v10400, %v10399
  %v10454 = vpack.c.b16 %v10402, %v10401
  %v10455 = vpack.c.b16 %v10404, %v10403
  %v10456 = vpack.c.b16 %v10406, %v10405
  %v10457 = vpack.c.b16 %v10408, %v10407
  %v10458 = vpack.c.b16 %v10410, %v10409
  %v10459 = vpack.c.b16 %v10412, %v10411
  %v10460 = vpack.c.b16 %v10414, %v10413
  %v10461 = vpack.c.b16 %v10416, %v10415
  %v10462 = vpack.c.b16 %v10418, %v10417
  %v10463 = vpack.c.b16 %v10420, %v10419
  %v10464 = vpack.c.b16 %v10422, %v10421
  %v10465 = vpack.c.b16 %v10424, %v10423
  %v10466 = vpack.c.b16 %v10426, %v10425
  %v10467 = vpack.c.b16 %v10428, %v10427
  %v10468 = vpack.c.b16 %v10430, %v10429
  %v10469 = vpack.c.b16 %v10432, %v10431
  %v10470 = vpack.c.b16 %v10434, %v10433
  %v10471 = vpack.c.b16 %v10436, %v10435
  %v10472 = vpack.c.b16 %v10438, %v10437
  %v10473 = vpack.c.b16 %v10440, %v10439
  %v10474 = vpack.c.b16 %v10442, %v10441
  %10507 = vmatprep.subr.bf16.mxu0 0
  %10508 = vmatpush1.bf16.msra.mxu0 %v10450
  %10509 = vmatprep.subr.bf16.mxu0 0
  %10510 = vmatpush1.bf16.msra.mxu0 %v10449
  %10511 = vmatprep.subr.bf16.mxu0 0
  %10512 = vmatpush1.bf16.msra.mxu0 %v10448
  %10513 = vmatprep.subr.bf16.mxu0 0
  %10514 = vmatpush1.bf16.msra.mxu0 %v10447
  %10515 = vmatprep.subr.bf16.mxu0 0
  %10516 = vmatpush1.bf16.msra.mxu0 %v10446
  %10517 = vmatprep.subr.bf16.mxu0 0
  %10518 = vmatpush1.bf16.msra.mxu0 %v10445
  %10519 = vmatprep.subr.bf16.mxu0 0
  %10520 = vmatpush1.bf16.msra.mxu0 %v10444
  %10521 = vmatprep.subr.bf16.mxu0 0
  %10522 = vmatpush1.bf16.msra.mxu0 %v10443
  %10523 = vmatprep.subr.bf16.mxu0 0
  %10524 = vmatpush2.bf16.msra.mxu0 %v10458
  %10525 = vmatprep.subr.bf16.mxu0 0
  %10526 = vmatpush2.bf16.msra.mxu0 %v10457
  %10527 = vmatprep.subr.bf16.mxu0 0
  %10528 = vmatpush2.bf16.msra.mxu0 %v10456
  %10529 = vmatprep.subr.bf16.mxu0 0
  %10530 = vmatpush2.bf16.msra.mxu0 %v10455
  %10531 = vmatprep.subr.bf16.mxu0 0
  %10532 = vmatpush2.bf16.msra.mxu0 %v10454
  %10533 = vmatprep.subr.bf16.mxu0 0
  %10534 = vmatpush2.bf16.msra.mxu0 %v10453
  %10535 = vmatprep.subr.bf16.mxu0 0
  %10536 = vmatpush2.bf16.msra.mxu0 %v10452
  %10537 = vmatprep.subr.bf16.mxu0 0
  %10538 = vmatpush2.bf16.msra.mxu0 %v10451
  %10539 = vmatprep.mubr.bf16.mxu0 %v10241
  %10540 = vmatmul.mubr.bf16.gmra.mxu0 %v10240
  %v10541 = vpop.f32.mrf.mxu0
  %v10542 = vadd.f32 %v10313, %v10541
  %v10543 = vpop.f32.mrf.mxu0
  %v10544 = vpop.f32.mrf.mxu0
  %v10545 = vpop.f32.mrf.mxu0
  %10546 = vdwg.mxu0
  %10547 = vmatprep.subr.bf16.mxu0 0
  %10548 = vmatpush1.bf16.msra.mxu0 %v10466
  %10549 = vmatprep.subr.bf16.mxu0 0
  %10550 = vmatpush1.bf16.msra.mxu0 %v10465
  %10551 = vmatprep.subr.bf16.mxu0 0
  %10552 = vmatpush1.bf16.msra.mxu0 %v10464
  %10553 = vmatprep.subr.bf16.mxu0 0
  %10554 = vmatpush1.bf16.msra.mxu0 %v10463
  %10555 = vmatprep.subr.bf16.mxu0 0
  %10556 = vmatpush1.bf16.msra.mxu0 %v10462
  %10557 = vmatprep.subr.bf16.mxu0 0
  %10558 = vmatpush1.bf16.msra.mxu0 %v10461
  %10559 = vmatprep.subr.bf16.mxu0 0
  %10560 = vmatpush1.bf16.msra.mxu0 %v10460
  %10561 = vmatprep.subr.bf16.mxu0 0
  %10562 = vmatpush1.bf16.msra.mxu0 %v10459
  %10563 = vmatprep.subr.bf16.mxu0 0
  %10564 = vmatpush2.bf16.msra.mxu0 %v10474
  %10565 = vmatprep.subr.bf16.mxu0 0
  %10566 = vmatpush2.bf16.msra.mxu0 %v10473
  %10567 = vmatprep.subr.bf16.mxu0 0
  %10568 = vmatpush2.bf16.msra.mxu0 %v10472
  %10569 = vmatprep.subr.bf16.mxu0 0
  %10570 = vmatpush2.bf16.msra.mxu0 %v10471
  %10571 = vmatprep.subr.bf16.mxu0 0
  %10572 = vmatpush2.bf16.msra.mxu0 %v10470
  %10573 = vmatprep.subr.bf16.mxu0 0
  %10574 = vmatpush2.bf16.msra.mxu0 %v10469
  %10575 = vmatprep.subr.bf16.mxu0 0
  %10576 = vmatpush2.bf16.msra.mxu0 %v10468
  %10577 = vmatprep.subr.bf16.mxu0 0
  %10578 = vmatpush2.bf16.msra.mxu0 %v10467
  %10579 = vmatprep.mubr.bf16.mxu0 %v10243
  %10580 = vmatmul.mubr.bf16.gmra.mxu0 %v10242
  %v10581 = vpop.f32.mrf.mxu0
  %v10582 = vadd.f32 %v10542, %v10581
  %v10583 = vpop.f32.mrf.mxu0
  %v10584 = vpop.f32.mrf.mxu0
  %v10585 = vpop.f32.mrf.mxu0
  %10586 = vdwg.mxu0
  %10587 = vst [vmem:[%s11] sm:$0x3] %v10582
  // Predicated region
  $region76: #{a3c_forward.1} parent=0 // pred_check
    _
  $region77: #{a3c_forward.1} parent=0 // pred_check_branch
    %10589 = sbr.rel (0) target = $region79
  $region78: #{a3c_forward.1} parent=0 // pred_region
    _
  $region79: #{a3c_forward.1} parent=0 // pred_fallthru
    _
  // Predicated region
  $region80: #{a3c_forward.1} parent=0 // pred_check
    _
  $region81: #{a3c_forward.1} parent=0 // pred_check_branch
    %10591 = sbr.rel (0) target = $region83
  $region82: #{a3c_forward.1} parent=0 // pred_region
    _
  $region83: #{a3c_forward.1} parent=0 // pred_fallthru
    _
  %10592 = vsyncmov [#allocation3]
  %s10593 = vpop.sfrf %10592
  %p10594 = scmp.eq.s32.totalorder %s10593, 0
  %p10595 = pneg %p10594
  %10597 = shalt.err (%p10595)

</llo_original>
